<compile_context>
chip_gen: v7x
topology: tpu7x:2x2x1
jax: 0.10.0
libtpu: 0.0.40
codegen_flags: <defaults>
</compile_context>

<pallas_src>
import functools
import math

import jax
import jax.numpy as jnp
from jax.experimental import pallas as pl
from jax.experimental.pallas import tpu as pltpu

FEAT = 343                  # GCN feature dim (hardcoded in the PyTorch module)
FEAT_PAD = 384              # padded to a multiple of 128 (lane-dense)
HID1, HID2, HID3 = 512, 256, 64
HID3_PAD = 128              # pad fc3 output / fc4 input to a full lane group
OUT_PAD = 128               # final layer padded to one full lane group
BN_EPS = 1e-5


def round_up(v, m):
    return ((v + m - 1) // m) * m


# ----------------------------------------------------------------------------
# Generation-aware VMEM budget (v5e/v6e: 128 MiB physical, v7x: 64 MiB per TC)
# ----------------------------------------------------------------------------
def _tpu_vmem_capacity_bytes():
    try:
        info = pltpu.get_tpu_info()
        cap = getattr(info, "vmem_capacity_bytes", None)
        if cap:
            return int(cap)
    except Exception:
        pass
    return 128 * 1024 * 1024        # assume a 128-MiB part if the query is unavailable


_VMEM_CAP = _tpu_vmem_capacity_bytes()
if _VMEM_CAP >= 100 * 1024 * 1024:   # v5e / v6e class
    VMEM_LIMIT = 96 * 1024 * 1024
    NODE_TILE = 512
else:                                # v7x class (64 MiB per TensorCore)
    VMEM_LIMIT = 48 * 1024 * 1024
    NODE_TILE = 256

AGG_K_TILE = 2048                    # wide reduction tile for the non-resident fallback


def _support_fits_vmem(n_pad, node_tile):
    """Can the full (n_pad, FEAT_PAD) bf16 support matrix stay VMEM-resident
    alongside the double-buffered adj row tiles and the output tile?"""
    sup_bytes = n_pad * FEAT_PAD * 2
    adj_tile_bytes = node_tile * n_pad * 2
    out_tile_bytes = node_tile * FEAT_PAD * 4
    est = 2 * (sup_bytes + adj_tile_bytes + out_tile_bytes)   # conservative x2 buffering
    return est <= int(0.75 * VMEM_LIMIT)


# ----------------------------------------------------------------------------
# GCN stage A:  support = x @ W     (tiled over node rows, W VMEM-resident)
# ----------------------------------------------------------------------------
def support_kernel(x_ref, w_ref, o_ref):
    o_ref[...] = jnp.dot(
        x_ref[...], w_ref[...], preferred_element_type=jnp.float32
    ).astype(o_ref.dtype)


def gcn_support(x_bf16, w_bf16, *, node_tile):
    n, f = x_bf16.shape
    return pl.pallas_call(
        support_kernel,
        out_shape=jax.ShapeDtypeStruct((n, f), jnp.bfloat16),
        grid=(n // node_tile,),
        in_specs=[
            pl.BlockSpec((node_tile, f), lambda i: (i, 0)),
            pl.BlockSpec((f, f), lambda i: (0, 0)),          # W stays VMEM-resident
        ],
        out_specs=pl.BlockSpec((node_tile, f), lambda i: (i, 0)),
        compiler_params=pltpu.CompilerParams(
            dimension_semantics=("parallel",),
            vmem_limit_bytes=VMEM_LIMIT,
        ),
    )(x_bf16, w_bf16)


# ----------------------------------------------------------------------------
# GCN stage B:  out = (relu?)(adj @ support)
#   Path 1 (support VMEM-resident): 1-D grid over row tiles, single dot per step.
#   Path 2 (fallback, large N):     2-D grid with wide k_tile + f32 accumulator.
# ----------------------------------------------------------------------------
def aggregate_resident_kernel(adj_ref, sup_ref, o_ref, *, relu):
    out = jnp.dot(adj_ref[...], sup_ref[...], preferred_element_type=jnp.float32)
    if relu:
        out = jnp.maximum(out, 0.0)
    o_ref[...] = out.astype(o_ref.dtype)


def aggregate_tiled_kernel(adj_ref, sup_ref, o_ref, acc_ref, *, relu):
    @pl.when(pl.program_id(1) == 0)
    def _():
        acc_ref[...] = jnp.zeros_like(acc_ref)

    acc_ref[...] += jnp.dot(
        adj_ref[...], sup_ref[...], preferred_element_type=jnp.float32
    )

    @pl.when(pl.program_id(1) == pl.num_programs(1) - 1)
    def _():
        out = acc_ref[...]
        if relu:
            out = jnp.maximum(out, 0.0)
        o_ref[...] = out.astype(o_ref.dtype)


def gcn_aggregate(adj_bf16, sup_bf16, *, relu, out_dtype, node_tile, resident, k_tile):
    n = adj_bf16.shape[0]
    f = sup_bf16.shape[1]

    if resident:
        return pl.pallas_call(
            functools.partial(aggregate_resident_kernel, relu=relu),
            out_shape=jax.ShapeDtypeStruct((n, f), out_dtype),
            grid=(n // node_tile,),
            in_specs=[
                pl.BlockSpec((node_tile, n), lambda i: (i, 0)),
                pl.BlockSpec((n, f), lambda i: (0, 0)),       # support stays resident
            ],
            out_specs=pl.BlockSpec((node_tile, f), lambda i: (i, 0)),
            compiler_params=pltpu.CompilerParams(
                dimension_semantics=("parallel",),
                vmem_limit_bytes=VMEM_LIMIT,
            ),
        )(adj_bf16, sup_bf16)

    return pl.pallas_call(
        functools.partial(aggregate_tiled_kernel, relu=relu),
        out_shape=jax.ShapeDtypeStruct((n, f), out_dtype),
        grid=(n // node_tile, n // k_tile),
        in_specs=[
            pl.BlockSpec((node_tile, k_tile), lambda i, k: (i, k)),
            pl.BlockSpec((k_tile, f), lambda i, k: (k, 0)),
        ],
        out_specs=pl.BlockSpec((node_tile, f), lambda i, k: (i, 0)),
        scratch_shapes=[pltpu.VMEM((node_tile, f), jnp.float32)],
        compiler_params=pltpu.CompilerParams(
            dimension_semantics=("parallel", "arbitrary"),
            vmem_limit_bytes=VMEM_LIMIT,
        ),
    )(adj_bf16, sup_bf16)


# ----------------------------------------------------------------------------
# Fused MLP head (fc1..fc4 + mish + folded-BN + sigmoid), batch-tiled.
#   dsi = [x2[pro1] || x2[pro2]]  (bf16, lane-dense 2*FEAT_PAD) arrives as an input;
#   all weights are VMEM-resident across batch tiles.
# ----------------------------------------------------------------------------
def mlp_kernel(dsi_ref,
               w1_ref, b1_ref,
               w2_ref, b2_ref,
               w3_ref, b3_ref,
               w4_ref, b4_ref,
               o_ref, *, sigmoid):
    def mish(v):
        # mish(x) = x * tanh(softplus(x)) = x * u/(u+2),  u = e^x (e^x + 2)
        vc = jnp.minimum(v, 20.0)                    # overflow guard
        e = jnp.exp(vc)
        u = e * (e + 2.0)
        m = v * u * pl.reciprocal(u + 2.0, approx=True)
        return jnp.where(v > 20.0, v, m)             # mish(x) ~ x for large x

    h = (jnp.dot(dsi_ref[...], w1_ref[...], preferred_element_type=jnp.float32)
         + b1_ref[...])
    h = mish(h)                                      # bn1 folded into W2/b2
    h = jnp.dot(h.astype(jnp.bfloat16), w2_ref[...],
                preferred_element_type=jnp.float32) + b2_ref[...]
    h = mish(h)                                      # bn2 folded into W3/b3
    h = jnp.dot(h.astype(jnp.bfloat16), w3_ref[...],
                preferred_element_type=jnp.float32) + b3_ref[...]
    h = mish(h)                                      # bn3 folded into W4/b4
    h = jnp.dot(h.astype(jnp.bfloat16), w4_ref[...],
                preferred_element_type=jnp.float32) + b4_ref[...]
    if sigmoid:
        h = jax.nn.sigmoid(h)
    o_ref[...] = h.astype(o_ref.dtype)


def mlp_head(dsi_pad, mlp_params, *, sigmoid, batch_tile):
    b_pad, k = dsi_pad.shape
    w1, b1, w2, b2, w3, b3, w4, b4 = mlp_params

    def const_spec(arr):
        nd = arr.ndim
        return pl.BlockSpec(arr.shape, lambda i, nd=nd: (0,) * nd)

    return pl.pallas_call(
        functools.partial(mlp_kernel, sigmoid=sigmoid),
        out_shape=jax.ShapeDtypeStruct((b_pad, OUT_PAD), jnp.float32),
        grid=(b_pad // batch_tile,),
        in_specs=[
            pl.BlockSpec((batch_tile, k), lambda i: (i, 0)),
            const_spec(w1), const_spec(b1),
            const_spec(w2), const_spec(b2),
            const_spec(w3), const_spec(b3),
            const_spec(w4), const_spec(b4),
        ],
        out_specs=pl.BlockSpec((batch_tile, OUT_PAD), lambda i: (i, 0)),
        compiler_params=pltpu.CompilerParams(
            dimension_semantics=("parallel",),
            vmem_limit_bytes=VMEM_LIMIT,
        ),
    )(dsi_pad, w1, b1, w2, b2, w3, b3, w4, b4)


# ----------------------------------------------------------------------------
# Full forward (padding / gather / final slicing are plain-JAX glue)
# ----------------------------------------------------------------------------
def dsi_predictor_forward(x, adj, pro1_index, pro2_index, params, *,
                          out_features=1, sigmoid=True, node_tile=None):
    gc1_w, gc2_w, mlp_params = params
    n = x.shape[0]
    batch = pro1_index.shape[0]

    node_tile = NODE_TILE if node_tile is None else node_tile
    n_pad = round_up(n, node_tile)
    resident = _support_fits_vmem(n_pad, node_tile)
    k_tile = None
    if not resident:
        k_tile = AGG_K_TILE
        n_pad = round_up(n, k_tile)          # k_tile is a multiple of node_tile

    # zero-pad node rows and feature columns -> padded results stay exact
    x_pad = jnp.zeros((n_pad, FEAT_PAD), jnp.bfloat16)
    x_pad = x_pad.at[:n, :FEAT].set(x.astype(jnp.bfloat16))
    adj_pad = jnp.zeros((n_pad, n_pad), jnp.bfloat16)
    adj_pad = adj_pad.at[:n, :n].set(adj.astype(jnp.bfloat16))

    # GCN layer 1: relu(adj @ (x @ W1))
    sup1 = gcn_support(x_pad, gc1_w, node_tile=node_tile)
    x1 = gcn_aggregate(adj_pad, sup1, relu=True, out_dtype=jnp.bfloat16,
                       node_tile=node_tile, resident=resident, k_tile=k_tile)
    # GCN layer 2: adj @ (x1 @ W2)   (bf16 output: it is consumed in bf16 by fc1)
    sup2 = gcn_support(x1, gc2_w, node_tile=node_tile)
    x2 = gcn_aggregate(adj_pad, sup2, relu=False, out_dtype=jnp.bfloat16,
                       node_tile=node_tile, resident=resident, k_tile=k_tile)

    # Vectorized row gather + concat (XLA HBM gather; x2 is NOT pinned in VMEM).
    p1 = pro1_index.astype(jnp.int32)
    p2 = pro2_index.astype(jnp.int32)
    dsi = jnp.concatenate([jnp.take(x2, p1, axis=0),
                           jnp.take(x2, p2, axis=0)], axis=1)   # (B, 2*FEAT_PAD) bf16

    # Right-size the batch tile: pad to 8, single tile for small batches.
    b_pad8 = round_up(max(batch, 1), 8)
    batch_tile = b_pad8 if b_pad8 <= 512 else 128
    b_pad = round_up(b_pad8, batch_tile)
    dsi_pad = jnp.zeros((b_pad, 2 * FEAT_PAD), jnp.bfloat16).at[:batch].set(dsi)

    out = mlp_head(dsi_pad, mlp_params, sigmoid=sigmoid, batch_tile=batch_tile)
    return out[:batch, :out_features]


# ----------------------------------------------------------------------------
# Deterministic parameter construction (PyTorch-like init) + kernel-side prep
# ----------------------------------------------------------------------------
def xavier_uniform(key, shape):
    fan_in, fan_out = shape
    limit = math.sqrt(6.0 / (fan_in + fan_out))
    return jax.random.uniform(key, shape, jnp.float32, -limit, limit)


def linear_params(key, fan_in, fan_out):
    kw, kb = jax.random.split(key)
    bound = 1.0 / math.sqrt(fan_in)
    w = jax.random.uniform(kw, (fan_in, fan_out), jnp.float32, -bound, bound)
    b = jax.random.uniform(kb, (1, fan_out), jnp.float32, -bound, bound)
    return w, b


def bn_scale_shift(key, dim):
    kg, kb, km, kv = jax.random.split(key, 4)
    gamma = 1.0 + 0.1 * jax.random.normal(kg, (1, dim), jnp.float32)
    beta = 0.1 * jax.random.normal(kb, (1, dim), jnp.float32)
    run_mean = 0.1 * jax.random.normal(km, (1, dim), jnp.float32)
    run_var = 1.0 + 0.1 * jax.random.uniform(kv, (1, dim), jnp.float32)
    scale = gamma / jnp.sqrt(run_var + BN_EPS)
    shift = beta - run_mean * scale
    return scale, shift


def make_params(key, out_features):
    keys = jax.random.split(key, 9)
    gc1_w = xavier_uniform(keys[0], (FEAT, FEAT))
    gc2_w = xavier_uniform(keys[1], (FEAT, FEAT))
    w1, b1 = linear_params(keys[2], 2 * FEAT, HID1)
    s1, t1 = bn_scale_shift(keys[3], HID1)
    w2, b2 = linear_params(keys[4], HID1, HID2)
    s2, t2 = bn_scale_shift(keys[5], HID2)
    w3, b3 = linear_params(keys[6], HID2, HID3)
    s3, t3 = bn_scale_shift(keys[7], HID3)
    w4, b4 = linear_params(keys[8], HID3, out_features)
    return (gc1_w, gc2_w, w1, b1, s1, t1, w2, b2, s2, t2, w3, b3, s3, t3, w4, b4)


def prepare_kernel_params(raw):
    (gc1_w, gc2_w, w1, b1, s1, t1, w2, b2, s2, t2, w3, b3, s3, t3, w4, b4) = raw
    out_features = w4.shape[1]

    def pad_gcn(w):
        wp = jnp.zeros((FEAT_PAD, FEAT_PAD), jnp.float32).at[:FEAT, :FEAT].set(w)
        return wp.astype(jnp.bfloat16)

    gc1p, gc2p = pad_gcn(gc1_w), pad_gcn(gc2_w)

    # fc1 weight packed for the (B, 2*FEAT_PAD) concatenated input:
    # rows [0:343] act on the pro1 features (dsi cols 0:343),
    # rows [384:727] act on the pro2 features (dsi cols 384:727).
    w1p = jnp.zeros((2 * FEAT_PAD, HID1), jnp.float32)
    w1p = w1p.at[:FEAT].set(w1[:FEAT])
    w1p = w1p.at[FEAT_PAD:FEAT_PAD + FEAT].set(w1[FEAT:])

    # fold eval-mode BatchNorm (y = x*s + t) into the following Linear layer
    w2f = w2 * s1.reshape(-1, 1)
    b2f = b2 + t1 @ w2
    w3f = w3 * s2.reshape(-1, 1)
    b3f = b3 + t2 @ w3
    w4f = w4 * s3.reshape(-1, 1)
    b4f = b4 + t3 @ w4

    # pad HID3 64 -> 128 (lane-dense fc3 output / fc4 input); mish(0)=0, so the
    # zero-padded columns contribute nothing through the zero-padded W4 rows.
    w3p = jnp.zeros((HID2, HID3_PAD), jnp.float32).at[:, :HID3].set(w3f)
    b3p = jnp.zeros((1, HID3_PAD), jnp.float32).at[:, :HID3].set(b3f)
    # pad the final layer to a full 128-lane output slab
    w4p = jnp.zeros((HID3_PAD, OUT_PAD), jnp.float32).at[:HID3, :out_features].set(w4f)
    b4p = jnp.zeros((1, OUT_PAD), jnp.float32).at[:, :out_features].set(b4f)

    mlp = (w1p.astype(jnp.bfloat16), b1,
           w2f.astype(jnp.bfloat16), b2f,
           w3p.astype(jnp.bfloat16), b3p,
           w4p.astype(jnp.bfloat16), b4p)
    return (gc1p, gc2p, mlp), out_features


# ----------------------------------------------------------------------------
# Pure-JAX references (exact f32, and a bf16-matmul mirror of the kernel path)
# ----------------------------------------------------------------------------
def _mish_exact(v):
    return v * jnp.tanh(jax.nn.softplus(v))


def reference_forward(x, adj, p1, p2, raw, *, sigmoid=True):
    (gc1_w, gc2_w, w1, b1, s1, t1, w2, b2, s2, t2, w3, b3, s3, t3, w4, b4) = raw
    x1 = jnp.maximum(adj @ (x @ gc1_w), 0.0)
    x2 = adj @ (x1 @ gc2_w)
    dsi = jnp.concatenate([x2[p1], x2[p2]], axis=1)
    h = _mish_exact(dsi @ w1 + b1) * s1 + t1
    h = _mish_exact(h @ w2 + b2) * s2 + t2
    h = _mish_exact(h @ w3 + b3) * s3 + t3
    h = h @ w4 + b4
    return jax.nn.sigmoid(h) if sigmoid else h


def reference_forward_bf16(x, adj, p1, p2, raw, *, sigmoid=True):
    (gc1_w, gc2_w, w1, b1, s1, t1, w2, b2, s2, t2, w3, b3, s3, t3, w4, b4) = raw
    bf = jnp.bfloat16

    def mm(a, b):
        return jnp.dot(a.astype(bf), b.astype(bf), preferred_element_type=jnp.float32)

    sup1 = mm(x, gc1_w).astype(bf)
    x1 = jnp.maximum(
        jnp.dot(adj.astype(bf), sup1, preferred_element_type=jnp.float32), 0.0
    ).astype(bf)
    sup2 = jnp.dot(x1, gc2_w.astype(bf), preferred_element_type=jnp.float32).astype(bf)
    x2 = jnp.dot(adj.astype(bf), sup2, preferred_element_type=jnp.float32)
    dsi = jnp.concatenate([x2[p1], x2[p2]], axis=1)
    h = _mish_exact(mm(dsi, w1) + b1) * s1 + t1
    h = _mish_exact(mm(h, w2) + b2) * s2 + t2
    h = _mish_exact(mm(h, w3) + b3) * s3 + t3
    h = mm(h, w4) + b4
    return jax.nn.sigmoid(h) if sigmoid else h


if __name__ == "__main__":
    key = jax.random.PRNGKey(0)
    k_param, k_x, k_adj, k_i1, k_i2 = jax.random.split(key, 5)

    num_nodes = 16          # small graph for the self-test
    batch = 8               # number of DSI pairs
    out_features = 1

    raw_params = make_params(k_param, out_features)
    kernel_params, out_feat = prepare_kernel_params(raw_params)

    # node features
    x = jax.random.normal(k_x, (num_nodes, FEAT), jnp.float32)

    # symmetric normalized adjacency with self loops (dense)
    a = (jax.random.uniform(k_adj, (num_nodes, num_nodes)) > 0.7).astype(jnp.float32)
    a = jnp.maximum(a, a.T) + jnp.eye(num_nodes, dtype=jnp.float32)
    deg = jnp.sum(a, axis=1)
    d_inv_sqrt = 1.0 / jnp.sqrt(deg)
    adj = a * d_inv_sqrt[:, None] * d_inv_sqrt[None, :]

    pro1_index = jax.random.randint(k_i1, (batch,), 0, num_nodes, jnp.int32)
    pro2_index = jax.random.randint(k_i2, (batch,), 0, num_nodes, jnp.int32)

    fwd = jax.jit(functools.partial(
        dsi_predictor_forward, out_features=out_feat, sigmoid=True))
    out = fwd(x, adj, pro1_index, pro2_index, kernel_params)
    out = jax.block_until_ready(out)

    ref_bf16 = reference_forward_bf16(x, adj, pro1_index, pro2_index, raw_params,
                                      sigmoid=True)
    ref_f32 = reference_forward(x, adj, pro1_index, pro2_index, raw_params,
                                sigmoid=True)

    assert out.shape == (batch, out_features)
    # primary check: same math in plain JAX with matching bf16 matmul precision
    assert jnp.allclose(out, ref_bf16, rtol=1.5e-2, atol=1.5e-2), \
        "mismatch vs bf16 reference"
    # sanity check against the exact f32 module semantics (loose: bf16 drift)
    assert jnp.allclose(out, ref_f32, rtol=8e-2, atol=8e-2), \
        "mismatch vs f32 reference"

    print("KERNEL_OK")
</pallas_src>

<mosaic_0001>
module attributes {stable_mosaic.version = 11 : i64} {
  func.func @support_kernel(%arg0: i32, %arg1: memref<512x384xbf16, #tpu.memory_space<vmem>>, %arg2: memref<384x384xbf16, #tpu.memory_space<vmem>>, %arg3: memref<512x384xbf16, #tpu.memory_space<vmem>>) attributes {dimension_semantics = [#tpu.dimension_semantics<parallel>], iteration_bounds = array<i64: 1>, scalar_prefetch = 0 : i64, scratch_operands = 0 : i64, tpu.core_type = #tpu.core_type<tc>, window_params = [{transform_indices = @transform_0, window_bounds = array<i64: 512, 384>}, {pipeline_mode = #tpu.pipeline_mode<synchronous>, transform_indices = @transform_1, window_bounds = array<i64: 384, 384>}, {transform_indices = @transform_2, window_bounds = array<i64: 512, 384>}]} {
    %c0 = arith.constant 0 : index
    %c0_0 = arith.constant 0 : index
    %0 = vector.load %arg1[%c0, %c0_0] : memref<512x384xbf16, #tpu.memory_space<vmem>>, vector<512x384xbf16>
    %c0_1 = arith.constant 0 : index
    %c0_2 = arith.constant 0 : index
    %1 = vector.load %arg2[%c0_1, %c0_2] : memref<384x384xbf16, #tpu.memory_space<vmem>>, vector<384x384xbf16>
    %cst = arith.constant dense<0.000000e+00> : vector<512x384xf32>
    %2 = tpu.matmul %0, %1, %cst {dimension_numbers = #tpu.dot_dimension_numbers<[1], [0], [0], [1], [0, 0, 1, 1], [], []>} : vector<512x384xbf16>, vector<384x384xbf16>, vector<512x384xf32> -> vector<512x384xf32>
    %3 = arith.truncf %2 : vector<512x384xf32> to vector<512x384xbf16>
    %c0_3 = arith.constant 0 : index
    %c0_4 = arith.constant 0 : index
    %4 = vector.load %arg3[%c0_3, %c0_4] : memref<512x384xbf16, #tpu.memory_space<vmem>>, vector<512x384xbf16>
    tpu.vector_store %arg3[%c0_3, %c0_4], %3 {strides = array<i32>} : memref<512x384xbf16, #tpu.memory_space<vmem>>, vector<512x384xbf16>,
    return
  }
  func.func @transform_0(%arg0: i32) -> (i32, i32) {
    %c0_i32 = arith.constant 0 : i32
    %c0_i32_0 = arith.constant 0 : i32
    return %arg0, %c0_i32 : i32, i32
  }
  func.func @transform_1(%arg0: i32) -> (i32, i32) {
    %c0_i32 = arith.constant 0 : i32
    %c0_i32_0 = arith.constant 0 : i32
    %c0_i32_1 = arith.constant 0 : i32
    return %c0_i32, %c0_i32_0 : i32, i32
  }
  func.func @transform_2(%arg0: i32) -> (i32, i32) {
    %c0_i32 = arith.constant 0 : i32
    %c0_i32_0 = arith.constant 0 : i32
    return %arg0, %c0_i32 : i32, i32
  }
}

module attributes {stable_mosaic.version = 11 : i64} {
  func.func @aggregate_resident_kernel(%arg0: i32, %arg1: memref<512x512xbf16, #tpu.memory_space<vmem>>, %arg2: memref<512x384xbf16, #tpu.memory_space<vmem>>, %arg3: memref<512x384xbf16, #tpu.memory_space<vmem>>) attributes {dimension_semantics = [#tpu.dimension_semantics<parallel>], iteration_bounds = array<i64: 1>, scalar_prefetch = 0 : i64, scratch_operands = 0 : i64, tpu.core_type = #tpu.core_type<tc>, window_params = [{transform_indices = @transform_0, window_bounds = array<i64: 512, 512>}, {pipeline_mode = #tpu.pipeline_mode<synchronous>, transform_indices = @transform_1, window_bounds = array<i64: 512, 384>}, {transform_indices = @transform_2, window_bounds = array<i64: 512, 384>}]} {
    %c0 = arith.constant 0 : index
    %c0_0 = arith.constant 0 : index
    %0 = vector.load %arg1[%c0, %c0_0] : memref<512x512xbf16, #tpu.memory_space<vmem>>, vector<512x512xbf16>
    %c0_1 = arith.constant 0 : index
    %c0_2 = arith.constant 0 : index
    %1 = vector.load %arg2[%c0_1, %c0_2] : memref<512x384xbf16, #tpu.memory_space<vmem>>, vector<512x384xbf16>
    %cst = arith.constant dense<0.000000e+00> : vector<512x384xf32>
    %2 = tpu.matmul %0, %1, %cst {dimension_numbers = #tpu.dot_dimension_numbers<[1], [0], [0], [1], [0, 0, 1, 1], [], []>} : vector<512x512xbf16>, vector<512x384xbf16>, vector<512x384xf32> -> vector<512x384xf32>
    %cst_3 = arith.constant 0.000000e+00 : f32
    %3 = vector.broadcast %cst_3 : f32 to vector<512x384xf32>
    %4 = arith.maximumf %2, %3 : vector<512x384xf32>
    %5 = arith.truncf %4 : vector<512x384xf32> to vector<512x384xbf16>
    %c0_4 = arith.constant 0 : index
    %c0_5 = arith.constant 0 : index
    %6 = vector.load %arg3[%c0_4, %c0_5] : memref<512x384xbf16, #tpu.memory_space<vmem>>, vector<512x384xbf16>
    tpu.vector_store %arg3[%c0_4, %c0_5], %5 {strides = array<i32>} : memref<512x384xbf16, #tpu.memory_space<vmem>>, vector<512x384xbf16>,
    return
  }
  func.func @transform_0(%arg0: i32) -> (i32, i32) {
    %c0_i32 = arith.constant 0 : i32
    %c0_i32_0 = arith.constant 0 : i32
    return %arg0, %c0_i32 : i32, i32
  }
  func.func @transform_1(%arg0: i32) -> (i32, i32) {
    %c0_i32 = arith.constant 0 : i32
    %c0_i32_0 = arith.constant 0 : i32
    %c0_i32_1 = arith.constant 0 : i32
    return %c0_i32, %c0_i32_0 : i32, i32
  }
  func.func @transform_2(%arg0: i32) -> (i32, i32) {
    %c0_i32 = arith.constant 0 : i32
    %c0_i32_0 = arith.constant 0 : i32
    return %arg0, %c0_i32 : i32, i32
  }
}

module attributes {stable_mosaic.version = 11 : i64} {
  func.func @aggregate_resident_kernel(%arg0: i32, %arg1: memref<512x512xbf16, #tpu.memory_space<vmem>>, %arg2: memref<512x384xbf16, #tpu.memory_space<vmem>>, %arg3: memref<512x384xbf16, #tpu.memory_space<vmem>>) attributes {dimension_semantics = [#tpu.dimension_semantics<parallel>], iteration_bounds = array<i64: 1>, scalar_prefetch = 0 : i64, scratch_operands = 0 : i64, tpu.core_type = #tpu.core_type<tc>, window_params = [{transform_indices = @transform_0, window_bounds = array<i64: 512, 512>}, {pipeline_mode = #tpu.pipeline_mode<synchronous>, transform_indices = @transform_1, window_bounds = array<i64: 512, 384>}, {transform_indices = @transform_2, window_bounds = array<i64: 512, 384>}]} {
    %c0 = arith.constant 0 : index
    %c0_0 = arith.constant 0 : index
    %0 = vector.load %arg1[%c0, %c0_0] : memref<512x512xbf16, #tpu.memory_space<vmem>>, vector<512x512xbf16>
    %c0_1 = arith.constant 0 : index
    %c0_2 = arith.constant 0 : index
    %1 = vector.load %arg2[%c0_1, %c0_2] : memref<512x384xbf16, #tpu.memory_space<vmem>>, vector<512x384xbf16>
    %cst = arith.constant dense<0.000000e+00> : vector<512x384xf32>
    %2 = tpu.matmul %0, %1, %cst {dimension_numbers = #tpu.dot_dimension_numbers<[1], [0], [0], [1], [0, 0, 1, 1], [], []>} : vector<512x512xbf16>, vector<512x384xbf16>, vector<512x384xf32> -> vector<512x384xf32>
    %3 = arith.truncf %2 : vector<512x384xf32> to vector<512x384xbf16>
    %c0_3 = arith.constant 0 : index
    %c0_4 = arith.constant 0 : index
    %4 = vector.load %arg3[%c0_3, %c0_4] : memref<512x384xbf16, #tpu.memory_space<vmem>>, vector<512x384xbf16>
    tpu.vector_store %arg3[%c0_3, %c0_4], %3 {strides = array<i32>} : memref<512x384xbf16, #tpu.memory_space<vmem>>, vector<512x384xbf16>,
    return
  }
  func.func @transform_0(%arg0: i32) -> (i32, i32) {
    %c0_i32 = arith.constant 0 : i32
    %c0_i32_0 = arith.constant 0 : i32
    return %arg0, %c0_i32 : i32, i32
  }
  func.func @transform_1(%arg0: i32) -> (i32, i32) {
    %c0_i32 = arith.constant 0 : i32
    %c0_i32_0 = arith.constant 0 : i32
    %c0_i32_1 = arith.constant 0 : i32
    return %c0_i32, %c0_i32_0 : i32, i32
  }
  func.func @transform_2(%arg0: i32) -> (i32, i32) {
    %c0_i32 = arith.constant 0 : i32
    %c0_i32_0 = arith.constant 0 : i32
    return %arg0, %c0_i32 : i32, i32
  }
}

module attributes {stable_mosaic.version = 11 : i64} {
  func.func @mlp_kernel(%arg0: i32, %arg1: memref<8x768xbf16, #tpu.memory_space<vmem>>, %arg2: memref<768x512xbf16, #tpu.memory_space<vmem>>, %arg3: memref<1x512xf32, #tpu.memory_space<vmem>>, %arg4: memref<512x256xbf16, #tpu.memory_space<vmem>>, %arg5: memref<1x256xf32, #tpu.memory_space<vmem>>, %arg6: memref<256x128xbf16, #tpu.memory_space<vmem>>, %arg7: memref<1x128xf32, #tpu.memory_space<vmem>>, %arg8: memref<128x128xbf16, #tpu.memory_space<vmem>>, %arg9: memref<1x128xf32, #tpu.memory_space<vmem>>, %arg10: memref<8x128xf32, #tpu.memory_space<vmem>>) attributes {dimension_semantics = [#tpu.dimension_semantics<parallel>], iteration_bounds = array<i64: 1>, scalar_prefetch = 0 : i64, scratch_operands = 0 : i64, tpu.core_type = #tpu.core_type<tc>, window_params = [{transform_indices = @transform_0, window_bounds = array<i64: 8, 768>}, {pipeline_mode = #tpu.pipeline_mode<synchronous>, transform_indices = @transform_1, window_bounds = array<i64: 768, 512>}, {pipeline_mode = #tpu.pipeline_mode<synchronous>, transform_indices = @transform_2, window_bounds = array<i64: 1, 512>}, {pipeline_mode = #tpu.pipeline_mode<synchronous>, transform_indices = @transform_3, window_bounds = array<i64: 512, 256>}, {pipeline_mode = #tpu.pipeline_mode<synchronous>, transform_indices = @transform_4, window_bounds = array<i64: 1, 256>}, {pipeline_mode = #tpu.pipeline_mode<synchronous>, transform_indices = @transform_5, window_bounds = array<i64: 256, 128>}, {pipeline_mode = #tpu.pipeline_mode<synchronous>, transform_indices = @transform_6, window_bounds = array<i64: 1, 128>}, {pipeline_mode = #tpu.pipeline_mode<synchronous>, transform_indices = @transform_7, window_bounds = array<i64: 128, 128>}, {pipeline_mode = #tpu.pipeline_mode<synchronous>, transform_indices = @transform_8, window_bounds = array<i64: 1, 128>}, {transform_indices = @transform_9, window_bounds = array<i64: 8, 128>}]} {
    %c0 = arith.constant 0 : index
    %c0_0 = arith.constant 0 : index
    %0 = vector.load %arg1[%c0, %c0_0] : memref<8x768xbf16, #tpu.memory_space<vmem>>, vector<8x768xbf16>
    %c0_1 = arith.constant 0 : index
    %c0_2 = arith.constant 0 : index
    %1 = vector.load %arg2[%c0_1, %c0_2] : memref<768x512xbf16, #tpu.memory_space<vmem>>, vector<768x512xbf16>
    %cst = arith.constant dense<0.000000e+00> : vector<8x512xf32>
    %2 = tpu.matmul %0, %1, %cst {dimension_numbers = #tpu.dot_dimension_numbers<[1], [0], [0], [1], [0, 0, 1, 1], [], []>} : vector<8x768xbf16>, vector<768x512xbf16>, vector<8x512xf32> -> vector<8x512xf32>
    %c0_3 = arith.constant 0 : index
    %c0_4 = arith.constant 0 : index
    %3 = vector.load %arg3[%c0_3, %c0_4] : memref<1x512xf32, #tpu.memory_space<vmem>>, vector<1x512xf32>
    %4 = vector.broadcast %3 : vector<1x512xf32> to vector<8x512xf32>
    %5 = arith.addf %2, %4 : vector<8x512xf32>
    %cst_5 = arith.constant 2.000000e+01 : f32
    %6 = vector.broadcast %cst_5 : f32 to vector<8x512xf32>
    %7 = arith.minimumf %5, %6 : vector<8x512xf32>
    %8 = math.exp %7 : vector<8x512xf32>
    %cst_6 = arith.constant 2.000000e+00 : f32
    %9 = vector.broadcast %cst_6 : f32 to vector<8x512xf32>
    %10 = arith.addf %8, %9 : vector<8x512xf32>
    %11 = arith.mulf %8, %10 : vector<8x512xf32>
    %12 = arith.mulf %5, %11 : vector<8x512xf32>
    %cst_7 = arith.constant 2.000000e+00 : f32
    %13 = vector.broadcast %cst_7 : f32 to vector<8x512xf32>
    %14 = arith.addf %11, %13 : vector<8x512xf32>
    %15 = tpu.reciprocal %14 {approx = true} : vector<8x512xf32> -> vector<8x512xf32>
    %16 = arith.mulf %12, %15 : vector<8x512xf32>
    %cst_8 = arith.constant 2.000000e+01 : f32
    %17 = vector.broadcast %cst_8 : f32 to vector<8x512xf32>
    %18 = arith.cmpf ogt, %5, %17 : vector<8x512xf32>
    %19 = arith.select %18, %5, %16 : vector<8x512xi1>, vector<8x512xf32>
    %20 = arith.truncf %19 : vector<8x512xf32> to vector<8x512xbf16>
    %c0_9 = arith.constant 0 : index
    %c0_10 = arith.constant 0 : index
    %21 = vector.load %arg4[%c0_9, %c0_10] : memref<512x256xbf16, #tpu.memory_space<vmem>>, vector<512x256xbf16>
    %cst_11 = arith.constant dense<0.000000e+00> : vector<8x256xf32>
    %22 = tpu.matmul %20, %21, %cst_11 {dimension_numbers = #tpu.dot_dimension_numbers<[1], [0], [0], [1], [0, 0, 1, 1], [], []>} : vector<8x512xbf16>, vector<512x256xbf16>, vector<8x256xf32> -> vector<8x256xf32>
    %c0_12 = arith.constant 0 : index
    %c0_13 = arith.constant 0 : index
    %23 = vector.load %arg5[%c0_12, %c0_13] : memref<1x256xf32, #tpu.memory_space<vmem>>, vector<1x256xf32>
    %24 = vector.broadcast %23 : vector<1x256xf32> to vector<8x256xf32>
    %25 = arith.addf %22, %24 : vector<8x256xf32>
    %cst_14 = arith.constant 2.000000e+01 : f32
    %26 = vector.broadcast %cst_14 : f32 to vector<8x256xf32>
    %27 = arith.minimumf %25, %26 : vector<8x256xf32>
    %28 = math.exp %27 : vector<8x256xf32>
    %cst_15 = arith.constant 2.000000e+00 : f32
    %29 = vector.broadcast %cst_15 : f32 to vector<8x256xf32>
    %30 = arith.addf %28, %29 : vector<8x256xf32>
    %31 = arith.mulf %28, %30 : vector<8x256xf32>
    %32 = arith.mulf %25, %31 : vector<8x256xf32>
    %cst_16 = arith.constant 2.000000e+00 : f32
    %33 = vector.broadcast %cst_16 : f32 to vector<8x256xf32>
    %34 = arith.addf %31, %33 : vector<8x256xf32>
    %35 = tpu.reciprocal %34 {approx = true} : vector<8x256xf32> -> vector<8x256xf32>
    %36 = arith.mulf %32, %35 : vector<8x256xf32>
    %cst_17 = arith.constant 2.000000e+01 : f32
    %37 = vector.broadcast %cst_17 : f32 to vector<8x256xf32>
    %38 = arith.cmpf ogt, %25, %37 : vector<8x256xf32>
    %39 = arith.select %38, %25, %36 : vector<8x256xi1>, vector<8x256xf32>
    %40 = arith.truncf %39 : vector<8x256xf32> to vector<8x256xbf16>
    %c0_18 = arith.constant 0 : index
    %c0_19 = arith.constant 0 : index
    %41 = vector.load %arg6[%c0_18, %c0_19] : memref<256x128xbf16, #tpu.memory_space<vmem>>, vector<256x128xbf16>
    %cst_20 = arith.constant dense<0.000000e+00> : vector<8x128xf32>
    %42 = tpu.matmul %40, %41, %cst_20 {dimension_numbers = #tpu.dot_dimension_numbers<[1], [0], [0], [1], [0, 0, 1, 1], [], []>} : vector<8x256xbf16>, vector<256x128xbf16>, vector<8x128xf32> -> vector<8x128xf32>
    %c0_21 = arith.constant 0 : index
    %c0_22 = arith.constant 0 : index
    %43 = vector.load %arg7[%c0_21, %c0_22] : memref<1x128xf32, #tpu.memory_space<vmem>>, vector<1x128xf32>
    %44 = vector.broadcast %43 : vector<1x128xf32> to vector<8x128xf32>
    %45 = arith.addf %42, %44 : vector<8x128xf32>
    %cst_23 = arith.constant 2.000000e+01 : f32
    %46 = vector.broadcast %cst_23 : f32 to vector<8x128xf32>
    %47 = arith.minimumf %45, %46 : vector<8x128xf32>
    %48 = math.exp %47 : vector<8x128xf32>
    %cst_24 = arith.constant 2.000000e+00 : f32
    %49 = vector.broadcast %cst_24 : f32 to vector<8x128xf32>
    %50 = arith.addf %48, %49 : vector<8x128xf32>
    %51 = arith.mulf %48, %50 : vector<8x128xf32>
    %52 = arith.mulf %45, %51 : vector<8x128xf32>
    %cst_25 = arith.constant 2.000000e+00 : f32
    %53 = vector.broadcast %cst_25 : f32 to vector<8x128xf32>
    %54 = arith.addf %51, %53 : vector<8x128xf32>
    %55 = tpu.reciprocal %54 {approx = true} : vector<8x128xf32> -> vector<8x128xf32>
    %56 = arith.mulf %52, %55 : vector<8x128xf32>
    %cst_26 = arith.constant 2.000000e+01 : f32
    %57 = vector.broadcast %cst_26 : f32 to vector<8x128xf32>
    %58 = arith.cmpf ogt, %45, %57 : vector<8x128xf32>
    %59 = arith.select %58, %45, %56 : vector<8x128xi1>, vector<8x128xf32>
    %60 = arith.truncf %59 : vector<8x128xf32> to vector<8x128xbf16>
    %c0_27 = arith.constant 0 : index
    %c0_28 = arith.constant 0 : index
    %61 = vector.load %arg8[%c0_27, %c0_28] : memref<128x128xbf16, #tpu.memory_space<vmem>>, vector<128x128xbf16>
    %cst_29 = arith.constant dense<0.000000e+00> : vector<8x128xf32>
    %62 = tpu.matmul %60, %61, %cst_29 {dimension_numbers = #tpu.dot_dimension_numbers<[1], [0], [0], [1], [0, 0, 1, 1], [], []>} : vector<8x128xbf16>, vector<128x128xbf16>, vector<8x128xf32> -> vector<8x128xf32>
    %c0_30 = arith.constant 0 : index
    %c0_31 = arith.constant 0 : index
    %63 = vector.load %arg9[%c0_30, %c0_31] : memref<1x128xf32, #tpu.memory_space<vmem>>, vector<1x128xf32>
    %64 = vector.broadcast %63 : vector<1x128xf32> to vector<8x128xf32>
    %65 = arith.addf %62, %64 : vector<8x128xf32>
    %66 = arith.negf %65 : vector<8x128xf32>
    %67 = math.exp %66 : vector<8x128xf32>
    %cst_32 = arith.constant 1.000000e+00 : f32
    %68 = vector.broadcast %cst_32 : f32 to vector<8x128xf32>
    %69 = arith.addf %68, %67 : vector<8x128xf32>
    %70 = arith.divf %68, %69 : vector<8x128xf32>
    %c0_33 = arith.constant 0 : index
    %c0_34 = arith.constant 0 : index
    %71 = vector.load %arg10[%c0_33, %c0_34] : memref<8x128xf32, #tpu.memory_space<vmem>>, vector<8x128xf32>
    tpu.vector_store %arg10[%c0_33, %c0_34], %70 {strides = array<i32>} : memref<8x128xf32, #tpu.memory_space<vmem>>, vector<8x128xf32>,
    return
  }
  func.func @transform_0(%arg0: i32) -> (i32, i32) {
    %c0_i32 = arith.constant 0 : i32
    %c0_i32_0 = arith.constant 0 : i32
    return %arg0, %c0_i32 : i32, i32
  }
  func.func @transform_1(%arg0: i32) -> (i32, i32) {
    %c0_i32 = arith.constant 0 : i32
    %c0_i32_0 = arith.constant 0 : i32
    %c0_i32_1 = arith.constant 0 : i32
    return %c0_i32, %c0_i32_0 : i32, i32
  }
  func.func @transform_2(%arg0: i32) -> (i32, i32) {
    %c0_i32 = arith.constant 0 : i32
    %c0_i32_0 = arith.constant 0 : i32
    %c0_i32_1 = arith.constant 0 : i32
    return %c0_i32, %c0_i32_0 : i32, i32
  }
  func.func @transform_3(%arg0: i32) -> (i32, i32) {
    %c0_i32 = arith.constant 0 : i32
    %c0_i32_0 = arith.constant 0 : i32
    %c0_i32_1 = arith.constant 0 : i32
    return %c0_i32, %c0_i32_0 : i32, i32
  }
  func.func @transform_4(%arg0: i32) -> (i32, i32) {
    %c0_i32 = arith.constant 0 : i32
    %c0_i32_0 = arith.constant 0 : i32
    %c0_i32_1 = arith.constant 0 : i32
    return %c0_i32, %c0_i32_0 : i32, i32
  }
  func.func @transform_5(%arg0: i32) -> (i32, i32) {
    %c0_i32 = arith.constant 0 : i32
    %c0_i32_0 = arith.constant 0 : i32
    %c0_i32_1 = arith.constant 0 : i32
    return %c0_i32, %c0_i32_0 : i32, i32
  }
  func.func @transform_6(%arg0: i32) -> (i32, i32) {
    %c0_i32 = arith.constant 0 : i32
    %c0_i32_0 = arith.constant 0 : i32
    %c0_i32_1 = arith.constant 0 : i32
    return %c0_i32, %c0_i32_0 : i32, i32
  }
  func.func @transform_7(%arg0: i32) -> (i32, i32) {
    %c0_i32 = arith.constant 0 : i32
    %c0_i32_0 = arith.constant 0 : i32
    %c0_i32_1 = arith.constant 0 : i32
    return %c0_i32, %c0_i32_0 : i32, i32
  }
  func.func @transform_8(%arg0: i32) -> (i32, i32) {
    %c0_i32 = arith.constant 0 : i32
    %c0_i32_0 = arith.constant 0 : i32
    %c0_i32_1 = arith.constant 0 : i32
    return %c0_i32, %c0_i32_0 : i32, i32
  }
  func.func @transform_9(%arg0: i32) -> (i32, i32) {
    %c0_i32 = arith.constant 0 : i32
    %c0_i32_0 = arith.constant 0 : i32
    return %arg0, %c0_i32 : i32, i32
  }
}

</mosaic_0001>

<llo_original>
// kernel: dsi_predictor_forward.5
$region0: #{dsi_predictor_forward.5}
  #allocation0 [shape = 'u32[]', space=smem, size = 0x4, offset = 0x4, fixed_abs, tag = 'smem constant byte address 0x4 - core index']
  #allocation1 [shape = 'u32[144,128]{1,0:T(1,128)}', space=vmem, size = 0x12000, scoped, tag = 'internal scratch']
  %s0 = inlined_call_operand.hbm [shape: bf16[512,384], index: 0, kind: input, shape index: {}]
  %s1 = inlined_call_operand.hbm [shape: bf16[384,384], index: 1, kind: input, shape index: {}]
  %s2 = inlined_call_operand.hbm [shape: bf16[512,384], index: 2, kind: output, shape index: {}]
  %s3 = sld [smem:[#allocation0]]
  $region26: #{dsi_predictor_forward.5} parent=0
    _
  %s5 = ssub.s32 1, %s3
  %s6 = scalar_select 0, %s5, %s3
  $region1: #{dsi_predictor_forward.5} parent=0
    #allocation2 [shape = 'u8[393216]{0}', space=vmem, size = 0x60000, scoped, tag = 'input window, operand 0, single buffered']
    #allocation3 [shape = 's32[1]{0}', space=sflag, size = 0x4, scoped, tag = 'scoped memory for dsi_predictor_forward.5']
    #allocation4 [shape = 's32[1]{0}', space=sflag, size = 0x4, scoped, tag = 'scoped memory for dsi_predictor_forward.5']
    #allocation5 [shape = 'u8[294912]{0}', space=vmem, size = 0x48000, scoped, tag = 'input window, operand 1, single buffered']
    #allocation6 [shape = 's32[1]{0}', space=sflag, size = 0x4, scoped, tag = 'scoped memory for dsi_predictor_forward.5']
    #allocation7 [shape = 'u8[393216]{0}', space=vmem, size = 0x60000, scoped, tag = 'output window, operand 0, single buffered']
    %7 = vsyncpa [#allocation3], 0
    %8 = vsyncpa [#allocation6], 0
    %9 = vsyncpa [#allocation4], 0
    // Predicated region
    $region2: #{dsi_predictor_forward.5} parent=1 // pred_check
      _
    $region3: #{dsi_predictor_forward.5} parent=1 // pred_check_branch
      %11 = sbr.rel (0) target = $region5
    $region4: #{dsi_predictor_forward.5} parent=1 // pred_region
      %s13 = ssub.s32 12288, 12288
      %14 = vsyncadd [#allocation3], %s13
      %s15 = sshll.u32 [#allocation2], 4
      %s16 = int_to_ptr.vmem [resolvable:$true] %s15
      %21 = dma.hbm_to_vmem [thread:$0]  %s0, 12288, %s16, [#allocation3], 192, 192, 12
    $region5: #{dsi_predictor_forward.5} parent=1 // pred_fallthru
      _
    // Predicated region
    $region6: #{dsi_predictor_forward.5} parent=1 // pred_check
      _
    $region7: #{dsi_predictor_forward.5} parent=1 // pred_check_branch
      %23 = sbr.rel (0) target = $region9
    $region8: #{dsi_predictor_forward.5} parent=1 // pred_region
      %s25 = ssub.s32 9216, 9216
      %26 = vsyncadd [#allocation6], %s25
      %s27 = sshll.u32 [#allocation5], 4
      %s28 = int_to_ptr.vmem [resolvable:$true] %s27
      %33 = dma.hbm_to_vmem [thread:$0]  %s1, 9216, %s28, [#allocation6], 192, 192, 12
    $region9: #{dsi_predictor_forward.5} parent=1 // pred_fallthru
      _
    // Predicated region
    $region10: #{dsi_predictor_forward.5} parent=1 // pred_check
      _
    $region11: #{dsi_predictor_forward.5} parent=1 // pred_check_branch
      %35 = sbr.rel (0) target = $region13
    $region12: #{dsi_predictor_forward.5} parent=1 // pred_region
      %36 = dma.done [#allocation3], 12288
    $region13: #{dsi_predictor_forward.5} parent=1 // pred_fallthru
      _
    // Predicated region
    $region14: #{dsi_predictor_forward.5} parent=1 // pred_check
      _
    $region15: #{dsi_predictor_forward.5} parent=1 // pred_check_branch
      %38 = sbr.rel (0) target = $region17
    $region16: #{dsi_predictor_forward.5} parent=1 // pred_region
      %39 = dma.done [#allocation6], 9216
    $region17: #{dsi_predictor_forward.5} parent=1 // pred_fallthru
      _
    %v41 = vld [vmem:[#allocation2] sm:$0xff]
    %v42 = vld [vmem:[#allocation2 + $0x8] sm:$0xf]
    %v43 = vld [vmem:[#allocation2 + $0xc] sm:$0xff]
    %v44 = vld [vmem:[#allocation2 + $0x14] sm:$0xf]
    %v45 = vld [vmem:[#allocation2 + $0x18] sm:$0xff]
    %v46 = vld [vmem:[#allocation2 + $0x20] sm:$0xf]
    %v47 = vld [vmem:[#allocation2 + $0x24] sm:$0xff]
    %v48 = vld [vmem:[#allocation2 + $0x2c] sm:$0xf]
    %v49 = vld [vmem:[#allocation2 + $0x30] sm:$0xff]
    %v50 = vld [vmem:[#allocation2 + $0x38] sm:$0xf]
    %v51 = vld [vmem:[#allocation2 + $0x3c] sm:$0xff]
    %v52 = vld [vmem:[#allocation2 + $0x44] sm:$0xf]
    %v53 = vld [vmem:[#allocation2 + $0x48] sm:$0xff]
    %v54 = vld [vmem:[#allocation2 + $0x50] sm:$0xf]
    %v55 = vld [vmem:[#allocation2 + $0x54] sm:$0xff]
    %v56 = vld [vmem:[#allocation2 + $0x5c] sm:$0xf]
    %v57 = vld [vmem:[#allocation2 + $0x60] sm:$0xff]
    %v58 = vld [vmem:[#allocation2 + $0x68] sm:$0xf]
    %v59 = vld [vmem:[#allocation2 + $0x6c] sm:$0xff]
    %v60 = vld [vmem:[#allocation2 + $0x74] sm:$0xf]
    %v61 = vld [vmem:[#allocation2 + $0x78] sm:$0xff]
    %v62 = vld [vmem:[#allocation2 + $0x80] sm:$0xf]
    %v63 = vld [vmem:[#allocation2 + $0x84] sm:$0xff]
    %v64 = vld [vmem:[#allocation2 + $0x8c] sm:$0xf]
    %v65 = vld [vmem:[#allocation2 + $0x90] sm:$0xff]
    %v66 = vld [vmem:[#allocation2 + $0x98] sm:$0xf]
    %v67 = vld [vmem:[#allocation2 + $0x9c] sm:$0xff]
    %v68 = vld [vmem:[#allocation2 + $0xa4] sm:$0xf]
    %v69 = vld [vmem:[#allocation2 + $0xa8] sm:$0xff]
    %v70 = vld [vmem:[#allocation2 + $0xb0] sm:$0xf]
    %v71 = vld [vmem:[#allocation2 + $0xb4] sm:$0xff]
    %v72 = vld [vmem:[#allocation2 + $0xbc] sm:$0xf]
    %v73 = vld [vmem:[#allocation2 + $0xc0] sm:$0xff]
    %v74 = vld [vmem:[#allocation2 + $0xc8] sm:$0xf]
    %v75 = vld [vmem:[#allocation2 + $0xcc] sm:$0xff]
    %v76 = vld [vmem:[#allocation2 + $0xd4] sm:$0xf]
    %v77 = vld [vmem:[#allocation2 + $0xd8] sm:$0xff]
    %v78 = vld [vmem:[#allocation2 + $0xe0] sm:$0xf]
    %v79 = vld [vmem:[#allocation2 + $0xe4] sm:$0xff]
    %v80 = vld [vmem:[#allocation2 + $0xec] sm:$0xf]
    %v81 = vld [vmem:[#allocation2 + $0xf0] sm:$0xff]
    %v82 = vld [vmem:[#allocation2 + $0xf8] sm:$0xf]
    %v83 = vld [vmem:[#allocation2 + $0xfc] sm:$0xff]
    %v84 = vld [vmem:[#allocation2 + $0x104] sm:$0xf]
    %v85 = vld [vmem:[#allocation2 + $0x108] sm:$0xff]
    %v86 = vld [vmem:[#allocation2 + $0x110] sm:$0xf]
    %v87 = vld [vmem:[#allocation2 + $0x114] sm:$0xff]
    %v88 = vld [vmem:[#allocation2 + $0x11c] sm:$0xf]
    %v89 = vld [vmem:[#allocation2 + $0x120] sm:$0xff]
    %v90 = vld [vmem:[#allocation2 + $0x128] sm:$0xf]
    %v91 = vld [vmem:[#allocation2 + $0x12c] sm:$0xff]
    %v92 = vld [vmem:[#allocation2 + $0x134] sm:$0xf]
    %v93 = vld [vmem:[#allocation2 + $0x138] sm:$0xff]
    %v94 = vld [vmem:[#allocation2 + $0x140] sm:$0xf]
    %v95 = vld [vmem:[#allocation2 + $0x144] sm:$0xff]
    %v96 = vld [vmem:[#allocation2 + $0x14c] sm:$0xf]
    %v97 = vld [vmem:[#allocation2 + $0x150] sm:$0xff]
    %v98 = vld [vmem:[#allocation2 + $0x158] sm:$0xf]
    %v99 = vld [vmem:[#allocation2 + $0x15c] sm:$0xff]
    %v100 = vld [vmem:[#allocation2 + $0x164] sm:$0xf]
    %v101 = vld [vmem:[#allocation2 + $0x168] sm:$0xff]
    %v102 = vld [vmem:[#allocation2 + $0x170] sm:$0xf]
    %v103 = vld [vmem:[#allocation2 + $0x174] sm:$0xff]
    %v104 = vld [vmem:[#allocation2 + $0x17c] sm:$0xf]
    %v105 = vld [vmem:[#allocation2 + $0x180] sm:$0xff]
    %v106 = vld [vmem:[#allocation2 + $0x188] sm:$0xf]
    %v107 = vld [vmem:[#allocation2 + $0x18c] sm:$0xff]
    %v108 = vld [vmem:[#allocation2 + $0x194] sm:$0xf]
    %v109 = vld [vmem:[#allocation2 + $0x198] sm:$0xff]
    %v110 = vld [vmem:[#allocation2 + $0x1a0] sm:$0xf]
    %v111 = vld [vmem:[#allocation2 + $0x1a4] sm:$0xff]
    %v112 = vld [vmem:[#allocation2 + $0x1ac] sm:$0xf]
    %v113 = vld [vmem:[#allocation2 + $0x1b0] sm:$0xff]
    %v114 = vld [vmem:[#allocation2 + $0x1b8] sm:$0xf]
    %v115 = vld [vmem:[#allocation2 + $0x1bc] sm:$0xff]
    %v116 = vld [vmem:[#allocation2 + $0x1c4] sm:$0xf]
    %v117 = vld [vmem:[#allocation2 + $0x1c8] sm:$0xff]
    %v118 = vld [vmem:[#allocation2 + $0x1d0] sm:$0xf]
    %v119 = vld [vmem:[#allocation2 + $0x1d4] sm:$0xff]
    %v120 = vld [vmem:[#allocation2 + $0x1dc] sm:$0xf]
    %v121 = vld [vmem:[#allocation2 + $0x1e0] sm:$0xff]
    %v122 = vld [vmem:[#allocation2 + $0x1e8] sm:$0xf]
    %v123 = vld [vmem:[#allocation2 + $0x1ec] sm:$0xff]
    %v124 = vld [vmem:[#allocation2 + $0x1f4] sm:$0xf]
    %v125 = vld [vmem:[#allocation2 + $0x1f8] sm:$0xff]
    %v126 = vld [vmem:[#allocation2 + $0x200] sm:$0xf]
    %v127 = vld [vmem:[#allocation2 + $0x204] sm:$0xff]
    %v128 = vld [vmem:[#allocation2 + $0x20c] sm:$0xf]
    %v129 = vld [vmem:[#allocation2 + $0x210] sm:$0xff]
    %v130 = vld [vmem:[#allocation2 + $0x218] sm:$0xf]
    %v131 = vld [vmem:[#allocation2 + $0x21c] sm:$0xff]
    %v132 = vld [vmem:[#allocation2 + $0x224] sm:$0xf]
    %v133 = vld [vmem:[#allocation2 + $0x228] sm:$0xff]
    %v134 = vld [vmem:[#allocation2 + $0x230] sm:$0xf]
    %v135 = vld [vmem:[#allocation2 + $0x234] sm:$0xff]
    %v136 = vld [vmem:[#allocation2 + $0x23c] sm:$0xf]
    %v137 = vld [vmem:[#allocation2 + $0x240] sm:$0xff]
    %v138 = vld [vmem:[#allocation2 + $0x248] sm:$0xf]
    %v139 = vld [vmem:[#allocation2 + $0x24c] sm:$0xff]
    %v140 = vld [vmem:[#allocation2 + $0x254] sm:$0xf]
    %v141 = vld [vmem:[#allocation2 + $0x258] sm:$0xff]
    %v142 = vld [vmem:[#allocation2 + $0x260] sm:$0xf]
    %v143 = vld [vmem:[#allocation2 + $0x264] sm:$0xff]
    %v144 = vld [vmem:[#allocation2 + $0x26c] sm:$0xf]
    %v145 = vld [vmem:[#allocation2 + $0x270] sm:$0xff]
    %v146 = vld [vmem:[#allocation2 + $0x278] sm:$0xf]
    %v147 = vld [vmem:[#allocation2 + $0x27c] sm:$0xff]
    %v148 = vld [vmem:[#allocation2 + $0x284] sm:$0xf]
    %v149 = vld [vmem:[#allocation2 + $0x288] sm:$0xff]
    %v150 = vld [vmem:[#allocation2 + $0x290] sm:$0xf]
    %v151 = vld [vmem:[#allocation2 + $0x294] sm:$0xff]
    %v152 = vld [vmem:[#allocation2 + $0x29c] sm:$0xf]
    %v153 = vld [vmem:[#allocation2 + $0x2a0] sm:$0xff]
    %v154 = vld [vmem:[#allocation2 + $0x2a8] sm:$0xf]
    %v155 = vld [vmem:[#allocation2 + $0x2ac] sm:$0xff]
    %v156 = vld [vmem:[#allocation2 + $0x2b4] sm:$0xf]
    %v157 = vld [vmem:[#allocation2 + $0x2b8] sm:$0xff]
    %v158 = vld [vmem:[#allocation2 + $0x2c0] sm:$0xf]
    %v159 = vld [vmem:[#allocation2 + $0x2c4] sm:$0xff]
    %v160 = vld [vmem:[#allocation2 + $0x2cc] sm:$0xf]
    %v161 = vld [vmem:[#allocation2 + $0x2d0] sm:$0xff]
    %v162 = vld [vmem:[#allocation2 + $0x2d8] sm:$0xf]
    %v163 = vld [vmem:[#allocation2 + $0x2dc] sm:$0xff]
    %v164 = vld [vmem:[#allocation2 + $0x2e4] sm:$0xf]
    %v165 = vld [vmem:[#allocation2 + $0x2e8] sm:$0xff]
    %v166 = vld [vmem:[#allocation2 + $0x2f0] sm:$0xf]
    %v167 = vld [vmem:[#allocation2 + $0x2f4] sm:$0xff]
    %v168 = vld [vmem:[#allocation2 + $0x2fc] sm:$0xf]
    %v169 = vld [vmem:[#allocation5] sm:$0xff]
    %v170 = vld [vmem:[#allocation5 + $0x8] sm:$0xf]
    %v171 = vld [vmem:[#allocation5 + $0xc] sm:$0xff]
    %v172 = vld [vmem:[#allocation5 + $0x14] sm:$0xf]
    %v173 = vld [vmem:[#allocation5 + $0x18] sm:$0xff]
    %v174 = vld [vmem:[#allocation5 + $0x20] sm:$0xf]
    %v175 = vld [vmem:[#allocation5 + $0x24] sm:$0xff]
    %v176 = vld [vmem:[#allocation5 + $0x2c] sm:$0xf]
    %v177 = vld [vmem:[#allocation5 + $0x30] sm:$0xff]
    %v178 = vld [vmem:[#allocation5 + $0x38] sm:$0xf]
    %v179 = vld [vmem:[#allocation5 + $0x3c] sm:$0xff]
    %v180 = vld [vmem:[#allocation5 + $0x44] sm:$0xf]
    %v181 = vld [vmem:[#allocation5 + $0x48] sm:$0xff]
    %v182 = vld [vmem:[#allocation5 + $0x50] sm:$0xf]
    %v183 = vld [vmem:[#allocation5 + $0x54] sm:$0xff]
    %v184 = vld [vmem:[#allocation5 + $0x5c] sm:$0xf]
    %v185 = vld [vmem:[#allocation5 + $0x60] sm:$0xff]
    %v186 = vld [vmem:[#allocation5 + $0x68] sm:$0xf]
    %v187 = vld [vmem:[#allocation5 + $0x6c] sm:$0xff]
    %v188 = vld [vmem:[#allocation5 + $0x74] sm:$0xf]
    %v189 = vld [vmem:[#allocation5 + $0x78] sm:$0xff]
    %v190 = vld [vmem:[#allocation5 + $0x80] sm:$0xf]
    %v191 = vld [vmem:[#allocation5 + $0x84] sm:$0xff]
    %v192 = vld [vmem:[#allocation5 + $0x8c] sm:$0xf]
    %v193 = vld [vmem:[#allocation5 + $0x90] sm:$0xff]
    %v194 = vld [vmem:[#allocation5 + $0x98] sm:$0xf]
    %v195 = vld [vmem:[#allocation5 + $0x9c] sm:$0xff]
    %v196 = vld [vmem:[#allocation5 + $0xa4] sm:$0xf]
    %v197 = vld [vmem:[#allocation5 + $0xa8] sm:$0xff]
    %v198 = vld [vmem:[#allocation5 + $0xb0] sm:$0xf]
    %v199 = vld [vmem:[#allocation5 + $0xb4] sm:$0xff]
    %v200 = vld [vmem:[#allocation5 + $0xbc] sm:$0xf]
    %v201 = vld [vmem:[#allocation5 + $0xc0] sm:$0xff]
    %v202 = vld [vmem:[#allocation5 + $0xc8] sm:$0xf]
    %v203 = vld [vmem:[#allocation5 + $0xcc] sm:$0xff]
    %v204 = vld [vmem:[#allocation5 + $0xd4] sm:$0xf]
    %v205 = vld [vmem:[#allocation5 + $0xd8] sm:$0xff]
    %v206 = vld [vmem:[#allocation5 + $0xe0] sm:$0xf]
    %v207 = vld [vmem:[#allocation5 + $0xe4] sm:$0xff]
    %v208 = vld [vmem:[#allocation5 + $0xec] sm:$0xf]
    %v209 = vld [vmem:[#allocation5 + $0xf0] sm:$0xff]
    %v210 = vld [vmem:[#allocation5 + $0xf8] sm:$0xf]
    %v211 = vld [vmem:[#allocation5 + $0xfc] sm:$0xff]
    %v212 = vld [vmem:[#allocation5 + $0x104] sm:$0xf]
    %v213 = vld [vmem:[#allocation5 + $0x108] sm:$0xff]
    %v214 = vld [vmem:[#allocation5 + $0x110] sm:$0xf]
    %v215 = vld [vmem:[#allocation5 + $0x114] sm:$0xff]
    %v216 = vld [vmem:[#allocation5 + $0x11c] sm:$0xf]
    %v217 = vld [vmem:[#allocation5 + $0x120] sm:$0xff]
    %v218 = vld [vmem:[#allocation5 + $0x128] sm:$0xf]
    %v219 = vld [vmem:[#allocation5 + $0x12c] sm:$0xff]
    %v220 = vld [vmem:[#allocation5 + $0x134] sm:$0xf]
    %v221 = vld [vmem:[#allocation5 + $0x138] sm:$0xff]
    %v222 = vld [vmem:[#allocation5 + $0x140] sm:$0xf]
    %v223 = vld [vmem:[#allocation5 + $0x144] sm:$0xff]
    %v224 = vld [vmem:[#allocation5 + $0x14c] sm:$0xf]
    %v225 = vld [vmem:[#allocation5 + $0x150] sm:$0xff]
    %v226 = vld [vmem:[#allocation5 + $0x158] sm:$0xf]
    %v227 = vld [vmem:[#allocation5 + $0x15c] sm:$0xff]
    %v228 = vld [vmem:[#allocation5 + $0x164] sm:$0xf]
    %v229 = vld [vmem:[#allocation5 + $0x168] sm:$0xff]
    %v230 = vld [vmem:[#allocation5 + $0x170] sm:$0xf]
    %v231 = vld [vmem:[#allocation5 + $0x174] sm:$0xff]
    %v232 = vld [vmem:[#allocation5 + $0x17c] sm:$0xf]
    %v233 = vld [vmem:[#allocation5 + $0x180] sm:$0xff]
    %v234 = vld [vmem:[#allocation5 + $0x188] sm:$0xf]
    %v235 = vld [vmem:[#allocation5 + $0x18c] sm:$0xff]
    %v236 = vld [vmem:[#allocation5 + $0x194] sm:$0xf]
    %v237 = vld [vmem:[#allocation5 + $0x198] sm:$0xff]
    %v238 = vld [vmem:[#allocation5 + $0x1a0] sm:$0xf]
    %v239 = vld [vmem:[#allocation5 + $0x1a4] sm:$0xff]
    %v240 = vld [vmem:[#allocation5 + $0x1ac] sm:$0xf]
    %v241 = vld [vmem:[#allocation5 + $0x1b0] sm:$0xff]
    %v242 = vld [vmem:[#allocation5 + $0x1b8] sm:$0xf]
    %v243 = vld [vmem:[#allocation5 + $0x1bc] sm:$0xff]
    %v244 = vld [vmem:[#allocation5 + $0x1c4] sm:$0xf]
    %v245 = vld [vmem:[#allocation5 + $0x1c8] sm:$0xff]
    %v246 = vld [vmem:[#allocation5 + $0x1d0] sm:$0xf]
    %v247 = vld [vmem:[#allocation5 + $0x1d4] sm:$0xff]
    %v248 = vld [vmem:[#allocation5 + $0x1dc] sm:$0xf]
    %v249 = vld [vmem:[#allocation5 + $0x1e0] sm:$0xff]
    %v250 = vld [vmem:[#allocation5 + $0x1e8] sm:$0xf]
    %v251 = vld [vmem:[#allocation5 + $0x1ec] sm:$0xff]
    %v252 = vld [vmem:[#allocation5 + $0x1f4] sm:$0xf]
    %v253 = vld [vmem:[#allocation5 + $0x1f8] sm:$0xff]
    %v254 = vld [vmem:[#allocation5 + $0x200] sm:$0xf]
    %v255 = vld [vmem:[#allocation5 + $0x204] sm:$0xff]
    %v256 = vld [vmem:[#allocation5 + $0x20c] sm:$0xf]
    %v257 = vld [vmem:[#allocation5 + $0x210] sm:$0xff]
    %v258 = vld [vmem:[#allocation5 + $0x218] sm:$0xf]
    %v259 = vld [vmem:[#allocation5 + $0x21c] sm:$0xff]
    %v260 = vld [vmem:[#allocation5 + $0x224] sm:$0xf]
    %v261 = vld [vmem:[#allocation5 + $0x228] sm:$0xff]
    %v262 = vld [vmem:[#allocation5 + $0x230] sm:$0xf]
    %v263 = vld [vmem:[#allocation5 + $0x234] sm:$0xff]
    %v264 = vld [vmem:[#allocation5 + $0x23c] sm:$0xf]
    %v393 = vunpack.c.l.b16 %v41
    %v394 = vunpack.c.h.b16 %v41
    %v395 = vunpack.c.l.b16 %v42
    %v396 = vunpack.c.l.b16 %v43
    %v397 = vunpack.c.h.b16 %v43
    %v398 = vunpack.c.l.b16 %v44
    %v399 = vunpack.c.l.b16 %v45
    %v400 = vunpack.c.h.b16 %v45
    %v401 = vunpack.c.l.b16 %v46
    %v402 = vunpack.c.l.b16 %v47
    %v403 = vunpack.c.h.b16 %v47
    %v404 = vunpack.c.l.b16 %v48
    %v405 = vunpack.c.l.b16 %v49
    %v406 = vunpack.c.h.b16 %v49
    %v407 = vunpack.c.l.b16 %v50
    %v408 = vunpack.c.l.b16 %v51
    %v409 = vunpack.c.h.b16 %v51
    %v410 = vunpack.c.l.b16 %v52
    %v411 = vunpack.c.l.b16 %v53
    %v412 = vunpack.c.h.b16 %v53
    %v413 = vunpack.c.l.b16 %v54
    %v414 = vunpack.c.l.b16 %v55
    %v415 = vunpack.c.h.b16 %v55
    %v416 = vunpack.c.l.b16 %v56
    %v417 = vunpack.c.l.b16 %v57
    %v418 = vunpack.c.h.b16 %v57
    %v419 = vunpack.c.l.b16 %v58
    %v420 = vunpack.c.l.b16 %v59
    %v421 = vunpack.c.h.b16 %v59
    %v422 = vunpack.c.l.b16 %v60
    %v423 = vunpack.c.l.b16 %v61
    %v424 = vunpack.c.h.b16 %v61
    %v425 = vunpack.c.l.b16 %v62
    %v426 = vunpack.c.l.b16 %v63
    %v427 = vunpack.c.h.b16 %v63
    %v428 = vunpack.c.l.b16 %v64
    %v429 = vunpack.c.l.b16 %v65
    %v430 = vunpack.c.h.b16 %v65
    %v431 = vunpack.c.l.b16 %v66
    %v432 = vunpack.c.l.b16 %v67
    %v433 = vunpack.c.h.b16 %v67
    %v434 = vunpack.c.l.b16 %v68
    %v435 = vunpack.c.l.b16 %v69
    %v436 = vunpack.c.h.b16 %v69
    %v437 = vunpack.c.l.b16 %v70
    %v438 = vunpack.c.l.b16 %v71
    %v439 = vunpack.c.h.b16 %v71
    %v440 = vunpack.c.l.b16 %v72
    %v441 = vunpack.c.l.b16 %v73
    %v442 = vunpack.c.h.b16 %v73
    %v443 = vunpack.c.l.b16 %v74
    %v444 = vunpack.c.l.b16 %v75
    %v445 = vunpack.c.h.b16 %v75
    %v446 = vunpack.c.l.b16 %v76
    %v447 = vunpack.c.l.b16 %v77
    %v448 = vunpack.c.h.b16 %v77
    %v449 = vunpack.c.l.b16 %v78
    %v450 = vunpack.c.l.b16 %v79
    %v451 = vunpack.c.h.b16 %v79
    %v452 = vunpack.c.l.b16 %v80
    %v453 = vunpack.c.l.b16 %v81
    %v454 = vunpack.c.h.b16 %v81
    %v455 = vunpack.c.l.b16 %v82
    %v456 = vunpack.c.l.b16 %v83
    %v457 = vunpack.c.h.b16 %v83
    %v458 = vunpack.c.l.b16 %v84
    %v459 = vunpack.c.l.b16 %v85
    %v460 = vunpack.c.h.b16 %v85
    %v461 = vunpack.c.l.b16 %v86
    %v462 = vunpack.c.l.b16 %v87
    %v463 = vunpack.c.h.b16 %v87
    %v464 = vunpack.c.l.b16 %v88
    %v465 = vunpack.c.l.b16 %v89
    %v466 = vunpack.c.h.b16 %v89
    %v467 = vunpack.c.l.b16 %v90
    %v468 = vunpack.c.l.b16 %v91
    %v469 = vunpack.c.h.b16 %v91
    %v470 = vunpack.c.l.b16 %v92
    %v471 = vunpack.c.l.b16 %v93
    %v472 = vunpack.c.h.b16 %v93
    %v473 = vunpack.c.l.b16 %v94
    %v474 = vunpack.c.l.b16 %v95
    %v475 = vunpack.c.h.b16 %v95
    %v476 = vunpack.c.l.b16 %v96
    %v477 = vunpack.c.l.b16 %v97
    %v478 = vunpack.c.h.b16 %v97
    %v479 = vunpack.c.l.b16 %v98
    %v480 = vunpack.c.l.b16 %v99
    %v481 = vunpack.c.h.b16 %v99
    %v482 = vunpack.c.l.b16 %v100
    %v483 = vunpack.c.l.b16 %v101
    %v484 = vunpack.c.h.b16 %v101
    %v485 = vunpack.c.l.b16 %v102
    %v486 = vunpack.c.l.b16 %v103
    %v487 = vunpack.c.h.b16 %v103
    %v488 = vunpack.c.l.b16 %v104
    %v489 = vunpack.c.l.b16 %v105
    %v490 = vunpack.c.h.b16 %v105
    %v491 = vunpack.c.l.b16 %v106
    %v492 = vunpack.c.l.b16 %v107
    %v493 = vunpack.c.h.b16 %v107
    %v494 = vunpack.c.l.b16 %v108
    %v495 = vunpack.c.l.b16 %v109
    %v496 = vunpack.c.h.b16 %v109
    %v497 = vunpack.c.l.b16 %v110
    %v498 = vunpack.c.l.b16 %v111
    %v499 = vunpack.c.h.b16 %v111
    %v500 = vunpack.c.l.b16 %v112
    %v501 = vunpack.c.l.b16 %v113
    %v502 = vunpack.c.h.b16 %v113
    %v503 = vunpack.c.l.b16 %v114
    %v504 = vunpack.c.l.b16 %v115
    %v505 = vunpack.c.h.b16 %v115
    %v506 = vunpack.c.l.b16 %v116
    %v507 = vunpack.c.l.b16 %v117
    %v508 = vunpack.c.h.b16 %v117
    %v509 = vunpack.c.l.b16 %v118
    %v510 = vunpack.c.l.b16 %v119
    %v511 = vunpack.c.h.b16 %v119
    %v512 = vunpack.c.l.b16 %v120
    %v513 = vunpack.c.l.b16 %v121
    %v514 = vunpack.c.h.b16 %v121
    %v515 = vunpack.c.l.b16 %v122
    %v516 = vunpack.c.l.b16 %v123
    %v517 = vunpack.c.h.b16 %v123
    %v518 = vunpack.c.l.b16 %v124
    %v519 = vunpack.c.l.b16 %v125
    %v520 = vunpack.c.h.b16 %v125
    %v521 = vunpack.c.l.b16 %v126
    %v522 = vunpack.c.l.b16 %v127
    %v523 = vunpack.c.h.b16 %v127
    %v524 = vunpack.c.l.b16 %v128
    %v525 = vunpack.c.l.b16 %v129
    %v526 = vunpack.c.h.b16 %v129
    %v527 = vunpack.c.l.b16 %v130
    %v528 = vunpack.c.l.b16 %v131
    %v529 = vunpack.c.h.b16 %v131
    %v530 = vunpack.c.l.b16 %v132
    %v531 = vunpack.c.l.b16 %v133
    %v532 = vunpack.c.h.b16 %v133
    %v533 = vunpack.c.l.b16 %v134
    %v534 = vunpack.c.l.b16 %v135
    %v535 = vunpack.c.h.b16 %v135
    %v536 = vunpack.c.l.b16 %v136
    %v537 = vunpack.c.l.b16 %v137
    %v538 = vunpack.c.h.b16 %v137
    %v539 = vunpack.c.l.b16 %v138
    %v540 = vunpack.c.l.b16 %v139
    %v541 = vunpack.c.h.b16 %v139
    %v542 = vunpack.c.l.b16 %v140
    %v543 = vunpack.c.l.b16 %v141
    %v544 = vunpack.c.h.b16 %v141
    %v545 = vunpack.c.l.b16 %v142
    %v546 = vunpack.c.l.b16 %v143
    %v547 = vunpack.c.h.b16 %v143
    %v548 = vunpack.c.l.b16 %v144
    %v549 = vunpack.c.l.b16 %v145
    %v550 = vunpack.c.h.b16 %v145
    %v551 = vunpack.c.l.b16 %v146
    %v552 = vunpack.c.l.b16 %v147
    %v553 = vunpack.c.h.b16 %v147
    %v554 = vunpack.c.l.b16 %v148
    %v555 = vunpack.c.l.b16 %v149
    %v556 = vunpack.c.h.b16 %v149
    %v557 = vunpack.c.l.b16 %v150
    %v558 = vunpack.c.l.b16 %v151
    %v559 = vunpack.c.h.b16 %v151
    %v560 = vunpack.c.l.b16 %v152
    %v561 = vunpack.c.l.b16 %v153
    %v562 = vunpack.c.h.b16 %v153
    %v563 = vunpack.c.l.b16 %v154
    %v564 = vunpack.c.l.b16 %v155
    %v565 = vunpack.c.h.b16 %v155
    %v566 = vunpack.c.l.b16 %v156
    %v567 = vunpack.c.l.b16 %v157
    %v568 = vunpack.c.h.b16 %v157
    %v569 = vunpack.c.l.b16 %v158
    %v570 = vunpack.c.l.b16 %v159
    %v571 = vunpack.c.h.b16 %v159
    %v572 = vunpack.c.l.b16 %v160
    %v573 = vunpack.c.l.b16 %v161
    %v574 = vunpack.c.h.b16 %v161
    %v575 = vunpack.c.l.b16 %v162
    %v576 = vunpack.c.l.b16 %v163
    %v577 = vunpack.c.h.b16 %v163
    %v578 = vunpack.c.l.b16 %v164
    %v579 = vunpack.c.l.b16 %v165
    %v580 = vunpack.c.h.b16 %v165
    %v581 = vunpack.c.l.b16 %v166
    %v582 = vunpack.c.l.b16 %v167
    %v583 = vunpack.c.h.b16 %v167
    %v584 = vunpack.c.l.b16 %v168
    %v585 = vpack.c.b16 %v396, %v393
    %v586 = vpack.c.b16 %v397, %v394
    %v587 = vpack.c.b16 %v398, %v395
    %v588 = vpack.c.b16 %v402, %v399
    %v589 = vpack.c.b16 %v403, %v400
    %v590 = vpack.c.b16 %v404, %v401
    %v591 = vpack.c.b16 %v408, %v405
    %v592 = vpack.c.b16 %v409, %v406
    %v593 = vpack.c.b16 %v410, %v407
    %v594 = vpack.c.b16 %v414, %v411
    %v595 = vpack.c.b16 %v415, %v412
    %v596 = vpack.c.b16 %v416, %v413
    %v597 = vpack.c.b16 %v420, %v417
    %v598 = vpack.c.b16 %v421, %v418
    %v599 = vpack.c.b16 %v422, %v419
    %v600 = vpack.c.b16 %v426, %v423
    %v601 = vpack.c.b16 %v427, %v424
    %v602 = vpack.c.b16 %v428, %v425
    %v603 = vpack.c.b16 %v432, %v429
    %v604 = vpack.c.b16 %v433, %v430
    %v605 = vpack.c.b16 %v434, %v431
    %v606 = vpack.c.b16 %v438, %v435
    %v607 = vpack.c.b16 %v439, %v436
    %v608 = vpack.c.b16 %v440, %v437
    %v609 = vpack.c.b16 %v444, %v441
    %v610 = vpack.c.b16 %v445, %v442
    %v611 = vpack.c.b16 %v446, %v443
    %v612 = vpack.c.b16 %v450, %v447
    %v613 = vpack.c.b16 %v451, %v448
    %v614 = vpack.c.b16 %v452, %v449
    %v615 = vpack.c.b16 %v456, %v453
    %v616 = vpack.c.b16 %v457, %v454
    %v617 = vpack.c.b16 %v458, %v455
    %v618 = vpack.c.b16 %v462, %v459
    %v619 = vpack.c.b16 %v463, %v460
    %v620 = vpack.c.b16 %v464, %v461
    %v621 = vpack.c.b16 %v468, %v465
    %v622 = vpack.c.b16 %v469, %v466
    %v623 = vpack.c.b16 %v470, %v467
    %v624 = vpack.c.b16 %v474, %v471
    %v625 = vpack.c.b16 %v475, %v472
    %v626 = vpack.c.b16 %v476, %v473
    %v627 = vpack.c.b16 %v480, %v477
    %v628 = vpack.c.b16 %v481, %v478
    %v629 = vpack.c.b16 %v482, %v479
    %v630 = vpack.c.b16 %v486, %v483
    %v631 = vpack.c.b16 %v487, %v484
    %v632 = vpack.c.b16 %v488, %v485
    %v633 = vpack.c.b16 %v492, %v489
    %v634 = vpack.c.b16 %v493, %v490
    %v635 = vpack.c.b16 %v494, %v491
    %v636 = vpack.c.b16 %v498, %v495
    %v637 = vpack.c.b16 %v499, %v496
    %v638 = vpack.c.b16 %v500, %v497
    %v639 = vpack.c.b16 %v504, %v501
    %v640 = vpack.c.b16 %v505, %v502
    %v641 = vpack.c.b16 %v506, %v503
    %v642 = vpack.c.b16 %v510, %v507
    %v643 = vpack.c.b16 %v511, %v508
    %v644 = vpack.c.b16 %v512, %v509
    %v645 = vpack.c.b16 %v516, %v513
    %v646 = vpack.c.b16 %v517, %v514
    %v647 = vpack.c.b16 %v518, %v515
    %v648 = vpack.c.b16 %v522, %v519
    %v649 = vpack.c.b16 %v523, %v520
    %v650 = vpack.c.b16 %v524, %v521
    %v651 = vpack.c.b16 %v528, %v525
    %v652 = vpack.c.b16 %v529, %v526
    %v653 = vpack.c.b16 %v530, %v527
    %v654 = vpack.c.b16 %v534, %v531
    %v655 = vpack.c.b16 %v535, %v532
    %v656 = vpack.c.b16 %v536, %v533
    %v657 = vpack.c.b16 %v540, %v537
    %v658 = vpack.c.b16 %v541, %v538
    %v659 = vpack.c.b16 %v542, %v539
    %v660 = vpack.c.b16 %v546, %v543
    %v661 = vpack.c.b16 %v547, %v544
    %v662 = vpack.c.b16 %v548, %v545
    %v663 = vpack.c.b16 %v552, %v549
    %v664 = vpack.c.b16 %v553, %v550
    %v665 = vpack.c.b16 %v554, %v551
    %v666 = vpack.c.b16 %v558, %v555
    %v667 = vpack.c.b16 %v559, %v556
    %v668 = vpack.c.b16 %v560, %v557
    %v669 = vpack.c.b16 %v564, %v561
    %v670 = vpack.c.b16 %v565, %v562
    %v671 = vpack.c.b16 %v566, %v563
    %v672 = vpack.c.b16 %v570, %v567
    %v673 = vpack.c.b16 %v571, %v568
    %v674 = vpack.c.b16 %v572, %v569
    %v675 = vpack.c.b16 %v576, %v573
    %v676 = vpack.c.b16 %v577, %v574
    %v677 = vpack.c.b16 %v578, %v575
    %v678 = vpack.c.b16 %v582, %v579
    %v679 = vpack.c.b16 %v583, %v580
    %v680 = vpack.c.b16 %v584, %v581
    %v873 = vunpack.c.l.b16 %v169
    %v874 = vunpack.c.h.b16 %v169
    %v875 = vunpack.c.l.b16 %v170
    %v876 = vunpack.c.l.b16 %v171
    %v877 = vunpack.c.h.b16 %v171
    %v878 = vunpack.c.l.b16 %v172
    %v879 = vunpack.c.l.b16 %v173
    %v880 = vunpack.c.h.b16 %v173
    %v881 = vunpack.c.l.b16 %v174
    %v882 = vunpack.c.l.b16 %v175
    %v883 = vunpack.c.h.b16 %v175
    %v884 = vunpack.c.l.b16 %v176
    %v885 = vunpack.c.l.b16 %v177
    %v886 = vunpack.c.h.b16 %v177
    %v887 = vunpack.c.l.b16 %v178
    %v888 = vunpack.c.l.b16 %v179
    %v889 = vunpack.c.h.b16 %v179
    %v890 = vunpack.c.l.b16 %v180
    %v891 = vunpack.c.l.b16 %v181
    %v892 = vunpack.c.h.b16 %v181
    %v893 = vunpack.c.l.b16 %v182
    %v894 = vunpack.c.l.b16 %v183
    %v895 = vunpack.c.h.b16 %v183
    %v896 = vunpack.c.l.b16 %v184
    %v897 = vunpack.c.l.b16 %v185
    %v898 = vunpack.c.h.b16 %v185
    %v899 = vunpack.c.l.b16 %v186
    %v900 = vunpack.c.l.b16 %v187
    %v901 = vunpack.c.h.b16 %v187
    %v902 = vunpack.c.l.b16 %v188
    %v903 = vunpack.c.l.b16 %v189
    %v904 = vunpack.c.h.b16 %v189
    %v905 = vunpack.c.l.b16 %v190
    %v906 = vunpack.c.l.b16 %v191
    %v907 = vunpack.c.h.b16 %v191
    %v908 = vunpack.c.l.b16 %v192
    %v909 = vunpack.c.l.b16 %v193
    %v910 = vunpack.c.h.b16 %v193
    %v911 = vunpack.c.l.b16 %v194
    %v912 = vunpack.c.l.b16 %v195
    %v913 = vunpack.c.h.b16 %v195
    %v914 = vunpack.c.l.b16 %v196
    %v915 = vunpack.c.l.b16 %v197
    %v916 = vunpack.c.h.b16 %v197
    %v917 = vunpack.c.l.b16 %v198
    %v918 = vunpack.c.l.b16 %v199
    %v919 = vunpack.c.h.b16 %v199
    %v920 = vunpack.c.l.b16 %v200
    %v921 = vunpack.c.l.b16 %v201
    %v922 = vunpack.c.h.b16 %v201
    %v923 = vunpack.c.l.b16 %v202
    %v924 = vunpack.c.l.b16 %v203
    %v925 = vunpack.c.h.b16 %v203
    %v926 = vunpack.c.l.b16 %v204
    %v927 = vunpack.c.l.b16 %v205
    %v928 = vunpack.c.h.b16 %v205
    %v929 = vunpack.c.l.b16 %v206
    %v930 = vunpack.c.l.b16 %v207
    %v931 = vunpack.c.h.b16 %v207
    %v932 = vunpack.c.l.b16 %v208
    %v933 = vunpack.c.l.b16 %v209
    %v934 = vunpack.c.h.b16 %v209
    %v935 = vunpack.c.l.b16 %v210
    %v936 = vunpack.c.l.b16 %v211
    %v937 = vunpack.c.h.b16 %v211
    %v938 = vunpack.c.l.b16 %v212
    %v939 = vunpack.c.l.b16 %v213
    %v940 = vunpack.c.h.b16 %v213
    %v941 = vunpack.c.l.b16 %v214
    %v942 = vunpack.c.l.b16 %v215
    %v943 = vunpack.c.h.b16 %v215
    %v944 = vunpack.c.l.b16 %v216
    %v945 = vunpack.c.l.b16 %v217
    %v946 = vunpack.c.h.b16 %v217
    %v947 = vunpack.c.l.b16 %v218
    %v948 = vunpack.c.l.b16 %v219
    %v949 = vunpack.c.h.b16 %v219
    %v950 = vunpack.c.l.b16 %v220
    %v951 = vunpack.c.l.b16 %v221
    %v952 = vunpack.c.h.b16 %v221
    %v953 = vunpack.c.l.b16 %v222
    %v954 = vunpack.c.l.b16 %v223
    %v955 = vunpack.c.h.b16 %v223
    %v956 = vunpack.c.l.b16 %v224
    %v957 = vunpack.c.l.b16 %v225
    %v958 = vunpack.c.h.b16 %v225
    %v959 = vunpack.c.l.b16 %v226
    %v960 = vunpack.c.l.b16 %v227
    %v961 = vunpack.c.h.b16 %v227
    %v962 = vunpack.c.l.b16 %v228
    %v963 = vunpack.c.l.b16 %v229
    %v964 = vunpack.c.h.b16 %v229
    %v965 = vunpack.c.l.b16 %v230
    %v966 = vunpack.c.l.b16 %v231
    %v967 = vunpack.c.h.b16 %v231
    %v968 = vunpack.c.l.b16 %v232
    %v969 = vunpack.c.l.b16 %v233
    %v970 = vunpack.c.h.b16 %v233
    %v971 = vunpack.c.l.b16 %v234
    %v972 = vunpack.c.l.b16 %v235
    %v973 = vunpack.c.h.b16 %v235
    %v974 = vunpack.c.l.b16 %v236
    %v975 = vunpack.c.l.b16 %v237
    %v976 = vunpack.c.h.b16 %v237
    %v977 = vunpack.c.l.b16 %v238
    %v978 = vunpack.c.l.b16 %v239
    %v979 = vunpack.c.h.b16 %v239
    %v980 = vunpack.c.l.b16 %v240
    %v981 = vunpack.c.l.b16 %v241
    %v982 = vunpack.c.h.b16 %v241
    %v983 = vunpack.c.l.b16 %v242
    %v984 = vunpack.c.l.b16 %v243
    %v985 = vunpack.c.h.b16 %v243
    %v986 = vunpack.c.l.b16 %v244
    %v987 = vunpack.c.l.b16 %v245
    %v988 = vunpack.c.h.b16 %v245
    %v989 = vunpack.c.l.b16 %v246
    %v990 = vunpack.c.l.b16 %v247
    %v991 = vunpack.c.h.b16 %v247
    %v992 = vunpack.c.l.b16 %v248
    %v993 = vunpack.c.l.b16 %v249
    %v994 = vunpack.c.h.b16 %v249
    %v995 = vunpack.c.l.b16 %v250
    %v996 = vunpack.c.l.b16 %v251
    %v997 = vunpack.c.h.b16 %v251
    %v998 = vunpack.c.l.b16 %v252
    %v999 = vunpack.c.l.b16 %v253
    %v1000 = vunpack.c.h.b16 %v253
    %v1001 = vunpack.c.l.b16 %v254
    %v1002 = vunpack.c.l.b16 %v255
    %v1003 = vunpack.c.h.b16 %v255
    %v1004 = vunpack.c.l.b16 %v256
    %v1005 = vunpack.c.l.b16 %v257
    %v1006 = vunpack.c.h.b16 %v257
    %v1007 = vunpack.c.l.b16 %v258
    %v1008 = vunpack.c.l.b16 %v259
    %v1009 = vunpack.c.h.b16 %v259
    %v1010 = vunpack.c.l.b16 %v260
    %v1011 = vunpack.c.l.b16 %v261
    %v1012 = vunpack.c.h.b16 %v261
    %v1013 = vunpack.c.l.b16 %v262
    %v1014 = vunpack.c.l.b16 %v263
    %v1015 = vunpack.c.h.b16 %v263
    %v1016 = vunpack.c.l.b16 %v264
    %v1017 = vpack.c.b16 %v876, %v873
    %v1018 = vpack.c.b16 %v877, %v874
    %v1019 = vpack.c.b16 %v878, %v875
    %v1020 = vpack.c.b16 %v882, %v879
    %v1021 = vpack.c.b16 %v883, %v880
    %v1022 = vpack.c.b16 %v884, %v881
    %v1023 = vpack.c.b16 %v888, %v885
    %v1024 = vpack.c.b16 %v889, %v886
    %v1025 = vpack.c.b16 %v890, %v887
    %v1026 = vpack.c.b16 %v894, %v891
    %v1027 = vpack.c.b16 %v895, %v892
    %v1028 = vpack.c.b16 %v896, %v893
    %v1029 = vpack.c.b16 %v900, %v897
    %v1030 = vpack.c.b16 %v901, %v898
    %v1031 = vpack.c.b16 %v902, %v899
    %v1032 = vpack.c.b16 %v906, %v903
    %v1033 = vpack.c.b16 %v907, %v904
    %v1034 = vpack.c.b16 %v908, %v905
    %v1035 = vpack.c.b16 %v912, %v909
    %v1036 = vpack.c.b16 %v913, %v910
    %v1037 = vpack.c.b16 %v914, %v911
    %v1038 = vpack.c.b16 %v918, %v915
    %v1039 = vpack.c.b16 %v919, %v916
    %v1040 = vpack.c.b16 %v920, %v917
    %v1041 = vpack.c.b16 %v924, %v921
    %v1042 = vpack.c.b16 %v925, %v922
    %v1043 = vpack.c.b16 %v926, %v923
    %v1044 = vpack.c.b16 %v930, %v927
    %v1045 = vpack.c.b16 %v931, %v928
    %v1046 = vpack.c.b16 %v932, %v929
    %v1047 = vpack.c.b16 %v936, %v933
    %v1048 = vpack.c.b16 %v937, %v934
    %v1049 = vpack.c.b16 %v938, %v935
    %v1050 = vpack.c.b16 %v942, %v939
    %v1051 = vpack.c.b16 %v943, %v940
    %v1052 = vpack.c.b16 %v944, %v941
    %v1053 = vpack.c.b16 %v948, %v945
    %v1054 = vpack.c.b16 %v949, %v946
    %v1055 = vpack.c.b16 %v950, %v947
    %v1056 = vpack.c.b16 %v954, %v951
    %v1057 = vpack.c.b16 %v955, %v952
    %v1058 = vpack.c.b16 %v956, %v953
    %v1059 = vpack.c.b16 %v960, %v957
    %v1060 = vpack.c.b16 %v961, %v958
    %v1061 = vpack.c.b16 %v962, %v959
    %v1062 = vpack.c.b16 %v966, %v963
    %v1063 = vpack.c.b16 %v967, %v964
    %v1064 = vpack.c.b16 %v968, %v965
    %v1065 = vpack.c.b16 %v972, %v969
    %v1066 = vpack.c.b16 %v973, %v970
    %v1067 = vpack.c.b16 %v974, %v971
    %v1068 = vpack.c.b16 %v978, %v975
    %v1069 = vpack.c.b16 %v979, %v976
    %v1070 = vpack.c.b16 %v980, %v977
    %v1071 = vpack.c.b16 %v984, %v981
    %v1072 = vpack.c.b16 %v985, %v982
    %v1073 = vpack.c.b16 %v986, %v983
    %v1074 = vpack.c.b16 %v990, %v987
    %v1075 = vpack.c.b16 %v991, %v988
    %v1076 = vpack.c.b16 %v992, %v989
    %v1077 = vpack.c.b16 %v996, %v993
    %v1078 = vpack.c.b16 %v997, %v994
    %v1079 = vpack.c.b16 %v998, %v995
    %v1080 = vpack.c.b16 %v1002, %v999
    %v1081 = vpack.c.b16 %v1003, %v1000
    %v1082 = vpack.c.b16 %v1004, %v1001
    %v1083 = vpack.c.b16 %v1008, %v1005
    %v1084 = vpack.c.b16 %v1009, %v1006
    %v1085 = vpack.c.b16 %v1010, %v1007
    %v1086 = vpack.c.b16 %v1014, %v1011
    %v1087 = vpack.c.b16 %v1015, %v1012
    %v1088 = vpack.c.b16 %v1016, %v1013
    %1161 = vmatprep.subr.bf16.mxu0 %v1018
    %1162 = vmatpush1.bf16.msra.mxu0 %v1017
    %1163 = vmatprep.subr.bf16.mxu0 %v1021
    %1164 = vmatpush1.bf16.msra.mxu0 %v1020
    %1165 = vmatprep.subr.bf16.mxu0 %v1024
    %1166 = vmatpush1.bf16.msra.mxu0 %v1023
    %1167 = vmatprep.subr.bf16.mxu0 %v1027
    %1168 = vmatpush1.bf16.msra.mxu0 %v1026
    %1169 = vmatprep.subr.bf16.mxu0 %v1030
    %1170 = vmatpush1.bf16.msra.mxu0 %v1029
    %1171 = vmatprep.subr.bf16.mxu0 %v1033
    %1172 = vmatpush1.bf16.msra.mxu0 %v1032
    %1173 = vmatprep.subr.bf16.mxu0 %v1036
    %1174 = vmatpush1.bf16.msra.mxu0 %v1035
    %1175 = vmatprep.subr.bf16.mxu0 %v1039
    %1176 = vmatpush1.bf16.msra.mxu0 %v1038
    %1177 = vmatprep.subr.bf16.mxu0 %v1042
    %1178 = vmatpush1.bf16.msra.mxu0 %v1041
    %1179 = vmatprep.subr.bf16.mxu0 %v1045
    %1180 = vmatpush1.bf16.msra.mxu0 %v1044
    %1181 = vmatprep.subr.bf16.mxu0 %v1048
    %1182 = vmatpush1.bf16.msra.mxu0 %v1047
    %1183 = vmatprep.subr.bf16.mxu0 %v1051
    %1184 = vmatpush1.bf16.msra.mxu0 %v1050
    %1185 = vmatprep.subr.bf16.mxu0 %v1054
    %1186 = vmatpush1.bf16.msra.mxu0 %v1053
    %1187 = vmatprep.subr.bf16.mxu0 %v1057
    %1188 = vmatpush1.bf16.msra.mxu0 %v1056
    %1189 = vmatprep.subr.bf16.mxu0 %v1060
    %1190 = vmatpush1.bf16.msra.mxu0 %v1059
    %1191 = vmatprep.subr.bf16.mxu0 %v1063
    %1192 = vmatpush1.bf16.msra.mxu0 %v1062
    %1193 = vmatprep.mubr.bf16.mxu0 %v586
    %1194 = vmatmul.mubr.bf16.gmra.mrb[0].mxu0 %v585
    %v1195 = vpop.f32.mrb[0].mxu0
    %v1196 = vadd.f32 0.0, %v1195
    %v1197 = vpop.f32.mrb[0].mxu0
    %v1198 = vadd.f32 0.0, %v1197
    %v1199 = vpop.f32.mrb[0].mxu0
    %v1200 = vadd.f32 0.0, %v1199
    %v1201 = vpop.f32.mrb[0].mxu0
    %v1202 = vadd.f32 0.0, %v1201
    %1203 = vmatprep.mubr.bf16.mxu0 %v589
    %1204 = vmatmul.mubr.bf16.gmra.mrb[0].mxu0 %v588
    %v1205 = vpop.f32.mrb[0].mxu0
    %v1206 = vadd.f32 0.0, %v1205
    %v1207 = vpop.f32.mrb[0].mxu0
    %v1208 = vadd.f32 0.0, %v1207
    %v1209 = vpop.f32.mrb[0].mxu0
    %v1210 = vadd.f32 0.0, %v1209
    %v1211 = vpop.f32.mrb[0].mxu0
    %v1212 = vadd.f32 0.0, %v1211
    %1213 = vmatprep.mubr.bf16.mxu0 %v592
    %1214 = vmatmul.mubr.bf16.gmra.mrb[0].mxu0 %v591
    %v1215 = vpop.f32.mrb[0].mxu0
    %v1216 = vadd.f32 0.0, %v1215
    %v1217 = vpop.f32.mrb[0].mxu0
    %v1218 = vadd.f32 0.0, %v1217
    %v1219 = vpop.f32.mrb[0].mxu0
    %v1220 = vadd.f32 0.0, %v1219
    %v1221 = vpop.f32.mrb[0].mxu0
    %v1222 = vadd.f32 0.0, %v1221
    %1223 = vmatprep.mubr.bf16.mxu0 %v595
    %1224 = vmatmul.mubr.bf16.gmra.mrb[0].mxu0 %v594
    %v1225 = vpop.f32.mrb[0].mxu0
    %v1226 = vadd.f32 0.0, %v1225
    %v1227 = vpop.f32.mrb[0].mxu0
    %v1228 = vadd.f32 0.0, %v1227
    %v1229 = vpop.f32.mrb[0].mxu0
    %v1230 = vadd.f32 0.0, %v1229
    %v1231 = vpop.f32.mrb[0].mxu0
    %v1232 = vadd.f32 0.0, %v1231
    %1233 = vmatprep.mubr.bf16.mxu0 %v598
    %1234 = vmatmul.mubr.bf16.gmra.mrb[0].mxu0 %v597
    %v1235 = vpop.f32.mrb[0].mxu0
    %v1236 = vadd.f32 0.0, %v1235
    %v1237 = vpop.f32.mrb[0].mxu0
    %v1238 = vadd.f32 0.0, %v1237
    %v1239 = vpop.f32.mrb[0].mxu0
    %v1240 = vadd.f32 0.0, %v1239
    %v1241 = vpop.f32.mrb[0].mxu0
    %v1242 = vadd.f32 0.0, %v1241
    %1243 = vmatprep.mubr.bf16.mxu0 %v601
    %1244 = vmatmul.mubr.bf16.gmra.mrb[0].mxu0 %v600
    %v1245 = vpop.f32.mrb[0].mxu0
    %v1246 = vadd.f32 0.0, %v1245
    %v1247 = vpop.f32.mrb[0].mxu0
    %v1248 = vadd.f32 0.0, %v1247
    %v1249 = vpop.f32.mrb[0].mxu0
    %v1250 = vadd.f32 0.0, %v1249
    %v1251 = vpop.f32.mrb[0].mxu0
    %v1252 = vadd.f32 0.0, %v1251
    %1253 = vmatprep.mubr.bf16.mxu0 %v604
    %1254 = vmatmul.mubr.bf16.gmra.mrb[0].mxu0 %v603
    %v1255 = vpop.f32.mrb[0].mxu0
    %v1256 = vadd.f32 0.0, %v1255
    %v1257 = vpop.f32.mrb[0].mxu0
    %v1258 = vadd.f32 0.0, %v1257
    %v1259 = vpop.f32.mrb[0].mxu0
    %v1260 = vadd.f32 0.0, %v1259
    %v1261 = vpop.f32.mrb[0].mxu0
    %v1262 = vadd.f32 0.0, %v1261
    %1263 = vmatprep.mubr.bf16.mxu0 %v607
    %1264 = vmatmul.mubr.bf16.gmra.mrb[0].mxu0 %v606
    %v1265 = vpop.f32.mrb[0].mxu0
    %v1266 = vadd.f32 0.0, %v1265
    %v1267 = vpop.f32.mrb[0].mxu0
    %v1268 = vadd.f32 0.0, %v1267
    %v1269 = vpop.f32.mrb[0].mxu0
    %v1270 = vadd.f32 0.0, %v1269
    %v1271 = vpop.f32.mrb[0].mxu0
    %v1272 = vadd.f32 0.0, %v1271
    %1273 = vmatprep.mubr.bf16.mxu0 %v610
    %1274 = vmatmul.mubr.bf16.gmra.mrb[0].mxu0 %v609
    %v1275 = vpop.f32.mrb[0].mxu0
    %v1276 = vadd.f32 0.0, %v1275
    %v1277 = vpop.f32.mrb[0].mxu0
    %v1278 = vadd.f32 0.0, %v1277
    %v1279 = vpop.f32.mrb[0].mxu0
    %v1280 = vadd.f32 0.0, %v1279
    %v1281 = vpop.f32.mrb[0].mxu0
    %v1282 = vadd.f32 0.0, %v1281
    %1283 = vmatprep.mubr.bf16.mxu0 %v613
    %1284 = vmatmul.mubr.bf16.gmra.mrb[0].mxu0 %v612
    %v1285 = vpop.f32.mrb[0].mxu0
    %v1286 = vadd.f32 0.0, %v1285
    %v1287 = vpop.f32.mrb[0].mxu0
    %v1288 = vadd.f32 0.0, %v1287
    %v1289 = vpop.f32.mrb[0].mxu0
    %v1290 = vadd.f32 0.0, %v1289
    %v1291 = vpop.f32.mrb[0].mxu0
    %v1292 = vadd.f32 0.0, %v1291
    %1293 = vmatprep.mubr.bf16.mxu0 %v616
    %1294 = vmatmul.mubr.bf16.gmra.mrb[0].mxu0 %v615
    %v1295 = vpop.f32.mrb[0].mxu0
    %v1296 = vadd.f32 0.0, %v1295
    %v1297 = vpop.f32.mrb[0].mxu0
    %v1298 = vadd.f32 0.0, %v1297
    %v1299 = vpop.f32.mrb[0].mxu0
    %v1300 = vadd.f32 0.0, %v1299
    %v1301 = vpop.f32.mrb[0].mxu0
    %v1302 = vadd.f32 0.0, %v1301
    %1303 = vmatprep.mubr.bf16.mxu0 %v619
    %1304 = vmatmul.mubr.bf16.gmra.mrb[0].mxu0 %v618
    %v1305 = vpop.f32.mrb[0].mxu0
    %v1306 = vadd.f32 0.0, %v1305
    %v1307 = vpop.f32.mrb[0].mxu0
    %v1308 = vadd.f32 0.0, %v1307
    %v1309 = vpop.f32.mrb[0].mxu0
    %v1310 = vadd.f32 0.0, %v1309
    %v1311 = vpop.f32.mrb[0].mxu0
    %v1312 = vadd.f32 0.0, %v1311
    %1313 = vmatprep.mubr.bf16.mxu0 %v622
    %1314 = vmatmul.mubr.bf16.gmra.mrb[0].mxu0 %v621
    %v1315 = vpop.f32.mrb[0].mxu0
    %v1316 = vadd.f32 0.0, %v1315
    %v1317 = vpop.f32.mrb[0].mxu0
    %v1318 = vadd.f32 0.0, %v1317
    %v1319 = vpop.f32.mrb[0].mxu0
    %v1320 = vadd.f32 0.0, %v1319
    %v1321 = vpop.f32.mrb[0].mxu0
    %v1322 = vadd.f32 0.0, %v1321
    %1323 = vmatprep.mubr.bf16.mxu0 %v625
    %1324 = vmatmul.mubr.bf16.gmra.mrb[0].mxu0 %v624
    %v1325 = vpop.f32.mrb[0].mxu0
    %v1326 = vadd.f32 0.0, %v1325
    %v1327 = vpop.f32.mrb[0].mxu0
    %v1328 = vadd.f32 0.0, %v1327
    %v1329 = vpop.f32.mrb[0].mxu0
    %v1330 = vadd.f32 0.0, %v1329
    %v1331 = vpop.f32.mrb[0].mxu0
    %v1332 = vadd.f32 0.0, %v1331
    %1333 = vmatprep.mubr.bf16.mxu0 %v628
    %1334 = vmatmul.mubr.bf16.gmra.mrb[0].mxu0 %v627
    %v1335 = vpop.f32.mrb[0].mxu0
    %v1336 = vadd.f32 0.0, %v1335
    %v1337 = vpop.f32.mrb[0].mxu0
    %v1338 = vadd.f32 0.0, %v1337
    %v1339 = vpop.f32.mrb[0].mxu0
    %v1340 = vadd.f32 0.0, %v1339
    %v1341 = vpop.f32.mrb[0].mxu0
    %v1342 = vadd.f32 0.0, %v1341
    %1343 = vmatprep.mubr.bf16.mxu0 %v631
    %1344 = vmatmul.mubr.bf16.gmra.mrb[0].mxu0 %v630
    %v1345 = vpop.f32.mrb[0].mxu0
    %v1346 = vadd.f32 0.0, %v1345
    %v1347 = vpop.f32.mrb[0].mxu0
    %v1348 = vadd.f32 0.0, %v1347
    %v1349 = vpop.f32.mrb[0].mxu0
    %v1350 = vadd.f32 0.0, %v1349
    %v1351 = vpop.f32.mrb[0].mxu0
    %v1352 = vadd.f32 0.0, %v1351
    %1353 = vmatprep.mubr.bf16.mxu0 %v634
    %1354 = vmatmul.mubr.bf16.gmra.mrb[0].mxu0 %v633
    %v1355 = vpop.f32.mrb[0].mxu0
    %v1356 = vadd.f32 0.0, %v1355
    %v1357 = vpop.f32.mrb[0].mxu0
    %v1358 = vadd.f32 0.0, %v1357
    %v1359 = vpop.f32.mrb[0].mxu0
    %v1360 = vadd.f32 0.0, %v1359
    %v1361 = vpop.f32.mrb[0].mxu0
    %v1362 = vadd.f32 0.0, %v1361
    %1363 = vmatprep.mubr.bf16.mxu0 %v637
    %1364 = vmatmul.mubr.bf16.gmra.mrb[0].mxu0 %v636
    %v1365 = vpop.f32.mrb[0].mxu0
    %v1366 = vadd.f32 0.0, %v1365
    %v1367 = vpop.f32.mrb[0].mxu0
    %v1368 = vadd.f32 0.0, %v1367
    %v1369 = vpop.f32.mrb[0].mxu0
    %v1370 = vadd.f32 0.0, %v1369
    %v1371 = vpop.f32.mrb[0].mxu0
    %v1372 = vadd.f32 0.0, %v1371
    %1373 = vmatprep.mubr.bf16.mxu0 %v640
    %1374 = vmatmul.mubr.bf16.gmra.mrb[0].mxu0 %v639
    %v1375 = vpop.f32.mrb[0].mxu0
    %v1376 = vadd.f32 0.0, %v1375
    %v1377 = vpop.f32.mrb[0].mxu0
    %v1378 = vadd.f32 0.0, %v1377
    %v1379 = vpop.f32.mrb[0].mxu0
    %v1380 = vadd.f32 0.0, %v1379
    %v1381 = vpop.f32.mrb[0].mxu0
    %v1382 = vadd.f32 0.0, %v1381
    %1383 = vmatprep.mubr.bf16.mxu0 %v643
    %1384 = vmatmul.mubr.bf16.gmra.mrb[0].mxu0 %v642
    %v1385 = vpop.f32.mrb[0].mxu0
    %v1386 = vadd.f32 0.0, %v1385
    %v1387 = vpop.f32.mrb[0].mxu0
    %v1388 = vadd.f32 0.0, %v1387
    %v1389 = vpop.f32.mrb[0].mxu0
    %v1390 = vadd.f32 0.0, %v1389
    %v1391 = vpop.f32.mrb[0].mxu0
    %v1392 = vadd.f32 0.0, %v1391
    %1393 = vmatprep.mubr.bf16.mxu0 %v646
    %1394 = vmatmul.mubr.bf16.gmra.mrb[0].mxu0 %v645
    %v1395 = vpop.f32.mrb[0].mxu0
    %v1396 = vadd.f32 0.0, %v1395
    %v1397 = vpop.f32.mrb[0].mxu0
    %v1398 = vadd.f32 0.0, %v1397
    %v1399 = vpop.f32.mrb[0].mxu0
    %v1400 = vadd.f32 0.0, %v1399
    %v1401 = vpop.f32.mrb[0].mxu0
    %v1402 = vadd.f32 0.0, %v1401
    %1403 = vmatprep.mubr.bf16.mxu0 %v649
    %1404 = vmatmul.mubr.bf16.gmra.mrb[0].mxu0 %v648
    %v1405 = vpop.f32.mrb[0].mxu0
    %v1406 = vadd.f32 0.0, %v1405
    %v1407 = vpop.f32.mrb[0].mxu0
    %v1408 = vadd.f32 0.0, %v1407
    %v1409 = vpop.f32.mrb[0].mxu0
    %v1410 = vadd.f32 0.0, %v1409
    %v1411 = vpop.f32.mrb[0].mxu0
    %v1412 = vadd.f32 0.0, %v1411
    %1413 = vmatprep.mubr.bf16.mxu0 %v652
    %1414 = vmatmul.mubr.bf16.gmra.mrb[0].mxu0 %v651
    %v1415 = vpop.f32.mrb[0].mxu0
    %v1416 = vadd.f32 0.0, %v1415
    %v1417 = vpop.f32.mrb[0].mxu0
    %v1418 = vadd.f32 0.0, %v1417
    %v1419 = vpop.f32.mrb[0].mxu0
    %v1420 = vadd.f32 0.0, %v1419
    %v1421 = vpop.f32.mrb[0].mxu0
    %v1422 = vadd.f32 0.0, %v1421
    %1423 = vmatprep.mubr.bf16.mxu0 %v655
    %1424 = vmatmul.mubr.bf16.gmra.mrb[0].mxu0 %v654
    %v1425 = vpop.f32.mrb[0].mxu0
    %v1426 = vadd.f32 0.0, %v1425
    %v1427 = vpop.f32.mrb[0].mxu0
    %v1428 = vadd.f32 0.0, %v1427
    %v1429 = vpop.f32.mrb[0].mxu0
    %v1430 = vadd.f32 0.0, %v1429
    %v1431 = vpop.f32.mrb[0].mxu0
    %v1432 = vadd.f32 0.0, %v1431
    %1433 = vmatprep.mubr.bf16.mxu0 %v658
    %1434 = vmatmul.mubr.bf16.gmra.mrb[0].mxu0 %v657
    %v1435 = vpop.f32.mrb[0].mxu0
    %v1436 = vadd.f32 0.0, %v1435
    %v1437 = vpop.f32.mrb[0].mxu0
    %v1438 = vadd.f32 0.0, %v1437
    %v1439 = vpop.f32.mrb[0].mxu0
    %v1440 = vadd.f32 0.0, %v1439
    %v1441 = vpop.f32.mrb[0].mxu0
    %v1442 = vadd.f32 0.0, %v1441
    %1443 = vmatprep.mubr.bf16.mxu0 %v661
    %1444 = vmatmul.mubr.bf16.gmra.mrb[0].mxu0 %v660
    %v1445 = vpop.f32.mrb[0].mxu0
    %v1446 = vadd.f32 0.0, %v1445
    %v1447 = vpop.f32.mrb[0].mxu0
    %v1448 = vadd.f32 0.0, %v1447
    %v1449 = vpop.f32.mrb[0].mxu0
    %v1450 = vadd.f32 0.0, %v1449
    %v1451 = vpop.f32.mrb[0].mxu0
    %v1452 = vadd.f32 0.0, %v1451
    %1453 = vmatprep.mubr.bf16.mxu0 %v664
    %1454 = vmatmul.mubr.bf16.gmra.mrb[0].mxu0 %v663
    %v1455 = vpop.f32.mrb[0].mxu0
    %v1456 = vadd.f32 0.0, %v1455
    %v1457 = vpop.f32.mrb[0].mxu0
    %v1458 = vadd.f32 0.0, %v1457
    %v1459 = vpop.f32.mrb[0].mxu0
    %v1460 = vadd.f32 0.0, %v1459
    %v1461 = vpop.f32.mrb[0].mxu0
    %v1462 = vadd.f32 0.0, %v1461
    %1463 = vmatprep.mubr.bf16.mxu0 %v667
    %1464 = vmatmul.mubr.bf16.gmra.mrb[0].mxu0 %v666
    %v1465 = vpop.f32.mrb[0].mxu0
    %v1466 = vadd.f32 0.0, %v1465
    %v1467 = vpop.f32.mrb[0].mxu0
    %v1468 = vadd.f32 0.0, %v1467
    %v1469 = vpop.f32.mrb[0].mxu0
    %v1470 = vadd.f32 0.0, %v1469
    %v1471 = vpop.f32.mrb[0].mxu0
    %v1472 = vadd.f32 0.0, %v1471
    %1473 = vmatprep.mubr.bf16.mxu0 %v670
    %1474 = vmatmul.mubr.bf16.gmra.mrb[0].mxu0 %v669
    %v1475 = vpop.f32.mrb[0].mxu0
    %v1476 = vadd.f32 0.0, %v1475
    %v1477 = vpop.f32.mrb[0].mxu0
    %v1478 = vadd.f32 0.0, %v1477
    %v1479 = vpop.f32.mrb[0].mxu0
    %v1480 = vadd.f32 0.0, %v1479
    %v1481 = vpop.f32.mrb[0].mxu0
    %v1482 = vadd.f32 0.0, %v1481
    %1483 = vmatprep.mubr.bf16.mxu0 %v673
    %1484 = vmatmul.mubr.bf16.gmra.mrb[0].mxu0 %v672
    %v1485 = vpop.f32.mrb[0].mxu0
    %v1486 = vadd.f32 0.0, %v1485
    %v1487 = vpop.f32.mrb[0].mxu0
    %v1488 = vadd.f32 0.0, %v1487
    %v1489 = vpop.f32.mrb[0].mxu0
    %v1490 = vadd.f32 0.0, %v1489
    %v1491 = vpop.f32.mrb[0].mxu0
    %v1492 = vadd.f32 0.0, %v1491
    %1493 = vmatprep.mubr.bf16.mxu0 %v676
    %1494 = vmatmul.mubr.bf16.gmra.mrb[0].mxu0 %v675
    %v1495 = vpop.f32.mrb[0].mxu0
    %v1496 = vadd.f32 0.0, %v1495
    %v1497 = vpop.f32.mrb[0].mxu0
    %v1498 = vadd.f32 0.0, %v1497
    %v1499 = vpop.f32.mrb[0].mxu0
    %v1500 = vadd.f32 0.0, %v1499
    %v1501 = vpop.f32.mrb[0].mxu0
    %v1502 = vadd.f32 0.0, %v1501
    %1503 = vmatprep.mubr.bf16.mxu0 %v679
    %1504 = vmatmul.mubr.bf16.gmra.mrb[0].mxu0 %v678
    %v1505 = vpop.f32.mrb[0].mxu0
    %v1506 = vadd.f32 0.0, %v1505
    %v1507 = vpop.f32.mrb[0].mxu0
    %v1508 = vadd.f32 0.0, %v1507
    %v1509 = vpop.f32.mrb[0].mxu0
    %v1510 = vadd.f32 0.0, %v1509
    %v1511 = vpop.f32.mrb[0].mxu0
    %v1512 = vadd.f32 0.0, %v1511
    %1513 = vdwg.mxu0
    %1514 = vmatprep.subr.bf16.mxu0 %v1066
    %1515 = vmatpush1.bf16.msra.mxu0 %v1065
    %1516 = vmatprep.subr.bf16.mxu0 %v1069
    %1517 = vmatpush1.bf16.msra.mxu0 %v1068
    %1518 = vmatprep.subr.bf16.mxu0 %v1072
    %1519 = vmatpush1.bf16.msra.mxu0 %v1071
    %1520 = vmatprep.subr.bf16.mxu0 %v1075
    %1521 = vmatpush1.bf16.msra.mxu0 %v1074
    %1522 = vmatprep.subr.bf16.mxu0 %v1078
    %1523 = vmatpush1.bf16.msra.mxu0 %v1077
    %1524 = vmatprep.subr.bf16.mxu0 %v1081
    %1525 = vmatpush1.bf16.msra.mxu0 %v1080
    %1526 = vmatprep.subr.bf16.mxu0 %v1084
    %1527 = vmatpush1.bf16.msra.mxu0 %v1083
    %1528 = vmatprep.subr.bf16.mxu0 %v1087
    %1529 = vmatpush1.bf16.msra.mxu0 %v1086
    %1530 = vmatprep.subr.bf16.mxu0 0
    %1531 = vmatpush1.bf16.msra.mxu0 0
    %1532 = vmatprep.subr.bf16.mxu0 0
    %1533 = vmatpush1.bf16.msra.mxu0 0
    %1534 = vmatprep.subr.bf16.mxu0 0
    %1535 = vmatpush1.bf16.msra.mxu0 0
    %1536 = vmatprep.subr.bf16.mxu0 0
    %1537 = vmatpush1.bf16.msra.mxu0 0
    %1538 = vmatprep.subr.bf16.mxu0 0
    %1539 = vmatpush1.bf16.msra.mxu0 0
    %1540 = vmatprep.subr.bf16.mxu0 0
    %1541 = vmatpush1.bf16.msra.mxu0 0
    %1542 = vmatprep.subr.bf16.mxu0 0
    %1543 = vmatpush1.bf16.msra.mxu0 0
    %1544 = vmatprep.subr.bf16.mxu0 0
    %1545 = vmatpush1.bf16.msra.mxu0 0
    %1546 = vmatprep.mubr.bf16.mxu0 0
    %1547 = vmatmul.mubr.bf16.gmra.mrb[0].mxu0 %v587
    %v1548 = vpop.f32.mrb[0].mxu0
    %v1549 = vadd.f32 %v1196, %v1548
    %v1550 = vpop.f32.mrb[0].mxu0
    %v1551 = vadd.f32 %v1198, %v1550
    %v1552 = vpop.f32.mrb[0].mxu0
    %v1553 = vadd.f32 %v1200, %v1552
    %v1554 = vpop.f32.mrb[0].mxu0
    %v1555 = vadd.f32 %v1202, %v1554
    %1556 = vmatprep.mubr.bf16.mxu0 0
    %1557 = vmatmul.mubr.bf16.gmra.mrb[0].mxu0 %v590
    %v1558 = vpop.f32.mrb[0].mxu0
    %v1559 = vadd.f32 %v1206, %v1558
    %v1560 = vpop.f32.mrb[0].mxu0
    %v1561 = vadd.f32 %v1208, %v1560
    %v1562 = vpop.f32.mrb[0].mxu0
    %v1563 = vadd.f32 %v1210, %v1562
    %v1564 = vpop.f32.mrb[0].mxu0
    %v1565 = vadd.f32 %v1212, %v1564
    %1566 = vmatprep.mubr.bf16.mxu0 0
    %1567 = vmatmul.mubr.bf16.gmra.mrb[0].mxu0 %v593
    %v1568 = vpop.f32.mrb[0].mxu0
    %v1569 = vadd.f32 %v1216, %v1568
    %v1570 = vpop.f32.mrb[0].mxu0
    %v1571 = vadd.f32 %v1218, %v1570
    %v1572 = vpop.f32.mrb[0].mxu0
    %v1573 = vadd.f32 %v1220, %v1572
    %v1574 = vpop.f32.mrb[0].mxu0
    %v1575 = vadd.f32 %v1222, %v1574
    %1576 = vmatprep.mubr.bf16.mxu0 0
    %1577 = vmatmul.mubr.bf16.gmra.mrb[0].mxu0 %v596
    %v1578 = vpop.f32.mrb[0].mxu0
    %v1579 = vadd.f32 %v1226, %v1578
    %v1580 = vpop.f32.mrb[0].mxu0
    %v1581 = vadd.f32 %v1228, %v1580
    %v1582 = vpop.f32.mrb[0].mxu0
    %v1583 = vadd.f32 %v1230, %v1582
    %v1584 = vpop.f32.mrb[0].mxu0
    %v1585 = vadd.f32 %v1232, %v1584
    %1586 = vmatprep.mubr.bf16.mxu0 0
    %1587 = vmatmul.mubr.bf16.gmra.mrb[0].mxu0 %v599
    %v1588 = vpop.f32.mrb[0].mxu0
    %v1589 = vadd.f32 %v1236, %v1588
    %v1590 = vpop.f32.mrb[0].mxu0
    %v1591 = vadd.f32 %v1238, %v1590
    %v1592 = vpop.f32.mrb[0].mxu0
    %v1593 = vadd.f32 %v1240, %v1592
    %v1594 = vpop.f32.mrb[0].mxu0
    %v1595 = vadd.f32 %v1242, %v1594
    %1596 = vmatprep.mubr.bf16.mxu0 0
    %1597 = vmatmul.mubr.bf16.gmra.mrb[0].mxu0 %v602
    %v1598 = vpop.f32.mrb[0].mxu0
    %v1599 = vadd.f32 %v1246, %v1598
    %v1600 = vpop.f32.mrb[0].mxu0
    %v1601 = vadd.f32 %v1248, %v1600
    %v1602 = vpop.f32.mrb[0].mxu0
    %v1603 = vadd.f32 %v1250, %v1602
    %v1604 = vpop.f32.mrb[0].mxu0
    %v1605 = vadd.f32 %v1252, %v1604
    %1606 = vmatprep.mubr.bf16.mxu0 0
    %1607 = vmatmul.mubr.bf16.gmra.mrb[0].mxu0 %v605
    %v1608 = vpop.f32.mrb[0].mxu0
    %v1609 = vadd.f32 %v1256, %v1608
    %v1610 = vpop.f32.mrb[0].mxu0
    %v1611 = vadd.f32 %v1258, %v1610
    %v1612 = vpop.f32.mrb[0].mxu0
    %v1613 = vadd.f32 %v1260, %v1612
    %v1614 = vpop.f32.mrb[0].mxu0
    %v1615 = vadd.f32 %v1262, %v1614
    %1616 = vmatprep.mubr.bf16.mxu0 0
    %1617 = vmatmul.mubr.bf16.gmra.mrb[0].mxu0 %v608
    %v1618 = vpop.f32.mrb[0].mxu0
    %v1619 = vadd.f32 %v1266, %v1618
    %v1620 = vpop.f32.mrb[0].mxu0
    %v1621 = vadd.f32 %v1268, %v1620
    %v1622 = vpop.f32.mrb[0].mxu0
    %v1623 = vadd.f32 %v1270, %v1622
    %v1624 = vpop.f32.mrb[0].mxu0
    %v1625 = vadd.f32 %v1272, %v1624
    %1626 = vmatprep.mubr.bf16.mxu0 0
    %1627 = vmatmul.mubr.bf16.gmra.mrb[0].mxu0 %v611
    %v1628 = vpop.f32.mrb[0].mxu0
    %v1629 = vadd.f32 %v1276, %v1628
    %v1630 = vpop.f32.mrb[0].mxu0
    %v1631 = vadd.f32 %v1278, %v1630
    %v1632 = vpop.f32.mrb[0].mxu0
    %v1633 = vadd.f32 %v1280, %v1632
    %v1634 = vpop.f32.mrb[0].mxu0
    %v1635 = vadd.f32 %v1282, %v1634
    %1636 = vmatprep.mubr.bf16.mxu0 0
    %1637 = vmatmul.mubr.bf16.gmra.mrb[0].mxu0 %v614
    %v1638 = vpop.f32.mrb[0].mxu0
    %v1639 = vadd.f32 %v1286, %v1638
    %v1640 = vpop.f32.mrb[0].mxu0
    %v1641 = vadd.f32 %v1288, %v1640
    %v1642 = vpop.f32.mrb[0].mxu0
    %v1643 = vadd.f32 %v1290, %v1642
    %v1644 = vpop.f32.mrb[0].mxu0
    %v1645 = vadd.f32 %v1292, %v1644
    %1646 = vmatprep.mubr.bf16.mxu0 0
    %1647 = vmatmul.mubr.bf16.gmra.mrb[0].mxu0 %v617
    %v1648 = vpop.f32.mrb[0].mxu0
    %v1649 = vadd.f32 %v1296, %v1648
    %v1650 = vpop.f32.mrb[0].mxu0
    %v1651 = vadd.f32 %v1298, %v1650
    %v1652 = vpop.f32.mrb[0].mxu0
    %v1653 = vadd.f32 %v1300, %v1652
    %v1654 = vpop.f32.mrb[0].mxu0
    %v1655 = vadd.f32 %v1302, %v1654
    %1656 = vmatprep.mubr.bf16.mxu0 0
    %1657 = vmatmul.mubr.bf16.gmra.mrb[0].mxu0 %v620
    %v1658 = vpop.f32.mrb[0].mxu0
    %v1659 = vadd.f32 %v1306, %v1658
    %v1660 = vpop.f32.mrb[0].mxu0
    %v1661 = vadd.f32 %v1308, %v1660
    %v1662 = vpop.f32.mrb[0].mxu0
    %v1663 = vadd.f32 %v1310, %v1662
    %v1664 = vpop.f32.mrb[0].mxu0
    %v1665 = vadd.f32 %v1312, %v1664
    %1666 = vmatprep.mubr.bf16.mxu0 0
    %1667 = vmatmul.mubr.bf16.gmra.mrb[0].mxu0 %v623
    %v1668 = vpop.f32.mrb[0].mxu0
    %v1669 = vadd.f32 %v1316, %v1668
    %v1670 = vpop.f32.mrb[0].mxu0
    %v1671 = vadd.f32 %v1318, %v1670
    %v1672 = vpop.f32.mrb[0].mxu0
    %v1673 = vadd.f32 %v1320, %v1672
    %v1674 = vpop.f32.mrb[0].mxu0
    %v1675 = vadd.f32 %v1322, %v1674
    %1676 = vmatprep.mubr.bf16.mxu0 0
    %1677 = vmatmul.mubr.bf16.gmra.mrb[0].mxu0 %v626
    %v1678 = vpop.f32.mrb[0].mxu0
    %v1679 = vadd.f32 %v1326, %v1678
    %v1680 = vpop.f32.mrb[0].mxu0
    %v1681 = vadd.f32 %v1328, %v1680
    %v1682 = vpop.f32.mrb[0].mxu0
    %v1683 = vadd.f32 %v1330, %v1682
    %v1684 = vpop.f32.mrb[0].mxu0
    %v1685 = vadd.f32 %v1332, %v1684
    %1686 = vmatprep.mubr.bf16.mxu0 0
    %1687 = vmatmul.mubr.bf16.gmra.mrb[0].mxu0 %v629
    %v1688 = vpop.f32.mrb[0].mxu0
    %v1689 = vadd.f32 %v1336, %v1688
    %v1690 = vpop.f32.mrb[0].mxu0
    %v1691 = vadd.f32 %v1338, %v1690
    %v1692 = vpop.f32.mrb[0].mxu0
    %v1693 = vadd.f32 %v1340, %v1692
    %v1694 = vpop.f32.mrb[0].mxu0
    %v1695 = vadd.f32 %v1342, %v1694
    %1696 = vmatprep.mubr.bf16.mxu0 0
    %1697 = vmatmul.mubr.bf16.gmra.mrb[0].mxu0 %v632
    %v1698 = vpop.f32.mrb[0].mxu0
    %v1699 = vadd.f32 %v1346, %v1698
    %v1700 = vpop.f32.mrb[0].mxu0
    %v1701 = vadd.f32 %v1348, %v1700
    %v1702 = vpop.f32.mrb[0].mxu0
    %v1703 = vadd.f32 %v1350, %v1702
    %v1704 = vpop.f32.mrb[0].mxu0
    %v1705 = vadd.f32 %v1352, %v1704
    %1706 = vmatprep.mubr.bf16.mxu0 0
    %1707 = vmatmul.mubr.bf16.gmra.mrb[0].mxu0 %v635
    %v1708 = vpop.f32.mrb[0].mxu0
    %v1709 = vadd.f32 %v1356, %v1708
    %v1710 = vpop.f32.mrb[0].mxu0
    %v1711 = vadd.f32 %v1358, %v1710
    %v1712 = vpop.f32.mrb[0].mxu0
    %v1713 = vadd.f32 %v1360, %v1712
    %v1714 = vpop.f32.mrb[0].mxu0
    %v1715 = vadd.f32 %v1362, %v1714
    %1716 = vmatprep.mubr.bf16.mxu0 0
    %1717 = vmatmul.mubr.bf16.gmra.mrb[0].mxu0 %v638
    %v1718 = vpop.f32.mrb[0].mxu0
    %v1719 = vadd.f32 %v1366, %v1718
    %v1720 = vpop.f32.mrb[0].mxu0
    %v1721 = vadd.f32 %v1368, %v1720
    %v1722 = vpop.f32.mrb[0].mxu0
    %v1723 = vadd.f32 %v1370, %v1722
    %v1724 = vpop.f32.mrb[0].mxu0
    %v1725 = vadd.f32 %v1372, %v1724
    %1726 = vmatprep.mubr.bf16.mxu0 0
    %1727 = vmatmul.mubr.bf16.gmra.mrb[0].mxu0 %v641
    %v1728 = vpop.f32.mrb[0].mxu0
    %v1729 = vadd.f32 %v1376, %v1728
    %v1730 = vpop.f32.mrb[0].mxu0
    %v1731 = vadd.f32 %v1378, %v1730
    %v1732 = vpop.f32.mrb[0].mxu0
    %v1733 = vadd.f32 %v1380, %v1732
    %v1734 = vpop.f32.mrb[0].mxu0
    %v1735 = vadd.f32 %v1382, %v1734
    %1736 = vmatprep.mubr.bf16.mxu0 0
    %1737 = vmatmul.mubr.bf16.gmra.mrb[0].mxu0 %v644
    %v1738 = vpop.f32.mrb[0].mxu0
    %v1739 = vadd.f32 %v1386, %v1738
    %v1740 = vpop.f32.mrb[0].mxu0
    %v1741 = vadd.f32 %v1388, %v1740
    %v1742 = vpop.f32.mrb[0].mxu0
    %v1743 = vadd.f32 %v1390, %v1742
    %v1744 = vpop.f32.mrb[0].mxu0
    %v1745 = vadd.f32 %v1392, %v1744
    %1746 = vmatprep.mubr.bf16.mxu0 0
    %1747 = vmatmul.mubr.bf16.gmra.mrb[0].mxu0 %v647
    %v1748 = vpop.f32.mrb[0].mxu0
    %v1749 = vadd.f32 %v1396, %v1748
    %v1750 = vpop.f32.mrb[0].mxu0
    %v1751 = vadd.f32 %v1398, %v1750
    %v1752 = vpop.f32.mrb[0].mxu0
    %v1753 = vadd.f32 %v1400, %v1752
    %v1754 = vpop.f32.mrb[0].mxu0
    %v1755 = vadd.f32 %v1402, %v1754
    %1756 = vmatprep.mubr.bf16.mxu0 0
    %1757 = vmatmul.mubr.bf16.gmra.mrb[0].mxu0 %v650
    %v1758 = vpop.f32.mrb[0].mxu0
    %v1759 = vadd.f32 %v1406, %v1758
    %v1760 = vpop.f32.mrb[0].mxu0
    %v1761 = vadd.f32 %v1408, %v1760
    %v1762 = vpop.f32.mrb[0].mxu0
    %v1763 = vadd.f32 %v1410, %v1762
    %v1764 = vpop.f32.mrb[0].mxu0
    %v1765 = vadd.f32 %v1412, %v1764
    %1766 = vmatprep.mubr.bf16.mxu0 0
    %1767 = vmatmul.mubr.bf16.gmra.mrb[0].mxu0 %v653
    %v1768 = vpop.f32.mrb[0].mxu0
    %v1769 = vadd.f32 %v1416, %v1768
    %v1770 = vpop.f32.mrb[0].mxu0
    %v1771 = vadd.f32 %v1418, %v1770
    %v1772 = vpop.f32.mrb[0].mxu0
    %v1773 = vadd.f32 %v1420, %v1772
    %v1774 = vpop.f32.mrb[0].mxu0
    %v1775 = vadd.f32 %v1422, %v1774
    %1776 = vmatprep.mubr.bf16.mxu0 0
    %1777 = vmatmul.mubr.bf16.gmra.mrb[0].mxu0 %v656
    %v1778 = vpop.f32.mrb[0].mxu0
    %v1779 = vadd.f32 %v1426, %v1778
    %v1780 = vpop.f32.mrb[0].mxu0
    %v1781 = vadd.f32 %v1428, %v1780
    %v1782 = vpop.f32.mrb[0].mxu0
    %v1783 = vadd.f32 %v1430, %v1782
    %v1784 = vpop.f32.mrb[0].mxu0
    %v1785 = vadd.f32 %v1432, %v1784
    %1786 = vmatprep.mubr.bf16.mxu0 0
    %1787 = vmatmul.mubr.bf16.gmra.mrb[0].mxu0 %v659
    %v1788 = vpop.f32.mrb[0].mxu0
    %v1789 = vadd.f32 %v1436, %v1788
    %v1790 = vpop.f32.mrb[0].mxu0
    %v1791 = vadd.f32 %v1438, %v1790
    %v1792 = vpop.f32.mrb[0].mxu0
    %v1793 = vadd.f32 %v1440, %v1792
    %v1794 = vpop.f32.mrb[0].mxu0
    %v1795 = vadd.f32 %v1442, %v1794
    %1796 = vmatprep.mubr.bf16.mxu0 0
    %1797 = vmatmul.mubr.bf16.gmra.mrb[0].mxu0 %v662
    %v1798 = vpop.f32.mrb[0].mxu0
    %v1799 = vadd.f32 %v1446, %v1798
    %v1800 = vpop.f32.mrb[0].mxu0
    %v1801 = vadd.f32 %v1448, %v1800
    %v1802 = vpop.f32.mrb[0].mxu0
    %v1803 = vadd.f32 %v1450, %v1802
    %v1804 = vpop.f32.mrb[0].mxu0
    %v1805 = vadd.f32 %v1452, %v1804
    %1806 = vmatprep.mubr.bf16.mxu0 0
    %1807 = vmatmul.mubr.bf16.gmra.mrb[0].mxu0 %v665
    %v1808 = vpop.f32.mrb[0].mxu0
    %v1809 = vadd.f32 %v1456, %v1808
    %v1810 = vpop.f32.mrb[0].mxu0
    %v1811 = vadd.f32 %v1458, %v1810
    %v1812 = vpop.f32.mrb[0].mxu0
    %v1813 = vadd.f32 %v1460, %v1812
    %v1814 = vpop.f32.mrb[0].mxu0
    %v1815 = vadd.f32 %v1462, %v1814
    %1816 = vmatprep.mubr.bf16.mxu0 0
    %1817 = vmatmul.mubr.bf16.gmra.mrb[0].mxu0 %v668
    %v1818 = vpop.f32.mrb[0].mxu0
    %v1819 = vadd.f32 %v1466, %v1818
    %v1820 = vpop.f32.mrb[0].mxu0
    %v1821 = vadd.f32 %v1468, %v1820
    %v1822 = vpop.f32.mrb[0].mxu0
    %v1823 = vadd.f32 %v1470, %v1822
    %v1824 = vpop.f32.mrb[0].mxu0
    %v1825 = vadd.f32 %v1472, %v1824
    %1826 = vmatprep.mubr.bf16.mxu0 0
    %1827 = vmatmul.mubr.bf16.gmra.mrb[0].mxu0 %v671
    %v1828 = vpop.f32.mrb[0].mxu0
    %v1829 = vadd.f32 %v1476, %v1828
    %v1830 = vpop.f32.mrb[0].mxu0
    %v1831 = vadd.f32 %v1478, %v1830
    %v1832 = vpop.f32.mrb[0].mxu0
    %v1833 = vadd.f32 %v1480, %v1832
    %v1834 = vpop.f32.mrb[0].mxu0
    %v1835 = vadd.f32 %v1482, %v1834
    %1836 = vmatprep.mubr.bf16.mxu0 0
    %1837 = vmatmul.mubr.bf16.gmra.mrb[0].mxu0 %v674
    %v1838 = vpop.f32.mrb[0].mxu0
    %v1839 = vadd.f32 %v1486, %v1838
    %v1840 = vpop.f32.mrb[0].mxu0
    %v1841 = vadd.f32 %v1488, %v1840
    %v1842 = vpop.f32.mrb[0].mxu0
    %v1843 = vadd.f32 %v1490, %v1842
    %v1844 = vpop.f32.mrb[0].mxu0
    %v1845 = vadd.f32 %v1492, %v1844
    %1846 = vmatprep.mubr.bf16.mxu0 0
    %1847 = vmatmul.mubr.bf16.gmra.mrb[0].mxu0 %v677
    %v1848 = vpop.f32.mrb[0].mxu0
    %v1849 = vadd.f32 %v1496, %v1848
    %v1850 = vpop.f32.mrb[0].mxu0
    %v1851 = vadd.f32 %v1498, %v1850
    %v1852 = vpop.f32.mrb[0].mxu0
    %v1853 = vadd.f32 %v1500, %v1852
    %v1854 = vpop.f32.mrb[0].mxu0
    %v1855 = vadd.f32 %v1502, %v1854
    %1856 = vmatprep.mubr.bf16.mxu0 0
    %1857 = vmatmul.mubr.bf16.gmra.mrb[0].mxu0 %v680
    %v1858 = vpop.f32.mrb[0].mxu0
    %v1859 = vadd.f32 %v1506, %v1858
    %v1860 = vpop.f32.mrb[0].mxu0
    %v1861 = vadd.f32 %v1508, %v1860
    %v1862 = vpop.f32.mrb[0].mxu0
    %v1863 = vadd.f32 %v1510, %v1862
    %v1864 = vpop.f32.mrb[0].mxu0
    %v1865 = vadd.f32 %v1512, %v1864
    %1866 = vdwg.mxu0
    %1867 = vmatprep.subr.bf16.mxu0 0
    %1868 = vmatpush1.bf16.msra.mxu0 %v1019
    %1869 = vmatprep.subr.bf16.mxu0 0
    %1870 = vmatpush1.bf16.msra.mxu0 %v1022
    %1871 = vmatprep.subr.bf16.mxu0 0
    %1872 = vmatpush1.bf16.msra.mxu0 %v1025
    %1873 = vmatprep.subr.bf16.mxu0 0
    %1874 = vmatpush1.bf16.msra.mxu0 %v1028
    %1875 = vmatprep.subr.bf16.mxu0 0
    %1876 = vmatpush1.bf16.msra.mxu0 %v1031
    %1877 = vmatprep.subr.bf16.mxu0 0
    %1878 = vmatpush1.bf16.msra.mxu0 %v1034
    %1879 = vmatprep.subr.bf16.mxu0 0
    %1880 = vmatpush1.bf16.msra.mxu0 %v1037
    %1881 = vmatprep.subr.bf16.mxu0 0
    %1882 = vmatpush1.bf16.msra.mxu0 %v1040
    %1883 = vmatprep.subr.bf16.mxu0 0
    %1884 = vmatpush1.bf16.msra.mxu0 %v1043
    %1885 = vmatprep.subr.bf16.mxu0 0
    %1886 = vmatpush1.bf16.msra.mxu0 %v1046
    %1887 = vmatprep.subr.bf16.mxu0 0
    %1888 = vmatpush1.bf16.msra.mxu0 %v1049
    %1889 = vmatprep.subr.bf16.mxu0 0
    %1890 = vmatpush1.bf16.msra.mxu0 %v1052
    %1891 = vmatprep.subr.bf16.mxu0 0
    %1892 = vmatpush1.bf16.msra.mxu0 %v1055
    %1893 = vmatprep.subr.bf16.mxu0 0
    %1894 = vmatpush1.bf16.msra.mxu0 %v1058
    %1895 = vmatprep.subr.bf16.mxu0 0
    %1896 = vmatpush1.bf16.msra.mxu0 %v1061
    %1897 = vmatprep.subr.bf16.mxu0 0
    %1898 = vmatpush1.bf16.msra.mxu0 %v1064
    %1899 = vmatprep.mubr.bf16.mxu0 %v586
    %1900 = vmatmul.mubr.bf16.gmra.mrb[0].mxu0 %v585
    %v1901 = vpop.f32.mrb[0].mxu0
    %v1902 = vadd.f32 0.0, %v1901
    %v1903 = vpop.f32.mrb[0].mxu0
    %v1904 = vpop.f32.mrb[0].mxu0
    %v1905 = vadd.f32 0.0, %v1904
    %v1906 = vpop.f32.mrb[0].mxu0
    %1907 = vmatprep.mubr.bf16.mxu0 %v589
    %1908 = vmatmul.mubr.bf16.gmra.mrb[0].mxu0 %v588
    %v1909 = vpop.f32.mrb[0].mxu0
    %v1910 = vadd.f32 0.0, %v1909
    %v1911 = vpop.f32.mrb[0].mxu0
    %v1912 = vpop.f32.mrb[0].mxu0
    %v1913 = vadd.f32 0.0, %v1912
    %v1914 = vpop.f32.mrb[0].mxu0
    %1915 = vmatprep.mubr.bf16.mxu0 %v592
    %1916 = vmatmul.mubr.bf16.gmra.mrb[0].mxu0 %v591
    %v1917 = vpop.f32.mrb[0].mxu0
    %v1918 = vadd.f32 0.0, %v1917
    %v1919 = vpop.f32.mrb[0].mxu0
    %v1920 = vpop.f32.mrb[0].mxu0
    %v1921 = vadd.f32 0.0, %v1920
    %v1922 = vpop.f32.mrb[0].mxu0
    %1923 = vmatprep.mubr.bf16.mxu0 %v595
    %1924 = vmatmul.mubr.bf16.gmra.mrb[0].mxu0 %v594
    %v1925 = vpop.f32.mrb[0].mxu0
    %v1926 = vadd.f32 0.0, %v1925
    %v1927 = vpop.f32.mrb[0].mxu0
    %v1928 = vpop.f32.mrb[0].mxu0
    %v1929 = vadd.f32 0.0, %v1928
    %v1930 = vpop.f32.mrb[0].mxu0
    %1931 = vmatprep.mubr.bf16.mxu0 %v598
    %1932 = vmatmul.mubr.bf16.gmra.mrb[0].mxu0 %v597
    %v1933 = vpop.f32.mrb[0].mxu0
    %v1934 = vadd.f32 0.0, %v1933
    %v1935 = vpop.f32.mrb[0].mxu0
    %v1936 = vpop.f32.mrb[0].mxu0
    %v1937 = vadd.f32 0.0, %v1936
    %v1938 = vpop.f32.mrb[0].mxu0
    %1939 = vmatprep.mubr.bf16.mxu0 %v601
    %1940 = vmatmul.mubr.bf16.gmra.mrb[0].mxu0 %v600
    %v1941 = vpop.f32.mrb[0].mxu0
    %v1942 = vadd.f32 0.0, %v1941
    %v1943 = vpop.f32.mrb[0].mxu0
    %v1944 = vpop.f32.mrb[0].mxu0
    %v1945 = vadd.f32 0.0, %v1944
    %v1946 = vpop.f32.mrb[0].mxu0
    %1947 = vmatprep.mubr.bf16.mxu0 %v604
    %1948 = vmatmul.mubr.bf16.gmra.mrb[0].mxu0 %v603
    %v1949 = vpop.f32.mrb[0].mxu0
    %v1950 = vadd.f32 0.0, %v1949
    %v1951 = vpop.f32.mrb[0].mxu0
    %v1952 = vpop.f32.mrb[0].mxu0
    %v1953 = vadd.f32 0.0, %v1952
    %v1954 = vpop.f32.mrb[0].mxu0
    %1955 = vmatprep.mubr.bf16.mxu0 %v607
    %1956 = vmatmul.mubr.bf16.gmra.mrb[0].mxu0 %v606
    %v1957 = vpop.f32.mrb[0].mxu0
    %v1958 = vadd.f32 0.0, %v1957
    %v1959 = vpop.f32.mrb[0].mxu0
    %v1960 = vpop.f32.mrb[0].mxu0
    %v1961 = vadd.f32 0.0, %v1960
    %v1962 = vpop.f32.mrb[0].mxu0
    %1963 = vmatprep.mubr.bf16.mxu0 %v610
    %1964 = vmatmul.mubr.bf16.gmra.mrb[0].mxu0 %v609
    %v1965 = vpop.f32.mrb[0].mxu0
    %v1966 = vadd.f32 0.0, %v1965
    %v1967 = vpop.f32.mrb[0].mxu0
    %v1968 = vpop.f32.mrb[0].mxu0
    %v1969 = vadd.f32 0.0, %v1968
    %v1970 = vpop.f32.mrb[0].mxu0
    %1971 = vmatprep.mubr.bf16.mxu0 %v613
    %1972 = vmatmul.mubr.bf16.gmra.mrb[0].mxu0 %v612
    %v1973 = vpop.f32.mrb[0].mxu0
    %v1974 = vadd.f32 0.0, %v1973
    %v1975 = vpop.f32.mrb[0].mxu0
    %v1976 = vpop.f32.mrb[0].mxu0
    %v1977 = vadd.f32 0.0, %v1976
    %v1978 = vpop.f32.mrb[0].mxu0
    %1979 = vmatprep.mubr.bf16.mxu0 %v616
    %1980 = vmatmul.mubr.bf16.gmra.mrb[0].mxu0 %v615
    %v1981 = vpop.f32.mrb[0].mxu0
    %v1982 = vadd.f32 0.0, %v1981
    %v1983 = vpop.f32.mrb[0].mxu0
    %v1984 = vpop.f32.mrb[0].mxu0
    %v1985 = vadd.f32 0.0, %v1984
    %v1986 = vpop.f32.mrb[0].mxu0
    %1987 = vmatprep.mubr.bf16.mxu0 %v619
    %1988 = vmatmul.mubr.bf16.gmra.mrb[0].mxu0 %v618
    %v1989 = vpop.f32.mrb[0].mxu0
    %v1990 = vadd.f32 0.0, %v1989
    %v1991 = vpop.f32.mrb[0].mxu0
    %v1992 = vpop.f32.mrb[0].mxu0
    %v1993 = vadd.f32 0.0, %v1992
    %v1994 = vpop.f32.mrb[0].mxu0
    %1995 = vmatprep.mubr.bf16.mxu0 %v622
    %1996 = vmatmul.mubr.bf16.gmra.mrb[0].mxu0 %v621
    %v1997 = vpop.f32.mrb[0].mxu0
    %v1998 = vadd.f32 0.0, %v1997
    %v1999 = vpop.f32.mrb[0].mxu0
    %v2000 = vpop.f32.mrb[0].mxu0
    %v2001 = vadd.f32 0.0, %v2000
    %v2002 = vpop.f32.mrb[0].mxu0
    %2003 = vmatprep.mubr.bf16.mxu0 %v625
    %2004 = vmatmul.mubr.bf16.gmra.mrb[0].mxu0 %v624
    %v2005 = vpop.f32.mrb[0].mxu0
    %v2006 = vadd.f32 0.0, %v2005
    %v2007 = vpop.f32.mrb[0].mxu0
    %v2008 = vpop.f32.mrb[0].mxu0
    %v2009 = vadd.f32 0.0, %v2008
    %v2010 = vpop.f32.mrb[0].mxu0
    %2011 = vmatprep.mubr.bf16.mxu0 %v628
    %2012 = vmatmul.mubr.bf16.gmra.mrb[0].mxu0 %v627
    %v2013 = vpop.f32.mrb[0].mxu0
    %v2014 = vadd.f32 0.0, %v2013
    %v2015 = vpop.f32.mrb[0].mxu0
    %v2016 = vpop.f32.mrb[0].mxu0
    %v2017 = vadd.f32 0.0, %v2016
    %v2018 = vpop.f32.mrb[0].mxu0
    %2019 = vmatprep.mubr.bf16.mxu0 %v631
    %2020 = vmatmul.mubr.bf16.gmra.mrb[0].mxu0 %v630
    %v2021 = vpop.f32.mrb[0].mxu0
    %v2022 = vadd.f32 0.0, %v2021
    %v2023 = vpop.f32.mrb[0].mxu0
    %v2024 = vpop.f32.mrb[0].mxu0
    %v2025 = vadd.f32 0.0, %v2024
    %v2026 = vpop.f32.mrb[0].mxu0
    %2027 = vmatprep.mubr.bf16.mxu0 %v634
    %2028 = vmatmul.mubr.bf16.gmra.mrb[0].mxu0 %v633
    %v2029 = vpop.f32.mrb[0].mxu0
    %v2030 = vadd.f32 0.0, %v2029
    %v2031 = vpop.f32.mrb[0].mxu0
    %v2032 = vpop.f32.mrb[0].mxu0
    %v2033 = vadd.f32 0.0, %v2032
    %v2034 = vpop.f32.mrb[0].mxu0
    %2035 = vmatprep.mubr.bf16.mxu0 %v637
    %2036 = vmatmul.mubr.bf16.gmra.mrb[0].mxu0 %v636
    %v2037 = vpop.f32.mrb[0].mxu0
    %v2038 = vadd.f32 0.0, %v2037
    %v2039 = vpop.f32.mrb[0].mxu0
    %v2040 = vpop.f32.mrb[0].mxu0
    %v2041 = vadd.f32 0.0, %v2040
    %v2042 = vpop.f32.mrb[0].mxu0
    %2043 = vmatprep.mubr.bf16.mxu0 %v640
    %2044 = vmatmul.mubr.bf16.gmra.mrb[0].mxu0 %v639
    %v2045 = vpop.f32.mrb[0].mxu0
    %v2046 = vadd.f32 0.0, %v2045
    %v2047 = vpop.f32.mrb[0].mxu0
    %v2048 = vpop.f32.mrb[0].mxu0
    %v2049 = vadd.f32 0.0, %v2048
    %v2050 = vpop.f32.mrb[0].mxu0
    %2051 = vmatprep.mubr.bf16.mxu0 %v643
    %2052 = vmatmul.mubr.bf16.gmra.mrb[0].mxu0 %v642
    %v2053 = vpop.f32.mrb[0].mxu0
    %v2054 = vadd.f32 0.0, %v2053
    %v2055 = vpop.f32.mrb[0].mxu0
    %v2056 = vpop.f32.mrb[0].mxu0
    %v2057 = vadd.f32 0.0, %v2056
    %v2058 = vpop.f32.mrb[0].mxu0
    %2059 = vmatprep.mubr.bf16.mxu0 %v646
    %2060 = vmatmul.mubr.bf16.gmra.mrb[0].mxu0 %v645
    %v2061 = vpop.f32.mrb[0].mxu0
    %v2062 = vadd.f32 0.0, %v2061
    %v2063 = vpop.f32.mrb[0].mxu0
    %v2064 = vpop.f32.mrb[0].mxu0
    %v2065 = vadd.f32 0.0, %v2064
    %v2066 = vpop.f32.mrb[0].mxu0
    %2067 = vmatprep.mubr.bf16.mxu0 %v649
    %2068 = vmatmul.mubr.bf16.gmra.mrb[0].mxu0 %v648
    %v2069 = vpop.f32.mrb[0].mxu0
    %v2070 = vadd.f32 0.0, %v2069
    %v2071 = vpop.f32.mrb[0].mxu0
    %v2072 = vpop.f32.mrb[0].mxu0
    %v2073 = vadd.f32 0.0, %v2072
    %v2074 = vpop.f32.mrb[0].mxu0
    %2075 = vmatprep.mubr.bf16.mxu0 %v652
    %2076 = vmatmul.mubr.bf16.gmra.mrb[0].mxu0 %v651
    %v2077 = vpop.f32.mrb[0].mxu0
    %v2078 = vadd.f32 0.0, %v2077
    %v2079 = vpop.f32.mrb[0].mxu0
    %v2080 = vpop.f32.mrb[0].mxu0
    %v2081 = vadd.f32 0.0, %v2080
    %v2082 = vpop.f32.mrb[0].mxu0
    %2083 = vmatprep.mubr.bf16.mxu0 %v655
    %2084 = vmatmul.mubr.bf16.gmra.mrb[0].mxu0 %v654
    %v2085 = vpop.f32.mrb[0].mxu0
    %v2086 = vadd.f32 0.0, %v2085
    %v2087 = vpop.f32.mrb[0].mxu0
    %v2088 = vpop.f32.mrb[0].mxu0
    %v2089 = vadd.f32 0.0, %v2088
    %v2090 = vpop.f32.mrb[0].mxu0
    %2091 = vmatprep.mubr.bf16.mxu0 %v658
    %2092 = vmatmul.mubr.bf16.gmra.mrb[0].mxu0 %v657
    %v2093 = vpop.f32.mrb[0].mxu0
    %v2094 = vadd.f32 0.0, %v2093
    %v2095 = vpop.f32.mrb[0].mxu0
    %v2096 = vpop.f32.mrb[0].mxu0
    %v2097 = vadd.f32 0.0, %v2096
    %v2098 = vpop.f32.mrb[0].mxu0
    %2099 = vmatprep.mubr.bf16.mxu0 %v661
    %2100 = vmatmul.mubr.bf16.gmra.mrb[0].mxu0 %v660
    %v2101 = vpop.f32.mrb[0].mxu0
    %v2102 = vadd.f32 0.0, %v2101
    %v2103 = vpop.f32.mrb[0].mxu0
    %v2104 = vpop.f32.mrb[0].mxu0
    %v2105 = vadd.f32 0.0, %v2104
    %v2106 = vpop.f32.mrb[0].mxu0
    %2107 = vmatprep.mubr.bf16.mxu0 %v664
    %2108 = vmatmul.mubr.bf16.gmra.mrb[0].mxu0 %v663
    %v2109 = vpop.f32.mrb[0].mxu0
    %v2110 = vadd.f32 0.0, %v2109
    %v2111 = vpop.f32.mrb[0].mxu0
    %v2112 = vpop.f32.mrb[0].mxu0
    %v2113 = vadd.f32 0.0, %v2112
    %v2114 = vpop.f32.mrb[0].mxu0
    %2115 = vmatprep.mubr.bf16.mxu0 %v667
    %2116 = vmatmul.mubr.bf16.gmra.mrb[0].mxu0 %v666
    %v2117 = vpop.f32.mrb[0].mxu0
    %v2118 = vadd.f32 0.0, %v2117
    %v2119 = vpop.f32.mrb[0].mxu0
    %v2120 = vpop.f32.mrb[0].mxu0
    %v2121 = vadd.f32 0.0, %v2120
    %v2122 = vpop.f32.mrb[0].mxu0
    %2123 = vmatprep.mubr.bf16.mxu0 %v670
    %2124 = vmatmul.mubr.bf16.gmra.mrb[0].mxu0 %v669
    %v2125 = vpop.f32.mrb[0].mxu0
    %v2126 = vadd.f32 0.0, %v2125
    %v2127 = vpop.f32.mrb[0].mxu0
    %v2128 = vpop.f32.mrb[0].mxu0
    %v2129 = vadd.f32 0.0, %v2128
    %v2130 = vpop.f32.mrb[0].mxu0
    %2131 = vmatprep.mubr.bf16.mxu0 %v673
    %2132 = vmatmul.mubr.bf16.gmra.mrb[0].mxu0 %v672
    %v2133 = vpop.f32.mrb[0].mxu0
    %v2134 = vadd.f32 0.0, %v2133
    %v2135 = vpop.f32.mrb[0].mxu0
    %v2136 = vpop.f32.mrb[0].mxu0
    %v2137 = vadd.f32 0.0, %v2136
    %v2138 = vpop.f32.mrb[0].mxu0
    %2139 = vmatprep.mubr.bf16.mxu0 %v676
    %2140 = vmatmul.mubr.bf16.gmra.mrb[0].mxu0 %v675
    %v2141 = vpop.f32.mrb[0].mxu0
    %v2142 = vadd.f32 0.0, %v2141
    %v2143 = vpop.f32.mrb[0].mxu0
    %v2144 = vpop.f32.mrb[0].mxu0
    %v2145 = vadd.f32 0.0, %v2144
    %v2146 = vpop.f32.mrb[0].mxu0
    %2147 = vmatprep.mubr.bf16.mxu0 %v679
    %2148 = vmatmul.mubr.bf16.gmra.mrb[0].mxu0 %v678
    %v2149 = vpop.f32.mrb[0].mxu0
    %v2150 = vadd.f32 0.0, %v2149
    %v2151 = vpop.f32.mrb[0].mxu0
    %v2152 = vpop.f32.mrb[0].mxu0
    %v2153 = vadd.f32 0.0, %v2152
    %v2154 = vpop.f32.mrb[0].mxu0
    %2155 = vdwg.mxu0
    %2156 = vmatprep.subr.bf16.mxu0 0
    %2157 = vmatpush1.bf16.msra.mxu0 %v1067
    %2158 = vmatprep.subr.bf16.mxu0 0
    %2159 = vmatpush1.bf16.msra.mxu0 %v1070
    %2160 = vmatprep.subr.bf16.mxu0 0
    %2161 = vmatpush1.bf16.msra.mxu0 %v1073
    %2162 = vmatprep.subr.bf16.mxu0 0
    %2163 = vmatpush1.bf16.msra.mxu0 %v1076
    %2164 = vmatprep.subr.bf16.mxu0 0
    %2165 = vmatpush1.bf16.msra.mxu0 %v1079
    %2166 = vmatprep.subr.bf16.mxu0 0
    %2167 = vmatpush1.bf16.msra.mxu0 %v1082
    %2168 = vmatprep.subr.bf16.mxu0 0
    %2169 = vmatpush1.bf16.msra.mxu0 %v1085
    %2170 = vmatprep.subr.bf16.mxu0 0
    %2171 = vmatpush1.bf16.msra.mxu0 %v1088
    %2172 = vmatprep.subr.bf16.mxu0 0
    %2173 = vmatpush1.bf16.msra.mxu0 0
    %2174 = vmatprep.subr.bf16.mxu0 0
    %2175 = vmatpush1.bf16.msra.mxu0 0
    %2176 = vmatprep.subr.bf16.mxu0 0
    %2177 = vmatpush1.bf16.msra.mxu0 0
    %2178 = vmatprep.subr.bf16.mxu0 0
    %2179 = vmatpush1.bf16.msra.mxu0 0
    %2180 = vmatprep.subr.bf16.mxu0 0
    %2181 = vmatpush1.bf16.msra.mxu0 0
    %2182 = vmatprep.subr.bf16.mxu0 0
    %2183 = vmatpush1.bf16.msra.mxu0 0
    %2184 = vmatprep.subr.bf16.mxu0 0
    %2185 = vmatpush1.bf16.msra.mxu0 0
    %2186 = vmatprep.subr.bf16.mxu0 0
    %2187 = vmatpush1.bf16.msra.mxu0 0
    %2188 = vmatprep.mubr.bf16.mxu0 0
    %2189 = vmatmul.mubr.bf16.gmra.mrb[0].mxu0 %v587
    %v2190 = vpop.f32.mrb[0].mxu0
    %v2191 = vadd.f32 %v1902, %v2190
    %v2192 = vpop.f32.mrb[0].mxu0
    %v2193 = vpop.f32.mrb[0].mxu0
    %v2194 = vadd.f32 %v1905, %v2193
    %v2195 = vpop.f32.mrb[0].mxu0
    %2196 = vmatprep.mubr.bf16.mxu0 0
    %2197 = vmatmul.mubr.bf16.gmra.mrb[0].mxu0 %v590
    %v2198 = vpop.f32.mrb[0].mxu0
    %v2199 = vadd.f32 %v1910, %v2198
    %v2200 = vpop.f32.mrb[0].mxu0
    %v2201 = vpop.f32.mrb[0].mxu0
    %v2202 = vadd.f32 %v1913, %v2201
    %v2203 = vpop.f32.mrb[0].mxu0
    %2204 = vmatprep.mubr.bf16.mxu0 0
    %2205 = vmatmul.mubr.bf16.gmra.mrb[0].mxu0 %v593
    %v2206 = vpop.f32.mrb[0].mxu0
    %v2207 = vadd.f32 %v1918, %v2206
    %v2208 = vpop.f32.mrb[0].mxu0
    %v2209 = vpop.f32.mrb[0].mxu0
    %v2210 = vadd.f32 %v1921, %v2209
    %v2211 = vpop.f32.mrb[0].mxu0
    %2212 = vmatprep.mubr.bf16.mxu0 0
    %2213 = vmatmul.mubr.bf16.gmra.mrb[0].mxu0 %v596
    %v2214 = vpop.f32.mrb[0].mxu0
    %v2215 = vadd.f32 %v1926, %v2214
    %v2216 = vpop.f32.mrb[0].mxu0
    %v2217 = vpop.f32.mrb[0].mxu0
    %v2218 = vadd.f32 %v1929, %v2217
    %v2219 = vpop.f32.mrb[0].mxu0
    %2220 = vmatprep.mubr.bf16.mxu0 0
    %2221 = vmatmul.mubr.bf16.gmra.mrb[0].mxu0 %v599
    %v2222 = vpop.f32.mrb[0].mxu0
    %v2223 = vadd.f32 %v1934, %v2222
    %v2224 = vpop.f32.mrb[0].mxu0
    %v2225 = vpop.f32.mrb[0].mxu0
    %v2226 = vadd.f32 %v1937, %v2225
    %v2227 = vpop.f32.mrb[0].mxu0
    %2228 = vmatprep.mubr.bf16.mxu0 0
    %2229 = vmatmul.mubr.bf16.gmra.mrb[0].mxu0 %v602
    %v2230 = vpop.f32.mrb[0].mxu0
    %v2231 = vadd.f32 %v1942, %v2230
    %v2232 = vpop.f32.mrb[0].mxu0
    %v2233 = vpop.f32.mrb[0].mxu0
    %v2234 = vadd.f32 %v1945, %v2233
    %v2235 = vpop.f32.mrb[0].mxu0
    %2236 = vmatprep.mubr.bf16.mxu0 0
    %2237 = vmatmul.mubr.bf16.gmra.mrb[0].mxu0 %v605
    %v2238 = vpop.f32.mrb[0].mxu0
    %v2239 = vadd.f32 %v1950, %v2238
    %v2240 = vpop.f32.mrb[0].mxu0
    %v2241 = vpop.f32.mrb[0].mxu0
    %v2242 = vadd.f32 %v1953, %v2241
    %v2243 = vpop.f32.mrb[0].mxu0
    %2244 = vmatprep.mubr.bf16.mxu0 0
    %2245 = vmatmul.mubr.bf16.gmra.mrb[0].mxu0 %v608
    %v2246 = vpop.f32.mrb[0].mxu0
    %v2247 = vadd.f32 %v1958, %v2246
    %v2248 = vpop.f32.mrb[0].mxu0
    %v2249 = vpop.f32.mrb[0].mxu0
    %v2250 = vadd.f32 %v1961, %v2249
    %v2251 = vpop.f32.mrb[0].mxu0
    %2252 = vmatprep.mubr.bf16.mxu0 0
    %2253 = vmatmul.mubr.bf16.gmra.mrb[0].mxu0 %v611
    %v2254 = vpop.f32.mrb[0].mxu0
    %v2255 = vadd.f32 %v1966, %v2254
    %v2256 = vpop.f32.mrb[0].mxu0
    %v2257 = vpop.f32.mrb[0].mxu0
    %v2258 = vadd.f32 %v1969, %v2257
    %v2259 = vpop.f32.mrb[0].mxu0
    %2260 = vmatprep.mubr.bf16.mxu0 0
    %2261 = vmatmul.mubr.bf16.gmra.mrb[0].mxu0 %v614
    %v2262 = vpop.f32.mrb[0].mxu0
    %v2263 = vadd.f32 %v1974, %v2262
    %v2264 = vpop.f32.mrb[0].mxu0
    %v2265 = vpop.f32.mrb[0].mxu0
    %v2266 = vadd.f32 %v1977, %v2265
    %v2267 = vpop.f32.mrb[0].mxu0
    %2268 = vmatprep.mubr.bf16.mxu0 0
    %2269 = vmatmul.mubr.bf16.gmra.mrb[0].mxu0 %v617
    %v2270 = vpop.f32.mrb[0].mxu0
    %v2271 = vadd.f32 %v1982, %v2270
    %v2272 = vpop.f32.mrb[0].mxu0
    %v2273 = vpop.f32.mrb[0].mxu0
    %v2274 = vadd.f32 %v1985, %v2273
    %v2275 = vpop.f32.mrb[0].mxu0
    %2276 = vmatprep.mubr.bf16.mxu0 0
    %2277 = vmatmul.mubr.bf16.gmra.mrb[0].mxu0 %v620
    %v2278 = vpop.f32.mrb[0].mxu0
    %v2279 = vadd.f32 %v1990, %v2278
    %v2280 = vpop.f32.mrb[0].mxu0
    %v2281 = vpop.f32.mrb[0].mxu0
    %v2282 = vadd.f32 %v1993, %v2281
    %v2283 = vpop.f32.mrb[0].mxu0
    %2284 = vmatprep.mubr.bf16.mxu0 0
    %2285 = vmatmul.mubr.bf16.gmra.mrb[0].mxu0 %v623
    %v2286 = vpop.f32.mrb[0].mxu0
    %v2287 = vadd.f32 %v1998, %v2286
    %v2288 = vpop.f32.mrb[0].mxu0
    %v2289 = vpop.f32.mrb[0].mxu0
    %v2290 = vadd.f32 %v2001, %v2289
    %v2291 = vpop.f32.mrb[0].mxu0
    %2292 = vmatprep.mubr.bf16.mxu0 0
    %2293 = vmatmul.mubr.bf16.gmra.mrb[0].mxu0 %v626
    %v2294 = vpop.f32.mrb[0].mxu0
    %v2295 = vadd.f32 %v2006, %v2294
    %v2296 = vpop.f32.mrb[0].mxu0
    %v2297 = vpop.f32.mrb[0].mxu0
    %v2298 = vadd.f32 %v2009, %v2297
    %v2299 = vpop.f32.mrb[0].mxu0
    %2300 = vmatprep.mubr.bf16.mxu0 0
    %2301 = vmatmul.mubr.bf16.gmra.mrb[0].mxu0 %v629
    %v2302 = vpop.f32.mrb[0].mxu0
    %v2303 = vadd.f32 %v2014, %v2302
    %v2304 = vpop.f32.mrb[0].mxu0
    %v2305 = vpop.f32.mrb[0].mxu0
    %v2306 = vadd.f32 %v2017, %v2305
    %v2307 = vpop.f32.mrb[0].mxu0
    %2308 = vmatprep.mubr.bf16.mxu0 0
    %2309 = vmatmul.mubr.bf16.gmra.mrb[0].mxu0 %v632
    %v2310 = vpop.f32.mrb[0].mxu0
    %v2311 = vadd.f32 %v2022, %v2310
    %v2312 = vpop.f32.mrb[0].mxu0
    %v2313 = vpop.f32.mrb[0].mxu0
    %v2314 = vadd.f32 %v2025, %v2313
    %v2315 = vpop.f32.mrb[0].mxu0
    %2316 = vmatprep.mubr.bf16.mxu0 0
    %2317 = vmatmul.mubr.bf16.gmra.mrb[0].mxu0 %v635
    %v2318 = vpop.f32.mrb[0].mxu0
    %v2319 = vadd.f32 %v2030, %v2318
    %v2320 = vpop.f32.mrb[0].mxu0
    %v2321 = vpop.f32.mrb[0].mxu0
    %v2322 = vadd.f32 %v2033, %v2321
    %v2323 = vpop.f32.mrb[0].mxu0
    %2324 = vmatprep.mubr.bf16.mxu0 0
    %2325 = vmatmul.mubr.bf16.gmra.mrb[0].mxu0 %v638
    %v2326 = vpop.f32.mrb[0].mxu0
    %v2327 = vadd.f32 %v2038, %v2326
    %v2328 = vpop.f32.mrb[0].mxu0
    %v2329 = vpop.f32.mrb[0].mxu0
    %v2330 = vadd.f32 %v2041, %v2329
    %v2331 = vpop.f32.mrb[0].mxu0
    %2332 = vmatprep.mubr.bf16.mxu0 0
    %2333 = vmatmul.mubr.bf16.gmra.mrb[0].mxu0 %v641
    %v2334 = vpop.f32.mrb[0].mxu0
    %v2335 = vadd.f32 %v2046, %v2334
    %v2336 = vpop.f32.mrb[0].mxu0
    %v2337 = vpop.f32.mrb[0].mxu0
    %v2338 = vadd.f32 %v2049, %v2337
    %v2339 = vpop.f32.mrb[0].mxu0
    %2340 = vmatprep.mubr.bf16.mxu0 0
    %2341 = vmatmul.mubr.bf16.gmra.mrb[0].mxu0 %v644
    %v2342 = vpop.f32.mrb[0].mxu0
    %v2343 = vadd.f32 %v2054, %v2342
    %v2344 = vpop.f32.mrb[0].mxu0
    %v2345 = vpop.f32.mrb[0].mxu0
    %v2346 = vadd.f32 %v2057, %v2345
    %v2347 = vpop.f32.mrb[0].mxu0
    %2348 = vmatprep.mubr.bf16.mxu0 0
    %2349 = vmatmul.mubr.bf16.gmra.mrb[0].mxu0 %v647
    %v2350 = vpop.f32.mrb[0].mxu0
    %v2351 = vadd.f32 %v2062, %v2350
    %v2352 = vpop.f32.mrb[0].mxu0
    %v2353 = vpop.f32.mrb[0].mxu0
    %v2354 = vadd.f32 %v2065, %v2353
    %v2355 = vpop.f32.mrb[0].mxu0
    %2356 = vmatprep.mubr.bf16.mxu0 0
    %2357 = vmatmul.mubr.bf16.gmra.mrb[0].mxu0 %v650
    %v2358 = vpop.f32.mrb[0].mxu0
    %v2359 = vadd.f32 %v2070, %v2358
    %v2360 = vpop.f32.mrb[0].mxu0
    %v2361 = vpop.f32.mrb[0].mxu0
    %v2362 = vadd.f32 %v2073, %v2361
    %v2363 = vpop.f32.mrb[0].mxu0
    %2364 = vmatprep.mubr.bf16.mxu0 0
    %2365 = vmatmul.mubr.bf16.gmra.mrb[0].mxu0 %v653
    %v2366 = vpop.f32.mrb[0].mxu0
    %v2367 = vadd.f32 %v2078, %v2366
    %v2368 = vpop.f32.mrb[0].mxu0
    %v2369 = vpop.f32.mrb[0].mxu0
    %v2370 = vadd.f32 %v2081, %v2369
    %v2371 = vpop.f32.mrb[0].mxu0
    %2372 = vmatprep.mubr.bf16.mxu0 0
    %2373 = vmatmul.mubr.bf16.gmra.mrb[0].mxu0 %v656
    %v2374 = vpop.f32.mrb[0].mxu0
    %v2375 = vadd.f32 %v2086, %v2374
    %v2376 = vpop.f32.mrb[0].mxu0
    %v2377 = vpop.f32.mrb[0].mxu0
    %v2378 = vadd.f32 %v2089, %v2377
    %v2379 = vpop.f32.mrb[0].mxu0
    %2380 = vmatprep.mubr.bf16.mxu0 0
    %2381 = vmatmul.mubr.bf16.gmra.mrb[0].mxu0 %v659
    %v2382 = vpop.f32.mrb[0].mxu0
    %v2383 = vadd.f32 %v2094, %v2382
    %v2384 = vpop.f32.mrb[0].mxu0
    %v2385 = vpop.f32.mrb[0].mxu0
    %v2386 = vadd.f32 %v2097, %v2385
    %v2387 = vpop.f32.mrb[0].mxu0
    %2388 = vmatprep.mubr.bf16.mxu0 0
    %2389 = vmatmul.mubr.bf16.gmra.mrb[0].mxu0 %v662
    %v2390 = vpop.f32.mrb[0].mxu0
    %v2391 = vadd.f32 %v2102, %v2390
    %v2392 = vpop.f32.mrb[0].mxu0
    %v2393 = vpop.f32.mrb[0].mxu0
    %v2394 = vadd.f32 %v2105, %v2393
    %v2395 = vpop.f32.mrb[0].mxu0
    %2396 = vmatprep.mubr.bf16.mxu0 0
    %2397 = vmatmul.mubr.bf16.gmra.mrb[0].mxu0 %v665
    %v2398 = vpop.f32.mrb[0].mxu0
    %v2399 = vadd.f32 %v2110, %v2398
    %v2400 = vpop.f32.mrb[0].mxu0
    %v2401 = vpop.f32.mrb[0].mxu0
    %v2402 = vadd.f32 %v2113, %v2401
    %v2403 = vpop.f32.mrb[0].mxu0
    %2404 = vmatprep.mubr.bf16.mxu0 0
    %2405 = vmatmul.mubr.bf16.gmra.mrb[0].mxu0 %v668
    %v2406 = vpop.f32.mrb[0].mxu0
    %v2407 = vadd.f32 %v2118, %v2406
    %v2408 = vpop.f32.mrb[0].mxu0
    %v2409 = vpop.f32.mrb[0].mxu0
    %v2410 = vadd.f32 %v2121, %v2409
    %v2411 = vpop.f32.mrb[0].mxu0
    %2412 = vmatprep.mubr.bf16.mxu0 0
    %2413 = vmatmul.mubr.bf16.gmra.mrb[0].mxu0 %v671
    %v2414 = vpop.f32.mrb[0].mxu0
    %v2415 = vadd.f32 %v2126, %v2414
    %v2416 = vpop.f32.mrb[0].mxu0
    %v2417 = vpop.f32.mrb[0].mxu0
    %v2418 = vadd.f32 %v2129, %v2417
    %v2419 = vpop.f32.mrb[0].mxu0
    %2420 = vmatprep.mubr.bf16.mxu0 0
    %2421 = vmatmul.mubr.bf16.gmra.mrb[0].mxu0 %v674
    %v2422 = vpop.f32.mrb[0].mxu0
    %v2423 = vadd.f32 %v2134, %v2422
    %v2424 = vpop.f32.mrb[0].mxu0
    %v2425 = vpop.f32.mrb[0].mxu0
    %v2426 = vadd.f32 %v2137, %v2425
    %v2427 = vpop.f32.mrb[0].mxu0
    %2428 = vmatprep.mubr.bf16.mxu0 0
    %2429 = vmatmul.mubr.bf16.gmra.mrb[0].mxu0 %v677
    %v2430 = vpop.f32.mrb[0].mxu0
    %v2431 = vadd.f32 %v2142, %v2430
    %v2432 = vpop.f32.mrb[0].mxu0
    %v2433 = vpop.f32.mrb[0].mxu0
    %v2434 = vadd.f32 %v2145, %v2433
    %v2435 = vpop.f32.mrb[0].mxu0
    %2436 = vmatprep.mubr.bf16.mxu0 0
    %2437 = vmatmul.mubr.bf16.gmra.mrb[0].mxu0 %v680
    %v2438 = vpop.f32.mrb[0].mxu0
    %v2439 = vadd.f32 %v2150, %v2438
    %v2440 = vpop.f32.mrb[0].mxu0
    %v2441 = vpop.f32.mrb[0].mxu0
    %v2442 = vadd.f32 %v2153, %v2441
    %v2443 = vpop.f32.mrb[0].mxu0
    %2444 = vdwg.mxu0
    %v2445 = vpack.c.bf16 %v1553, %v1549
    %v2446 = vpack.c.bf16 %v1555, %v1551
    %v2447 = vpack.c.bf16 %v2194, %v2191
    %v2448 = vpack.c.bf16 %v1563, %v1559
    %v2449 = vpack.c.bf16 %v1565, %v1561
    %v2450 = vpack.c.bf16 %v2202, %v2199
    %v2451 = vpack.c.bf16 %v1573, %v1569
    %v2452 = vpack.c.bf16 %v1575, %v1571
    %v2453 = vpack.c.bf16 %v2210, %v2207
    %v2454 = vpack.c.bf16 %v1583, %v1579
    %v2455 = vpack.c.bf16 %v1585, %v1581
    %v2456 = vpack.c.bf16 %v2218, %v2215
    %v2457 = vpack.c.bf16 %v1593, %v1589
    %v2458 = vpack.c.bf16 %v1595, %v1591
    %v2459 = vpack.c.bf16 %v2226, %v2223
    %v2460 = vpack.c.bf16 %v1603, %v1599
    %v2461 = vpack.c.bf16 %v1605, %v1601
    %v2462 = vpack.c.bf16 %v2234, %v2231
    %v2463 = vpack.c.bf16 %v1613, %v1609
    %v2464 = vpack.c.bf16 %v1615, %v1611
    %v2465 = vpack.c.bf16 %v2242, %v2239
    %v2466 = vpack.c.bf16 %v1623, %v1619
    %v2467 = vpack.c.bf16 %v1625, %v1621
    %v2468 = vpack.c.bf16 %v2250, %v2247
    %v2469 = vpack.c.bf16 %v1633, %v1629
    %v2470 = vpack.c.bf16 %v1635, %v1631
    %v2471 = vpack.c.bf16 %v2258, %v2255
    %v2472 = vpack.c.bf16 %v1643, %v1639
    %v2473 = vpack.c.bf16 %v1645, %v1641
    %v2474 = vpack.c.bf16 %v2266, %v2263
    %v2475 = vpack.c.bf16 %v1653, %v1649
    %v2476 = vpack.c.bf16 %v1655, %v1651
    %v2477 = vpack.c.bf16 %v2274, %v2271
    %v2478 = vpack.c.bf16 %v1663, %v1659
    %v2479 = vpack.c.bf16 %v1665, %v1661
    %v2480 = vpack.c.bf16 %v2282, %v2279
    %v2481 = vpack.c.bf16 %v1673, %v1669
    %v2482 = vpack.c.bf16 %v1675, %v1671
    %v2483 = vpack.c.bf16 %v2290, %v2287
    %v2484 = vpack.c.bf16 %v1683, %v1679
    %v2485 = vpack.c.bf16 %v1685, %v1681
    %v2486 = vpack.c.bf16 %v2298, %v2295
    %v2487 = vpack.c.bf16 %v1693, %v1689
    %v2488 = vpack.c.bf16 %v1695, %v1691
    %v2489 = vpack.c.bf16 %v2306, %v2303
    %v2490 = vpack.c.bf16 %v1703, %v1699
    %v2491 = vpack.c.bf16 %v1705, %v1701
    %v2492 = vpack.c.bf16 %v2314, %v2311
    %v2493 = vpack.c.bf16 %v1713, %v1709
    %v2494 = vpack.c.bf16 %v1715, %v1711
    %v2495 = vpack.c.bf16 %v2322, %v2319
    %v2496 = vpack.c.bf16 %v1723, %v1719
    %v2497 = vpack.c.bf16 %v1725, %v1721
    %v2498 = vpack.c.bf16 %v2330, %v2327
    %v2499 = vpack.c.bf16 %v1733, %v1729
    %v2500 = vpack.c.bf16 %v1735, %v1731
    %v2501 = vpack.c.bf16 %v2338, %v2335
    %v2502 = vpack.c.bf16 %v1743, %v1739
    %v2503 = vpack.c.bf16 %v1745, %v1741
    %v2504 = vpack.c.bf16 %v2346, %v2343
    %v2505 = vpack.c.bf16 %v1753, %v1749
    %v2506 = vpack.c.bf16 %v1755, %v1751
    %v2507 = vpack.c.bf16 %v2354, %v2351
    %v2508 = vpack.c.bf16 %v1763, %v1759
    %v2509 = vpack.c.bf16 %v1765, %v1761
    %v2510 = vpack.c.bf16 %v2362, %v2359
    %v2511 = vpack.c.bf16 %v1773, %v1769
    %v2512 = vpack.c.bf16 %v1775, %v1771
    %v2513 = vpack.c.bf16 %v2370, %v2367
    %v2514 = vpack.c.bf16 %v1783, %v1779
    %v2515 = vpack.c.bf16 %v1785, %v1781
    %v2516 = vpack.c.bf16 %v2378, %v2375
    %v2517 = vpack.c.bf16 %v1793, %v1789
    %v2518 = vpack.c.bf16 %v1795, %v1791
    %v2519 = vpack.c.bf16 %v2386, %v2383
    %v2520 = vpack.c.bf16 %v1803, %v1799
    %v2521 = vpack.c.bf16 %v1805, %v1801
    %v2522 = vpack.c.bf16 %v2394, %v2391
    %v2523 = vpack.c.bf16 %v1813, %v1809
    %v2524 = vpack.c.bf16 %v1815, %v1811
    %v2525 = vpack.c.bf16 %v2402, %v2399
    %v2526 = vpack.c.bf16 %v1823, %v1819
    %v2527 = vpack.c.bf16 %v1825, %v1821
    %v2528 = vpack.c.bf16 %v2410, %v2407
    %v2529 = vpack.c.bf16 %v1833, %v1829
    %v2530 = vpack.c.bf16 %v1835, %v1831
    %v2531 = vpack.c.bf16 %v2418, %v2415
    %v2532 = vpack.c.bf16 %v1843, %v1839
    %v2533 = vpack.c.bf16 %v1845, %v1841
    %v2534 = vpack.c.bf16 %v2426, %v2423
    %v2535 = vpack.c.bf16 %v1853, %v1849
    %v2536 = vpack.c.bf16 %v1855, %v1851
    %v2537 = vpack.c.bf16 %v2434, %v2431
    %v2538 = vpack.c.bf16 %v1863, %v1859
    %v2539 = vpack.c.bf16 %v1865, %v1861
    %v2540 = vpack.c.bf16 %v2442, %v2439
    %v2637 = vunpack.c.l.b16 %v2445
    %v2638 = vunpack.c.l.b16 %v2446
    %v2639 = vunpack.c.l.b16 %v2447
    %v2640 = vunpack.c.h.b16 %v2445
    %v2641 = vunpack.c.h.b16 %v2446
    %v2642 = vunpack.c.h.b16 %v2447
    %v2643 = vunpack.c.l.b16 %v2448
    %v2644 = vunpack.c.l.b16 %v2449
    %v2645 = vunpack.c.l.b16 %v2450
    %v2646 = vunpack.c.h.b16 %v2448
    %v2647 = vunpack.c.h.b16 %v2449
    %v2648 = vunpack.c.h.b16 %v2450
    %v2649 = vunpack.c.l.b16 %v2451
    %v2650 = vunpack.c.l.b16 %v2452
    %v2651 = vunpack.c.l.b16 %v2453
    %v2652 = vunpack.c.h.b16 %v2451
    %v2653 = vunpack.c.h.b16 %v2452
    %v2654 = vunpack.c.h.b16 %v2453
    %v2655 = vunpack.c.l.b16 %v2454
    %v2656 = vunpack.c.l.b16 %v2455
    %v2657 = vunpack.c.l.b16 %v2456
    %v2658 = vunpack.c.h.b16 %v2454
    %v2659 = vunpack.c.h.b16 %v2455
    %v2660 = vunpack.c.h.b16 %v2456
    %v2661 = vunpack.c.l.b16 %v2457
    %v2662 = vunpack.c.l.b16 %v2458
    %v2663 = vunpack.c.l.b16 %v2459
    %v2664 = vunpack.c.h.b16 %v2457
    %v2665 = vunpack.c.h.b16 %v2458
    %v2666 = vunpack.c.h.b16 %v2459
    %v2667 = vunpack.c.l.b16 %v2460
    %v2668 = vunpack.c.l.b16 %v2461
    %v2669 = vunpack.c.l.b16 %v2462
    %v2670 = vunpack.c.h.b16 %v2460
    %v2671 = vunpack.c.h.b16 %v2461
    %v2672 = vunpack.c.h.b16 %v2462
    %v2673 = vunpack.c.l.b16 %v2463
    %v2674 = vunpack.c.l.b16 %v2464
    %v2675 = vunpack.c.l.b16 %v2465
    %v2676 = vunpack.c.h.b16 %v2463
    %v2677 = vunpack.c.h.b16 %v2464
    %v2678 = vunpack.c.h.b16 %v2465
    %v2679 = vunpack.c.l.b16 %v2466
    %v2680 = vunpack.c.l.b16 %v2467
    %v2681 = vunpack.c.l.b16 %v2468
    %v2682 = vunpack.c.h.b16 %v2466
    %v2683 = vunpack.c.h.b16 %v2467
    %v2684 = vunpack.c.h.b16 %v2468
    %v2685 = vunpack.c.l.b16 %v2469
    %v2686 = vunpack.c.l.b16 %v2470
    %v2687 = vunpack.c.l.b16 %v2471
    %v2688 = vunpack.c.h.b16 %v2469
    %v2689 = vunpack.c.h.b16 %v2470
    %v2690 = vunpack.c.h.b16 %v2471
    %v2691 = vunpack.c.l.b16 %v2472
    %v2692 = vunpack.c.l.b16 %v2473
    %v2693 = vunpack.c.l.b16 %v2474
    %v2694 = vunpack.c.h.b16 %v2472
    %v2695 = vunpack.c.h.b16 %v2473
    %v2696 = vunpack.c.h.b16 %v2474
    %v2697 = vunpack.c.l.b16 %v2475
    %v2698 = vunpack.c.l.b16 %v2476
    %v2699 = vunpack.c.l.b16 %v2477
    %v2700 = vunpack.c.h.b16 %v2475
    %v2701 = vunpack.c.h.b16 %v2476
    %v2702 = vunpack.c.h.b16 %v2477
    %v2703 = vunpack.c.l.b16 %v2478
    %v2704 = vunpack.c.l.b16 %v2479
    %v2705 = vunpack.c.l.b16 %v2480
    %v2706 = vunpack.c.h.b16 %v2478
    %v2707 = vunpack.c.h.b16 %v2479
    %v2708 = vunpack.c.h.b16 %v2480
    %v2709 = vunpack.c.l.b16 %v2481
    %v2710 = vunpack.c.l.b16 %v2482
    %v2711 = vunpack.c.l.b16 %v2483
    %v2712 = vunpack.c.h.b16 %v2481
    %v2713 = vunpack.c.h.b16 %v2482
    %v2714 = vunpack.c.h.b16 %v2483
    %v2715 = vunpack.c.l.b16 %v2484
    %v2716 = vunpack.c.l.b16 %v2485
    %v2717 = vunpack.c.l.b16 %v2486
    %v2718 = vunpack.c.h.b16 %v2484
    %v2719 = vunpack.c.h.b16 %v2485
    %v2720 = vunpack.c.h.b16 %v2486
    %v2721 = vunpack.c.l.b16 %v2487
    %v2722 = vunpack.c.l.b16 %v2488
    %v2723 = vunpack.c.l.b16 %v2489
    %v2724 = vunpack.c.h.b16 %v2487
    %v2725 = vunpack.c.h.b16 %v2488
    %v2726 = vunpack.c.h.b16 %v2489
    %v2727 = vunpack.c.l.b16 %v2490
    %v2728 = vunpack.c.l.b16 %v2491
    %v2729 = vunpack.c.l.b16 %v2492
    %v2730 = vunpack.c.h.b16 %v2490
    %v2731 = vunpack.c.h.b16 %v2491
    %v2732 = vunpack.c.h.b16 %v2492
    %v2733 = vunpack.c.l.b16 %v2493
    %v2734 = vunpack.c.l.b16 %v2494
    %v2735 = vunpack.c.l.b16 %v2495
    %v2736 = vunpack.c.h.b16 %v2493
    %v2737 = vunpack.c.h.b16 %v2494
    %v2738 = vunpack.c.h.b16 %v2495
    %v2739 = vunpack.c.l.b16 %v2496
    %v2740 = vunpack.c.l.b16 %v2497
    %v2741 = vunpack.c.l.b16 %v2498
    %v2742 = vunpack.c.h.b16 %v2496
    %v2743 = vunpack.c.h.b16 %v2497
    %v2744 = vunpack.c.h.b16 %v2498
    %v2745 = vunpack.c.l.b16 %v2499
    %v2746 = vunpack.c.l.b16 %v2500
    %v2747 = vunpack.c.l.b16 %v2501
    %v2748 = vunpack.c.h.b16 %v2499
    %v2749 = vunpack.c.h.b16 %v2500
    %v2750 = vunpack.c.h.b16 %v2501
    %v2751 = vunpack.c.l.b16 %v2502
    %v2752 = vunpack.c.l.b16 %v2503
    %v2753 = vunpack.c.l.b16 %v2504
    %v2754 = vunpack.c.h.b16 %v2502
    %v2755 = vunpack.c.h.b16 %v2503
    %v2756 = vunpack.c.h.b16 %v2504
    %v2757 = vunpack.c.l.b16 %v2505
    %v2758 = vunpack.c.l.b16 %v2506
    %v2759 = vunpack.c.l.b16 %v2507
    %v2760 = vunpack.c.h.b16 %v2505
    %v2761 = vunpack.c.h.b16 %v2506
    %v2762 = vunpack.c.h.b16 %v2507
    %v2763 = vunpack.c.l.b16 %v2508
    %v2764 = vunpack.c.l.b16 %v2509
    %v2765 = vunpack.c.l.b16 %v2510
    %v2766 = vunpack.c.h.b16 %v2508
    %v2767 = vunpack.c.h.b16 %v2509
    %v2768 = vunpack.c.h.b16 %v2510
    %v2769 = vunpack.c.l.b16 %v2511
    %v2770 = vunpack.c.l.b16 %v2512
    %v2771 = vunpack.c.l.b16 %v2513
    %v2772 = vunpack.c.h.b16 %v2511
    %v2773 = vunpack.c.h.b16 %v2512
    %v2774 = vunpack.c.h.b16 %v2513
    %v2775 = vunpack.c.l.b16 %v2514
    %v2776 = vunpack.c.l.b16 %v2515
    %v2777 = vunpack.c.l.b16 %v2516
    %v2778 = vunpack.c.h.b16 %v2514
    %v2779 = vunpack.c.h.b16 %v2515
    %v2780 = vunpack.c.h.b16 %v2516
    %v2781 = vunpack.c.l.b16 %v2517
    %v2782 = vunpack.c.l.b16 %v2518
    %v2783 = vunpack.c.l.b16 %v2519
    %v2784 = vunpack.c.h.b16 %v2517
    %v2785 = vunpack.c.h.b16 %v2518
    %v2786 = vunpack.c.h.b16 %v2519
    %v2787 = vunpack.c.l.b16 %v2520
    %v2788 = vunpack.c.l.b16 %v2521
    %v2789 = vunpack.c.l.b16 %v2522
    %v2790 = vunpack.c.h.b16 %v2520
    %v2791 = vunpack.c.h.b16 %v2521
    %v2792 = vunpack.c.h.b16 %v2522
    %v2793 = vunpack.c.l.b16 %v2523
    %v2794 = vunpack.c.l.b16 %v2524
    %v2795 = vunpack.c.l.b16 %v2525
    %v2796 = vunpack.c.h.b16 %v2523
    %v2797 = vunpack.c.h.b16 %v2524
    %v2798 = vunpack.c.h.b16 %v2525
    %v2799 = vunpack.c.l.b16 %v2526
    %v2800 = vunpack.c.l.b16 %v2527
    %v2801 = vunpack.c.l.b16 %v2528
    %v2802 = vunpack.c.h.b16 %v2526
    %v2803 = vunpack.c.h.b16 %v2527
    %v2804 = vunpack.c.h.b16 %v2528
    %v2805 = vunpack.c.l.b16 %v2529
    %v2806 = vunpack.c.l.b16 %v2530
    %v2807 = vunpack.c.l.b16 %v2531
    %v2808 = vunpack.c.h.b16 %v2529
    %v2809 = vunpack.c.h.b16 %v2530
    %v2810 = vunpack.c.h.b16 %v2531
    %v2811 = vunpack.c.l.b16 %v2532
    %v2812 = vunpack.c.l.b16 %v2533
    %v2813 = vunpack.c.l.b16 %v2534
    %v2814 = vunpack.c.h.b16 %v2532
    %v2815 = vunpack.c.h.b16 %v2533
    %v2816 = vunpack.c.h.b16 %v2534
    %v2817 = vunpack.c.l.b16 %v2535
    %v2818 = vunpack.c.l.b16 %v2536
    %v2819 = vunpack.c.l.b16 %v2537
    %v2820 = vunpack.c.h.b16 %v2535
    %v2821 = vunpack.c.h.b16 %v2536
    %v2822 = vunpack.c.h.b16 %v2537
    %v2823 = vunpack.c.l.b16 %v2538
    %v2824 = vunpack.c.l.b16 %v2539
    %v2825 = vunpack.c.l.b16 %v2540
    %v2826 = vunpack.c.h.b16 %v2538
    %v2827 = vunpack.c.h.b16 %v2539
    %v2828 = vunpack.c.h.b16 %v2540
    %v2829 = vpack.c.b16 %v2638, %v2637
    %v2830 = vpack.c.b16 %v2639, %v2639
    %v2831 = vpack.c.b16 %v2641, %v2640
    %v2832 = vpack.c.b16 %v2642, %v2642
    %v2833 = vpack.c.b16 %v2644, %v2643
    %v2834 = vpack.c.b16 %v2645, %v2645
    %v2835 = vpack.c.b16 %v2647, %v2646
    %v2836 = vpack.c.b16 %v2648, %v2648
    %v2837 = vpack.c.b16 %v2650, %v2649
    %v2838 = vpack.c.b16 %v2651, %v2651
    %v2839 = vpack.c.b16 %v2653, %v2652
    %v2840 = vpack.c.b16 %v2654, %v2654
    %v2841 = vpack.c.b16 %v2656, %v2655
    %v2842 = vpack.c.b16 %v2657, %v2657
    %v2843 = vpack.c.b16 %v2659, %v2658
    %v2844 = vpack.c.b16 %v2660, %v2660
    %v2845 = vpack.c.b16 %v2662, %v2661
    %v2846 = vpack.c.b16 %v2663, %v2663
    %v2847 = vpack.c.b16 %v2665, %v2664
    %v2848 = vpack.c.b16 %v2666, %v2666
    %v2849 = vpack.c.b16 %v2668, %v2667
    %v2850 = vpack.c.b16 %v2669, %v2669
    %v2851 = vpack.c.b16 %v2671, %v2670
    %v2852 = vpack.c.b16 %v2672, %v2672
    %v2853 = vpack.c.b16 %v2674, %v2673
    %v2854 = vpack.c.b16 %v2675, %v2675
    %v2855 = vpack.c.b16 %v2677, %v2676
    %v2856 = vpack.c.b16 %v2678, %v2678
    %v2857 = vpack.c.b16 %v2680, %v2679
    %v2858 = vpack.c.b16 %v2681, %v2681
    %v2859 = vpack.c.b16 %v2683, %v2682
    %v2860 = vpack.c.b16 %v2684, %v2684
    %v2861 = vpack.c.b16 %v2686, %v2685
    %v2862 = vpack.c.b16 %v2687, %v2687
    %v2863 = vpack.c.b16 %v2689, %v2688
    %v2864 = vpack.c.b16 %v2690, %v2690
    %v2865 = vpack.c.b16 %v2692, %v2691
    %v2866 = vpack.c.b16 %v2693, %v2693
    %v2867 = vpack.c.b16 %v2695, %v2694
    %v2868 = vpack.c.b16 %v2696, %v2696
    %v2869 = vpack.c.b16 %v2698, %v2697
    %v2870 = vpack.c.b16 %v2699, %v2699
    %v2871 = vpack.c.b16 %v2701, %v2700
    %v2872 = vpack.c.b16 %v2702, %v2702
    %v2873 = vpack.c.b16 %v2704, %v2703
    %v2874 = vpack.c.b16 %v2705, %v2705
    %v2875 = vpack.c.b16 %v2707, %v2706
    %v2876 = vpack.c.b16 %v2708, %v2708
    %v2877 = vpack.c.b16 %v2710, %v2709
    %v2878 = vpack.c.b16 %v2711, %v2711
    %v2879 = vpack.c.b16 %v2713, %v2712
    %v2880 = vpack.c.b16 %v2714, %v2714
    %v2881 = vpack.c.b16 %v2716, %v2715
    %v2882 = vpack.c.b16 %v2717, %v2717
    %v2883 = vpack.c.b16 %v2719, %v2718
    %v2884 = vpack.c.b16 %v2720, %v2720
    %v2885 = vpack.c.b16 %v2722, %v2721
    %v2886 = vpack.c.b16 %v2723, %v2723
    %v2887 = vpack.c.b16 %v2725, %v2724
    %v2888 = vpack.c.b16 %v2726, %v2726
    %v2889 = vpack.c.b16 %v2728, %v2727
    %v2890 = vpack.c.b16 %v2729, %v2729
    %v2891 = vpack.c.b16 %v2731, %v2730
    %v2892 = vpack.c.b16 %v2732, %v2732
    %v2893 = vpack.c.b16 %v2734, %v2733
    %v2894 = vpack.c.b16 %v2735, %v2735
    %v2895 = vpack.c.b16 %v2737, %v2736
    %v2896 = vpack.c.b16 %v2738, %v2738
    %v2897 = vpack.c.b16 %v2740, %v2739
    %v2898 = vpack.c.b16 %v2741, %v2741
    %v2899 = vpack.c.b16 %v2743, %v2742
    %v2900 = vpack.c.b16 %v2744, %v2744
    %v2901 = vpack.c.b16 %v2746, %v2745
    %v2902 = vpack.c.b16 %v2747, %v2747
    %v2903 = vpack.c.b16 %v2749, %v2748
    %v2904 = vpack.c.b16 %v2750, %v2750
    %v2905 = vpack.c.b16 %v2752, %v2751
    %v2906 = vpack.c.b16 %v2753, %v2753
    %v2907 = vpack.c.b16 %v2755, %v2754
    %v2908 = vpack.c.b16 %v2756, %v2756
    %v2909 = vpack.c.b16 %v2758, %v2757
    %v2910 = vpack.c.b16 %v2759, %v2759
    %v2911 = vpack.c.b16 %v2761, %v2760
    %v2912 = vpack.c.b16 %v2762, %v2762
    %v2913 = vpack.c.b16 %v2764, %v2763
    %v2914 = vpack.c.b16 %v2765, %v2765
    %v2915 = vpack.c.b16 %v2767, %v2766
    %v2916 = vpack.c.b16 %v2768, %v2768
    %v2917 = vpack.c.b16 %v2770, %v2769
    %v2918 = vpack.c.b16 %v2771, %v2771
    %v2919 = vpack.c.b16 %v2773, %v2772
    %v2920 = vpack.c.b16 %v2774, %v2774
    %v2921 = vpack.c.b16 %v2776, %v2775
    %v2922 = vpack.c.b16 %v2777, %v2777
    %v2923 = vpack.c.b16 %v2779, %v2778
    %v2924 = vpack.c.b16 %v2780, %v2780
    %v2925 = vpack.c.b16 %v2782, %v2781
    %v2926 = vpack.c.b16 %v2783, %v2783
    %v2927 = vpack.c.b16 %v2785, %v2784
    %v2928 = vpack.c.b16 %v2786, %v2786
    %v2929 = vpack.c.b16 %v2788, %v2787
    %v2930 = vpack.c.b16 %v2789, %v2789
    %v2931 = vpack.c.b16 %v2791, %v2790
    %v2932 = vpack.c.b16 %v2792, %v2792
    %v2933 = vpack.c.b16 %v2794, %v2793
    %v2934 = vpack.c.b16 %v2795, %v2795
    %v2935 = vpack.c.b16 %v2797, %v2796
    %v2936 = vpack.c.b16 %v2798, %v2798
    %v2937 = vpack.c.b16 %v2800, %v2799
    %v2938 = vpack.c.b16 %v2801, %v2801
    %v2939 = vpack.c.b16 %v2803, %v2802
    %v2940 = vpack.c.b16 %v2804, %v2804
    %v2941 = vpack.c.b16 %v2806, %v2805
    %v2942 = vpack.c.b16 %v2807, %v2807
    %v2943 = vpack.c.b16 %v2809, %v2808
    %v2944 = vpack.c.b16 %v2810, %v2810
    %v2945 = vpack.c.b16 %v2812, %v2811
    %v2946 = vpack.c.b16 %v2813, %v2813
    %v2947 = vpack.c.b16 %v2815, %v2814
    %v2948 = vpack.c.b16 %v2816, %v2816
    %v2949 = vpack.c.b16 %v2818, %v2817
    %v2950 = vpack.c.b16 %v2819, %v2819
    %v2951 = vpack.c.b16 %v2821, %v2820
    %v2952 = vpack.c.b16 %v2822, %v2822
    %v2953 = vpack.c.b16 %v2824, %v2823
    %v2954 = vpack.c.b16 %v2825, %v2825
    %v2955 = vpack.c.b16 %v2827, %v2826
    %v2956 = vpack.c.b16 %v2828, %v2828
    %3085 = vst [vmem:[#allocation7] sm:$0xff] %v2829
    %3086 = vst [vmem:[#allocation7 + $0x8] sm:$0xf] %v2830
    %3087 = vst [vmem:[#allocation7 + $0xc] sm:$0xff] %v2831
    %3088 = vst [vmem:[#allocation7 + $0x14] sm:$0xf] %v2832
    %3089 = vst [vmem:[#allocation7 + $0x18] sm:$0xff] %v2833
    %3090 = vst [vmem:[#allocation7 + $0x20] sm:$0xf] %v2834
    %3091 = vst [vmem:[#allocation7 + $0x24] sm:$0xff] %v2835
    %3092 = vst [vmem:[#allocation7 + $0x2c] sm:$0xf] %v2836
    %3093 = vst [vmem:[#allocation7 + $0x30] sm:$0xff] %v2837
    %3094 = vst [vmem:[#allocation7 + $0x38] sm:$0xf] %v2838
    %3095 = vst [vmem:[#allocation7 + $0x3c] sm:$0xff] %v2839
    %3096 = vst [vmem:[#allocation7 + $0x44] sm:$0xf] %v2840
    %3097 = vst [vmem:[#allocation7 + $0x48] sm:$0xff] %v2841
    %3098 = vst [vmem:[#allocation7 + $0x50] sm:$0xf] %v2842
    %3099 = vst [vmem:[#allocation7 + $0x54] sm:$0xff] %v2843
    %3100 = vst [vmem:[#allocation7 + $0x5c] sm:$0xf] %v2844
    %3101 = vst [vmem:[#allocation7 + $0x60] sm:$0xff] %v2845
    %3102 = vst [vmem:[#allocation7 + $0x68] sm:$0xf] %v2846
    %3103 = vst [vmem:[#allocation7 + $0x6c] sm:$0xff] %v2847
    %3104 = vst [vmem:[#allocation7 + $0x74] sm:$0xf] %v2848
    %3105 = vst [vmem:[#allocation7 + $0x78] sm:$0xff] %v2849
    %3106 = vst [vmem:[#allocation7 + $0x80] sm:$0xf] %v2850
    %3107 = vst [vmem:[#allocation7 + $0x84] sm:$0xff] %v2851
    %3108 = vst [vmem:[#allocation7 + $0x8c] sm:$0xf] %v2852
    %3109 = vst [vmem:[#allocation7 + $0x90] sm:$0xff] %v2853
    %3110 = vst [vmem:[#allocation7 + $0x98] sm:$0xf] %v2854
    %3111 = vst [vmem:[#allocation7 + $0x9c] sm:$0xff] %v2855
    %3112 = vst [vmem:[#allocation7 + $0xa4] sm:$0xf] %v2856
    %3113 = vst [vmem:[#allocation7 + $0xa8] sm:$0xff] %v2857
    %3114 = vst [vmem:[#allocation7 + $0xb0] sm:$0xf] %v2858
    %3115 = vst [vmem:[#allocation7 + $0xb4] sm:$0xff] %v2859
    %3116 = vst [vmem:[#allocation7 + $0xbc] sm:$0xf] %v2860
    %3117 = vst [vmem:[#allocation7 + $0xc0] sm:$0xff] %v2861
    %3118 = vst [vmem:[#allocation7 + $0xc8] sm:$0xf] %v2862
    %3119 = vst [vmem:[#allocation7 + $0xcc] sm:$0xff] %v2863
    %3120 = vst [vmem:[#allocation7 + $0xd4] sm:$0xf] %v2864
    %3121 = vst [vmem:[#allocation7 + $0xd8] sm:$0xff] %v2865
    %3122 = vst [vmem:[#allocation7 + $0xe0] sm:$0xf] %v2866
    %3123 = vst [vmem:[#allocation7 + $0xe4] sm:$0xff] %v2867
    %3124 = vst [vmem:[#allocation7 + $0xec] sm:$0xf] %v2868
    %3125 = vst [vmem:[#allocation7 + $0xf0] sm:$0xff] %v2869
    %3126 = vst [vmem:[#allocation7 + $0xf8] sm:$0xf] %v2870
    %3127 = vst [vmem:[#allocation7 + $0xfc] sm:$0xff] %v2871
    %3128 = vst [vmem:[#allocation7 + $0x104] sm:$0xf] %v2872
    %3129 = vst [vmem:[#allocation7 + $0x108] sm:$0xff] %v2873
    %3130 = vst [vmem:[#allocation7 + $0x110] sm:$0xf] %v2874
    %3131 = vst [vmem:[#allocation7 + $0x114] sm:$0xff] %v2875
    %3132 = vst [vmem:[#allocation7 + $0x11c] sm:$0xf] %v2876
    %3133 = vst [vmem:[#allocation7 + $0x120] sm:$0xff] %v2877
    %3134 = vst [vmem:[#allocation7 + $0x128] sm:$0xf] %v2878
    %3135 = vst [vmem:[#allocation7 + $0x12c] sm:$0xff] %v2879
    %3136 = vst [vmem:[#allocation7 + $0x134] sm:$0xf] %v2880
    %3137 = vst [vmem:[#allocation7 + $0x138] sm:$0xff] %v2881
    %3138 = vst [vmem:[#allocation7 + $0x140] sm:$0xf] %v2882
    %3139 = vst [vmem:[#allocation7 + $0x144] sm:$0xff] %v2883
    %3140 = vst [vmem:[#allocation7 + $0x14c] sm:$0xf] %v2884
    %3141 = vst [vmem:[#allocation7 + $0x150] sm:$0xff] %v2885
    %3142 = vst [vmem:[#allocation7 + $0x158] sm:$0xf] %v2886
    %3143 = vst [vmem:[#allocation7 + $0x15c] sm:$0xff] %v2887
    %3144 = vst [vmem:[#allocation7 + $0x164] sm:$0xf] %v2888
    %3145 = vst [vmem:[#allocation7 + $0x168] sm:$0xff] %v2889
    %3146 = vst [vmem:[#allocation7 + $0x170] sm:$0xf] %v2890
    %3147 = vst [vmem:[#allocation7 + $0x174] sm:$0xff] %v2891
    %3148 = vst [vmem:[#allocation7 + $0x17c] sm:$0xf] %v2892
    %3149 = vst [vmem:[#allocation7 + $0x180] sm:$0xff] %v2893
    %3150 = vst [vmem:[#allocation7 + $0x188] sm:$0xf] %v2894
    %3151 = vst [vmem:[#allocation7 + $0x18c] sm:$0xff] %v2895
    %3152 = vst [vmem:[#allocation7 + $0x194] sm:$0xf] %v2896
    %3153 = vst [vmem:[#allocation7 + $0x198] sm:$0xff] %v2897
    %3154 = vst [vmem:[#allocation7 + $0x1a0] sm:$0xf] %v2898
    %3155 = vst [vmem:[#allocation7 + $0x1a4] sm:$0xff] %v2899
    %3156 = vst [vmem:[#allocation7 + $0x1ac] sm:$0xf] %v2900
    %3157 = vst [vmem:[#allocation7 + $0x1b0] sm:$0xff] %v2901
    %3158 = vst [vmem:[#allocation7 + $0x1b8] sm:$0xf] %v2902
    %3159 = vst [vmem:[#allocation7 + $0x1bc] sm:$0xff] %v2903
    %3160 = vst [vmem:[#allocation7 + $0x1c4] sm:$0xf] %v2904
    %3161 = vst [vmem:[#allocation7 + $0x1c8] sm:$0xff] %v2905
    %3162 = vst [vmem:[#allocation7 + $0x1d0] sm:$0xf] %v2906
    %3163 = vst [vmem:[#allocation7 + $0x1d4] sm:$0xff] %v2907
    %3164 = vst [vmem:[#allocation7 + $0x1dc] sm:$0xf] %v2908
    %3165 = vst [vmem:[#allocation7 + $0x1e0] sm:$0xff] %v2909
    %3166 = vst [vmem:[#allocation7 + $0x1e8] sm:$0xf] %v2910
    %3167 = vst [vmem:[#allocation7 + $0x1ec] sm:$0xff] %v2911
    %3168 = vst [vmem:[#allocation7 + $0x1f4] sm:$0xf] %v2912
    %3169 = vst [vmem:[#allocation7 + $0x1f8] sm:$0xff] %v2913
    %3170 = vst [vmem:[#allocation7 + $0x200] sm:$0xf] %v2914
    %3171 = vst [vmem:[#allocation7 + $0x204] sm:$0xff] %v2915
    %3172 = vst [vmem:[#allocation7 + $0x20c] sm:$0xf] %v2916
    %3173 = vst [vmem:[#allocation7 + $0x210] sm:$0xff] %v2917
    %3174 = vst [vmem:[#allocation7 + $0x218] sm:$0xf] %v2918
    %3175 = vst [vmem:[#allocation7 + $0x21c] sm:$0xff] %v2919
    %3176 = vst [vmem:[#allocation7 + $0x224] sm:$0xf] %v2920
    %3177 = vst [vmem:[#allocation7 + $0x228] sm:$0xff] %v2921
    %3178 = vst [vmem:[#allocation7 + $0x230] sm:$0xf] %v2922
    %3179 = vst [vmem:[#allocation7 + $0x234] sm:$0xff] %v2923
    %3180 = vst [vmem:[#allocation7 + $0x23c] sm:$0xf] %v2924
    %3181 = vst [vmem:[#allocation7 + $0x240] sm:$0xff] %v2925
    %3182 = vst [vmem:[#allocation7 + $0x248] sm:$0xf] %v2926
    %3183 = vst [vmem:[#allocation7 + $0x24c] sm:$0xff] %v2927
    %3184 = vst [vmem:[#allocation7 + $0x254] sm:$0xf] %v2928
    %3185 = vst [vmem:[#allocation7 + $0x258] sm:$0xff] %v2929
    %3186 = vst [vmem:[#allocation7 + $0x260] sm:$0xf] %v2930
    %3187 = vst [vmem:[#allocation7 + $0x264] sm:$0xff] %v2931
    %3188 = vst [vmem:[#allocation7 + $0x26c] sm:$0xf] %v2932
    %3189 = vst [vmem:[#allocation7 + $0x270] sm:$0xff] %v2933
    %3190 = vst [vmem:[#allocation7 + $0x278] sm:$0xf] %v2934
    %3191 = vst [vmem:[#allocation7 + $0x27c] sm:$0xff] %v2935
    %3192 = vst [vmem:[#allocation7 + $0x284] sm:$0xf] %v2936
    %3193 = vst [vmem:[#allocation7 + $0x288] sm:$0xff] %v2937
    %3194 = vst [vmem:[#allocation7 + $0x290] sm:$0xf] %v2938
    %3195 = vst [vmem:[#allocation7 + $0x294] sm:$0xff] %v2939
    %3196 = vst [vmem:[#allocation7 + $0x29c] sm:$0xf] %v2940
    %3197 = vst [vmem:[#allocation7 + $0x2a0] sm:$0xff] %v2941
    %3198 = vst [vmem:[#allocation7 + $0x2a8] sm:$0xf] %v2942
    %3199 = vst [vmem:[#allocation7 + $0x2ac] sm:$0xff] %v2943
    %3200 = vst [vmem:[#allocation7 + $0x2b4] sm:$0xf] %v2944
    %3201 = vst [vmem:[#allocation7 + $0x2b8] sm:$0xff] %v2945
    %3202 = vst [vmem:[#allocation7 + $0x2c0] sm:$0xf] %v2946
    %3203 = vst [vmem:[#allocation7 + $0x2c4] sm:$0xff] %v2947
    %3204 = vst [vmem:[#allocation7 + $0x2cc] sm:$0xf] %v2948
    %3205 = vst [vmem:[#allocation7 + $0x2d0] sm:$0xff] %v2949
    %3206 = vst [vmem:[#allocation7 + $0x2d8] sm:$0xf] %v2950
    %3207 = vst [vmem:[#allocation7 + $0x2dc] sm:$0xff] %v2951
    %3208 = vst [vmem:[#allocation7 + $0x2e4] sm:$0xf] %v2952
    %3209 = vst [vmem:[#allocation7 + $0x2e8] sm:$0xff] %v2953
    %3210 = vst [vmem:[#allocation7 + $0x2f0] sm:$0xf] %v2954
    %3211 = vst [vmem:[#allocation7 + $0x2f4] sm:$0xff] %v2955
    %3212 = vst [vmem:[#allocation7 + $0x2fc] sm:$0xf] %v2956
    // Predicated region
    $region18: #{dsi_predictor_forward.5} parent=1 // pred_check
      _
    $region19: #{dsi_predictor_forward.5} parent=1 // pred_check_branch
      %3214 = sbr.rel (0) target = $region21
    $region20: #{dsi_predictor_forward.5} parent=1 // pred_region
      %s3216 = ssub.s32 12288, 12288
      %3217 = vsyncadd [#allocation4], %s3216
      %s3218 = sshll.u32 [#allocation7], 4
      %s3219 = int_to_ptr.vmem [resolvable:$true] %s3218
      %3224 = dma.vmem_to_hbm [thread:$0]  %s3219, 12288, %s2, [#allocation4], 192, 192, 12
    $region21: #{dsi_predictor_forward.5} parent=1 // pred_fallthru
      _
    // Predicated region
    $region22: #{dsi_predictor_forward.5} parent=1 // pred_check
      _
    $region23: #{dsi_predictor_forward.5} parent=1 // pred_check_branch
      %3226 = sbr.rel (0) target = $region25
    $region24: #{dsi_predictor_forward.5} parent=1 // pred_region
      %3227 = dma.done [#allocation4], 12288
    $region25: #{dsi_predictor_forward.5} parent=1 // pred_fallthru
      _
    %3228 = vsyncpa [#allocation3], 1
    %3229 = vsyncpa [#allocation6], 1
    %3230 = vsyncpa [#allocation4], 1

// kernel: dsi_predictor_forward.8
$region0: #{dsi_predictor_forward.8}
  #allocation0 [shape = 'u32[]', space=smem, size = 0x4, offset = 0x4, fixed_abs, tag = 'smem constant byte address 0x4 - core index']
  #allocation1 [shape = 'u32[144,128]{1,0:T(1,128)}', space=vmem, size = 0x12000, scoped, tag = 'internal scratch']
  %s0 = inlined_call_operand.hbm [shape: bf16[512,512], index: 0, kind: input, shape index: {}]
  %s1 = inlined_call_operand.hbm [shape: bf16[512,384], index: 1, kind: input, shape index: {}]
  %s2 = inlined_call_operand.hbm [shape: bf16[512,384], index: 2, kind: output, shape index: {}]
  %s3 = sld [smem:[#allocation0]]
  $region26: #{dsi_predictor_forward.8} parent=0
    _
  %s5 = ssub.s32 1, %s3
  %s6 = scalar_select 0, %s5, %s3
  $region1: #{dsi_predictor_forward.8} parent=0
    #allocation2 [shape = 'u8[524288]{0}', space=vmem, size = 0x80000, scoped, tag = 'input window, operand 0, single buffered']
    #allocation3 [shape = 's32[1]{0}', space=sflag, size = 0x4, scoped, tag = 'scoped memory for dsi_predictor_forward.8']
    #allocation4 [shape = 's32[1]{0}', space=sflag, size = 0x4, scoped, tag = 'scoped memory for dsi_predictor_forward.8']
    #allocation5 [shape = 'u8[393216]{0}', space=vmem, size = 0x60000, scoped, tag = 'input window, operand 1, single buffered']
    #allocation6 [shape = 's32[1]{0}', space=sflag, size = 0x4, scoped, tag = 'scoped memory for dsi_predictor_forward.8']
    #allocation7 [shape = 'u8[393216]{0}', space=vmem, size = 0x60000, scoped, tag = 'output window, operand 0, single buffered']
    %7 = vsyncpa [#allocation3], 0
    %8 = vsyncpa [#allocation6], 0
    %9 = vsyncpa [#allocation4], 0
    // Predicated region
    $region2: #{dsi_predictor_forward.8} parent=1 // pred_check
      _
    $region3: #{dsi_predictor_forward.8} parent=1 // pred_check_branch
      %11 = sbr.rel (0) target = $region5
    $region4: #{dsi_predictor_forward.8} parent=1 // pred_region
      %s13 = ssub.s32 16384, 16384
      %14 = vsyncadd [#allocation3], %s13
      %s15 = sshll.u32 [#allocation2], 4
      %s16 = int_to_ptr.vmem [resolvable:$true] %s15
      %21 = dma.hbm_to_vmem [thread:$0]  %s0, 16384, %s16, [#allocation3], 256, 256, 16
    $region5: #{dsi_predictor_forward.8} parent=1 // pred_fallthru
      _
    // Predicated region
    $region6: #{dsi_predictor_forward.8} parent=1 // pred_check
      _
    $region7: #{dsi_predictor_forward.8} parent=1 // pred_check_branch
      %23 = sbr.rel (0) target = $region9
    $region8: #{dsi_predictor_forward.8} parent=1 // pred_region
      %s25 = ssub.s32 12288, 12288
      %26 = vsyncadd [#allocation6], %s25
      %s27 = sshll.u32 [#allocation5], 4
      %s28 = int_to_ptr.vmem [resolvable:$true] %s27
      %33 = dma.hbm_to_vmem [thread:$0]  %s1, 12288, %s28, [#allocation6], 192, 192, 12
    $region9: #{dsi_predictor_forward.8} parent=1 // pred_fallthru
      _
    // Predicated region
    $region10: #{dsi_predictor_forward.8} parent=1 // pred_check
      _
    $region11: #{dsi_predictor_forward.8} parent=1 // pred_check_branch
      %35 = sbr.rel (0) target = $region13
    $region12: #{dsi_predictor_forward.8} parent=1 // pred_region
      %36 = dma.done [#allocation3], 16384
    $region13: #{dsi_predictor_forward.8} parent=1 // pred_fallthru
      _
    // Predicated region
    $region14: #{dsi_predictor_forward.8} parent=1 // pred_check
      _
    $region15: #{dsi_predictor_forward.8} parent=1 // pred_check_branch
      %38 = sbr.rel (0) target = $region17
    $region16: #{dsi_predictor_forward.8} parent=1 // pred_region
      %39 = dma.done [#allocation6], 12288
    $region17: #{dsi_predictor_forward.8} parent=1 // pred_fallthru
      _
    %v41 = vld [vmem:[#allocation2] sm:$0xff]
    %v42 = vld [vmem:[#allocation2 + $0x8] sm:$0xff]
    %v43 = vld [vmem:[#allocation2 + $0x10] sm:$0xff]
    %v44 = vld [vmem:[#allocation2 + $0x18] sm:$0xff]
    %v45 = vld [vmem:[#allocation2 + $0x20] sm:$0xff]
    %v46 = vld [vmem:[#allocation2 + $0x28] sm:$0xff]
    %v47 = vld [vmem:[#allocation2 + $0x30] sm:$0xff]
    %v48 = vld [vmem:[#allocation2 + $0x38] sm:$0xff]
    %v49 = vld [vmem:[#allocation2 + $0x40] sm:$0xff]
    %v50 = vld [vmem:[#allocation2 + $0x48] sm:$0xff]
    %v51 = vld [vmem:[#allocation2 + $0x50] sm:$0xff]
    %v52 = vld [vmem:[#allocation2 + $0x58] sm:$0xff]
    %v53 = vld [vmem:[#allocation2 + $0x60] sm:$0xff]
    %v54 = vld [vmem:[#allocation2 + $0x68] sm:$0xff]
    %v55 = vld [vmem:[#allocation2 + $0x70] sm:$0xff]
    %v56 = vld [vmem:[#allocation2 + $0x78] sm:$0xff]
    %v57 = vld [vmem:[#allocation2 + $0x80] sm:$0xff]
    %v58 = vld [vmem:[#allocation2 + $0x88] sm:$0xff]
    %v59 = vld [vmem:[#allocation2 + $0x90] sm:$0xff]
    %v60 = vld [vmem:[#allocation2 + $0x98] sm:$0xff]
    %v61 = vld [vmem:[#allocation2 + $0xa0] sm:$0xff]
    %v62 = vld [vmem:[#allocation2 + $0xa8] sm:$0xff]
    %v63 = vld [vmem:[#allocation2 + $0xb0] sm:$0xff]
    %v64 = vld [vmem:[#allocation2 + $0xb8] sm:$0xff]
    %v65 = vld [vmem:[#allocation2 + $0xc0] sm:$0xff]
    %v66 = vld [vmem:[#allocation2 + $0xc8] sm:$0xff]
    %v67 = vld [vmem:[#allocation2 + $0xd0] sm:$0xff]
    %v68 = vld [vmem:[#allocation2 + $0xd8] sm:$0xff]
    %v69 = vld [vmem:[#allocation2 + $0xe0] sm:$0xff]
    %v70 = vld [vmem:[#allocation2 + $0xe8] sm:$0xff]
    %v71 = vld [vmem:[#allocation2 + $0xf0] sm:$0xff]
    %v72 = vld [vmem:[#allocation2 + $0xf8] sm:$0xff]
    %v73 = vld [vmem:[#allocation2 + $0x100] sm:$0xff]
    %v74 = vld [vmem:[#allocation2 + $0x108] sm:$0xff]
    %v75 = vld [vmem:[#allocation2 + $0x110] sm:$0xff]
    %v76 = vld [vmem:[#allocation2 + $0x118] sm:$0xff]
    %v77 = vld [vmem:[#allocation2 + $0x120] sm:$0xff]
    %v78 = vld [vmem:[#allocation2 + $0x128] sm:$0xff]
    %v79 = vld [vmem:[#allocation2 + $0x130] sm:$0xff]
    %v80 = vld [vmem:[#allocation2 + $0x138] sm:$0xff]
    %v81 = vld [vmem:[#allocation2 + $0x140] sm:$0xff]
    %v82 = vld [vmem:[#allocation2 + $0x148] sm:$0xff]
    %v83 = vld [vmem:[#allocation2 + $0x150] sm:$0xff]
    %v84 = vld [vmem:[#allocation2 + $0x158] sm:$0xff]
    %v85 = vld [vmem:[#allocation2 + $0x160] sm:$0xff]
    %v86 = vld [vmem:[#allocation2 + $0x168] sm:$0xff]
    %v87 = vld [vmem:[#allocation2 + $0x170] sm:$0xff]
    %v88 = vld [vmem:[#allocation2 + $0x178] sm:$0xff]
    %v89 = vld [vmem:[#allocation2 + $0x180] sm:$0xff]
    %v90 = vld [vmem:[#allocation2 + $0x188] sm:$0xff]
    %v91 = vld [vmem:[#allocation2 + $0x190] sm:$0xff]
    %v92 = vld [vmem:[#allocation2 + $0x198] sm:$0xff]
    %v93 = vld [vmem:[#allocation2 + $0x1a0] sm:$0xff]
    %v94 = vld [vmem:[#allocation2 + $0x1a8] sm:$0xff]
    %v95 = vld [vmem:[#allocation2 + $0x1b0] sm:$0xff]
    %v96 = vld [vmem:[#allocation2 + $0x1b8] sm:$0xff]
    %v97 = vld [vmem:[#allocation2 + $0x1c0] sm:$0xff]
    %v98 = vld [vmem:[#allocation2 + $0x1c8] sm:$0xff]
    %v99 = vld [vmem:[#allocation2 + $0x1d0] sm:$0xff]
    %v100 = vld [vmem:[#allocation2 + $0x1d8] sm:$0xff]
    %v101 = vld [vmem:[#allocation2 + $0x1e0] sm:$0xff]
    %v102 = vld [vmem:[#allocation2 + $0x1e8] sm:$0xff]
    %v103 = vld [vmem:[#allocation2 + $0x1f0] sm:$0xff]
    %v104 = vld [vmem:[#allocation2 + $0x1f8] sm:$0xff]
    %v105 = vld [vmem:[#allocation2 + $0x200] sm:$0xff]
    %v106 = vld [vmem:[#allocation2 + $0x208] sm:$0xff]
    %v107 = vld [vmem:[#allocation2 + $0x210] sm:$0xff]
    %v108 = vld [vmem:[#allocation2 + $0x218] sm:$0xff]
    %v109 = vld [vmem:[#allocation2 + $0x220] sm:$0xff]
    %v110 = vld [vmem:[#allocation2 + $0x228] sm:$0xff]
    %v111 = vld [vmem:[#allocation2 + $0x230] sm:$0xff]
    %v112 = vld [vmem:[#allocation2 + $0x238] sm:$0xff]
    %v113 = vld [vmem:[#allocation2 + $0x240] sm:$0xff]
    %v114 = vld [vmem:[#allocation2 + $0x248] sm:$0xff]
    %v115 = vld [vmem:[#allocation2 + $0x250] sm:$0xff]
    %v116 = vld [vmem:[#allocation2 + $0x258] sm:$0xff]
    %v117 = vld [vmem:[#allocation2 + $0x260] sm:$0xff]
    %v118 = vld [vmem:[#allocation2 + $0x268] sm:$0xff]
    %v119 = vld [vmem:[#allocation2 + $0x270] sm:$0xff]
    %v120 = vld [vmem:[#allocation2 + $0x278] sm:$0xff]
    %v121 = vld [vmem:[#allocation2 + $0x280] sm:$0xff]
    %v122 = vld [vmem:[#allocation2 + $0x288] sm:$0xff]
    %v123 = vld [vmem:[#allocation2 + $0x290] sm:$0xff]
    %v124 = vld [vmem:[#allocation2 + $0x298] sm:$0xff]
    %v125 = vld [vmem:[#allocation2 + $0x2a0] sm:$0xff]
    %v126 = vld [vmem:[#allocation2 + $0x2a8] sm:$0xff]
    %v127 = vld [vmem:[#allocation2 + $0x2b0] sm:$0xff]
    %v128 = vld [vmem:[#allocation2 + $0x2b8] sm:$0xff]
    %v129 = vld [vmem:[#allocation2 + $0x2c0] sm:$0xff]
    %v130 = vld [vmem:[#allocation2 + $0x2c8] sm:$0xff]
    %v131 = vld [vmem:[#allocation2 + $0x2d0] sm:$0xff]
    %v132 = vld [vmem:[#allocation2 + $0x2d8] sm:$0xff]
    %v133 = vld [vmem:[#allocation2 + $0x2e0] sm:$0xff]
    %v134 = vld [vmem:[#allocation2 + $0x2e8] sm:$0xff]
    %v135 = vld [vmem:[#allocation2 + $0x2f0] sm:$0xff]
    %v136 = vld [vmem:[#allocation2 + $0x2f8] sm:$0xff]
    %v137 = vld [vmem:[#allocation2 + $0x300] sm:$0xff]
    %v138 = vld [vmem:[#allocation2 + $0x308] sm:$0xff]
    %v139 = vld [vmem:[#allocation2 + $0x310] sm:$0xff]
    %v140 = vld [vmem:[#allocation2 + $0x318] sm:$0xff]
    %v141 = vld [vmem:[#allocation2 + $0x320] sm:$0xff]
    %v142 = vld [vmem:[#allocation2 + $0x328] sm:$0xff]
    %v143 = vld [vmem:[#allocation2 + $0x330] sm:$0xff]
    %v144 = vld [vmem:[#allocation2 + $0x338] sm:$0xff]
    %v145 = vld [vmem:[#allocation2 + $0x340] sm:$0xff]
    %v146 = vld [vmem:[#allocation2 + $0x348] sm:$0xff]
    %v147 = vld [vmem:[#allocation2 + $0x350] sm:$0xff]
    %v148 = vld [vmem:[#allocation2 + $0x358] sm:$0xff]
    %v149 = vld [vmem:[#allocation2 + $0x360] sm:$0xff]
    %v150 = vld [vmem:[#allocation2 + $0x368] sm:$0xff]
    %v151 = vld [vmem:[#allocation2 + $0x370] sm:$0xff]
    %v152 = vld [vmem:[#allocation2 + $0x378] sm:$0xff]
    %v153 = vld [vmem:[#allocation2 + $0x380] sm:$0xff]
    %v154 = vld [vmem:[#allocation2 + $0x388] sm:$0xff]
    %v155 = vld [vmem:[#allocation2 + $0x390] sm:$0xff]
    %v156 = vld [vmem:[#allocation2 + $0x398] sm:$0xff]
    %v157 = vld [vmem:[#allocation2 + $0x3a0] sm:$0xff]
    %v158 = vld [vmem:[#allocation2 + $0x3a8] sm:$0xff]
    %v159 = vld [vmem:[#allocation2 + $0x3b0] sm:$0xff]
    %v160 = vld [vmem:[#allocation2 + $0x3b8] sm:$0xff]
    %v161 = vld [vmem:[#allocation2 + $0x3c0] sm:$0xff]
    %v162 = vld [vmem:[#allocation2 + $0x3c8] sm:$0xff]
    %v163 = vld [vmem:[#allocation2 + $0x3d0] sm:$0xff]
    %v164 = vld [vmem:[#allocation2 + $0x3d8] sm:$0xff]
    %v165 = vld [vmem:[#allocation2 + $0x3e0] sm:$0xff]
    %v166 = vld [vmem:[#allocation2 + $0x3e8] sm:$0xff]
    %v167 = vld [vmem:[#allocation2 + $0x3f0] sm:$0xff]
    %v168 = vld [vmem:[#allocation2 + $0x3f8] sm:$0xff]
    %v169 = vld [vmem:[#allocation5] sm:$0xff]
    %v170 = vld [vmem:[#allocation5 + $0x8] sm:$0xf]
    %v171 = vld [vmem:[#allocation5 + $0xc] sm:$0xff]
    %v172 = vld [vmem:[#allocation5 + $0x14] sm:$0xf]
    %v173 = vld [vmem:[#allocation5 + $0x18] sm:$0xff]
    %v174 = vld [vmem:[#allocation5 + $0x20] sm:$0xf]
    %v175 = vld [vmem:[#allocation5 + $0x24] sm:$0xff]
    %v176 = vld [vmem:[#allocation5 + $0x2c] sm:$0xf]
    %v177 = vld [vmem:[#allocation5 + $0x30] sm:$0xff]
    %v178 = vld [vmem:[#allocation5 + $0x38] sm:$0xf]
    %v179 = vld [vmem:[#allocation5 + $0x3c] sm:$0xff]
    %v180 = vld [vmem:[#allocation5 + $0x44] sm:$0xf]
    %v181 = vld [vmem:[#allocation5 + $0x48] sm:$0xff]
    %v182 = vld [vmem:[#allocation5 + $0x50] sm:$0xf]
    %v183 = vld [vmem:[#allocation5 + $0x54] sm:$0xff]
    %v184 = vld [vmem:[#allocation5 + $0x5c] sm:$0xf]
    %v185 = vld [vmem:[#allocation5 + $0x60] sm:$0xff]
    %v186 = vld [vmem:[#allocation5 + $0x68] sm:$0xf]
    %v187 = vld [vmem:[#allocation5 + $0x6c] sm:$0xff]
    %v188 = vld [vmem:[#allocation5 + $0x74] sm:$0xf]
    %v189 = vld [vmem:[#allocation5 + $0x78] sm:$0xff]
    %v190 = vld [vmem:[#allocation5 + $0x80] sm:$0xf]
    %v191 = vld [vmem:[#allocation5 + $0x84] sm:$0xff]
    %v192 = vld [vmem:[#allocation5 + $0x8c] sm:$0xf]
    %v193 = vld [vmem:[#allocation5 + $0x90] sm:$0xff]
    %v194 = vld [vmem:[#allocation5 + $0x98] sm:$0xf]
    %v195 = vld [vmem:[#allocation5 + $0x9c] sm:$0xff]
    %v196 = vld [vmem:[#allocation5 + $0xa4] sm:$0xf]
    %v197 = vld [vmem:[#allocation5 + $0xa8] sm:$0xff]
    %v198 = vld [vmem:[#allocation5 + $0xb0] sm:$0xf]
    %v199 = vld [vmem:[#allocation5 + $0xb4] sm:$0xff]
    %v200 = vld [vmem:[#allocation5 + $0xbc] sm:$0xf]
    %v201 = vld [vmem:[#allocation5 + $0xc0] sm:$0xff]
    %v202 = vld [vmem:[#allocation5 + $0xc8] sm:$0xf]
    %v203 = vld [vmem:[#allocation5 + $0xcc] sm:$0xff]
    %v204 = vld [vmem:[#allocation5 + $0xd4] sm:$0xf]
    %v205 = vld [vmem:[#allocation5 + $0xd8] sm:$0xff]
    %v206 = vld [vmem:[#allocation5 + $0xe0] sm:$0xf]
    %v207 = vld [vmem:[#allocation5 + $0xe4] sm:$0xff]
    %v208 = vld [vmem:[#allocation5 + $0xec] sm:$0xf]
    %v209 = vld [vmem:[#allocation5 + $0xf0] sm:$0xff]
    %v210 = vld [vmem:[#allocation5 + $0xf8] sm:$0xf]
    %v211 = vld [vmem:[#allocation5 + $0xfc] sm:$0xff]
    %v212 = vld [vmem:[#allocation5 + $0x104] sm:$0xf]
    %v213 = vld [vmem:[#allocation5 + $0x108] sm:$0xff]
    %v214 = vld [vmem:[#allocation5 + $0x110] sm:$0xf]
    %v215 = vld [vmem:[#allocation5 + $0x114] sm:$0xff]
    %v216 = vld [vmem:[#allocation5 + $0x11c] sm:$0xf]
    %v217 = vld [vmem:[#allocation5 + $0x120] sm:$0xff]
    %v218 = vld [vmem:[#allocation5 + $0x128] sm:$0xf]
    %v219 = vld [vmem:[#allocation5 + $0x12c] sm:$0xff]
    %v220 = vld [vmem:[#allocation5 + $0x134] sm:$0xf]
    %v221 = vld [vmem:[#allocation5 + $0x138] sm:$0xff]
    %v222 = vld [vmem:[#allocation5 + $0x140] sm:$0xf]
    %v223 = vld [vmem:[#allocation5 + $0x144] sm:$0xff]
    %v224 = vld [vmem:[#allocation5 + $0x14c] sm:$0xf]
    %v225 = vld [vmem:[#allocation5 + $0x150] sm:$0xff]
    %v226 = vld [vmem:[#allocation5 + $0x158] sm:$0xf]
    %v227 = vld [vmem:[#allocation5 + $0x15c] sm:$0xff]
    %v228 = vld [vmem:[#allocation5 + $0x164] sm:$0xf]
    %v229 = vld [vmem:[#allocation5 + $0x168] sm:$0xff]
    %v230 = vld [vmem:[#allocation5 + $0x170] sm:$0xf]
    %v231 = vld [vmem:[#allocation5 + $0x174] sm:$0xff]
    %v232 = vld [vmem:[#allocation5 + $0x17c] sm:$0xf]
    %v233 = vld [vmem:[#allocation5 + $0x180] sm:$0xff]
    %v234 = vld [vmem:[#allocation5 + $0x188] sm:$0xf]
    %v235 = vld [vmem:[#allocation5 + $0x18c] sm:$0xff]
    %v236 = vld [vmem:[#allocation5 + $0x194] sm:$0xf]
    %v237 = vld [vmem:[#allocation5 + $0x198] sm:$0xff]
    %v238 = vld [vmem:[#allocation5 + $0x1a0] sm:$0xf]
    %v239 = vld [vmem:[#allocation5 + $0x1a4] sm:$0xff]
    %v240 = vld [vmem:[#allocation5 + $0x1ac] sm:$0xf]
    %v241 = vld [vmem:[#allocation5 + $0x1b0] sm:$0xff]
    %v242 = vld [vmem:[#allocation5 + $0x1b8] sm:$0xf]
    %v243 = vld [vmem:[#allocation5 + $0x1bc] sm:$0xff]
    %v244 = vld [vmem:[#allocation5 + $0x1c4] sm:$0xf]
    %v245 = vld [vmem:[#allocation5 + $0x1c8] sm:$0xff]
    %v246 = vld [vmem:[#allocation5 + $0x1d0] sm:$0xf]
    %v247 = vld [vmem:[#allocation5 + $0x1d4] sm:$0xff]
    %v248 = vld [vmem:[#allocation5 + $0x1dc] sm:$0xf]
    %v249 = vld [vmem:[#allocation5 + $0x1e0] sm:$0xff]
    %v250 = vld [vmem:[#allocation5 + $0x1e8] sm:$0xf]
    %v251 = vld [vmem:[#allocation5 + $0x1ec] sm:$0xff]
    %v252 = vld [vmem:[#allocation5 + $0x1f4] sm:$0xf]
    %v253 = vld [vmem:[#allocation5 + $0x1f8] sm:$0xff]
    %v254 = vld [vmem:[#allocation5 + $0x200] sm:$0xf]
    %v255 = vld [vmem:[#allocation5 + $0x204] sm:$0xff]
    %v256 = vld [vmem:[#allocation5 + $0x20c] sm:$0xf]
    %v257 = vld [vmem:[#allocation5 + $0x210] sm:$0xff]
    %v258 = vld [vmem:[#allocation5 + $0x218] sm:$0xf]
    %v259 = vld [vmem:[#allocation5 + $0x21c] sm:$0xff]
    %v260 = vld [vmem:[#allocation5 + $0x224] sm:$0xf]
    %v261 = vld [vmem:[#allocation5 + $0x228] sm:$0xff]
    %v262 = vld [vmem:[#allocation5 + $0x230] sm:$0xf]
    %v263 = vld [vmem:[#allocation5 + $0x234] sm:$0xff]
    %v264 = vld [vmem:[#allocation5 + $0x23c] sm:$0xf]
    %v265 = vld [vmem:[#allocation5 + $0x240] sm:$0xff]
    %v266 = vld [vmem:[#allocation5 + $0x248] sm:$0xf]
    %v267 = vld [vmem:[#allocation5 + $0x24c] sm:$0xff]
    %v268 = vld [vmem:[#allocation5 + $0x254] sm:$0xf]
    %v269 = vld [vmem:[#allocation5 + $0x258] sm:$0xff]
    %v270 = vld [vmem:[#allocation5 + $0x260] sm:$0xf]
    %v271 = vld [vmem:[#allocation5 + $0x264] sm:$0xff]
    %v272 = vld [vmem:[#allocation5 + $0x26c] sm:$0xf]
    %v273 = vld [vmem:[#allocation5 + $0x270] sm:$0xff]
    %v274 = vld [vmem:[#allocation5 + $0x278] sm:$0xf]
    %v275 = vld [vmem:[#allocation5 + $0x27c] sm:$0xff]
    %v276 = vld [vmem:[#allocation5 + $0x284] sm:$0xf]
    %v277 = vld [vmem:[#allocation5 + $0x288] sm:$0xff]
    %v278 = vld [vmem:[#allocation5 + $0x290] sm:$0xf]
    %v279 = vld [vmem:[#allocation5 + $0x294] sm:$0xff]
    %v280 = vld [vmem:[#allocation5 + $0x29c] sm:$0xf]
    %v281 = vld [vmem:[#allocation5 + $0x2a0] sm:$0xff]
    %v282 = vld [vmem:[#allocation5 + $0x2a8] sm:$0xf]
    %v283 = vld [vmem:[#allocation5 + $0x2ac] sm:$0xff]
    %v284 = vld [vmem:[#allocation5 + $0x2b4] sm:$0xf]
    %v285 = vld [vmem:[#allocation5 + $0x2b8] sm:$0xff]
    %v286 = vld [vmem:[#allocation5 + $0x2c0] sm:$0xf]
    %v287 = vld [vmem:[#allocation5 + $0x2c4] sm:$0xff]
    %v288 = vld [vmem:[#allocation5 + $0x2cc] sm:$0xf]
    %v289 = vld [vmem:[#allocation5 + $0x2d0] sm:$0xff]
    %v290 = vld [vmem:[#allocation5 + $0x2d8] sm:$0xf]
    %v291 = vld [vmem:[#allocation5 + $0x2dc] sm:$0xff]
    %v292 = vld [vmem:[#allocation5 + $0x2e4] sm:$0xf]
    %v293 = vld [vmem:[#allocation5 + $0x2e8] sm:$0xff]
    %v294 = vld [vmem:[#allocation5 + $0x2f0] sm:$0xf]
    %v295 = vld [vmem:[#allocation5 + $0x2f4] sm:$0xff]
    %v296 = vld [vmem:[#allocation5 + $0x2fc] sm:$0xf]
    %v425 = vunpack.c.l.b16 %v41
    %v426 = vunpack.c.h.b16 %v41
    %v427 = vunpack.c.l.b16 %v42
    %v428 = vunpack.c.h.b16 %v42
    %v429 = vunpack.c.l.b16 %v43
    %v430 = vunpack.c.h.b16 %v43
    %v431 = vunpack.c.l.b16 %v44
    %v432 = vunpack.c.h.b16 %v44
    %v433 = vunpack.c.l.b16 %v45
    %v434 = vunpack.c.h.b16 %v45
    %v435 = vunpack.c.l.b16 %v46
    %v436 = vunpack.c.h.b16 %v46
    %v437 = vunpack.c.l.b16 %v47
    %v438 = vunpack.c.h.b16 %v47
    %v439 = vunpack.c.l.b16 %v48
    %v440 = vunpack.c.h.b16 %v48
    %v441 = vunpack.c.l.b16 %v49
    %v442 = vunpack.c.h.b16 %v49
    %v443 = vunpack.c.l.b16 %v50
    %v444 = vunpack.c.h.b16 %v50
    %v445 = vunpack.c.l.b16 %v51
    %v446 = vunpack.c.h.b16 %v51
    %v447 = vunpack.c.l.b16 %v52
    %v448 = vunpack.c.h.b16 %v52
    %v449 = vunpack.c.l.b16 %v53
    %v450 = vunpack.c.h.b16 %v53
    %v451 = vunpack.c.l.b16 %v54
    %v452 = vunpack.c.h.b16 %v54
    %v453 = vunpack.c.l.b16 %v55
    %v454 = vunpack.c.h.b16 %v55
    %v455 = vunpack.c.l.b16 %v56
    %v456 = vunpack.c.h.b16 %v56
    %v457 = vunpack.c.l.b16 %v57
    %v458 = vunpack.c.h.b16 %v57
    %v459 = vunpack.c.l.b16 %v58
    %v460 = vunpack.c.h.b16 %v58
    %v461 = vunpack.c.l.b16 %v59
    %v462 = vunpack.c.h.b16 %v59
    %v463 = vunpack.c.l.b16 %v60
    %v464 = vunpack.c.h.b16 %v60
    %v465 = vunpack.c.l.b16 %v61
    %v466 = vunpack.c.h.b16 %v61
    %v467 = vunpack.c.l.b16 %v62
    %v468 = vunpack.c.h.b16 %v62
    %v469 = vunpack.c.l.b16 %v63
    %v470 = vunpack.c.h.b16 %v63
    %v471 = vunpack.c.l.b16 %v64
    %v472 = vunpack.c.h.b16 %v64
    %v473 = vunpack.c.l.b16 %v65
    %v474 = vunpack.c.h.b16 %v65
    %v475 = vunpack.c.l.b16 %v66
    %v476 = vunpack.c.h.b16 %v66
    %v477 = vunpack.c.l.b16 %v67
    %v478 = vunpack.c.h.b16 %v67
    %v479 = vunpack.c.l.b16 %v68
    %v480 = vunpack.c.h.b16 %v68
    %v481 = vunpack.c.l.b16 %v69
    %v482 = vunpack.c.h.b16 %v69
    %v483 = vunpack.c.l.b16 %v70
    %v484 = vunpack.c.h.b16 %v70
    %v485 = vunpack.c.l.b16 %v71
    %v486 = vunpack.c.h.b16 %v71
    %v487 = vunpack.c.l.b16 %v72
    %v488 = vunpack.c.h.b16 %v72
    %v489 = vunpack.c.l.b16 %v73
    %v490 = vunpack.c.h.b16 %v73
    %v491 = vunpack.c.l.b16 %v74
    %v492 = vunpack.c.h.b16 %v74
    %v493 = vunpack.c.l.b16 %v75
    %v494 = vunpack.c.h.b16 %v75
    %v495 = vunpack.c.l.b16 %v76
    %v496 = vunpack.c.h.b16 %v76
    %v497 = vunpack.c.l.b16 %v77
    %v498 = vunpack.c.h.b16 %v77
    %v499 = vunpack.c.l.b16 %v78
    %v500 = vunpack.c.h.b16 %v78
    %v501 = vunpack.c.l.b16 %v79
    %v502 = vunpack.c.h.b16 %v79
    %v503 = vunpack.c.l.b16 %v80
    %v504 = vunpack.c.h.b16 %v80
    %v505 = vunpack.c.l.b16 %v81
    %v506 = vunpack.c.h.b16 %v81
    %v507 = vunpack.c.l.b16 %v82
    %v508 = vunpack.c.h.b16 %v82
    %v509 = vunpack.c.l.b16 %v83
    %v510 = vunpack.c.h.b16 %v83
    %v511 = vunpack.c.l.b16 %v84
    %v512 = vunpack.c.h.b16 %v84
    %v513 = vunpack.c.l.b16 %v85
    %v514 = vunpack.c.h.b16 %v85
    %v515 = vunpack.c.l.b16 %v86
    %v516 = vunpack.c.h.b16 %v86
    %v517 = vunpack.c.l.b16 %v87
    %v518 = vunpack.c.h.b16 %v87
    %v519 = vunpack.c.l.b16 %v88
    %v520 = vunpack.c.h.b16 %v88
    %v521 = vunpack.c.l.b16 %v89
    %v522 = vunpack.c.h.b16 %v89
    %v523 = vunpack.c.l.b16 %v90
    %v524 = vunpack.c.h.b16 %v90
    %v525 = vunpack.c.l.b16 %v91
    %v526 = vunpack.c.h.b16 %v91
    %v527 = vunpack.c.l.b16 %v92
    %v528 = vunpack.c.h.b16 %v92
    %v529 = vunpack.c.l.b16 %v93
    %v530 = vunpack.c.h.b16 %v93
    %v531 = vunpack.c.l.b16 %v94
    %v532 = vunpack.c.h.b16 %v94
    %v533 = vunpack.c.l.b16 %v95
    %v534 = vunpack.c.h.b16 %v95
    %v535 = vunpack.c.l.b16 %v96
    %v536 = vunpack.c.h.b16 %v96
    %v537 = vunpack.c.l.b16 %v97
    %v538 = vunpack.c.h.b16 %v97
    %v539 = vunpack.c.l.b16 %v98
    %v540 = vunpack.c.h.b16 %v98
    %v541 = vunpack.c.l.b16 %v99
    %v542 = vunpack.c.h.b16 %v99
    %v543 = vunpack.c.l.b16 %v100
    %v544 = vunpack.c.h.b16 %v100
    %v545 = vunpack.c.l.b16 %v101
    %v546 = vunpack.c.h.b16 %v101
    %v547 = vunpack.c.l.b16 %v102
    %v548 = vunpack.c.h.b16 %v102
    %v549 = vunpack.c.l.b16 %v103
    %v550 = vunpack.c.h.b16 %v103
    %v551 = vunpack.c.l.b16 %v104
    %v552 = vunpack.c.h.b16 %v104
    %v553 = vunpack.c.l.b16 %v105
    %v554 = vunpack.c.h.b16 %v105
    %v555 = vunpack.c.l.b16 %v106
    %v556 = vunpack.c.h.b16 %v106
    %v557 = vunpack.c.l.b16 %v107
    %v558 = vunpack.c.h.b16 %v107
    %v559 = vunpack.c.l.b16 %v108
    %v560 = vunpack.c.h.b16 %v108
    %v561 = vunpack.c.l.b16 %v109
    %v562 = vunpack.c.h.b16 %v109
    %v563 = vunpack.c.l.b16 %v110
    %v564 = vunpack.c.h.b16 %v110
    %v565 = vunpack.c.l.b16 %v111
    %v566 = vunpack.c.h.b16 %v111
    %v567 = vunpack.c.l.b16 %v112
    %v568 = vunpack.c.h.b16 %v112
    %v569 = vunpack.c.l.b16 %v113
    %v570 = vunpack.c.h.b16 %v113
    %v571 = vunpack.c.l.b16 %v114
    %v572 = vunpack.c.h.b16 %v114
    %v573 = vunpack.c.l.b16 %v115
    %v574 = vunpack.c.h.b16 %v115
    %v575 = vunpack.c.l.b16 %v116
    %v576 = vunpack.c.h.b16 %v116
    %v577 = vunpack.c.l.b16 %v117
    %v578 = vunpack.c.h.b16 %v117
    %v579 = vunpack.c.l.b16 %v118
    %v580 = vunpack.c.h.b16 %v118
    %v581 = vunpack.c.l.b16 %v119
    %v582 = vunpack.c.h.b16 %v119
    %v583 = vunpack.c.l.b16 %v120
    %v584 = vunpack.c.h.b16 %v120
    %v585 = vunpack.c.l.b16 %v121
    %v586 = vunpack.c.h.b16 %v121
    %v587 = vunpack.c.l.b16 %v122
    %v588 = vunpack.c.h.b16 %v122
    %v589 = vunpack.c.l.b16 %v123
    %v590 = vunpack.c.h.b16 %v123
    %v591 = vunpack.c.l.b16 %v124
    %v592 = vunpack.c.h.b16 %v124
    %v593 = vunpack.c.l.b16 %v125
    %v594 = vunpack.c.h.b16 %v125
    %v595 = vunpack.c.l.b16 %v126
    %v596 = vunpack.c.h.b16 %v126
    %v597 = vunpack.c.l.b16 %v127
    %v598 = vunpack.c.h.b16 %v127
    %v599 = vunpack.c.l.b16 %v128
    %v600 = vunpack.c.h.b16 %v128
    %v601 = vunpack.c.l.b16 %v129
    %v602 = vunpack.c.h.b16 %v129
    %v603 = vunpack.c.l.b16 %v130
    %v604 = vunpack.c.h.b16 %v130
    %v605 = vunpack.c.l.b16 %v131
    %v606 = vunpack.c.h.b16 %v131
    %v607 = vunpack.c.l.b16 %v132
    %v608 = vunpack.c.h.b16 %v132
    %v609 = vunpack.c.l.b16 %v133
    %v610 = vunpack.c.h.b16 %v133
    %v611 = vunpack.c.l.b16 %v134
    %v612 = vunpack.c.h.b16 %v134
    %v613 = vunpack.c.l.b16 %v135
    %v614 = vunpack.c.h.b16 %v135
    %v615 = vunpack.c.l.b16 %v136
    %v616 = vunpack.c.h.b16 %v136
    %v617 = vunpack.c.l.b16 %v137
    %v618 = vunpack.c.h.b16 %v137
    %v619 = vunpack.c.l.b16 %v138
    %v620 = vunpack.c.h.b16 %v138
    %v621 = vunpack.c.l.b16 %v139
    %v622 = vunpack.c.h.b16 %v139
    %v623 = vunpack.c.l.b16 %v140
    %v624 = vunpack.c.h.b16 %v140
    %v625 = vunpack.c.l.b16 %v141
    %v626 = vunpack.c.h.b16 %v141
    %v627 = vunpack.c.l.b16 %v142
    %v628 = vunpack.c.h.b16 %v142
    %v629 = vunpack.c.l.b16 %v143
    %v630 = vunpack.c.h.b16 %v143
    %v631 = vunpack.c.l.b16 %v144
    %v632 = vunpack.c.h.b16 %v144
    %v633 = vunpack.c.l.b16 %v145
    %v634 = vunpack.c.h.b16 %v145
    %v635 = vunpack.c.l.b16 %v146
    %v636 = vunpack.c.h.b16 %v146
    %v637 = vunpack.c.l.b16 %v147
    %v638 = vunpack.c.h.b16 %v147
    %v639 = vunpack.c.l.b16 %v148
    %v640 = vunpack.c.h.b16 %v148
    %v641 = vunpack.c.l.b16 %v149
    %v642 = vunpack.c.h.b16 %v149
    %v643 = vunpack.c.l.b16 %v150
    %v644 = vunpack.c.h.b16 %v150
    %v645 = vunpack.c.l.b16 %v151
    %v646 = vunpack.c.h.b16 %v151
    %v647 = vunpack.c.l.b16 %v152
    %v648 = vunpack.c.h.b16 %v152
    %v649 = vunpack.c.l.b16 %v153
    %v650 = vunpack.c.h.b16 %v153
    %v651 = vunpack.c.l.b16 %v154
    %v652 = vunpack.c.h.b16 %v154
    %v653 = vunpack.c.l.b16 %v155
    %v654 = vunpack.c.h.b16 %v155
    %v655 = vunpack.c.l.b16 %v156
    %v656 = vunpack.c.h.b16 %v156
    %v657 = vunpack.c.l.b16 %v157
    %v658 = vunpack.c.h.b16 %v157
    %v659 = vunpack.c.l.b16 %v158
    %v660 = vunpack.c.h.b16 %v158
    %v661 = vunpack.c.l.b16 %v159
    %v662 = vunpack.c.h.b16 %v159
    %v663 = vunpack.c.l.b16 %v160
    %v664 = vunpack.c.h.b16 %v160
    %v665 = vunpack.c.l.b16 %v161
    %v666 = vunpack.c.h.b16 %v161
    %v667 = vunpack.c.l.b16 %v162
    %v668 = vunpack.c.h.b16 %v162
    %v669 = vunpack.c.l.b16 %v163
    %v670 = vunpack.c.h.b16 %v163
    %v671 = vunpack.c.l.b16 %v164
    %v672 = vunpack.c.h.b16 %v164
    %v673 = vunpack.c.l.b16 %v165
    %v674 = vunpack.c.h.b16 %v165
    %v675 = vunpack.c.l.b16 %v166
    %v676 = vunpack.c.h.b16 %v166
    %v677 = vunpack.c.l.b16 %v167
    %v678 = vunpack.c.h.b16 %v167
    %v679 = vunpack.c.l.b16 %v168
    %v680 = vunpack.c.h.b16 %v168
    %v681 = vpack.c.b16 %v429, %v425
    %v682 = vpack.c.b16 %v430, %v426
    %v683 = vpack.c.b16 %v431, %v427
    %v684 = vpack.c.b16 %v432, %v428
    %v685 = vpack.c.b16 %v437, %v433
    %v686 = vpack.c.b16 %v438, %v434
    %v687 = vpack.c.b16 %v439, %v435
    %v688 = vpack.c.b16 %v440, %v436
    %v689 = vpack.c.b16 %v445, %v441
    %v690 = vpack.c.b16 %v446, %v442
    %v691 = vpack.c.b16 %v447, %v443
    %v692 = vpack.c.b16 %v448, %v444
    %v693 = vpack.c.b16 %v453, %v449
    %v694 = vpack.c.b16 %v454, %v450
    %v695 = vpack.c.b16 %v455, %v451
    %v696 = vpack.c.b16 %v456, %v452
    %v697 = vpack.c.b16 %v461, %v457
    %v698 = vpack.c.b16 %v462, %v458
    %v699 = vpack.c.b16 %v463, %v459
    %v700 = vpack.c.b16 %v464, %v460
    %v701 = vpack.c.b16 %v469, %v465
    %v702 = vpack.c.b16 %v470, %v466
    %v703 = vpack.c.b16 %v471, %v467
    %v704 = vpack.c.b16 %v472, %v468
    %v705 = vpack.c.b16 %v477, %v473
    %v706 = vpack.c.b16 %v478, %v474
    %v707 = vpack.c.b16 %v479, %v475
    %v708 = vpack.c.b16 %v480, %v476
    %v709 = vpack.c.b16 %v485, %v481
    %v710 = vpack.c.b16 %v486, %v482
    %v711 = vpack.c.b16 %v487, %v483
    %v712 = vpack.c.b16 %v488, %v484
    %v713 = vpack.c.b16 %v493, %v489
    %v714 = vpack.c.b16 %v494, %v490
    %v715 = vpack.c.b16 %v495, %v491
    %v716 = vpack.c.b16 %v496, %v492
    %v717 = vpack.c.b16 %v501, %v497
    %v718 = vpack.c.b16 %v502, %v498
    %v719 = vpack.c.b16 %v503, %v499
    %v720 = vpack.c.b16 %v504, %v500
    %v721 = vpack.c.b16 %v509, %v505
    %v722 = vpack.c.b16 %v510, %v506
    %v723 = vpack.c.b16 %v511, %v507
    %v724 = vpack.c.b16 %v512, %v508
    %v725 = vpack.c.b16 %v517, %v513
    %v726 = vpack.c.b16 %v518, %v514
    %v727 = vpack.c.b16 %v519, %v515
    %v728 = vpack.c.b16 %v520, %v516
    %v729 = vpack.c.b16 %v525, %v521
    %v730 = vpack.c.b16 %v526, %v522
    %v731 = vpack.c.b16 %v527, %v523
    %v732 = vpack.c.b16 %v528, %v524
    %v733 = vpack.c.b16 %v533, %v529
    %v734 = vpack.c.b16 %v534, %v530
    %v735 = vpack.c.b16 %v535, %v531
    %v736 = vpack.c.b16 %v536, %v532
    %v737 = vpack.c.b16 %v541, %v537
    %v738 = vpack.c.b16 %v542, %v538
    %v739 = vpack.c.b16 %v543, %v539
    %v740 = vpack.c.b16 %v544, %v540
    %v741 = vpack.c.b16 %v549, %v545
    %v742 = vpack.c.b16 %v550, %v546
    %v743 = vpack.c.b16 %v551, %v547
    %v744 = vpack.c.b16 %v552, %v548
    %v745 = vpack.c.b16 %v557, %v553
    %v746 = vpack.c.b16 %v558, %v554
    %v747 = vpack.c.b16 %v559, %v555
    %v748 = vpack.c.b16 %v560, %v556
    %v749 = vpack.c.b16 %v565, %v561
    %v750 = vpack.c.b16 %v566, %v562
    %v751 = vpack.c.b16 %v567, %v563
    %v752 = vpack.c.b16 %v568, %v564
    %v753 = vpack.c.b16 %v573, %v569
    %v754 = vpack.c.b16 %v574, %v570
    %v755 = vpack.c.b16 %v575, %v571
    %v756 = vpack.c.b16 %v576, %v572
    %v757 = vpack.c.b16 %v581, %v577
    %v758 = vpack.c.b16 %v582, %v578
    %v759 = vpack.c.b16 %v583, %v579
    %v760 = vpack.c.b16 %v584, %v580
    %v761 = vpack.c.b16 %v589, %v585
    %v762 = vpack.c.b16 %v590, %v586
    %v763 = vpack.c.b16 %v591, %v587
    %v764 = vpack.c.b16 %v592, %v588
    %v765 = vpack.c.b16 %v597, %v593
    %v766 = vpack.c.b16 %v598, %v594
    %v767 = vpack.c.b16 %v599, %v595
    %v768 = vpack.c.b16 %v600, %v596
    %v769 = vpack.c.b16 %v605, %v601
    %v770 = vpack.c.b16 %v606, %v602
    %v771 = vpack.c.b16 %v607, %v603
    %v772 = vpack.c.b16 %v608, %v604
    %v773 = vpack.c.b16 %v613, %v609
    %v774 = vpack.c.b16 %v614, %v610
    %v775 = vpack.c.b16 %v615, %v611
    %v776 = vpack.c.b16 %v616, %v612
    %v777 = vpack.c.b16 %v621, %v617
    %v778 = vpack.c.b16 %v622, %v618
    %v779 = vpack.c.b16 %v623, %v619
    %v780 = vpack.c.b16 %v624, %v620
    %v781 = vpack.c.b16 %v629, %v625
    %v782 = vpack.c.b16 %v630, %v626
    %v783 = vpack.c.b16 %v631, %v627
    %v784 = vpack.c.b16 %v632, %v628
    %v785 = vpack.c.b16 %v637, %v633
    %v786 = vpack.c.b16 %v638, %v634
    %v787 = vpack.c.b16 %v639, %v635
    %v788 = vpack.c.b16 %v640, %v636
    %v789 = vpack.c.b16 %v645, %v641
    %v790 = vpack.c.b16 %v646, %v642
    %v791 = vpack.c.b16 %v647, %v643
    %v792 = vpack.c.b16 %v648, %v644
    %v793 = vpack.c.b16 %v653, %v649
    %v794 = vpack.c.b16 %v654, %v650
    %v795 = vpack.c.b16 %v655, %v651
    %v796 = vpack.c.b16 %v656, %v652
    %v797 = vpack.c.b16 %v661, %v657
    %v798 = vpack.c.b16 %v662, %v658
    %v799 = vpack.c.b16 %v663, %v659
    %v800 = vpack.c.b16 %v664, %v660
    %v801 = vpack.c.b16 %v669, %v665
    %v802 = vpack.c.b16 %v670, %v666
    %v803 = vpack.c.b16 %v671, %v667
    %v804 = vpack.c.b16 %v672, %v668
    %v805 = vpack.c.b16 %v677, %v673
    %v806 = vpack.c.b16 %v678, %v674
    %v807 = vpack.c.b16 %v679, %v675
    %v808 = vpack.c.b16 %v680, %v676
    %v1065 = vunpack.c.l.b16 %v169
    %v1066 = vunpack.c.h.b16 %v169
    %v1067 = vunpack.c.l.b16 %v170
    %v1068 = vunpack.c.l.b16 %v171
    %v1069 = vunpack.c.h.b16 %v171
    %v1070 = vunpack.c.l.b16 %v172
    %v1071 = vunpack.c.l.b16 %v173
    %v1072 = vunpack.c.h.b16 %v173
    %v1073 = vunpack.c.l.b16 %v174
    %v1074 = vunpack.c.l.b16 %v175
    %v1075 = vunpack.c.h.b16 %v175
    %v1076 = vunpack.c.l.b16 %v176
    %v1077 = vunpack.c.l.b16 %v177
    %v1078 = vunpack.c.h.b16 %v177
    %v1079 = vunpack.c.l.b16 %v178
    %v1080 = vunpack.c.l.b16 %v179
    %v1081 = vunpack.c.h.b16 %v179
    %v1082 = vunpack.c.l.b16 %v180
    %v1083 = vunpack.c.l.b16 %v181
    %v1084 = vunpack.c.h.b16 %v181
    %v1085 = vunpack.c.l.b16 %v182
    %v1086 = vunpack.c.l.b16 %v183
    %v1087 = vunpack.c.h.b16 %v183
    %v1088 = vunpack.c.l.b16 %v184
    %v1089 = vunpack.c.l.b16 %v185
    %v1090 = vunpack.c.h.b16 %v185
    %v1091 = vunpack.c.l.b16 %v186
    %v1092 = vunpack.c.l.b16 %v187
    %v1093 = vunpack.c.h.b16 %v187
    %v1094 = vunpack.c.l.b16 %v188
    %v1095 = vunpack.c.l.b16 %v189
    %v1096 = vunpack.c.h.b16 %v189
    %v1097 = vunpack.c.l.b16 %v190
    %v1098 = vunpack.c.l.b16 %v191
    %v1099 = vunpack.c.h.b16 %v191
    %v1100 = vunpack.c.l.b16 %v192
    %v1101 = vunpack.c.l.b16 %v193
    %v1102 = vunpack.c.h.b16 %v193
    %v1103 = vunpack.c.l.b16 %v194
    %v1104 = vunpack.c.l.b16 %v195
    %v1105 = vunpack.c.h.b16 %v195
    %v1106 = vunpack.c.l.b16 %v196
    %v1107 = vunpack.c.l.b16 %v197
    %v1108 = vunpack.c.h.b16 %v197
    %v1109 = vunpack.c.l.b16 %v198
    %v1110 = vunpack.c.l.b16 %v199
    %v1111 = vunpack.c.h.b16 %v199
    %v1112 = vunpack.c.l.b16 %v200
    %v1113 = vunpack.c.l.b16 %v201
    %v1114 = vunpack.c.h.b16 %v201
    %v1115 = vunpack.c.l.b16 %v202
    %v1116 = vunpack.c.l.b16 %v203
    %v1117 = vunpack.c.h.b16 %v203
    %v1118 = vunpack.c.l.b16 %v204
    %v1119 = vunpack.c.l.b16 %v205
    %v1120 = vunpack.c.h.b16 %v205
    %v1121 = vunpack.c.l.b16 %v206
    %v1122 = vunpack.c.l.b16 %v207
    %v1123 = vunpack.c.h.b16 %v207
    %v1124 = vunpack.c.l.b16 %v208
    %v1125 = vunpack.c.l.b16 %v209
    %v1126 = vunpack.c.h.b16 %v209
    %v1127 = vunpack.c.l.b16 %v210
    %v1128 = vunpack.c.l.b16 %v211
    %v1129 = vunpack.c.h.b16 %v211
    %v1130 = vunpack.c.l.b16 %v212
    %v1131 = vunpack.c.l.b16 %v213
    %v1132 = vunpack.c.h.b16 %v213
    %v1133 = vunpack.c.l.b16 %v214
    %v1134 = vunpack.c.l.b16 %v215
    %v1135 = vunpack.c.h.b16 %v215
    %v1136 = vunpack.c.l.b16 %v216
    %v1137 = vunpack.c.l.b16 %v217
    %v1138 = vunpack.c.h.b16 %v217
    %v1139 = vunpack.c.l.b16 %v218
    %v1140 = vunpack.c.l.b16 %v219
    %v1141 = vunpack.c.h.b16 %v219
    %v1142 = vunpack.c.l.b16 %v220
    %v1143 = vunpack.c.l.b16 %v221
    %v1144 = vunpack.c.h.b16 %v221
    %v1145 = vunpack.c.l.b16 %v222
    %v1146 = vunpack.c.l.b16 %v223
    %v1147 = vunpack.c.h.b16 %v223
    %v1148 = vunpack.c.l.b16 %v224
    %v1149 = vunpack.c.l.b16 %v225
    %v1150 = vunpack.c.h.b16 %v225
    %v1151 = vunpack.c.l.b16 %v226
    %v1152 = vunpack.c.l.b16 %v227
    %v1153 = vunpack.c.h.b16 %v227
    %v1154 = vunpack.c.l.b16 %v228
    %v1155 = vunpack.c.l.b16 %v229
    %v1156 = vunpack.c.h.b16 %v229
    %v1157 = vunpack.c.l.b16 %v230
    %v1158 = vunpack.c.l.b16 %v231
    %v1159 = vunpack.c.h.b16 %v231
    %v1160 = vunpack.c.l.b16 %v232
    %v1161 = vunpack.c.l.b16 %v233
    %v1162 = vunpack.c.h.b16 %v233
    %v1163 = vunpack.c.l.b16 %v234
    %v1164 = vunpack.c.l.b16 %v235
    %v1165 = vunpack.c.h.b16 %v235
    %v1166 = vunpack.c.l.b16 %v236
    %v1167 = vunpack.c.l.b16 %v237
    %v1168 = vunpack.c.h.b16 %v237
    %v1169 = vunpack.c.l.b16 %v238
    %v1170 = vunpack.c.l.b16 %v239
    %v1171 = vunpack.c.h.b16 %v239
    %v1172 = vunpack.c.l.b16 %v240
    %v1173 = vunpack.c.l.b16 %v241
    %v1174 = vunpack.c.h.b16 %v241
    %v1175 = vunpack.c.l.b16 %v242
    %v1176 = vunpack.c.l.b16 %v243
    %v1177 = vunpack.c.h.b16 %v243
    %v1178 = vunpack.c.l.b16 %v244
    %v1179 = vunpack.c.l.b16 %v245
    %v1180 = vunpack.c.h.b16 %v245
    %v1181 = vunpack.c.l.b16 %v246
    %v1182 = vunpack.c.l.b16 %v247
    %v1183 = vunpack.c.h.b16 %v247
    %v1184 = vunpack.c.l.b16 %v248
    %v1185 = vunpack.c.l.b16 %v249
    %v1186 = vunpack.c.h.b16 %v249
    %v1187 = vunpack.c.l.b16 %v250
    %v1188 = vunpack.c.l.b16 %v251
    %v1189 = vunpack.c.h.b16 %v251
    %v1190 = vunpack.c.l.b16 %v252
    %v1191 = vunpack.c.l.b16 %v253
    %v1192 = vunpack.c.h.b16 %v253
    %v1193 = vunpack.c.l.b16 %v254
    %v1194 = vunpack.c.l.b16 %v255
    %v1195 = vunpack.c.h.b16 %v255
    %v1196 = vunpack.c.l.b16 %v256
    %v1197 = vunpack.c.l.b16 %v257
    %v1198 = vunpack.c.h.b16 %v257
    %v1199 = vunpack.c.l.b16 %v258
    %v1200 = vunpack.c.l.b16 %v259
    %v1201 = vunpack.c.h.b16 %v259
    %v1202 = vunpack.c.l.b16 %v260
    %v1203 = vunpack.c.l.b16 %v261
    %v1204 = vunpack.c.h.b16 %v261
    %v1205 = vunpack.c.l.b16 %v262
    %v1206 = vunpack.c.l.b16 %v263
    %v1207 = vunpack.c.h.b16 %v263
    %v1208 = vunpack.c.l.b16 %v264
    %v1209 = vunpack.c.l.b16 %v265
    %v1210 = vunpack.c.h.b16 %v265
    %v1211 = vunpack.c.l.b16 %v266
    %v1212 = vunpack.c.l.b16 %v267
    %v1213 = vunpack.c.h.b16 %v267
    %v1214 = vunpack.c.l.b16 %v268
    %v1215 = vunpack.c.l.b16 %v269
    %v1216 = vunpack.c.h.b16 %v269
    %v1217 = vunpack.c.l.b16 %v270
    %v1218 = vunpack.c.l.b16 %v271
    %v1219 = vunpack.c.h.b16 %v271
    %v1220 = vunpack.c.l.b16 %v272
    %v1221 = vunpack.c.l.b16 %v273
    %v1222 = vunpack.c.h.b16 %v273
    %v1223 = vunpack.c.l.b16 %v274
    %v1224 = vunpack.c.l.b16 %v275
    %v1225 = vunpack.c.h.b16 %v275
    %v1226 = vunpack.c.l.b16 %v276
    %v1227 = vunpack.c.l.b16 %v277
    %v1228 = vunpack.c.h.b16 %v277
    %v1229 = vunpack.c.l.b16 %v278
    %v1230 = vunpack.c.l.b16 %v279
    %v1231 = vunpack.c.h.b16 %v279
    %v1232 = vunpack.c.l.b16 %v280
    %v1233 = vunpack.c.l.b16 %v281
    %v1234 = vunpack.c.h.b16 %v281
    %v1235 = vunpack.c.l.b16 %v282
    %v1236 = vunpack.c.l.b16 %v283
    %v1237 = vunpack.c.h.b16 %v283
    %v1238 = vunpack.c.l.b16 %v284
    %v1239 = vunpack.c.l.b16 %v285
    %v1240 = vunpack.c.h.b16 %v285
    %v1241 = vunpack.c.l.b16 %v286
    %v1242 = vunpack.c.l.b16 %v287
    %v1243 = vunpack.c.h.b16 %v287
    %v1244 = vunpack.c.l.b16 %v288
    %v1245 = vunpack.c.l.b16 %v289
    %v1246 = vunpack.c.h.b16 %v289
    %v1247 = vunpack.c.l.b16 %v290
    %v1248 = vunpack.c.l.b16 %v291
    %v1249 = vunpack.c.h.b16 %v291
    %v1250 = vunpack.c.l.b16 %v292
    %v1251 = vunpack.c.l.b16 %v293
    %v1252 = vunpack.c.h.b16 %v293
    %v1253 = vunpack.c.l.b16 %v294
    %v1254 = vunpack.c.l.b16 %v295
    %v1255 = vunpack.c.h.b16 %v295
    %v1256 = vunpack.c.l.b16 %v296
    %v1257 = vpack.c.b16 %v1068, %v1065
    %v1258 = vpack.c.b16 %v1069, %v1066
    %v1259 = vpack.c.b16 %v1070, %v1067
    %v1260 = vpack.c.b16 %v1074, %v1071
    %v1261 = vpack.c.b16 %v1075, %v1072
    %v1262 = vpack.c.b16 %v1076, %v1073
    %v1263 = vpack.c.b16 %v1080, %v1077
    %v1264 = vpack.c.b16 %v1081, %v1078
    %v1265 = vpack.c.b16 %v1082, %v1079
    %v1266 = vpack.c.b16 %v1086, %v1083
    %v1267 = vpack.c.b16 %v1087, %v1084
    %v1268 = vpack.c.b16 %v1088, %v1085
    %v1269 = vpack.c.b16 %v1092, %v1089
    %v1270 = vpack.c.b16 %v1093, %v1090
    %v1271 = vpack.c.b16 %v1094, %v1091
    %v1272 = vpack.c.b16 %v1098, %v1095
    %v1273 = vpack.c.b16 %v1099, %v1096
    %v1274 = vpack.c.b16 %v1100, %v1097
    %v1275 = vpack.c.b16 %v1104, %v1101
    %v1276 = vpack.c.b16 %v1105, %v1102
    %v1277 = vpack.c.b16 %v1106, %v1103
    %v1278 = vpack.c.b16 %v1110, %v1107
    %v1279 = vpack.c.b16 %v1111, %v1108
    %v1280 = vpack.c.b16 %v1112, %v1109
    %v1281 = vpack.c.b16 %v1116, %v1113
    %v1282 = vpack.c.b16 %v1117, %v1114
    %v1283 = vpack.c.b16 %v1118, %v1115
    %v1284 = vpack.c.b16 %v1122, %v1119
    %v1285 = vpack.c.b16 %v1123, %v1120
    %v1286 = vpack.c.b16 %v1124, %v1121
    %v1287 = vpack.c.b16 %v1128, %v1125
    %v1288 = vpack.c.b16 %v1129, %v1126
    %v1289 = vpack.c.b16 %v1130, %v1127
    %v1290 = vpack.c.b16 %v1134, %v1131
    %v1291 = vpack.c.b16 %v1135, %v1132
    %v1292 = vpack.c.b16 %v1136, %v1133
    %v1293 = vpack.c.b16 %v1140, %v1137
    %v1294 = vpack.c.b16 %v1141, %v1138
    %v1295 = vpack.c.b16 %v1142, %v1139
    %v1296 = vpack.c.b16 %v1146, %v1143
    %v1297 = vpack.c.b16 %v1147, %v1144
    %v1298 = vpack.c.b16 %v1148, %v1145
    %v1299 = vpack.c.b16 %v1152, %v1149
    %v1300 = vpack.c.b16 %v1153, %v1150
    %v1301 = vpack.c.b16 %v1154, %v1151
    %v1302 = vpack.c.b16 %v1158, %v1155
    %v1303 = vpack.c.b16 %v1159, %v1156
    %v1304 = vpack.c.b16 %v1160, %v1157
    %v1305 = vpack.c.b16 %v1164, %v1161
    %v1306 = vpack.c.b16 %v1165, %v1162
    %v1307 = vpack.c.b16 %v1166, %v1163
    %v1308 = vpack.c.b16 %v1170, %v1167
    %v1309 = vpack.c.b16 %v1171, %v1168
    %v1310 = vpack.c.b16 %v1172, %v1169
    %v1311 = vpack.c.b16 %v1176, %v1173
    %v1312 = vpack.c.b16 %v1177, %v1174
    %v1313 = vpack.c.b16 %v1178, %v1175
    %v1314 = vpack.c.b16 %v1182, %v1179
    %v1315 = vpack.c.b16 %v1183, %v1180
    %v1316 = vpack.c.b16 %v1184, %v1181
    %v1317 = vpack.c.b16 %v1188, %v1185
    %v1318 = vpack.c.b16 %v1189, %v1186
    %v1319 = vpack.c.b16 %v1190, %v1187
    %v1320 = vpack.c.b16 %v1194, %v1191
    %v1321 = vpack.c.b16 %v1195, %v1192
    %v1322 = vpack.c.b16 %v1196, %v1193
    %v1323 = vpack.c.b16 %v1200, %v1197
    %v1324 = vpack.c.b16 %v1201, %v1198
    %v1325 = vpack.c.b16 %v1202, %v1199
    %v1326 = vpack.c.b16 %v1206, %v1203
    %v1327 = vpack.c.b16 %v1207, %v1204
    %v1328 = vpack.c.b16 %v1208, %v1205
    %v1329 = vpack.c.b16 %v1212, %v1209
    %v1330 = vpack.c.b16 %v1213, %v1210
    %v1331 = vpack.c.b16 %v1214, %v1211
    %v1332 = vpack.c.b16 %v1218, %v1215
    %v1333 = vpack.c.b16 %v1219, %v1216
    %v1334 = vpack.c.b16 %v1220, %v1217
    %v1335 = vpack.c.b16 %v1224, %v1221
    %v1336 = vpack.c.b16 %v1225, %v1222
    %v1337 = vpack.c.b16 %v1226, %v1223
    %v1338 = vpack.c.b16 %v1230, %v1227
    %v1339 = vpack.c.b16 %v1231, %v1228
    %v1340 = vpack.c.b16 %v1232, %v1229
    %v1341 = vpack.c.b16 %v1236, %v1233
    %v1342 = vpack.c.b16 %v1237, %v1234
    %v1343 = vpack.c.b16 %v1238, %v1235
    %v1344 = vpack.c.b16 %v1242, %v1239
    %v1345 = vpack.c.b16 %v1243, %v1240
    %v1346 = vpack.c.b16 %v1244, %v1241
    %v1347 = vpack.c.b16 %v1248, %v1245
    %v1348 = vpack.c.b16 %v1249, %v1246
    %v1349 = vpack.c.b16 %v1250, %v1247
    %v1350 = vpack.c.b16 %v1254, %v1251
    %v1351 = vpack.c.b16 %v1255, %v1252
    %v1352 = vpack.c.b16 %v1256, %v1253
    %1449 = vmatprep.subr.bf16.mxu0 %v1258
    %1450 = vmatpush1.bf16.msra.mxu0 %v1257
    %1451 = vmatprep.subr.bf16.mxu0 %v1261
    %1452 = vmatpush1.bf16.msra.mxu0 %v1260
    %1453 = vmatprep.subr.bf16.mxu0 %v1264
    %1454 = vmatpush1.bf16.msra.mxu0 %v1263
    %1455 = vmatprep.subr.bf16.mxu0 %v1267
    %1456 = vmatpush1.bf16.msra.mxu0 %v1266
    %1457 = vmatprep.subr.bf16.mxu0 %v1270
    %1458 = vmatpush1.bf16.msra.mxu0 %v1269
    %1459 = vmatprep.subr.bf16.mxu0 %v1273
    %1460 = vmatpush1.bf16.msra.mxu0 %v1272
    %1461 = vmatprep.subr.bf16.mxu0 %v1276
    %1462 = vmatpush1.bf16.msra.mxu0 %v1275
    %1463 = vmatprep.subr.bf16.mxu0 %v1279
    %1464 = vmatpush1.bf16.msra.mxu0 %v1278
    %1465 = vmatprep.subr.bf16.mxu0 %v1282
    %1466 = vmatpush1.bf16.msra.mxu0 %v1281
    %1467 = vmatprep.subr.bf16.mxu0 %v1285
    %1468 = vmatpush1.bf16.msra.mxu0 %v1284
    %1469 = vmatprep.subr.bf16.mxu0 %v1288
    %1470 = vmatpush1.bf16.msra.mxu0 %v1287
    %1471 = vmatprep.subr.bf16.mxu0 %v1291
    %1472 = vmatpush1.bf16.msra.mxu0 %v1290
    %1473 = vmatprep.subr.bf16.mxu0 %v1294
    %1474 = vmatpush1.bf16.msra.mxu0 %v1293
    %1475 = vmatprep.subr.bf16.mxu0 %v1297
    %1476 = vmatpush1.bf16.msra.mxu0 %v1296
    %1477 = vmatprep.subr.bf16.mxu0 %v1300
    %1478 = vmatpush1.bf16.msra.mxu0 %v1299
    %1479 = vmatprep.subr.bf16.mxu0 %v1303
    %1480 = vmatpush1.bf16.msra.mxu0 %v1302
    %1481 = vmatprep.mubr.bf16.mxu0 %v682
    %1482 = vmatmul.mubr.bf16.gmra.mrb[0].mxu0 %v681
    %v1483 = vpop.f32.mrb[0].mxu0
    %v1484 = vadd.f32 0.0, %v1483
    %v1485 = vpop.f32.mrb[0].mxu0
    %v1486 = vadd.f32 0.0, %v1485
    %v1487 = vpop.f32.mrb[0].mxu0
    %v1488 = vadd.f32 0.0, %v1487
    %v1489 = vpop.f32.mrb[0].mxu0
    %v1490 = vadd.f32 0.0, %v1489
    %1491 = vmatprep.mubr.bf16.mxu0 %v686
    %1492 = vmatmul.mubr.bf16.gmra.mrb[0].mxu0 %v685
    %v1493 = vpop.f32.mrb[0].mxu0
    %v1494 = vadd.f32 0.0, %v1493
    %v1495 = vpop.f32.mrb[0].mxu0
    %v1496 = vadd.f32 0.0, %v1495
    %v1497 = vpop.f32.mrb[0].mxu0
    %v1498 = vadd.f32 0.0, %v1497
    %v1499 = vpop.f32.mrb[0].mxu0
    %v1500 = vadd.f32 0.0, %v1499
    %1501 = vmatprep.mubr.bf16.mxu0 %v690
    %1502 = vmatmul.mubr.bf16.gmra.mrb[0].mxu0 %v689
    %v1503 = vpop.f32.mrb[0].mxu0
    %v1504 = vadd.f32 0.0, %v1503
    %v1505 = vpop.f32.mrb[0].mxu0
    %v1506 = vadd.f32 0.0, %v1505
    %v1507 = vpop.f32.mrb[0].mxu0
    %v1508 = vadd.f32 0.0, %v1507
    %v1509 = vpop.f32.mrb[0].mxu0
    %v1510 = vadd.f32 0.0, %v1509
    %1511 = vmatprep.mubr.bf16.mxu0 %v694
    %1512 = vmatmul.mubr.bf16.gmra.mrb[0].mxu0 %v693
    %v1513 = vpop.f32.mrb[0].mxu0
    %v1514 = vadd.f32 0.0, %v1513
    %v1515 = vpop.f32.mrb[0].mxu0
    %v1516 = vadd.f32 0.0, %v1515
    %v1517 = vpop.f32.mrb[0].mxu0
    %v1518 = vadd.f32 0.0, %v1517
    %v1519 = vpop.f32.mrb[0].mxu0
    %v1520 = vadd.f32 0.0, %v1519
    %1521 = vmatprep.mubr.bf16.mxu0 %v698
    %1522 = vmatmul.mubr.bf16.gmra.mrb[0].mxu0 %v697
    %v1523 = vpop.f32.mrb[0].mxu0
    %v1524 = vadd.f32 0.0, %v1523
    %v1525 = vpop.f32.mrb[0].mxu0
    %v1526 = vadd.f32 0.0, %v1525
    %v1527 = vpop.f32.mrb[0].mxu0
    %v1528 = vadd.f32 0.0, %v1527
    %v1529 = vpop.f32.mrb[0].mxu0
    %v1530 = vadd.f32 0.0, %v1529
    %1531 = vmatprep.mubr.bf16.mxu0 %v702
    %1532 = vmatmul.mubr.bf16.gmra.mrb[0].mxu0 %v701
    %v1533 = vpop.f32.mrb[0].mxu0
    %v1534 = vadd.f32 0.0, %v1533
    %v1535 = vpop.f32.mrb[0].mxu0
    %v1536 = vadd.f32 0.0, %v1535
    %v1537 = vpop.f32.mrb[0].mxu0
    %v1538 = vadd.f32 0.0, %v1537
    %v1539 = vpop.f32.mrb[0].mxu0
    %v1540 = vadd.f32 0.0, %v1539
    %1541 = vmatprep.mubr.bf16.mxu0 %v706
    %1542 = vmatmul.mubr.bf16.gmra.mrb[0].mxu0 %v705
    %v1543 = vpop.f32.mrb[0].mxu0
    %v1544 = vadd.f32 0.0, %v1543
    %v1545 = vpop.f32.mrb[0].mxu0
    %v1546 = vadd.f32 0.0, %v1545
    %v1547 = vpop.f32.mrb[0].mxu0
    %v1548 = vadd.f32 0.0, %v1547
    %v1549 = vpop.f32.mrb[0].mxu0
    %v1550 = vadd.f32 0.0, %v1549
    %1551 = vmatprep.mubr.bf16.mxu0 %v710
    %1552 = vmatmul.mubr.bf16.gmra.mrb[0].mxu0 %v709
    %v1553 = vpop.f32.mrb[0].mxu0
    %v1554 = vadd.f32 0.0, %v1553
    %v1555 = vpop.f32.mrb[0].mxu0
    %v1556 = vadd.f32 0.0, %v1555
    %v1557 = vpop.f32.mrb[0].mxu0
    %v1558 = vadd.f32 0.0, %v1557
    %v1559 = vpop.f32.mrb[0].mxu0
    %v1560 = vadd.f32 0.0, %v1559
    %1561 = vmatprep.mubr.bf16.mxu0 %v714
    %1562 = vmatmul.mubr.bf16.gmra.mrb[0].mxu0 %v713
    %v1563 = vpop.f32.mrb[0].mxu0
    %v1564 = vadd.f32 0.0, %v1563
    %v1565 = vpop.f32.mrb[0].mxu0
    %v1566 = vadd.f32 0.0, %v1565
    %v1567 = vpop.f32.mrb[0].mxu0
    %v1568 = vadd.f32 0.0, %v1567
    %v1569 = vpop.f32.mrb[0].mxu0
    %v1570 = vadd.f32 0.0, %v1569
    %1571 = vmatprep.mubr.bf16.mxu0 %v718
    %1572 = vmatmul.mubr.bf16.gmra.mrb[0].mxu0 %v717
    %v1573 = vpop.f32.mrb[0].mxu0
    %v1574 = vadd.f32 0.0, %v1573
    %v1575 = vpop.f32.mrb[0].mxu0
    %v1576 = vadd.f32 0.0, %v1575
    %v1577 = vpop.f32.mrb[0].mxu0
    %v1578 = vadd.f32 0.0, %v1577
    %v1579 = vpop.f32.mrb[0].mxu0
    %v1580 = vadd.f32 0.0, %v1579
    %1581 = vmatprep.mubr.bf16.mxu0 %v722
    %1582 = vmatmul.mubr.bf16.gmra.mrb[0].mxu0 %v721
    %v1583 = vpop.f32.mrb[0].mxu0
    %v1584 = vadd.f32 0.0, %v1583
    %v1585 = vpop.f32.mrb[0].mxu0
    %v1586 = vadd.f32 0.0, %v1585
    %v1587 = vpop.f32.mrb[0].mxu0
    %v1588 = vadd.f32 0.0, %v1587
    %v1589 = vpop.f32.mrb[0].mxu0
    %v1590 = vadd.f32 0.0, %v1589
    %1591 = vmatprep.mubr.bf16.mxu0 %v726
    %1592 = vmatmul.mubr.bf16.gmra.mrb[0].mxu0 %v725
    %v1593 = vpop.f32.mrb[0].mxu0
    %v1594 = vadd.f32 0.0, %v1593
    %v1595 = vpop.f32.mrb[0].mxu0
    %v1596 = vadd.f32 0.0, %v1595
    %v1597 = vpop.f32.mrb[0].mxu0
    %v1598 = vadd.f32 0.0, %v1597
    %v1599 = vpop.f32.mrb[0].mxu0
    %v1600 = vadd.f32 0.0, %v1599
    %1601 = vmatprep.mubr.bf16.mxu0 %v730
    %1602 = vmatmul.mubr.bf16.gmra.mrb[0].mxu0 %v729
    %v1603 = vpop.f32.mrb[0].mxu0
    %v1604 = vadd.f32 0.0, %v1603
    %v1605 = vpop.f32.mrb[0].mxu0
    %v1606 = vadd.f32 0.0, %v1605
    %v1607 = vpop.f32.mrb[0].mxu0
    %v1608 = vadd.f32 0.0, %v1607
    %v1609 = vpop.f32.mrb[0].mxu0
    %v1610 = vadd.f32 0.0, %v1609
    %1611 = vmatprep.mubr.bf16.mxu0 %v734
    %1612 = vmatmul.mubr.bf16.gmra.mrb[0].mxu0 %v733
    %v1613 = vpop.f32.mrb[0].mxu0
    %v1614 = vadd.f32 0.0, %v1613
    %v1615 = vpop.f32.mrb[0].mxu0
    %v1616 = vadd.f32 0.0, %v1615
    %v1617 = vpop.f32.mrb[0].mxu0
    %v1618 = vadd.f32 0.0, %v1617
    %v1619 = vpop.f32.mrb[0].mxu0
    %v1620 = vadd.f32 0.0, %v1619
    %1621 = vmatprep.mubr.bf16.mxu0 %v738
    %1622 = vmatmul.mubr.bf16.gmra.mrb[0].mxu0 %v737
    %v1623 = vpop.f32.mrb[0].mxu0
    %v1624 = vadd.f32 0.0, %v1623
    %v1625 = vpop.f32.mrb[0].mxu0
    %v1626 = vadd.f32 0.0, %v1625
    %v1627 = vpop.f32.mrb[0].mxu0
    %v1628 = vadd.f32 0.0, %v1627
    %v1629 = vpop.f32.mrb[0].mxu0
    %v1630 = vadd.f32 0.0, %v1629
    %1631 = vmatprep.mubr.bf16.mxu0 %v742
    %1632 = vmatmul.mubr.bf16.gmra.mrb[0].mxu0 %v741
    %v1633 = vpop.f32.mrb[0].mxu0
    %v1634 = vadd.f32 0.0, %v1633
    %v1635 = vpop.f32.mrb[0].mxu0
    %v1636 = vadd.f32 0.0, %v1635
    %v1637 = vpop.f32.mrb[0].mxu0
    %v1638 = vadd.f32 0.0, %v1637
    %v1639 = vpop.f32.mrb[0].mxu0
    %v1640 = vadd.f32 0.0, %v1639
    %1641 = vmatprep.mubr.bf16.mxu0 %v746
    %1642 = vmatmul.mubr.bf16.gmra.mrb[0].mxu0 %v745
    %v1643 = vpop.f32.mrb[0].mxu0
    %v1644 = vadd.f32 0.0, %v1643
    %v1645 = vpop.f32.mrb[0].mxu0
    %v1646 = vadd.f32 0.0, %v1645
    %v1647 = vpop.f32.mrb[0].mxu0
    %v1648 = vadd.f32 0.0, %v1647
    %v1649 = vpop.f32.mrb[0].mxu0
    %v1650 = vadd.f32 0.0, %v1649
    %1651 = vmatprep.mubr.bf16.mxu0 %v750
    %1652 = vmatmul.mubr.bf16.gmra.mrb[0].mxu0 %v749
    %v1653 = vpop.f32.mrb[0].mxu0
    %v1654 = vadd.f32 0.0, %v1653
    %v1655 = vpop.f32.mrb[0].mxu0
    %v1656 = vadd.f32 0.0, %v1655
    %v1657 = vpop.f32.mrb[0].mxu0
    %v1658 = vadd.f32 0.0, %v1657
    %v1659 = vpop.f32.mrb[0].mxu0
    %v1660 = vadd.f32 0.0, %v1659
    %1661 = vmatprep.mubr.bf16.mxu0 %v754
    %1662 = vmatmul.mubr.bf16.gmra.mrb[0].mxu0 %v753
    %v1663 = vpop.f32.mrb[0].mxu0
    %v1664 = vadd.f32 0.0, %v1663
    %v1665 = vpop.f32.mrb[0].mxu0
    %v1666 = vadd.f32 0.0, %v1665
    %v1667 = vpop.f32.mrb[0].mxu0
    %v1668 = vadd.f32 0.0, %v1667
    %v1669 = vpop.f32.mrb[0].mxu0
    %v1670 = vadd.f32 0.0, %v1669
    %1671 = vmatprep.mubr.bf16.mxu0 %v758
    %1672 = vmatmul.mubr.bf16.gmra.mrb[0].mxu0 %v757
    %v1673 = vpop.f32.mrb[0].mxu0
    %v1674 = vadd.f32 0.0, %v1673
    %v1675 = vpop.f32.mrb[0].mxu0
    %v1676 = vadd.f32 0.0, %v1675
    %v1677 = vpop.f32.mrb[0].mxu0
    %v1678 = vadd.f32 0.0, %v1677
    %v1679 = vpop.f32.mrb[0].mxu0
    %v1680 = vadd.f32 0.0, %v1679
    %1681 = vmatprep.mubr.bf16.mxu0 %v762
    %1682 = vmatmul.mubr.bf16.gmra.mrb[0].mxu0 %v761
    %v1683 = vpop.f32.mrb[0].mxu0
    %v1684 = vadd.f32 0.0, %v1683
    %v1685 = vpop.f32.mrb[0].mxu0
    %v1686 = vadd.f32 0.0, %v1685
    %v1687 = vpop.f32.mrb[0].mxu0
    %v1688 = vadd.f32 0.0, %v1687
    %v1689 = vpop.f32.mrb[0].mxu0
    %v1690 = vadd.f32 0.0, %v1689
    %1691 = vmatprep.mubr.bf16.mxu0 %v766
    %1692 = vmatmul.mubr.bf16.gmra.mrb[0].mxu0 %v765
    %v1693 = vpop.f32.mrb[0].mxu0
    %v1694 = vadd.f32 0.0, %v1693
    %v1695 = vpop.f32.mrb[0].mxu0
    %v1696 = vadd.f32 0.0, %v1695
    %v1697 = vpop.f32.mrb[0].mxu0
    %v1698 = vadd.f32 0.0, %v1697
    %v1699 = vpop.f32.mrb[0].mxu0
    %v1700 = vadd.f32 0.0, %v1699
    %1701 = vmatprep.mubr.bf16.mxu0 %v770
    %1702 = vmatmul.mubr.bf16.gmra.mrb[0].mxu0 %v769
    %v1703 = vpop.f32.mrb[0].mxu0
    %v1704 = vadd.f32 0.0, %v1703
    %v1705 = vpop.f32.mrb[0].mxu0
    %v1706 = vadd.f32 0.0, %v1705
    %v1707 = vpop.f32.mrb[0].mxu0
    %v1708 = vadd.f32 0.0, %v1707
    %v1709 = vpop.f32.mrb[0].mxu0
    %v1710 = vadd.f32 0.0, %v1709
    %1711 = vmatprep.mubr.bf16.mxu0 %v774
    %1712 = vmatmul.mubr.bf16.gmra.mrb[0].mxu0 %v773
    %v1713 = vpop.f32.mrb[0].mxu0
    %v1714 = vadd.f32 0.0, %v1713
    %v1715 = vpop.f32.mrb[0].mxu0
    %v1716 = vadd.f32 0.0, %v1715
    %v1717 = vpop.f32.mrb[0].mxu0
    %v1718 = vadd.f32 0.0, %v1717
    %v1719 = vpop.f32.mrb[0].mxu0
    %v1720 = vadd.f32 0.0, %v1719
    %1721 = vmatprep.mubr.bf16.mxu0 %v778
    %1722 = vmatmul.mubr.bf16.gmra.mrb[0].mxu0 %v777
    %v1723 = vpop.f32.mrb[0].mxu0
    %v1724 = vadd.f32 0.0, %v1723
    %v1725 = vpop.f32.mrb[0].mxu0
    %v1726 = vadd.f32 0.0, %v1725
    %v1727 = vpop.f32.mrb[0].mxu0
    %v1728 = vadd.f32 0.0, %v1727
    %v1729 = vpop.f32.mrb[0].mxu0
    %v1730 = vadd.f32 0.0, %v1729
    %1731 = vmatprep.mubr.bf16.mxu0 %v782
    %1732 = vmatmul.mubr.bf16.gmra.mrb[0].mxu0 %v781
    %v1733 = vpop.f32.mrb[0].mxu0
    %v1734 = vadd.f32 0.0, %v1733
    %v1735 = vpop.f32.mrb[0].mxu0
    %v1736 = vadd.f32 0.0, %v1735
    %v1737 = vpop.f32.mrb[0].mxu0
    %v1738 = vadd.f32 0.0, %v1737
    %v1739 = vpop.f32.mrb[0].mxu0
    %v1740 = vadd.f32 0.0, %v1739
    %1741 = vmatprep.mubr.bf16.mxu0 %v786
    %1742 = vmatmul.mubr.bf16.gmra.mrb[0].mxu0 %v785
    %v1743 = vpop.f32.mrb[0].mxu0
    %v1744 = vadd.f32 0.0, %v1743
    %v1745 = vpop.f32.mrb[0].mxu0
    %v1746 = vadd.f32 0.0, %v1745
    %v1747 = vpop.f32.mrb[0].mxu0
    %v1748 = vadd.f32 0.0, %v1747
    %v1749 = vpop.f32.mrb[0].mxu0
    %v1750 = vadd.f32 0.0, %v1749
    %1751 = vmatprep.mubr.bf16.mxu0 %v790
    %1752 = vmatmul.mubr.bf16.gmra.mrb[0].mxu0 %v789
    %v1753 = vpop.f32.mrb[0].mxu0
    %v1754 = vadd.f32 0.0, %v1753
    %v1755 = vpop.f32.mrb[0].mxu0
    %v1756 = vadd.f32 0.0, %v1755
    %v1757 = vpop.f32.mrb[0].mxu0
    %v1758 = vadd.f32 0.0, %v1757
    %v1759 = vpop.f32.mrb[0].mxu0
    %v1760 = vadd.f32 0.0, %v1759
    %1761 = vmatprep.mubr.bf16.mxu0 %v794
    %1762 = vmatmul.mubr.bf16.gmra.mrb[0].mxu0 %v793
    %v1763 = vpop.f32.mrb[0].mxu0
    %v1764 = vadd.f32 0.0, %v1763
    %v1765 = vpop.f32.mrb[0].mxu0
    %v1766 = vadd.f32 0.0, %v1765
    %v1767 = vpop.f32.mrb[0].mxu0
    %v1768 = vadd.f32 0.0, %v1767
    %v1769 = vpop.f32.mrb[0].mxu0
    %v1770 = vadd.f32 0.0, %v1769
    %1771 = vmatprep.mubr.bf16.mxu0 %v798
    %1772 = vmatmul.mubr.bf16.gmra.mrb[0].mxu0 %v797
    %v1773 = vpop.f32.mrb[0].mxu0
    %v1774 = vadd.f32 0.0, %v1773
    %v1775 = vpop.f32.mrb[0].mxu0
    %v1776 = vadd.f32 0.0, %v1775
    %v1777 = vpop.f32.mrb[0].mxu0
    %v1778 = vadd.f32 0.0, %v1777
    %v1779 = vpop.f32.mrb[0].mxu0
    %v1780 = vadd.f32 0.0, %v1779
    %1781 = vmatprep.mubr.bf16.mxu0 %v802
    %1782 = vmatmul.mubr.bf16.gmra.mrb[0].mxu0 %v801
    %v1783 = vpop.f32.mrb[0].mxu0
    %v1784 = vadd.f32 0.0, %v1783
    %v1785 = vpop.f32.mrb[0].mxu0
    %v1786 = vadd.f32 0.0, %v1785
    %v1787 = vpop.f32.mrb[0].mxu0
    %v1788 = vadd.f32 0.0, %v1787
    %v1789 = vpop.f32.mrb[0].mxu0
    %v1790 = vadd.f32 0.0, %v1789
    %1791 = vmatprep.mubr.bf16.mxu0 %v806
    %1792 = vmatmul.mubr.bf16.gmra.mrb[0].mxu0 %v805
    %v1793 = vpop.f32.mrb[0].mxu0
    %v1794 = vadd.f32 0.0, %v1793
    %v1795 = vpop.f32.mrb[0].mxu0
    %v1796 = vadd.f32 0.0, %v1795
    %v1797 = vpop.f32.mrb[0].mxu0
    %v1798 = vadd.f32 0.0, %v1797
    %v1799 = vpop.f32.mrb[0].mxu0
    %v1800 = vadd.f32 0.0, %v1799
    %1801 = vdwg.mxu0
    %1802 = vmatprep.subr.bf16.mxu0 %v1306
    %1803 = vmatpush1.bf16.msra.mxu0 %v1305
    %1804 = vmatprep.subr.bf16.mxu0 %v1309
    %1805 = vmatpush1.bf16.msra.mxu0 %v1308
    %1806 = vmatprep.subr.bf16.mxu0 %v1312
    %1807 = vmatpush1.bf16.msra.mxu0 %v1311
    %1808 = vmatprep.subr.bf16.mxu0 %v1315
    %1809 = vmatpush1.bf16.msra.mxu0 %v1314
    %1810 = vmatprep.subr.bf16.mxu0 %v1318
    %1811 = vmatpush1.bf16.msra.mxu0 %v1317
    %1812 = vmatprep.subr.bf16.mxu0 %v1321
    %1813 = vmatpush1.bf16.msra.mxu0 %v1320
    %1814 = vmatprep.subr.bf16.mxu0 %v1324
    %1815 = vmatpush1.bf16.msra.mxu0 %v1323
    %1816 = vmatprep.subr.bf16.mxu0 %v1327
    %1817 = vmatpush1.bf16.msra.mxu0 %v1326
    %1818 = vmatprep.subr.bf16.mxu0 %v1330
    %1819 = vmatpush1.bf16.msra.mxu0 %v1329
    %1820 = vmatprep.subr.bf16.mxu0 %v1333
    %1821 = vmatpush1.bf16.msra.mxu0 %v1332
    %1822 = vmatprep.subr.bf16.mxu0 %v1336
    %1823 = vmatpush1.bf16.msra.mxu0 %v1335
    %1824 = vmatprep.subr.bf16.mxu0 %v1339
    %1825 = vmatpush1.bf16.msra.mxu0 %v1338
    %1826 = vmatprep.subr.bf16.mxu0 %v1342
    %1827 = vmatpush1.bf16.msra.mxu0 %v1341
    %1828 = vmatprep.subr.bf16.mxu0 %v1345
    %1829 = vmatpush1.bf16.msra.mxu0 %v1344
    %1830 = vmatprep.subr.bf16.mxu0 %v1348
    %1831 = vmatpush1.bf16.msra.mxu0 %v1347
    %1832 = vmatprep.subr.bf16.mxu0 %v1351
    %1833 = vmatpush1.bf16.msra.mxu0 %v1350
    %1834 = vmatprep.mubr.bf16.mxu0 %v684
    %1835 = vmatmul.mubr.bf16.gmra.mrb[0].mxu0 %v683
    %v1836 = vpop.f32.mrb[0].mxu0
    %v1837 = vadd.f32 %v1484, %v1836
    %v1838 = vpop.f32.mrb[0].mxu0
    %v1839 = vadd.f32 %v1486, %v1838
    %v1840 = vpop.f32.mrb[0].mxu0
    %v1841 = vadd.f32 %v1488, %v1840
    %v1842 = vpop.f32.mrb[0].mxu0
    %v1843 = vadd.f32 %v1490, %v1842
    %1844 = vmatprep.mubr.bf16.mxu0 %v688
    %1845 = vmatmul.mubr.bf16.gmra.mrb[0].mxu0 %v687
    %v1846 = vpop.f32.mrb[0].mxu0
    %v1847 = vadd.f32 %v1494, %v1846
    %v1848 = vpop.f32.mrb[0].mxu0
    %v1849 = vadd.f32 %v1496, %v1848
    %v1850 = vpop.f32.mrb[0].mxu0
    %v1851 = vadd.f32 %v1498, %v1850
    %v1852 = vpop.f32.mrb[0].mxu0
    %v1853 = vadd.f32 %v1500, %v1852
    %1854 = vmatprep.mubr.bf16.mxu0 %v692
    %1855 = vmatmul.mubr.bf16.gmra.mrb[0].mxu0 %v691
    %v1856 = vpop.f32.mrb[0].mxu0
    %v1857 = vadd.f32 %v1504, %v1856
    %v1858 = vpop.f32.mrb[0].mxu0
    %v1859 = vadd.f32 %v1506, %v1858
    %v1860 = vpop.f32.mrb[0].mxu0
    %v1861 = vadd.f32 %v1508, %v1860
    %v1862 = vpop.f32.mrb[0].mxu0
    %v1863 = vadd.f32 %v1510, %v1862
    %1864 = vmatprep.mubr.bf16.mxu0 %v696
    %1865 = vmatmul.mubr.bf16.gmra.mrb[0].mxu0 %v695
    %v1866 = vpop.f32.mrb[0].mxu0
    %v1867 = vadd.f32 %v1514, %v1866
    %v1868 = vpop.f32.mrb[0].mxu0
    %v1869 = vadd.f32 %v1516, %v1868
    %v1870 = vpop.f32.mrb[0].mxu0
    %v1871 = vadd.f32 %v1518, %v1870
    %v1872 = vpop.f32.mrb[0].mxu0
    %v1873 = vadd.f32 %v1520, %v1872
    %1874 = vmatprep.mubr.bf16.mxu0 %v700
    %1875 = vmatmul.mubr.bf16.gmra.mrb[0].mxu0 %v699
    %v1876 = vpop.f32.mrb[0].mxu0
    %v1877 = vadd.f32 %v1524, %v1876
    %v1878 = vpop.f32.mrb[0].mxu0
    %v1879 = vadd.f32 %v1526, %v1878
    %v1880 = vpop.f32.mrb[0].mxu0
    %v1881 = vadd.f32 %v1528, %v1880
    %v1882 = vpop.f32.mrb[0].mxu0
    %v1883 = vadd.f32 %v1530, %v1882
    %1884 = vmatprep.mubr.bf16.mxu0 %v704
    %1885 = vmatmul.mubr.bf16.gmra.mrb[0].mxu0 %v703
    %v1886 = vpop.f32.mrb[0].mxu0
    %v1887 = vadd.f32 %v1534, %v1886
    %v1888 = vpop.f32.mrb[0].mxu0
    %v1889 = vadd.f32 %v1536, %v1888
    %v1890 = vpop.f32.mrb[0].mxu0
    %v1891 = vadd.f32 %v1538, %v1890
    %v1892 = vpop.f32.mrb[0].mxu0
    %v1893 = vadd.f32 %v1540, %v1892
    %1894 = vmatprep.mubr.bf16.mxu0 %v708
    %1895 = vmatmul.mubr.bf16.gmra.mrb[0].mxu0 %v707
    %v1896 = vpop.f32.mrb[0].mxu0
    %v1897 = vadd.f32 %v1544, %v1896
    %v1898 = vpop.f32.mrb[0].mxu0
    %v1899 = vadd.f32 %v1546, %v1898
    %v1900 = vpop.f32.mrb[0].mxu0
    %v1901 = vadd.f32 %v1548, %v1900
    %v1902 = vpop.f32.mrb[0].mxu0
    %v1903 = vadd.f32 %v1550, %v1902
    %1904 = vmatprep.mubr.bf16.mxu0 %v712
    %1905 = vmatmul.mubr.bf16.gmra.mrb[0].mxu0 %v711
    %v1906 = vpop.f32.mrb[0].mxu0
    %v1907 = vadd.f32 %v1554, %v1906
    %v1908 = vpop.f32.mrb[0].mxu0
    %v1909 = vadd.f32 %v1556, %v1908
    %v1910 = vpop.f32.mrb[0].mxu0
    %v1911 = vadd.f32 %v1558, %v1910
    %v1912 = vpop.f32.mrb[0].mxu0
    %v1913 = vadd.f32 %v1560, %v1912
    %1914 = vmatprep.mubr.bf16.mxu0 %v716
    %1915 = vmatmul.mubr.bf16.gmra.mrb[0].mxu0 %v715
    %v1916 = vpop.f32.mrb[0].mxu0
    %v1917 = vadd.f32 %v1564, %v1916
    %v1918 = vpop.f32.mrb[0].mxu0
    %v1919 = vadd.f32 %v1566, %v1918
    %v1920 = vpop.f32.mrb[0].mxu0
    %v1921 = vadd.f32 %v1568, %v1920
    %v1922 = vpop.f32.mrb[0].mxu0
    %v1923 = vadd.f32 %v1570, %v1922
    %1924 = vmatprep.mubr.bf16.mxu0 %v720
    %1925 = vmatmul.mubr.bf16.gmra.mrb[0].mxu0 %v719
    %v1926 = vpop.f32.mrb[0].mxu0
    %v1927 = vadd.f32 %v1574, %v1926
    %v1928 = vpop.f32.mrb[0].mxu0
    %v1929 = vadd.f32 %v1576, %v1928
    %v1930 = vpop.f32.mrb[0].mxu0
    %v1931 = vadd.f32 %v1578, %v1930
    %v1932 = vpop.f32.mrb[0].mxu0
    %v1933 = vadd.f32 %v1580, %v1932
    %1934 = vmatprep.mubr.bf16.mxu0 %v724
    %1935 = vmatmul.mubr.bf16.gmra.mrb[0].mxu0 %v723
    %v1936 = vpop.f32.mrb[0].mxu0
    %v1937 = vadd.f32 %v1584, %v1936
    %v1938 = vpop.f32.mrb[0].mxu0
    %v1939 = vadd.f32 %v1586, %v1938
    %v1940 = vpop.f32.mrb[0].mxu0
    %v1941 = vadd.f32 %v1588, %v1940
    %v1942 = vpop.f32.mrb[0].mxu0
    %v1943 = vadd.f32 %v1590, %v1942
    %1944 = vmatprep.mubr.bf16.mxu0 %v728
    %1945 = vmatmul.mubr.bf16.gmra.mrb[0].mxu0 %v727
    %v1946 = vpop.f32.mrb[0].mxu0
    %v1947 = vadd.f32 %v1594, %v1946
    %v1948 = vpop.f32.mrb[0].mxu0
    %v1949 = vadd.f32 %v1596, %v1948
    %v1950 = vpop.f32.mrb[0].mxu0
    %v1951 = vadd.f32 %v1598, %v1950
    %v1952 = vpop.f32.mrb[0].mxu0
    %v1953 = vadd.f32 %v1600, %v1952
    %1954 = vmatprep.mubr.bf16.mxu0 %v732
    %1955 = vmatmul.mubr.bf16.gmra.mrb[0].mxu0 %v731
    %v1956 = vpop.f32.mrb[0].mxu0
    %v1957 = vadd.f32 %v1604, %v1956
    %v1958 = vpop.f32.mrb[0].mxu0
    %v1959 = vadd.f32 %v1606, %v1958
    %v1960 = vpop.f32.mrb[0].mxu0
    %v1961 = vadd.f32 %v1608, %v1960
    %v1962 = vpop.f32.mrb[0].mxu0
    %v1963 = vadd.f32 %v1610, %v1962
    %1964 = vmatprep.mubr.bf16.mxu0 %v736
    %1965 = vmatmul.mubr.bf16.gmra.mrb[0].mxu0 %v735
    %v1966 = vpop.f32.mrb[0].mxu0
    %v1967 = vadd.f32 %v1614, %v1966
    %v1968 = vpop.f32.mrb[0].mxu0
    %v1969 = vadd.f32 %v1616, %v1968
    %v1970 = vpop.f32.mrb[0].mxu0
    %v1971 = vadd.f32 %v1618, %v1970
    %v1972 = vpop.f32.mrb[0].mxu0
    %v1973 = vadd.f32 %v1620, %v1972
    %1974 = vmatprep.mubr.bf16.mxu0 %v740
    %1975 = vmatmul.mubr.bf16.gmra.mrb[0].mxu0 %v739
    %v1976 = vpop.f32.mrb[0].mxu0
    %v1977 = vadd.f32 %v1624, %v1976
    %v1978 = vpop.f32.mrb[0].mxu0
    %v1979 = vadd.f32 %v1626, %v1978
    %v1980 = vpop.f32.mrb[0].mxu0
    %v1981 = vadd.f32 %v1628, %v1980
    %v1982 = vpop.f32.mrb[0].mxu0
    %v1983 = vadd.f32 %v1630, %v1982
    %1984 = vmatprep.mubr.bf16.mxu0 %v744
    %1985 = vmatmul.mubr.bf16.gmra.mrb[0].mxu0 %v743
    %v1986 = vpop.f32.mrb[0].mxu0
    %v1987 = vadd.f32 %v1634, %v1986
    %v1988 = vpop.f32.mrb[0].mxu0
    %v1989 = vadd.f32 %v1636, %v1988
    %v1990 = vpop.f32.mrb[0].mxu0
    %v1991 = vadd.f32 %v1638, %v1990
    %v1992 = vpop.f32.mrb[0].mxu0
    %v1993 = vadd.f32 %v1640, %v1992
    %1994 = vmatprep.mubr.bf16.mxu0 %v748
    %1995 = vmatmul.mubr.bf16.gmra.mrb[0].mxu0 %v747
    %v1996 = vpop.f32.mrb[0].mxu0
    %v1997 = vadd.f32 %v1644, %v1996
    %v1998 = vpop.f32.mrb[0].mxu0
    %v1999 = vadd.f32 %v1646, %v1998
    %v2000 = vpop.f32.mrb[0].mxu0
    %v2001 = vadd.f32 %v1648, %v2000
    %v2002 = vpop.f32.mrb[0].mxu0
    %v2003 = vadd.f32 %v1650, %v2002
    %2004 = vmatprep.mubr.bf16.mxu0 %v752
    %2005 = vmatmul.mubr.bf16.gmra.mrb[0].mxu0 %v751
    %v2006 = vpop.f32.mrb[0].mxu0
    %v2007 = vadd.f32 %v1654, %v2006
    %v2008 = vpop.f32.mrb[0].mxu0
    %v2009 = vadd.f32 %v1656, %v2008
    %v2010 = vpop.f32.mrb[0].mxu0
    %v2011 = vadd.f32 %v1658, %v2010
    %v2012 = vpop.f32.mrb[0].mxu0
    %v2013 = vadd.f32 %v1660, %v2012
    %2014 = vmatprep.mubr.bf16.mxu0 %v756
    %2015 = vmatmul.mubr.bf16.gmra.mrb[0].mxu0 %v755
    %v2016 = vpop.f32.mrb[0].mxu0
    %v2017 = vadd.f32 %v1664, %v2016
    %v2018 = vpop.f32.mrb[0].mxu0
    %v2019 = vadd.f32 %v1666, %v2018
    %v2020 = vpop.f32.mrb[0].mxu0
    %v2021 = vadd.f32 %v1668, %v2020
    %v2022 = vpop.f32.mrb[0].mxu0
    %v2023 = vadd.f32 %v1670, %v2022
    %2024 = vmatprep.mubr.bf16.mxu0 %v760
    %2025 = vmatmul.mubr.bf16.gmra.mrb[0].mxu0 %v759
    %v2026 = vpop.f32.mrb[0].mxu0
    %v2027 = vadd.f32 %v1674, %v2026
    %v2028 = vpop.f32.mrb[0].mxu0
    %v2029 = vadd.f32 %v1676, %v2028
    %v2030 = vpop.f32.mrb[0].mxu0
    %v2031 = vadd.f32 %v1678, %v2030
    %v2032 = vpop.f32.mrb[0].mxu0
    %v2033 = vadd.f32 %v1680, %v2032
    %2034 = vmatprep.mubr.bf16.mxu0 %v764
    %2035 = vmatmul.mubr.bf16.gmra.mrb[0].mxu0 %v763
    %v2036 = vpop.f32.mrb[0].mxu0
    %v2037 = vadd.f32 %v1684, %v2036
    %v2038 = vpop.f32.mrb[0].mxu0
    %v2039 = vadd.f32 %v1686, %v2038
    %v2040 = vpop.f32.mrb[0].mxu0
    %v2041 = vadd.f32 %v1688, %v2040
    %v2042 = vpop.f32.mrb[0].mxu0
    %v2043 = vadd.f32 %v1690, %v2042
    %2044 = vmatprep.mubr.bf16.mxu0 %v768
    %2045 = vmatmul.mubr.bf16.gmra.mrb[0].mxu0 %v767
    %v2046 = vpop.f32.mrb[0].mxu0
    %v2047 = vadd.f32 %v1694, %v2046
    %v2048 = vpop.f32.mrb[0].mxu0
    %v2049 = vadd.f32 %v1696, %v2048
    %v2050 = vpop.f32.mrb[0].mxu0
    %v2051 = vadd.f32 %v1698, %v2050
    %v2052 = vpop.f32.mrb[0].mxu0
    %v2053 = vadd.f32 %v1700, %v2052
    %2054 = vmatprep.mubr.bf16.mxu0 %v772
    %2055 = vmatmul.mubr.bf16.gmra.mrb[0].mxu0 %v771
    %v2056 = vpop.f32.mrb[0].mxu0
    %v2057 = vadd.f32 %v1704, %v2056
    %v2058 = vpop.f32.mrb[0].mxu0
    %v2059 = vadd.f32 %v1706, %v2058
    %v2060 = vpop.f32.mrb[0].mxu0
    %v2061 = vadd.f32 %v1708, %v2060
    %v2062 = vpop.f32.mrb[0].mxu0
    %v2063 = vadd.f32 %v1710, %v2062
    %2064 = vmatprep.mubr.bf16.mxu0 %v776
    %2065 = vmatmul.mubr.bf16.gmra.mrb[0].mxu0 %v775
    %v2066 = vpop.f32.mrb[0].mxu0
    %v2067 = vadd.f32 %v1714, %v2066
    %v2068 = vpop.f32.mrb[0].mxu0
    %v2069 = vadd.f32 %v1716, %v2068
    %v2070 = vpop.f32.mrb[0].mxu0
    %v2071 = vadd.f32 %v1718, %v2070
    %v2072 = vpop.f32.mrb[0].mxu0
    %v2073 = vadd.f32 %v1720, %v2072
    %2074 = vmatprep.mubr.bf16.mxu0 %v780
    %2075 = vmatmul.mubr.bf16.gmra.mrb[0].mxu0 %v779
    %v2076 = vpop.f32.mrb[0].mxu0
    %v2077 = vadd.f32 %v1724, %v2076
    %v2078 = vpop.f32.mrb[0].mxu0
    %v2079 = vadd.f32 %v1726, %v2078
    %v2080 = vpop.f32.mrb[0].mxu0
    %v2081 = vadd.f32 %v1728, %v2080
    %v2082 = vpop.f32.mrb[0].mxu0
    %v2083 = vadd.f32 %v1730, %v2082
    %2084 = vmatprep.mubr.bf16.mxu0 %v784
    %2085 = vmatmul.mubr.bf16.gmra.mrb[0].mxu0 %v783
    %v2086 = vpop.f32.mrb[0].mxu0
    %v2087 = vadd.f32 %v1734, %v2086
    %v2088 = vpop.f32.mrb[0].mxu0
    %v2089 = vadd.f32 %v1736, %v2088
    %v2090 = vpop.f32.mrb[0].mxu0
    %v2091 = vadd.f32 %v1738, %v2090
    %v2092 = vpop.f32.mrb[0].mxu0
    %v2093 = vadd.f32 %v1740, %v2092
    %2094 = vmatprep.mubr.bf16.mxu0 %v788
    %2095 = vmatmul.mubr.bf16.gmra.mrb[0].mxu0 %v787
    %v2096 = vpop.f32.mrb[0].mxu0
    %v2097 = vadd.f32 %v1744, %v2096
    %v2098 = vpop.f32.mrb[0].mxu0
    %v2099 = vadd.f32 %v1746, %v2098
    %v2100 = vpop.f32.mrb[0].mxu0
    %v2101 = vadd.f32 %v1748, %v2100
    %v2102 = vpop.f32.mrb[0].mxu0
    %v2103 = vadd.f32 %v1750, %v2102
    %2104 = vmatprep.mubr.bf16.mxu0 %v792
    %2105 = vmatmul.mubr.bf16.gmra.mrb[0].mxu0 %v791
    %v2106 = vpop.f32.mrb[0].mxu0
    %v2107 = vadd.f32 %v1754, %v2106
    %v2108 = vpop.f32.mrb[0].mxu0
    %v2109 = vadd.f32 %v1756, %v2108
    %v2110 = vpop.f32.mrb[0].mxu0
    %v2111 = vadd.f32 %v1758, %v2110
    %v2112 = vpop.f32.mrb[0].mxu0
    %v2113 = vadd.f32 %v1760, %v2112
    %2114 = vmatprep.mubr.bf16.mxu0 %v796
    %2115 = vmatmul.mubr.bf16.gmra.mrb[0].mxu0 %v795
    %v2116 = vpop.f32.mrb[0].mxu0
    %v2117 = vadd.f32 %v1764, %v2116
    %v2118 = vpop.f32.mrb[0].mxu0
    %v2119 = vadd.f32 %v1766, %v2118
    %v2120 = vpop.f32.mrb[0].mxu0
    %v2121 = vadd.f32 %v1768, %v2120
    %v2122 = vpop.f32.mrb[0].mxu0
    %v2123 = vadd.f32 %v1770, %v2122
    %2124 = vmatprep.mubr.bf16.mxu0 %v800
    %2125 = vmatmul.mubr.bf16.gmra.mrb[0].mxu0 %v799
    %v2126 = vpop.f32.mrb[0].mxu0
    %v2127 = vadd.f32 %v1774, %v2126
    %v2128 = vpop.f32.mrb[0].mxu0
    %v2129 = vadd.f32 %v1776, %v2128
    %v2130 = vpop.f32.mrb[0].mxu0
    %v2131 = vadd.f32 %v1778, %v2130
    %v2132 = vpop.f32.mrb[0].mxu0
    %v2133 = vadd.f32 %v1780, %v2132
    %2134 = vmatprep.mubr.bf16.mxu0 %v804
    %2135 = vmatmul.mubr.bf16.gmra.mrb[0].mxu0 %v803
    %v2136 = vpop.f32.mrb[0].mxu0
    %v2137 = vadd.f32 %v1784, %v2136
    %v2138 = vpop.f32.mrb[0].mxu0
    %v2139 = vadd.f32 %v1786, %v2138
    %v2140 = vpop.f32.mrb[0].mxu0
    %v2141 = vadd.f32 %v1788, %v2140
    %v2142 = vpop.f32.mrb[0].mxu0
    %v2143 = vadd.f32 %v1790, %v2142
    %2144 = vmatprep.mubr.bf16.mxu0 %v808
    %2145 = vmatmul.mubr.bf16.gmra.mrb[0].mxu0 %v807
    %v2146 = vpop.f32.mrb[0].mxu0
    %v2147 = vadd.f32 %v1794, %v2146
    %v2148 = vpop.f32.mrb[0].mxu0
    %v2149 = vadd.f32 %v1796, %v2148
    %v2150 = vpop.f32.mrb[0].mxu0
    %v2151 = vadd.f32 %v1798, %v2150
    %v2152 = vpop.f32.mrb[0].mxu0
    %v2153 = vadd.f32 %v1800, %v2152
    %2154 = vdwg.mxu0
    %2155 = vmatprep.subr.bf16.mxu0 0
    %2156 = vmatpush1.bf16.msra.mxu0 %v1259
    %2157 = vmatprep.subr.bf16.mxu0 0
    %2158 = vmatpush1.bf16.msra.mxu0 %v1262
    %2159 = vmatprep.subr.bf16.mxu0 0
    %2160 = vmatpush1.bf16.msra.mxu0 %v1265
    %2161 = vmatprep.subr.bf16.mxu0 0
    %2162 = vmatpush1.bf16.msra.mxu0 %v1268
    %2163 = vmatprep.subr.bf16.mxu0 0
    %2164 = vmatpush1.bf16.msra.mxu0 %v1271
    %2165 = vmatprep.subr.bf16.mxu0 0
    %2166 = vmatpush1.bf16.msra.mxu0 %v1274
    %2167 = vmatprep.subr.bf16.mxu0 0
    %2168 = vmatpush1.bf16.msra.mxu0 %v1277
    %2169 = vmatprep.subr.bf16.mxu0 0
    %2170 = vmatpush1.bf16.msra.mxu0 %v1280
    %2171 = vmatprep.subr.bf16.mxu0 0
    %2172 = vmatpush1.bf16.msra.mxu0 %v1283
    %2173 = vmatprep.subr.bf16.mxu0 0
    %2174 = vmatpush1.bf16.msra.mxu0 %v1286
    %2175 = vmatprep.subr.bf16.mxu0 0
    %2176 = vmatpush1.bf16.msra.mxu0 %v1289
    %2177 = vmatprep.subr.bf16.mxu0 0
    %2178 = vmatpush1.bf16.msra.mxu0 %v1292
    %2179 = vmatprep.subr.bf16.mxu0 0
    %2180 = vmatpush1.bf16.msra.mxu0 %v1295
    %2181 = vmatprep.subr.bf16.mxu0 0
    %2182 = vmatpush1.bf16.msra.mxu0 %v1298
    %2183 = vmatprep.subr.bf16.mxu0 0
    %2184 = vmatpush1.bf16.msra.mxu0 %v1301
    %2185 = vmatprep.subr.bf16.mxu0 0
    %2186 = vmatpush1.bf16.msra.mxu0 %v1304
    %2187 = vmatprep.mubr.bf16.mxu0 %v682
    %2188 = vmatmul.mubr.bf16.gmra.mrb[0].mxu0 %v681
    %v2189 = vpop.f32.mrb[0].mxu0
    %v2190 = vadd.f32 0.0, %v2189
    %v2191 = vpop.f32.mrb[0].mxu0
    %v2192 = vpop.f32.mrb[0].mxu0
    %v2193 = vadd.f32 0.0, %v2192
    %v2194 = vpop.f32.mrb[0].mxu0
    %2195 = vmatprep.mubr.bf16.mxu0 %v686
    %2196 = vmatmul.mubr.bf16.gmra.mrb[0].mxu0 %v685
    %v2197 = vpop.f32.mrb[0].mxu0
    %v2198 = vadd.f32 0.0, %v2197
    %v2199 = vpop.f32.mrb[0].mxu0
    %v2200 = vpop.f32.mrb[0].mxu0
    %v2201 = vadd.f32 0.0, %v2200
    %v2202 = vpop.f32.mrb[0].mxu0
    %2203 = vmatprep.mubr.bf16.mxu0 %v690
    %2204 = vmatmul.mubr.bf16.gmra.mrb[0].mxu0 %v689
    %v2205 = vpop.f32.mrb[0].mxu0
    %v2206 = vadd.f32 0.0, %v2205
    %v2207 = vpop.f32.mrb[0].mxu0
    %v2208 = vpop.f32.mrb[0].mxu0
    %v2209 = vadd.f32 0.0, %v2208
    %v2210 = vpop.f32.mrb[0].mxu0
    %2211 = vmatprep.mubr.bf16.mxu0 %v694
    %2212 = vmatmul.mubr.bf16.gmra.mrb[0].mxu0 %v693
    %v2213 = vpop.f32.mrb[0].mxu0
    %v2214 = vadd.f32 0.0, %v2213
    %v2215 = vpop.f32.mrb[0].mxu0
    %v2216 = vpop.f32.mrb[0].mxu0
    %v2217 = vadd.f32 0.0, %v2216
    %v2218 = vpop.f32.mrb[0].mxu0
    %2219 = vmatprep.mubr.bf16.mxu0 %v698
    %2220 = vmatmul.mubr.bf16.gmra.mrb[0].mxu0 %v697
    %v2221 = vpop.f32.mrb[0].mxu0
    %v2222 = vadd.f32 0.0, %v2221
    %v2223 = vpop.f32.mrb[0].mxu0
    %v2224 = vpop.f32.mrb[0].mxu0
    %v2225 = vadd.f32 0.0, %v2224
    %v2226 = vpop.f32.mrb[0].mxu0
    %2227 = vmatprep.mubr.bf16.mxu0 %v702
    %2228 = vmatmul.mubr.bf16.gmra.mrb[0].mxu0 %v701
    %v2229 = vpop.f32.mrb[0].mxu0
    %v2230 = vadd.f32 0.0, %v2229
    %v2231 = vpop.f32.mrb[0].mxu0
    %v2232 = vpop.f32.mrb[0].mxu0
    %v2233 = vadd.f32 0.0, %v2232
    %v2234 = vpop.f32.mrb[0].mxu0
    %2235 = vmatprep.mubr.bf16.mxu0 %v706
    %2236 = vmatmul.mubr.bf16.gmra.mrb[0].mxu0 %v705
    %v2237 = vpop.f32.mrb[0].mxu0
    %v2238 = vadd.f32 0.0, %v2237
    %v2239 = vpop.f32.mrb[0].mxu0
    %v2240 = vpop.f32.mrb[0].mxu0
    %v2241 = vadd.f32 0.0, %v2240
    %v2242 = vpop.f32.mrb[0].mxu0
    %2243 = vmatprep.mubr.bf16.mxu0 %v710
    %2244 = vmatmul.mubr.bf16.gmra.mrb[0].mxu0 %v709
    %v2245 = vpop.f32.mrb[0].mxu0
    %v2246 = vadd.f32 0.0, %v2245
    %v2247 = vpop.f32.mrb[0].mxu0
    %v2248 = vpop.f32.mrb[0].mxu0
    %v2249 = vadd.f32 0.0, %v2248
    %v2250 = vpop.f32.mrb[0].mxu0
    %2251 = vmatprep.mubr.bf16.mxu0 %v714
    %2252 = vmatmul.mubr.bf16.gmra.mrb[0].mxu0 %v713
    %v2253 = vpop.f32.mrb[0].mxu0
    %v2254 = vadd.f32 0.0, %v2253
    %v2255 = vpop.f32.mrb[0].mxu0
    %v2256 = vpop.f32.mrb[0].mxu0
    %v2257 = vadd.f32 0.0, %v2256
    %v2258 = vpop.f32.mrb[0].mxu0
    %2259 = vmatprep.mubr.bf16.mxu0 %v718
    %2260 = vmatmul.mubr.bf16.gmra.mrb[0].mxu0 %v717
    %v2261 = vpop.f32.mrb[0].mxu0
    %v2262 = vadd.f32 0.0, %v2261
    %v2263 = vpop.f32.mrb[0].mxu0
    %v2264 = vpop.f32.mrb[0].mxu0
    %v2265 = vadd.f32 0.0, %v2264
    %v2266 = vpop.f32.mrb[0].mxu0
    %2267 = vmatprep.mubr.bf16.mxu0 %v722
    %2268 = vmatmul.mubr.bf16.gmra.mrb[0].mxu0 %v721
    %v2269 = vpop.f32.mrb[0].mxu0
    %v2270 = vadd.f32 0.0, %v2269
    %v2271 = vpop.f32.mrb[0].mxu0
    %v2272 = vpop.f32.mrb[0].mxu0
    %v2273 = vadd.f32 0.0, %v2272
    %v2274 = vpop.f32.mrb[0].mxu0
    %2275 = vmatprep.mubr.bf16.mxu0 %v726
    %2276 = vmatmul.mubr.bf16.gmra.mrb[0].mxu0 %v725
    %v2277 = vpop.f32.mrb[0].mxu0
    %v2278 = vadd.f32 0.0, %v2277
    %v2279 = vpop.f32.mrb[0].mxu0
    %v2280 = vpop.f32.mrb[0].mxu0
    %v2281 = vadd.f32 0.0, %v2280
    %v2282 = vpop.f32.mrb[0].mxu0
    %2283 = vmatprep.mubr.bf16.mxu0 %v730
    %2284 = vmatmul.mubr.bf16.gmra.mrb[0].mxu0 %v729
    %v2285 = vpop.f32.mrb[0].mxu0
    %v2286 = vadd.f32 0.0, %v2285
    %v2287 = vpop.f32.mrb[0].mxu0
    %v2288 = vpop.f32.mrb[0].mxu0
    %v2289 = vadd.f32 0.0, %v2288
    %v2290 = vpop.f32.mrb[0].mxu0
    %2291 = vmatprep.mubr.bf16.mxu0 %v734
    %2292 = vmatmul.mubr.bf16.gmra.mrb[0].mxu0 %v733
    %v2293 = vpop.f32.mrb[0].mxu0
    %v2294 = vadd.f32 0.0, %v2293
    %v2295 = vpop.f32.mrb[0].mxu0
    %v2296 = vpop.f32.mrb[0].mxu0
    %v2297 = vadd.f32 0.0, %v2296
    %v2298 = vpop.f32.mrb[0].mxu0
    %2299 = vmatprep.mubr.bf16.mxu0 %v738
    %2300 = vmatmul.mubr.bf16.gmra.mrb[0].mxu0 %v737
    %v2301 = vpop.f32.mrb[0].mxu0
    %v2302 = vadd.f32 0.0, %v2301
    %v2303 = vpop.f32.mrb[0].mxu0
    %v2304 = vpop.f32.mrb[0].mxu0
    %v2305 = vadd.f32 0.0, %v2304
    %v2306 = vpop.f32.mrb[0].mxu0
    %2307 = vmatprep.mubr.bf16.mxu0 %v742
    %2308 = vmatmul.mubr.bf16.gmra.mrb[0].mxu0 %v741
    %v2309 = vpop.f32.mrb[0].mxu0
    %v2310 = vadd.f32 0.0, %v2309
    %v2311 = vpop.f32.mrb[0].mxu0
    %v2312 = vpop.f32.mrb[0].mxu0
    %v2313 = vadd.f32 0.0, %v2312
    %v2314 = vpop.f32.mrb[0].mxu0
    %2315 = vmatprep.mubr.bf16.mxu0 %v746
    %2316 = vmatmul.mubr.bf16.gmra.mrb[0].mxu0 %v745
    %v2317 = vpop.f32.mrb[0].mxu0
    %v2318 = vadd.f32 0.0, %v2317
    %v2319 = vpop.f32.mrb[0].mxu0
    %v2320 = vpop.f32.mrb[0].mxu0
    %v2321 = vadd.f32 0.0, %v2320
    %v2322 = vpop.f32.mrb[0].mxu0
    %2323 = vmatprep.mubr.bf16.mxu0 %v750
    %2324 = vmatmul.mubr.bf16.gmra.mrb[0].mxu0 %v749
    %v2325 = vpop.f32.mrb[0].mxu0
    %v2326 = vadd.f32 0.0, %v2325
    %v2327 = vpop.f32.mrb[0].mxu0
    %v2328 = vpop.f32.mrb[0].mxu0
    %v2329 = vadd.f32 0.0, %v2328
    %v2330 = vpop.f32.mrb[0].mxu0
    %2331 = vmatprep.mubr.bf16.mxu0 %v754
    %2332 = vmatmul.mubr.bf16.gmra.mrb[0].mxu0 %v753
    %v2333 = vpop.f32.mrb[0].mxu0
    %v2334 = vadd.f32 0.0, %v2333
    %v2335 = vpop.f32.mrb[0].mxu0
    %v2336 = vpop.f32.mrb[0].mxu0
    %v2337 = vadd.f32 0.0, %v2336
    %v2338 = vpop.f32.mrb[0].mxu0
    %2339 = vmatprep.mubr.bf16.mxu0 %v758
    %2340 = vmatmul.mubr.bf16.gmra.mrb[0].mxu0 %v757
    %v2341 = vpop.f32.mrb[0].mxu0
    %v2342 = vadd.f32 0.0, %v2341
    %v2343 = vpop.f32.mrb[0].mxu0
    %v2344 = vpop.f32.mrb[0].mxu0
    %v2345 = vadd.f32 0.0, %v2344
    %v2346 = vpop.f32.mrb[0].mxu0
    %2347 = vmatprep.mubr.bf16.mxu0 %v762
    %2348 = vmatmul.mubr.bf16.gmra.mrb[0].mxu0 %v761
    %v2349 = vpop.f32.mrb[0].mxu0
    %v2350 = vadd.f32 0.0, %v2349
    %v2351 = vpop.f32.mrb[0].mxu0
    %v2352 = vpop.f32.mrb[0].mxu0
    %v2353 = vadd.f32 0.0, %v2352
    %v2354 = vpop.f32.mrb[0].mxu0
    %2355 = vmatprep.mubr.bf16.mxu0 %v766
    %2356 = vmatmul.mubr.bf16.gmra.mrb[0].mxu0 %v765
    %v2357 = vpop.f32.mrb[0].mxu0
    %v2358 = vadd.f32 0.0, %v2357
    %v2359 = vpop.f32.mrb[0].mxu0
    %v2360 = vpop.f32.mrb[0].mxu0
    %v2361 = vadd.f32 0.0, %v2360
    %v2362 = vpop.f32.mrb[0].mxu0
    %2363 = vmatprep.mubr.bf16.mxu0 %v770
    %2364 = vmatmul.mubr.bf16.gmra.mrb[0].mxu0 %v769
    %v2365 = vpop.f32.mrb[0].mxu0
    %v2366 = vadd.f32 0.0, %v2365
    %v2367 = vpop.f32.mrb[0].mxu0
    %v2368 = vpop.f32.mrb[0].mxu0
    %v2369 = vadd.f32 0.0, %v2368
    %v2370 = vpop.f32.mrb[0].mxu0
    %2371 = vmatprep.mubr.bf16.mxu0 %v774
    %2372 = vmatmul.mubr.bf16.gmra.mrb[0].mxu0 %v773
    %v2373 = vpop.f32.mrb[0].mxu0
    %v2374 = vadd.f32 0.0, %v2373
    %v2375 = vpop.f32.mrb[0].mxu0
    %v2376 = vpop.f32.mrb[0].mxu0
    %v2377 = vadd.f32 0.0, %v2376
    %v2378 = vpop.f32.mrb[0].mxu0
    %2379 = vmatprep.mubr.bf16.mxu0 %v778
    %2380 = vmatmul.mubr.bf16.gmra.mrb[0].mxu0 %v777
    %v2381 = vpop.f32.mrb[0].mxu0
    %v2382 = vadd.f32 0.0, %v2381
    %v2383 = vpop.f32.mrb[0].mxu0
    %v2384 = vpop.f32.mrb[0].mxu0
    %v2385 = vadd.f32 0.0, %v2384
    %v2386 = vpop.f32.mrb[0].mxu0
    %2387 = vmatprep.mubr.bf16.mxu0 %v782
    %2388 = vmatmul.mubr.bf16.gmra.mrb[0].mxu0 %v781
    %v2389 = vpop.f32.mrb[0].mxu0
    %v2390 = vadd.f32 0.0, %v2389
    %v2391 = vpop.f32.mrb[0].mxu0
    %v2392 = vpop.f32.mrb[0].mxu0
    %v2393 = vadd.f32 0.0, %v2392
    %v2394 = vpop.f32.mrb[0].mxu0
    %2395 = vmatprep.mubr.bf16.mxu0 %v786
    %2396 = vmatmul.mubr.bf16.gmra.mrb[0].mxu0 %v785
    %v2397 = vpop.f32.mrb[0].mxu0
    %v2398 = vadd.f32 0.0, %v2397
    %v2399 = vpop.f32.mrb[0].mxu0
    %v2400 = vpop.f32.mrb[0].mxu0
    %v2401 = vadd.f32 0.0, %v2400
    %v2402 = vpop.f32.mrb[0].mxu0
    %2403 = vmatprep.mubr.bf16.mxu0 %v790
    %2404 = vmatmul.mubr.bf16.gmra.mrb[0].mxu0 %v789
    %v2405 = vpop.f32.mrb[0].mxu0
    %v2406 = vadd.f32 0.0, %v2405
    %v2407 = vpop.f32.mrb[0].mxu0
    %v2408 = vpop.f32.mrb[0].mxu0
    %v2409 = vadd.f32 0.0, %v2408
    %v2410 = vpop.f32.mrb[0].mxu0
    %2411 = vmatprep.mubr.bf16.mxu0 %v794
    %2412 = vmatmul.mubr.bf16.gmra.mrb[0].mxu0 %v793
    %v2413 = vpop.f32.mrb[0].mxu0
    %v2414 = vadd.f32 0.0, %v2413
    %v2415 = vpop.f32.mrb[0].mxu0
    %v2416 = vpop.f32.mrb[0].mxu0
    %v2417 = vadd.f32 0.0, %v2416
    %v2418 = vpop.f32.mrb[0].mxu0
    %2419 = vmatprep.mubr.bf16.mxu0 %v798
    %2420 = vmatmul.mubr.bf16.gmra.mrb[0].mxu0 %v797
    %v2421 = vpop.f32.mrb[0].mxu0
    %v2422 = vadd.f32 0.0, %v2421
    %v2423 = vpop.f32.mrb[0].mxu0
    %v2424 = vpop.f32.mrb[0].mxu0
    %v2425 = vadd.f32 0.0, %v2424
    %v2426 = vpop.f32.mrb[0].mxu0
    %2427 = vmatprep.mubr.bf16.mxu0 %v802
    %2428 = vmatmul.mubr.bf16.gmra.mrb[0].mxu0 %v801
    %v2429 = vpop.f32.mrb[0].mxu0
    %v2430 = vadd.f32 0.0, %v2429
    %v2431 = vpop.f32.mrb[0].mxu0
    %v2432 = vpop.f32.mrb[0].mxu0
    %v2433 = vadd.f32 0.0, %v2432
    %v2434 = vpop.f32.mrb[0].mxu0
    %2435 = vmatprep.mubr.bf16.mxu0 %v806
    %2436 = vmatmul.mubr.bf16.gmra.mrb[0].mxu0 %v805
    %v2437 = vpop.f32.mrb[0].mxu0
    %v2438 = vadd.f32 0.0, %v2437
    %v2439 = vpop.f32.mrb[0].mxu0
    %v2440 = vpop.f32.mrb[0].mxu0
    %v2441 = vadd.f32 0.0, %v2440
    %v2442 = vpop.f32.mrb[0].mxu0
    %2443 = vdwg.mxu0
    %2444 = vmatprep.subr.bf16.mxu0 0
    %2445 = vmatpush1.bf16.msra.mxu0 %v1307
    %2446 = vmatprep.subr.bf16.mxu0 0
    %2447 = vmatpush1.bf16.msra.mxu0 %v1310
    %2448 = vmatprep.subr.bf16.mxu0 0
    %2449 = vmatpush1.bf16.msra.mxu0 %v1313
    %2450 = vmatprep.subr.bf16.mxu0 0
    %2451 = vmatpush1.bf16.msra.mxu0 %v1316
    %2452 = vmatprep.subr.bf16.mxu0 0
    %2453 = vmatpush1.bf16.msra.mxu0 %v1319
    %2454 = vmatprep.subr.bf16.mxu0 0
    %2455 = vmatpush1.bf16.msra.mxu0 %v1322
    %2456 = vmatprep.subr.bf16.mxu0 0
    %2457 = vmatpush1.bf16.msra.mxu0 %v1325
    %2458 = vmatprep.subr.bf16.mxu0 0
    %2459 = vmatpush1.bf16.msra.mxu0 %v1328
    %2460 = vmatprep.subr.bf16.mxu0 0
    %2461 = vmatpush1.bf16.msra.mxu0 %v1331
    %2462 = vmatprep.subr.bf16.mxu0 0
    %2463 = vmatpush1.bf16.msra.mxu0 %v1334
    %2464 = vmatprep.subr.bf16.mxu0 0
    %2465 = vmatpush1.bf16.msra.mxu0 %v1337
    %2466 = vmatprep.subr.bf16.mxu0 0
    %2467 = vmatpush1.bf16.msra.mxu0 %v1340
    %2468 = vmatprep.subr.bf16.mxu0 0
    %2469 = vmatpush1.bf16.msra.mxu0 %v1343
    %2470 = vmatprep.subr.bf16.mxu0 0
    %2471 = vmatpush1.bf16.msra.mxu0 %v1346
    %2472 = vmatprep.subr.bf16.mxu0 0
    %2473 = vmatpush1.bf16.msra.mxu0 %v1349
    %2474 = vmatprep.subr.bf16.mxu0 0
    %2475 = vmatpush1.bf16.msra.mxu0 %v1352
    %2476 = vmatprep.mubr.bf16.mxu0 %v684
    %2477 = vmatmul.mubr.bf16.gmra.mrb[0].mxu0 %v683
    %v2478 = vpop.f32.mrb[0].mxu0
    %v2479 = vadd.f32 %v2190, %v2478
    %v2480 = vpop.f32.mrb[0].mxu0
    %v2481 = vpop.f32.mrb[0].mxu0
    %v2482 = vadd.f32 %v2193, %v2481
    %v2483 = vpop.f32.mrb[0].mxu0
    %2484 = vmatprep.mubr.bf16.mxu0 %v688
    %2485 = vmatmul.mubr.bf16.gmra.mrb[0].mxu0 %v687
    %v2486 = vpop.f32.mrb[0].mxu0
    %v2487 = vadd.f32 %v2198, %v2486
    %v2488 = vpop.f32.mrb[0].mxu0
    %v2489 = vpop.f32.mrb[0].mxu0
    %v2490 = vadd.f32 %v2201, %v2489
    %v2491 = vpop.f32.mrb[0].mxu0
    %2492 = vmatprep.mubr.bf16.mxu0 %v692
    %2493 = vmatmul.mubr.bf16.gmra.mrb[0].mxu0 %v691
    %v2494 = vpop.f32.mrb[0].mxu0
    %v2495 = vadd.f32 %v2206, %v2494
    %v2496 = vpop.f32.mrb[0].mxu0
    %v2497 = vpop.f32.mrb[0].mxu0
    %v2498 = vadd.f32 %v2209, %v2497
    %v2499 = vpop.f32.mrb[0].mxu0
    %2500 = vmatprep.mubr.bf16.mxu0 %v696
    %2501 = vmatmul.mubr.bf16.gmra.mrb[0].mxu0 %v695
    %v2502 = vpop.f32.mrb[0].mxu0
    %v2503 = vadd.f32 %v2214, %v2502
    %v2504 = vpop.f32.mrb[0].mxu0
    %v2505 = vpop.f32.mrb[0].mxu0
    %v2506 = vadd.f32 %v2217, %v2505
    %v2507 = vpop.f32.mrb[0].mxu0
    %2508 = vmatprep.mubr.bf16.mxu0 %v700
    %2509 = vmatmul.mubr.bf16.gmra.mrb[0].mxu0 %v699
    %v2510 = vpop.f32.mrb[0].mxu0
    %v2511 = vadd.f32 %v2222, %v2510
    %v2512 = vpop.f32.mrb[0].mxu0
    %v2513 = vpop.f32.mrb[0].mxu0
    %v2514 = vadd.f32 %v2225, %v2513
    %v2515 = vpop.f32.mrb[0].mxu0
    %2516 = vmatprep.mubr.bf16.mxu0 %v704
    %2517 = vmatmul.mubr.bf16.gmra.mrb[0].mxu0 %v703
    %v2518 = vpop.f32.mrb[0].mxu0
    %v2519 = vadd.f32 %v2230, %v2518
    %v2520 = vpop.f32.mrb[0].mxu0
    %v2521 = vpop.f32.mrb[0].mxu0
    %v2522 = vadd.f32 %v2233, %v2521
    %v2523 = vpop.f32.mrb[0].mxu0
    %2524 = vmatprep.mubr.bf16.mxu0 %v708
    %2525 = vmatmul.mubr.bf16.gmra.mrb[0].mxu0 %v707
    %v2526 = vpop.f32.mrb[0].mxu0
    %v2527 = vadd.f32 %v2238, %v2526
    %v2528 = vpop.f32.mrb[0].mxu0
    %v2529 = vpop.f32.mrb[0].mxu0
    %v2530 = vadd.f32 %v2241, %v2529
    %v2531 = vpop.f32.mrb[0].mxu0
    %2532 = vmatprep.mubr.bf16.mxu0 %v712
    %2533 = vmatmul.mubr.bf16.gmra.mrb[0].mxu0 %v711
    %v2534 = vpop.f32.mrb[0].mxu0
    %v2535 = vadd.f32 %v2246, %v2534
    %v2536 = vpop.f32.mrb[0].mxu0
    %v2537 = vpop.f32.mrb[0].mxu0
    %v2538 = vadd.f32 %v2249, %v2537
    %v2539 = vpop.f32.mrb[0].mxu0
    %2540 = vmatprep.mubr.bf16.mxu0 %v716
    %2541 = vmatmul.mubr.bf16.gmra.mrb[0].mxu0 %v715
    %v2542 = vpop.f32.mrb[0].mxu0
    %v2543 = vadd.f32 %v2254, %v2542
    %v2544 = vpop.f32.mrb[0].mxu0
    %v2545 = vpop.f32.mrb[0].mxu0
    %v2546 = vadd.f32 %v2257, %v2545
    %v2547 = vpop.f32.mrb[0].mxu0
    %2548 = vmatprep.mubr.bf16.mxu0 %v720
    %2549 = vmatmul.mubr.bf16.gmra.mrb[0].mxu0 %v719
    %v2550 = vpop.f32.mrb[0].mxu0
    %v2551 = vadd.f32 %v2262, %v2550
    %v2552 = vpop.f32.mrb[0].mxu0
    %v2553 = vpop.f32.mrb[0].mxu0
    %v2554 = vadd.f32 %v2265, %v2553
    %v2555 = vpop.f32.mrb[0].mxu0
    %2556 = vmatprep.mubr.bf16.mxu0 %v724
    %2557 = vmatmul.mubr.bf16.gmra.mrb[0].mxu0 %v723
    %v2558 = vpop.f32.mrb[0].mxu0
    %v2559 = vadd.f32 %v2270, %v2558
    %v2560 = vpop.f32.mrb[0].mxu0
    %v2561 = vpop.f32.mrb[0].mxu0
    %v2562 = vadd.f32 %v2273, %v2561
    %v2563 = vpop.f32.mrb[0].mxu0
    %2564 = vmatprep.mubr.bf16.mxu0 %v728
    %2565 = vmatmul.mubr.bf16.gmra.mrb[0].mxu0 %v727
    %v2566 = vpop.f32.mrb[0].mxu0
    %v2567 = vadd.f32 %v2278, %v2566
    %v2568 = vpop.f32.mrb[0].mxu0
    %v2569 = vpop.f32.mrb[0].mxu0
    %v2570 = vadd.f32 %v2281, %v2569
    %v2571 = vpop.f32.mrb[0].mxu0
    %2572 = vmatprep.mubr.bf16.mxu0 %v732
    %2573 = vmatmul.mubr.bf16.gmra.mrb[0].mxu0 %v731
    %v2574 = vpop.f32.mrb[0].mxu0
    %v2575 = vadd.f32 %v2286, %v2574
    %v2576 = vpop.f32.mrb[0].mxu0
    %v2577 = vpop.f32.mrb[0].mxu0
    %v2578 = vadd.f32 %v2289, %v2577
    %v2579 = vpop.f32.mrb[0].mxu0
    %2580 = vmatprep.mubr.bf16.mxu0 %v736
    %2581 = vmatmul.mubr.bf16.gmra.mrb[0].mxu0 %v735
    %v2582 = vpop.f32.mrb[0].mxu0
    %v2583 = vadd.f32 %v2294, %v2582
    %v2584 = vpop.f32.mrb[0].mxu0
    %v2585 = vpop.f32.mrb[0].mxu0
    %v2586 = vadd.f32 %v2297, %v2585
    %v2587 = vpop.f32.mrb[0].mxu0
    %2588 = vmatprep.mubr.bf16.mxu0 %v740
    %2589 = vmatmul.mubr.bf16.gmra.mrb[0].mxu0 %v739
    %v2590 = vpop.f32.mrb[0].mxu0
    %v2591 = vadd.f32 %v2302, %v2590
    %v2592 = vpop.f32.mrb[0].mxu0
    %v2593 = vpop.f32.mrb[0].mxu0
    %v2594 = vadd.f32 %v2305, %v2593
    %v2595 = vpop.f32.mrb[0].mxu0
    %2596 = vmatprep.mubr.bf16.mxu0 %v744
    %2597 = vmatmul.mubr.bf16.gmra.mrb[0].mxu0 %v743
    %v2598 = vpop.f32.mrb[0].mxu0
    %v2599 = vadd.f32 %v2310, %v2598
    %v2600 = vpop.f32.mrb[0].mxu0
    %v2601 = vpop.f32.mrb[0].mxu0
    %v2602 = vadd.f32 %v2313, %v2601
    %v2603 = vpop.f32.mrb[0].mxu0
    %2604 = vmatprep.mubr.bf16.mxu0 %v748
    %2605 = vmatmul.mubr.bf16.gmra.mrb[0].mxu0 %v747
    %v2606 = vpop.f32.mrb[0].mxu0
    %v2607 = vadd.f32 %v2318, %v2606
    %v2608 = vpop.f32.mrb[0].mxu0
    %v2609 = vpop.f32.mrb[0].mxu0
    %v2610 = vadd.f32 %v2321, %v2609
    %v2611 = vpop.f32.mrb[0].mxu0
    %2612 = vmatprep.mubr.bf16.mxu0 %v752
    %2613 = vmatmul.mubr.bf16.gmra.mrb[0].mxu0 %v751
    %v2614 = vpop.f32.mrb[0].mxu0
    %v2615 = vadd.f32 %v2326, %v2614
    %v2616 = vpop.f32.mrb[0].mxu0
    %v2617 = vpop.f32.mrb[0].mxu0
    %v2618 = vadd.f32 %v2329, %v2617
    %v2619 = vpop.f32.mrb[0].mxu0
    %2620 = vmatprep.mubr.bf16.mxu0 %v756
    %2621 = vmatmul.mubr.bf16.gmra.mrb[0].mxu0 %v755
    %v2622 = vpop.f32.mrb[0].mxu0
    %v2623 = vadd.f32 %v2334, %v2622
    %v2624 = vpop.f32.mrb[0].mxu0
    %v2625 = vpop.f32.mrb[0].mxu0
    %v2626 = vadd.f32 %v2337, %v2625
    %v2627 = vpop.f32.mrb[0].mxu0
    %2628 = vmatprep.mubr.bf16.mxu0 %v760
    %2629 = vmatmul.mubr.bf16.gmra.mrb[0].mxu0 %v759
    %v2630 = vpop.f32.mrb[0].mxu0
    %v2631 = vadd.f32 %v2342, %v2630
    %v2632 = vpop.f32.mrb[0].mxu0
    %v2633 = vpop.f32.mrb[0].mxu0
    %v2634 = vadd.f32 %v2345, %v2633
    %v2635 = vpop.f32.mrb[0].mxu0
    %2636 = vmatprep.mubr.bf16.mxu0 %v764
    %2637 = vmatmul.mubr.bf16.gmra.mrb[0].mxu0 %v763
    %v2638 = vpop.f32.mrb[0].mxu0
    %v2639 = vadd.f32 %v2350, %v2638
    %v2640 = vpop.f32.mrb[0].mxu0
    %v2641 = vpop.f32.mrb[0].mxu0
    %v2642 = vadd.f32 %v2353, %v2641
    %v2643 = vpop.f32.mrb[0].mxu0
    %2644 = vmatprep.mubr.bf16.mxu0 %v768
    %2645 = vmatmul.mubr.bf16.gmra.mrb[0].mxu0 %v767
    %v2646 = vpop.f32.mrb[0].mxu0
    %v2647 = vadd.f32 %v2358, %v2646
    %v2648 = vpop.f32.mrb[0].mxu0
    %v2649 = vpop.f32.mrb[0].mxu0
    %v2650 = vadd.f32 %v2361, %v2649
    %v2651 = vpop.f32.mrb[0].mxu0
    %2652 = vmatprep.mubr.bf16.mxu0 %v772
    %2653 = vmatmul.mubr.bf16.gmra.mrb[0].mxu0 %v771
    %v2654 = vpop.f32.mrb[0].mxu0
    %v2655 = vadd.f32 %v2366, %v2654
    %v2656 = vpop.f32.mrb[0].mxu0
    %v2657 = vpop.f32.mrb[0].mxu0
    %v2658 = vadd.f32 %v2369, %v2657
    %v2659 = vpop.f32.mrb[0].mxu0
    %2660 = vmatprep.mubr.bf16.mxu0 %v776
    %2661 = vmatmul.mubr.bf16.gmra.mrb[0].mxu0 %v775
    %v2662 = vpop.f32.mrb[0].mxu0
    %v2663 = vadd.f32 %v2374, %v2662
    %v2664 = vpop.f32.mrb[0].mxu0
    %v2665 = vpop.f32.mrb[0].mxu0
    %v2666 = vadd.f32 %v2377, %v2665
    %v2667 = vpop.f32.mrb[0].mxu0
    %2668 = vmatprep.mubr.bf16.mxu0 %v780
    %2669 = vmatmul.mubr.bf16.gmra.mrb[0].mxu0 %v779
    %v2670 = vpop.f32.mrb[0].mxu0
    %v2671 = vadd.f32 %v2382, %v2670
    %v2672 = vpop.f32.mrb[0].mxu0
    %v2673 = vpop.f32.mrb[0].mxu0
    %v2674 = vadd.f32 %v2385, %v2673
    %v2675 = vpop.f32.mrb[0].mxu0
    %2676 = vmatprep.mubr.bf16.mxu0 %v784
    %2677 = vmatmul.mubr.bf16.gmra.mrb[0].mxu0 %v783
    %v2678 = vpop.f32.mrb[0].mxu0
    %v2679 = vadd.f32 %v2390, %v2678
    %v2680 = vpop.f32.mrb[0].mxu0
    %v2681 = vpop.f32.mrb[0].mxu0
    %v2682 = vadd.f32 %v2393, %v2681
    %v2683 = vpop.f32.mrb[0].mxu0
    %2684 = vmatprep.mubr.bf16.mxu0 %v788
    %2685 = vmatmul.mubr.bf16.gmra.mrb[0].mxu0 %v787
    %v2686 = vpop.f32.mrb[0].mxu0
    %v2687 = vadd.f32 %v2398, %v2686
    %v2688 = vpop.f32.mrb[0].mxu0
    %v2689 = vpop.f32.mrb[0].mxu0
    %v2690 = vadd.f32 %v2401, %v2689
    %v2691 = vpop.f32.mrb[0].mxu0
    %2692 = vmatprep.mubr.bf16.mxu0 %v792
    %2693 = vmatmul.mubr.bf16.gmra.mrb[0].mxu0 %v791
    %v2694 = vpop.f32.mrb[0].mxu0
    %v2695 = vadd.f32 %v2406, %v2694
    %v2696 = vpop.f32.mrb[0].mxu0
    %v2697 = vpop.f32.mrb[0].mxu0
    %v2698 = vadd.f32 %v2409, %v2697
    %v2699 = vpop.f32.mrb[0].mxu0
    %2700 = vmatprep.mubr.bf16.mxu0 %v796
    %2701 = vmatmul.mubr.bf16.gmra.mrb[0].mxu0 %v795
    %v2702 = vpop.f32.mrb[0].mxu0
    %v2703 = vadd.f32 %v2414, %v2702
    %v2704 = vpop.f32.mrb[0].mxu0
    %v2705 = vpop.f32.mrb[0].mxu0
    %v2706 = vadd.f32 %v2417, %v2705
    %v2707 = vpop.f32.mrb[0].mxu0
    %2708 = vmatprep.mubr.bf16.mxu0 %v800
    %2709 = vmatmul.mubr.bf16.gmra.mrb[0].mxu0 %v799
    %v2710 = vpop.f32.mrb[0].mxu0
    %v2711 = vadd.f32 %v2422, %v2710
    %v2712 = vpop.f32.mrb[0].mxu0
    %v2713 = vpop.f32.mrb[0].mxu0
    %v2714 = vadd.f32 %v2425, %v2713
    %v2715 = vpop.f32.mrb[0].mxu0
    %2716 = vmatprep.mubr.bf16.mxu0 %v804
    %2717 = vmatmul.mubr.bf16.gmra.mrb[0].mxu0 %v803
    %v2718 = vpop.f32.mrb[0].mxu0
    %v2719 = vadd.f32 %v2430, %v2718
    %v2720 = vpop.f32.mrb[0].mxu0
    %v2721 = vpop.f32.mrb[0].mxu0
    %v2722 = vadd.f32 %v2433, %v2721
    %v2723 = vpop.f32.mrb[0].mxu0
    %2724 = vmatprep.mubr.bf16.mxu0 %v808
    %2725 = vmatmul.mubr.bf16.gmra.mrb[0].mxu0 %v807
    %v2726 = vpop.f32.mrb[0].mxu0
    %v2727 = vadd.f32 %v2438, %v2726
    %v2728 = vpop.f32.mrb[0].mxu0
    %v2729 = vpop.f32.mrb[0].mxu0
    %v2730 = vadd.f32 %v2441, %v2729
    %v2731 = vpop.f32.mrb[0].mxu0
    %2732 = vdwg.mxu0
    %v2733 = vpack.c.bf16 %v1841, %v1837
    %v2734 = vpack.c.bf16 %v1843, %v1839
    %v2735 = vpack.c.bf16 %v2482, %v2479
    %v2736 = vpack.c.bf16 %v1851, %v1847
    %v2737 = vpack.c.bf16 %v1853, %v1849
    %v2738 = vpack.c.bf16 %v2490, %v2487
    %v2739 = vpack.c.bf16 %v1861, %v1857
    %v2740 = vpack.c.bf16 %v1863, %v1859
    %v2741 = vpack.c.bf16 %v2498, %v2495
    %v2742 = vpack.c.bf16 %v1871, %v1867
    %v2743 = vpack.c.bf16 %v1873, %v1869
    %v2744 = vpack.c.bf16 %v2506, %v2503
    %v2745 = vpack.c.bf16 %v1881, %v1877
    %v2746 = vpack.c.bf16 %v1883, %v1879
    %v2747 = vpack.c.bf16 %v2514, %v2511
    %v2748 = vpack.c.bf16 %v1891, %v1887
    %v2749 = vpack.c.bf16 %v1893, %v1889
    %v2750 = vpack.c.bf16 %v2522, %v2519
    %v2751 = vpack.c.bf16 %v1901, %v1897
    %v2752 = vpack.c.bf16 %v1903, %v1899
    %v2753 = vpack.c.bf16 %v2530, %v2527
    %v2754 = vpack.c.bf16 %v1911, %v1907
    %v2755 = vpack.c.bf16 %v1913, %v1909
    %v2756 = vpack.c.bf16 %v2538, %v2535
    %v2757 = vpack.c.bf16 %v1921, %v1917
    %v2758 = vpack.c.bf16 %v1923, %v1919
    %v2759 = vpack.c.bf16 %v2546, %v2543
    %v2760 = vpack.c.bf16 %v1931, %v1927
    %v2761 = vpack.c.bf16 %v1933, %v1929
    %v2762 = vpack.c.bf16 %v2554, %v2551
    %v2763 = vpack.c.bf16 %v1941, %v1937
    %v2764 = vpack.c.bf16 %v1943, %v1939
    %v2765 = vpack.c.bf16 %v2562, %v2559
    %v2766 = vpack.c.bf16 %v1951, %v1947
    %v2767 = vpack.c.bf16 %v1953, %v1949
    %v2768 = vpack.c.bf16 %v2570, %v2567
    %v2769 = vpack.c.bf16 %v1961, %v1957
    %v2770 = vpack.c.bf16 %v1963, %v1959
    %v2771 = vpack.c.bf16 %v2578, %v2575
    %v2772 = vpack.c.bf16 %v1971, %v1967
    %v2773 = vpack.c.bf16 %v1973, %v1969
    %v2774 = vpack.c.bf16 %v2586, %v2583
    %v2775 = vpack.c.bf16 %v1981, %v1977
    %v2776 = vpack.c.bf16 %v1983, %v1979
    %v2777 = vpack.c.bf16 %v2594, %v2591
    %v2778 = vpack.c.bf16 %v1991, %v1987
    %v2779 = vpack.c.bf16 %v1993, %v1989
    %v2780 = vpack.c.bf16 %v2602, %v2599
    %v2781 = vpack.c.bf16 %v2001, %v1997
    %v2782 = vpack.c.bf16 %v2003, %v1999
    %v2783 = vpack.c.bf16 %v2610, %v2607
    %v2784 = vpack.c.bf16 %v2011, %v2007
    %v2785 = vpack.c.bf16 %v2013, %v2009
    %v2786 = vpack.c.bf16 %v2618, %v2615
    %v2787 = vpack.c.bf16 %v2021, %v2017
    %v2788 = vpack.c.bf16 %v2023, %v2019
    %v2789 = vpack.c.bf16 %v2626, %v2623
    %v2790 = vpack.c.bf16 %v2031, %v2027
    %v2791 = vpack.c.bf16 %v2033, %v2029
    %v2792 = vpack.c.bf16 %v2634, %v2631
    %v2793 = vpack.c.bf16 %v2041, %v2037
    %v2794 = vpack.c.bf16 %v2043, %v2039
    %v2795 = vpack.c.bf16 %v2642, %v2639
    %v2796 = vpack.c.bf16 %v2051, %v2047
    %v2797 = vpack.c.bf16 %v2053, %v2049
    %v2798 = vpack.c.bf16 %v2650, %v2647
    %v2799 = vpack.c.bf16 %v2061, %v2057
    %v2800 = vpack.c.bf16 %v2063, %v2059
    %v2801 = vpack.c.bf16 %v2658, %v2655
    %v2802 = vpack.c.bf16 %v2071, %v2067
    %v2803 = vpack.c.bf16 %v2073, %v2069
    %v2804 = vpack.c.bf16 %v2666, %v2663
    %v2805 = vpack.c.bf16 %v2081, %v2077
    %v2806 = vpack.c.bf16 %v2083, %v2079
    %v2807 = vpack.c.bf16 %v2674, %v2671
    %v2808 = vpack.c.bf16 %v2091, %v2087
    %v2809 = vpack.c.bf16 %v2093, %v2089
    %v2810 = vpack.c.bf16 %v2682, %v2679
    %v2811 = vpack.c.bf16 %v2101, %v2097
    %v2812 = vpack.c.bf16 %v2103, %v2099
    %v2813 = vpack.c.bf16 %v2690, %v2687
    %v2814 = vpack.c.bf16 %v2111, %v2107
    %v2815 = vpack.c.bf16 %v2113, %v2109
    %v2816 = vpack.c.bf16 %v2698, %v2695
    %v2817 = vpack.c.bf16 %v2121, %v2117
    %v2818 = vpack.c.bf16 %v2123, %v2119
    %v2819 = vpack.c.bf16 %v2706, %v2703
    %v2820 = vpack.c.bf16 %v2131, %v2127
    %v2821 = vpack.c.bf16 %v2133, %v2129
    %v2822 = vpack.c.bf16 %v2714, %v2711
    %v2823 = vpack.c.bf16 %v2141, %v2137
    %v2824 = vpack.c.bf16 %v2143, %v2139
    %v2825 = vpack.c.bf16 %v2722, %v2719
    %v2826 = vpack.c.bf16 %v2151, %v2147
    %v2827 = vpack.c.bf16 %v2153, %v2149
    %v2828 = vpack.c.bf16 %v2730, %v2727
    %v2925 = vunpack.c.l.b16 %v2733
    %v2926 = vunpack.c.l.b16 %v2734
    %v2927 = vunpack.c.l.b16 %v2735
    %v2928 = vunpack.c.h.b16 %v2733
    %v2929 = vunpack.c.h.b16 %v2734
    %v2930 = vunpack.c.h.b16 %v2735
    %v2931 = vunpack.c.l.b16 %v2736
    %v2932 = vunpack.c.l.b16 %v2737
    %v2933 = vunpack.c.l.b16 %v2738
    %v2934 = vunpack.c.h.b16 %v2736
    %v2935 = vunpack.c.h.b16 %v2737
    %v2936 = vunpack.c.h.b16 %v2738
    %v2937 = vunpack.c.l.b16 %v2739
    %v2938 = vunpack.c.l.b16 %v2740
    %v2939 = vunpack.c.l.b16 %v2741
    %v2940 = vunpack.c.h.b16 %v2739
    %v2941 = vunpack.c.h.b16 %v2740
    %v2942 = vunpack.c.h.b16 %v2741
    %v2943 = vunpack.c.l.b16 %v2742
    %v2944 = vunpack.c.l.b16 %v2743
    %v2945 = vunpack.c.l.b16 %v2744
    %v2946 = vunpack.c.h.b16 %v2742
    %v2947 = vunpack.c.h.b16 %v2743
    %v2948 = vunpack.c.h.b16 %v2744
    %v2949 = vunpack.c.l.b16 %v2745
    %v2950 = vunpack.c.l.b16 %v2746
    %v2951 = vunpack.c.l.b16 %v2747
    %v2952 = vunpack.c.h.b16 %v2745
    %v2953 = vunpack.c.h.b16 %v2746
    %v2954 = vunpack.c.h.b16 %v2747
    %v2955 = vunpack.c.l.b16 %v2748
    %v2956 = vunpack.c.l.b16 %v2749
    %v2957 = vunpack.c.l.b16 %v2750
    %v2958 = vunpack.c.h.b16 %v2748
    %v2959 = vunpack.c.h.b16 %v2749
    %v2960 = vunpack.c.h.b16 %v2750
    %v2961 = vunpack.c.l.b16 %v2751
    %v2962 = vunpack.c.l.b16 %v2752
    %v2963 = vunpack.c.l.b16 %v2753
    %v2964 = vunpack.c.h.b16 %v2751
    %v2965 = vunpack.c.h.b16 %v2752
    %v2966 = vunpack.c.h.b16 %v2753
    %v2967 = vunpack.c.l.b16 %v2754
    %v2968 = vunpack.c.l.b16 %v2755
    %v2969 = vunpack.c.l.b16 %v2756
    %v2970 = vunpack.c.h.b16 %v2754
    %v2971 = vunpack.c.h.b16 %v2755
    %v2972 = vunpack.c.h.b16 %v2756
    %v2973 = vunpack.c.l.b16 %v2757
    %v2974 = vunpack.c.l.b16 %v2758
    %v2975 = vunpack.c.l.b16 %v2759
    %v2976 = vunpack.c.h.b16 %v2757
    %v2977 = vunpack.c.h.b16 %v2758
    %v2978 = vunpack.c.h.b16 %v2759
    %v2979 = vunpack.c.l.b16 %v2760
    %v2980 = vunpack.c.l.b16 %v2761
    %v2981 = vunpack.c.l.b16 %v2762
    %v2982 = vunpack.c.h.b16 %v2760
    %v2983 = vunpack.c.h.b16 %v2761
    %v2984 = vunpack.c.h.b16 %v2762
    %v2985 = vunpack.c.l.b16 %v2763
    %v2986 = vunpack.c.l.b16 %v2764
    %v2987 = vunpack.c.l.b16 %v2765
    %v2988 = vunpack.c.h.b16 %v2763
    %v2989 = vunpack.c.h.b16 %v2764
    %v2990 = vunpack.c.h.b16 %v2765
    %v2991 = vunpack.c.l.b16 %v2766
    %v2992 = vunpack.c.l.b16 %v2767
    %v2993 = vunpack.c.l.b16 %v2768
    %v2994 = vunpack.c.h.b16 %v2766
    %v2995 = vunpack.c.h.b16 %v2767
    %v2996 = vunpack.c.h.b16 %v2768
    %v2997 = vunpack.c.l.b16 %v2769
    %v2998 = vunpack.c.l.b16 %v2770
    %v2999 = vunpack.c.l.b16 %v2771
    %v3000 = vunpack.c.h.b16 %v2769
    %v3001 = vunpack.c.h.b16 %v2770
    %v3002 = vunpack.c.h.b16 %v2771
    %v3003 = vunpack.c.l.b16 %v2772
    %v3004 = vunpack.c.l.b16 %v2773
    %v3005 = vunpack.c.l.b16 %v2774
    %v3006 = vunpack.c.h.b16 %v2772
    %v3007 = vunpack.c.h.b16 %v2773
    %v3008 = vunpack.c.h.b16 %v2774
    %v3009 = vunpack.c.l.b16 %v2775
    %v3010 = vunpack.c.l.b16 %v2776
    %v3011 = vunpack.c.l.b16 %v2777
    %v3012 = vunpack.c.h.b16 %v2775
    %v3013 = vunpack.c.h.b16 %v2776
    %v3014 = vunpack.c.h.b16 %v2777
    %v3015 = vunpack.c.l.b16 %v2778
    %v3016 = vunpack.c.l.b16 %v2779
    %v3017 = vunpack.c.l.b16 %v2780
    %v3018 = vunpack.c.h.b16 %v2778
    %v3019 = vunpack.c.h.b16 %v2779
    %v3020 = vunpack.c.h.b16 %v2780
    %v3021 = vunpack.c.l.b16 %v2781
    %v3022 = vunpack.c.l.b16 %v2782
    %v3023 = vunpack.c.l.b16 %v2783
    %v3024 = vunpack.c.h.b16 %v2781
    %v3025 = vunpack.c.h.b16 %v2782
    %v3026 = vunpack.c.h.b16 %v2783
    %v3027 = vunpack.c.l.b16 %v2784
    %v3028 = vunpack.c.l.b16 %v2785
    %v3029 = vunpack.c.l.b16 %v2786
    %v3030 = vunpack.c.h.b16 %v2784
    %v3031 = vunpack.c.h.b16 %v2785
    %v3032 = vunpack.c.h.b16 %v2786
    %v3033 = vunpack.c.l.b16 %v2787
    %v3034 = vunpack.c.l.b16 %v2788
    %v3035 = vunpack.c.l.b16 %v2789
    %v3036 = vunpack.c.h.b16 %v2787
    %v3037 = vunpack.c.h.b16 %v2788
    %v3038 = vunpack.c.h.b16 %v2789
    %v3039 = vunpack.c.l.b16 %v2790
    %v3040 = vunpack.c.l.b16 %v2791
    %v3041 = vunpack.c.l.b16 %v2792
    %v3042 = vunpack.c.h.b16 %v2790
    %v3043 = vunpack.c.h.b16 %v2791
    %v3044 = vunpack.c.h.b16 %v2792
    %v3045 = vunpack.c.l.b16 %v2793
    %v3046 = vunpack.c.l.b16 %v2794
    %v3047 = vunpack.c.l.b16 %v2795
    %v3048 = vunpack.c.h.b16 %v2793
    %v3049 = vunpack.c.h.b16 %v2794
    %v3050 = vunpack.c.h.b16 %v2795
    %v3051 = vunpack.c.l.b16 %v2796
    %v3052 = vunpack.c.l.b16 %v2797
    %v3053 = vunpack.c.l.b16 %v2798
    %v3054 = vunpack.c.h.b16 %v2796
    %v3055 = vunpack.c.h.b16 %v2797
    %v3056 = vunpack.c.h.b16 %v2798
    %v3057 = vunpack.c.l.b16 %v2799
    %v3058 = vunpack.c.l.b16 %v2800
    %v3059 = vunpack.c.l.b16 %v2801
    %v3060 = vunpack.c.h.b16 %v2799
    %v3061 = vunpack.c.h.b16 %v2800
    %v3062 = vunpack.c.h.b16 %v2801
    %v3063 = vunpack.c.l.b16 %v2802
    %v3064 = vunpack.c.l.b16 %v2803
    %v3065 = vunpack.c.l.b16 %v2804
    %v3066 = vunpack.c.h.b16 %v2802
    %v3067 = vunpack.c.h.b16 %v2803
    %v3068 = vunpack.c.h.b16 %v2804
    %v3069 = vunpack.c.l.b16 %v2805
    %v3070 = vunpack.c.l.b16 %v2806
    %v3071 = vunpack.c.l.b16 %v2807
    %v3072 = vunpack.c.h.b16 %v2805
    %v3073 = vunpack.c.h.b16 %v2806
    %v3074 = vunpack.c.h.b16 %v2807
    %v3075 = vunpack.c.l.b16 %v2808
    %v3076 = vunpack.c.l.b16 %v2809
    %v3077 = vunpack.c.l.b16 %v2810
    %v3078 = vunpack.c.h.b16 %v2808
    %v3079 = vunpack.c.h.b16 %v2809
    %v3080 = vunpack.c.h.b16 %v2810
    %v3081 = vunpack.c.l.b16 %v2811
    %v3082 = vunpack.c.l.b16 %v2812
    %v3083 = vunpack.c.l.b16 %v2813
    %v3084 = vunpack.c.h.b16 %v2811
    %v3085 = vunpack.c.h.b16 %v2812
    %v3086 = vunpack.c.h.b16 %v2813
    %v3087 = vunpack.c.l.b16 %v2814
    %v3088 = vunpack.c.l.b16 %v2815
    %v3089 = vunpack.c.l.b16 %v2816
    %v3090 = vunpack.c.h.b16 %v2814
    %v3091 = vunpack.c.h.b16 %v2815
    %v3092 = vunpack.c.h.b16 %v2816
    %v3093 = vunpack.c.l.b16 %v2817
    %v3094 = vunpack.c.l.b16 %v2818
    %v3095 = vunpack.c.l.b16 %v2819
    %v3096 = vunpack.c.h.b16 %v2817
    %v3097 = vunpack.c.h.b16 %v2818
    %v3098 = vunpack.c.h.b16 %v2819
    %v3099 = vunpack.c.l.b16 %v2820
    %v3100 = vunpack.c.l.b16 %v2821
    %v3101 = vunpack.c.l.b16 %v2822
    %v3102 = vunpack.c.h.b16 %v2820
    %v3103 = vunpack.c.h.b16 %v2821
    %v3104 = vunpack.c.h.b16 %v2822
    %v3105 = vunpack.c.l.b16 %v2823
    %v3106 = vunpack.c.l.b16 %v2824
    %v3107 = vunpack.c.l.b16 %v2825
    %v3108 = vunpack.c.h.b16 %v2823
    %v3109 = vunpack.c.h.b16 %v2824
    %v3110 = vunpack.c.h.b16 %v2825
    %v3111 = vunpack.c.l.b16 %v2826
    %v3112 = vunpack.c.l.b16 %v2827
    %v3113 = vunpack.c.l.b16 %v2828
    %v3114 = vunpack.c.h.b16 %v2826
    %v3115 = vunpack.c.h.b16 %v2827
    %v3116 = vunpack.c.h.b16 %v2828
    %v3117 = vpack.c.b16 %v2926, %v2925
    %v3118 = vpack.c.b16 %v2927, %v2927
    %v3119 = vpack.c.b16 %v2929, %v2928
    %v3120 = vpack.c.b16 %v2930, %v2930
    %v3121 = vpack.c.b16 %v2932, %v2931
    %v3122 = vpack.c.b16 %v2933, %v2933
    %v3123 = vpack.c.b16 %v2935, %v2934
    %v3124 = vpack.c.b16 %v2936, %v2936
    %v3125 = vpack.c.b16 %v2938, %v2937
    %v3126 = vpack.c.b16 %v2939, %v2939
    %v3127 = vpack.c.b16 %v2941, %v2940
    %v3128 = vpack.c.b16 %v2942, %v2942
    %v3129 = vpack.c.b16 %v2944, %v2943
    %v3130 = vpack.c.b16 %v2945, %v2945
    %v3131 = vpack.c.b16 %v2947, %v2946
    %v3132 = vpack.c.b16 %v2948, %v2948
    %v3133 = vpack.c.b16 %v2950, %v2949
    %v3134 = vpack.c.b16 %v2951, %v2951
    %v3135 = vpack.c.b16 %v2953, %v2952
    %v3136 = vpack.c.b16 %v2954, %v2954
    %v3137 = vpack.c.b16 %v2956, %v2955
    %v3138 = vpack.c.b16 %v2957, %v2957
    %v3139 = vpack.c.b16 %v2959, %v2958
    %v3140 = vpack.c.b16 %v2960, %v2960
    %v3141 = vpack.c.b16 %v2962, %v2961
    %v3142 = vpack.c.b16 %v2963, %v2963
    %v3143 = vpack.c.b16 %v2965, %v2964
    %v3144 = vpack.c.b16 %v2966, %v2966
    %v3145 = vpack.c.b16 %v2968, %v2967
    %v3146 = vpack.c.b16 %v2969, %v2969
    %v3147 = vpack.c.b16 %v2971, %v2970
    %v3148 = vpack.c.b16 %v2972, %v2972
    %v3149 = vpack.c.b16 %v2974, %v2973
    %v3150 = vpack.c.b16 %v2975, %v2975
    %v3151 = vpack.c.b16 %v2977, %v2976
    %v3152 = vpack.c.b16 %v2978, %v2978
    %v3153 = vpack.c.b16 %v2980, %v2979
    %v3154 = vpack.c.b16 %v2981, %v2981
    %v3155 = vpack.c.b16 %v2983, %v2982
    %v3156 = vpack.c.b16 %v2984, %v2984
    %v3157 = vpack.c.b16 %v2986, %v2985
    %v3158 = vpack.c.b16 %v2987, %v2987
    %v3159 = vpack.c.b16 %v2989, %v2988
    %v3160 = vpack.c.b16 %v2990, %v2990
    %v3161 = vpack.c.b16 %v2992, %v2991
    %v3162 = vpack.c.b16 %v2993, %v2993
    %v3163 = vpack.c.b16 %v2995, %v2994
    %v3164 = vpack.c.b16 %v2996, %v2996
    %v3165 = vpack.c.b16 %v2998, %v2997
    %v3166 = vpack.c.b16 %v2999, %v2999
    %v3167 = vpack.c.b16 %v3001, %v3000
    %v3168 = vpack.c.b16 %v3002, %v3002
    %v3169 = vpack.c.b16 %v3004, %v3003
    %v3170 = vpack.c.b16 %v3005, %v3005
    %v3171 = vpack.c.b16 %v3007, %v3006
    %v3172 = vpack.c.b16 %v3008, %v3008
    %v3173 = vpack.c.b16 %v3010, %v3009
    %v3174 = vpack.c.b16 %v3011, %v3011
    %v3175 = vpack.c.b16 %v3013, %v3012
    %v3176 = vpack.c.b16 %v3014, %v3014
    %v3177 = vpack.c.b16 %v3016, %v3015
    %v3178 = vpack.c.b16 %v3017, %v3017
    %v3179 = vpack.c.b16 %v3019, %v3018
    %v3180 = vpack.c.b16 %v3020, %v3020
    %v3181 = vpack.c.b16 %v3022, %v3021
    %v3182 = vpack.c.b16 %v3023, %v3023
    %v3183 = vpack.c.b16 %v3025, %v3024
    %v3184 = vpack.c.b16 %v3026, %v3026
    %v3185 = vpack.c.b16 %v3028, %v3027
    %v3186 = vpack.c.b16 %v3029, %v3029
    %v3187 = vpack.c.b16 %v3031, %v3030
    %v3188 = vpack.c.b16 %v3032, %v3032
    %v3189 = vpack.c.b16 %v3034, %v3033
    %v3190 = vpack.c.b16 %v3035, %v3035
    %v3191 = vpack.c.b16 %v3037, %v3036
    %v3192 = vpack.c.b16 %v3038, %v3038
    %v3193 = vpack.c.b16 %v3040, %v3039
    %v3194 = vpack.c.b16 %v3041, %v3041
    %v3195 = vpack.c.b16 %v3043, %v3042
    %v3196 = vpack.c.b16 %v3044, %v3044
    %v3197 = vpack.c.b16 %v3046, %v3045
    %v3198 = vpack.c.b16 %v3047, %v3047
    %v3199 = vpack.c.b16 %v3049, %v3048
    %v3200 = vpack.c.b16 %v3050, %v3050
    %v3201 = vpack.c.b16 %v3052, %v3051
    %v3202 = vpack.c.b16 %v3053, %v3053
    %v3203 = vpack.c.b16 %v3055, %v3054
    %v3204 = vpack.c.b16 %v3056, %v3056
    %v3205 = vpack.c.b16 %v3058, %v3057
    %v3206 = vpack.c.b16 %v3059, %v3059
    %v3207 = vpack.c.b16 %v3061, %v3060
    %v3208 = vpack.c.b16 %v3062, %v3062
    %v3209 = vpack.c.b16 %v3064, %v3063
    %v3210 = vpack.c.b16 %v3065, %v3065
    %v3211 = vpack.c.b16 %v3067, %v3066
    %v3212 = vpack.c.b16 %v3068, %v3068
    %v3213 = vpack.c.b16 %v3070, %v3069
    %v3214 = vpack.c.b16 %v3071, %v3071
    %v3215 = vpack.c.b16 %v3073, %v3072
    %v3216 = vpack.c.b16 %v3074, %v3074
    %v3217 = vpack.c.b16 %v3076, %v3075
    %v3218 = vpack.c.b16 %v3077, %v3077
    %v3219 = vpack.c.b16 %v3079, %v3078
    %v3220 = vpack.c.b16 %v3080, %v3080
    %v3221 = vpack.c.b16 %v3082, %v3081
    %v3222 = vpack.c.b16 %v3083, %v3083
    %v3223 = vpack.c.b16 %v3085, %v3084
    %v3224 = vpack.c.b16 %v3086, %v3086
    %v3225 = vpack.c.b16 %v3088, %v3087
    %v3226 = vpack.c.b16 %v3089, %v3089
    %v3227 = vpack.c.b16 %v3091, %v3090
    %v3228 = vpack.c.b16 %v3092, %v3092
    %v3229 = vpack.c.b16 %v3094, %v3093
    %v3230 = vpack.c.b16 %v3095, %v3095
    %v3231 = vpack.c.b16 %v3097, %v3096
    %v3232 = vpack.c.b16 %v3098, %v3098
    %v3233 = vpack.c.b16 %v3100, %v3099
    %v3234 = vpack.c.b16 %v3101, %v3101
    %v3235 = vpack.c.b16 %v3103, %v3102
    %v3236 = vpack.c.b16 %v3104, %v3104
    %v3237 = vpack.c.b16 %v3106, %v3105
    %v3238 = vpack.c.b16 %v3107, %v3107
    %v3239 = vpack.c.b16 %v3109, %v3108
    %v3240 = vpack.c.b16 %v3110, %v3110
    %v3241 = vpack.c.b16 %v3112, %v3111
    %v3242 = vpack.c.b16 %v3113, %v3113
    %v3243 = vpack.c.b16 %v3115, %v3114
    %v3244 = vpack.c.b16 %v3116, %v3116
    %3373 = vst [vmem:[#allocation7] sm:$0xff] %v3117
    %3374 = vst [vmem:[#allocation7 + $0x8] sm:$0xf] %v3118
    %3375 = vst [vmem:[#allocation7 + $0xc] sm:$0xff] %v3119
    %3376 = vst [vmem:[#allocation7 + $0x14] sm:$0xf] %v3120
    %3377 = vst [vmem:[#allocation7 + $0x18] sm:$0xff] %v3121
    %3378 = vst [vmem:[#allocation7 + $0x20] sm:$0xf] %v3122
    %3379 = vst [vmem:[#allocation7 + $0x24] sm:$0xff] %v3123
    %3380 = vst [vmem:[#allocation7 + $0x2c] sm:$0xf] %v3124
    %3381 = vst [vmem:[#allocation7 + $0x30] sm:$0xff] %v3125
    %3382 = vst [vmem:[#allocation7 + $0x38] sm:$0xf] %v3126
    %3383 = vst [vmem:[#allocation7 + $0x3c] sm:$0xff] %v3127
    %3384 = vst [vmem:[#allocation7 + $0x44] sm:$0xf] %v3128
    %3385 = vst [vmem:[#allocation7 + $0x48] sm:$0xff] %v3129
    %3386 = vst [vmem:[#allocation7 + $0x50] sm:$0xf] %v3130
    %3387 = vst [vmem:[#allocation7 + $0x54] sm:$0xff] %v3131
    %3388 = vst [vmem:[#allocation7 + $0x5c] sm:$0xf] %v3132
    %3389 = vst [vmem:[#allocation7 + $0x60] sm:$0xff] %v3133
    %3390 = vst [vmem:[#allocation7 + $0x68] sm:$0xf] %v3134
    %3391 = vst [vmem:[#allocation7 + $0x6c] sm:$0xff] %v3135
    %3392 = vst [vmem:[#allocation7 + $0x74] sm:$0xf] %v3136
    %3393 = vst [vmem:[#allocation7 + $0x78] sm:$0xff] %v3137
    %3394 = vst [vmem:[#allocation7 + $0x80] sm:$0xf] %v3138
    %3395 = vst [vmem:[#allocation7 + $0x84] sm:$0xff] %v3139
    %3396 = vst [vmem:[#allocation7 + $0x8c] sm:$0xf] %v3140
    %3397 = vst [vmem:[#allocation7 + $0x90] sm:$0xff] %v3141
    %3398 = vst [vmem:[#allocation7 + $0x98] sm:$0xf] %v3142
    %3399 = vst [vmem:[#allocation7 + $0x9c] sm:$0xff] %v3143
    %3400 = vst [vmem:[#allocation7 + $0xa4] sm:$0xf] %v3144
    %3401 = vst [vmem:[#allocation7 + $0xa8] sm:$0xff] %v3145
    %3402 = vst [vmem:[#allocation7 + $0xb0] sm:$0xf] %v3146
    %3403 = vst [vmem:[#allocation7 + $0xb4] sm:$0xff] %v3147
    %3404 = vst [vmem:[#allocation7 + $0xbc] sm:$0xf] %v3148
    %3405 = vst [vmem:[#allocation7 + $0xc0] sm:$0xff] %v3149
    %3406 = vst [vmem:[#allocation7 + $0xc8] sm:$0xf] %v3150
    %3407 = vst [vmem:[#allocation7 + $0xcc] sm:$0xff] %v3151
    %3408 = vst [vmem:[#allocation7 + $0xd4] sm:$0xf] %v3152
    %3409 = vst [vmem:[#allocation7 + $0xd8] sm:$0xff] %v3153
    %3410 = vst [vmem:[#allocation7 + $0xe0] sm:$0xf] %v3154
    %3411 = vst [vmem:[#allocation7 + $0xe4] sm:$0xff] %v3155
    %3412 = vst [vmem:[#allocation7 + $0xec] sm:$0xf] %v3156
    %3413 = vst [vmem:[#allocation7 + $0xf0] sm:$0xff] %v3157
    %3414 = vst [vmem:[#allocation7 + $0xf8] sm:$0xf] %v3158
    %3415 = vst [vmem:[#allocation7 + $0xfc] sm:$0xff] %v3159
    %3416 = vst [vmem:[#allocation7 + $0x104] sm:$0xf] %v3160
    %3417 = vst [vmem:[#allocation7 + $0x108] sm:$0xff] %v3161
    %3418 = vst [vmem:[#allocation7 + $0x110] sm:$0xf] %v3162
    %3419 = vst [vmem:[#allocation7 + $0x114] sm:$0xff] %v3163
    %3420 = vst [vmem:[#allocation7 + $0x11c] sm:$0xf] %v3164
    %3421 = vst [vmem:[#allocation7 + $0x120] sm:$0xff] %v3165
    %3422 = vst [vmem:[#allocation7 + $0x128] sm:$0xf] %v3166
    %3423 = vst [vmem:[#allocation7 + $0x12c] sm:$0xff] %v3167
    %3424 = vst [vmem:[#allocation7 + $0x134] sm:$0xf] %v3168
    %3425 = vst [vmem:[#allocation7 + $0x138] sm:$0xff] %v3169
    %3426 = vst [vmem:[#allocation7 + $0x140] sm:$0xf] %v3170
    %3427 = vst [vmem:[#allocation7 + $0x144] sm:$0xff] %v3171
    %3428 = vst [vmem:[#allocation7 + $0x14c] sm:$0xf] %v3172
    %3429 = vst [vmem:[#allocation7 + $0x150] sm:$0xff] %v3173
    %3430 = vst [vmem:[#allocation7 + $0x158] sm:$0xf] %v3174
    %3431 = vst [vmem:[#allocation7 + $0x15c] sm:$0xff] %v3175
    %3432 = vst [vmem:[#allocation7 + $0x164] sm:$0xf] %v3176
    %3433 = vst [vmem:[#allocation7 + $0x168] sm:$0xff] %v3177
    %3434 = vst [vmem:[#allocation7 + $0x170] sm:$0xf] %v3178
    %3435 = vst [vmem:[#allocation7 + $0x174] sm:$0xff] %v3179
    %3436 = vst [vmem:[#allocation7 + $0x17c] sm:$0xf] %v3180
    %3437 = vst [vmem:[#allocation7 + $0x180] sm:$0xff] %v3181
    %3438 = vst [vmem:[#allocation7 + $0x188] sm:$0xf] %v3182
    %3439 = vst [vmem:[#allocation7 + $0x18c] sm:$0xff] %v3183
    %3440 = vst [vmem:[#allocation7 + $0x194] sm:$0xf] %v3184
    %3441 = vst [vmem:[#allocation7 + $0x198] sm:$0xff] %v3185
    %3442 = vst [vmem:[#allocation7 + $0x1a0] sm:$0xf] %v3186
    %3443 = vst [vmem:[#allocation7 + $0x1a4] sm:$0xff] %v3187
    %3444 = vst [vmem:[#allocation7 + $0x1ac] sm:$0xf] %v3188
    %3445 = vst [vmem:[#allocation7 + $0x1b0] sm:$0xff] %v3189
    %3446 = vst [vmem:[#allocation7 + $0x1b8] sm:$0xf] %v3190
    %3447 = vst [vmem:[#allocation7 + $0x1bc] sm:$0xff] %v3191
    %3448 = vst [vmem:[#allocation7 + $0x1c4] sm:$0xf] %v3192
    %3449 = vst [vmem:[#allocation7 + $0x1c8] sm:$0xff] %v3193
    %3450 = vst [vmem:[#allocation7 + $0x1d0] sm:$0xf] %v3194
    %3451 = vst [vmem:[#allocation7 + $0x1d4] sm:$0xff] %v3195
    %3452 = vst [vmem:[#allocation7 + $0x1dc] sm:$0xf] %v3196
    %3453 = vst [vmem:[#allocation7 + $0x1e0] sm:$0xff] %v3197
    %3454 = vst [vmem:[#allocation7 + $0x1e8] sm:$0xf] %v3198
    %3455 = vst [vmem:[#allocation7 + $0x1ec] sm:$0xff] %v3199
    %3456 = vst [vmem:[#allocation7 + $0x1f4] sm:$0xf] %v3200
    %3457 = vst [vmem:[#allocation7 + $0x1f8] sm:$0xff] %v3201
    %3458 = vst [vmem:[#allocation7 + $0x200] sm:$0xf] %v3202
    %3459 = vst [vmem:[#allocation7 + $0x204] sm:$0xff] %v3203
    %3460 = vst [vmem:[#allocation7 + $0x20c] sm:$0xf] %v3204
    %3461 = vst [vmem:[#allocation7 + $0x210] sm:$0xff] %v3205
    %3462 = vst [vmem:[#allocation7 + $0x218] sm:$0xf] %v3206
    %3463 = vst [vmem:[#allocation7 + $0x21c] sm:$0xff] %v3207
    %3464 = vst [vmem:[#allocation7 + $0x224] sm:$0xf] %v3208
    %3465 = vst [vmem:[#allocation7 + $0x228] sm:$0xff] %v3209
    %3466 = vst [vmem:[#allocation7 + $0x230] sm:$0xf] %v3210
    %3467 = vst [vmem:[#allocation7 + $0x234] sm:$0xff] %v3211
    %3468 = vst [vmem:[#allocation7 + $0x23c] sm:$0xf] %v3212
    %3469 = vst [vmem:[#allocation7 + $0x240] sm:$0xff] %v3213
    %3470 = vst [vmem:[#allocation7 + $0x248] sm:$0xf] %v3214
    %3471 = vst [vmem:[#allocation7 + $0x24c] sm:$0xff] %v3215
    %3472 = vst [vmem:[#allocation7 + $0x254] sm:$0xf] %v3216
    %3473 = vst [vmem:[#allocation7 + $0x258] sm:$0xff] %v3217
    %3474 = vst [vmem:[#allocation7 + $0x260] sm:$0xf] %v3218
    %3475 = vst [vmem:[#allocation7 + $0x264] sm:$0xff] %v3219
    %3476 = vst [vmem:[#allocation7 + $0x26c] sm:$0xf] %v3220
    %3477 = vst [vmem:[#allocation7 + $0x270] sm:$0xff] %v3221
    %3478 = vst [vmem:[#allocation7 + $0x278] sm:$0xf] %v3222
    %3479 = vst [vmem:[#allocation7 + $0x27c] sm:$0xff] %v3223
    %3480 = vst [vmem:[#allocation7 + $0x284] sm:$0xf] %v3224
    %3481 = vst [vmem:[#allocation7 + $0x288] sm:$0xff] %v3225
    %3482 = vst [vmem:[#allocation7 + $0x290] sm:$0xf] %v3226
    %3483 = vst [vmem:[#allocation7 + $0x294] sm:$0xff] %v3227
    %3484 = vst [vmem:[#allocation7 + $0x29c] sm:$0xf] %v3228
    %3485 = vst [vmem:[#allocation7 + $0x2a0] sm:$0xff] %v3229
    %3486 = vst [vmem:[#allocation7 + $0x2a8] sm:$0xf] %v3230
    %3487 = vst [vmem:[#allocation7 + $0x2ac] sm:$0xff] %v3231
    %3488 = vst [vmem:[#allocation7 + $0x2b4] sm:$0xf] %v3232
    %3489 = vst [vmem:[#allocation7 + $0x2b8] sm:$0xff] %v3233
    %3490 = vst [vmem:[#allocation7 + $0x2c0] sm:$0xf] %v3234
    %3491 = vst [vmem:[#allocation7 + $0x2c4] sm:$0xff] %v3235
    %3492 = vst [vmem:[#allocation7 + $0x2cc] sm:$0xf] %v3236
    %3493 = vst [vmem:[#allocation7 + $0x2d0] sm:$0xff] %v3237
    %3494 = vst [vmem:[#allocation7 + $0x2d8] sm:$0xf] %v3238
    %3495 = vst [vmem:[#allocation7 + $0x2dc] sm:$0xff] %v3239
    %3496 = vst [vmem:[#allocation7 + $0x2e4] sm:$0xf] %v3240
    %3497 = vst [vmem:[#allocation7 + $0x2e8] sm:$0xff] %v3241
    %3498 = vst [vmem:[#allocation7 + $0x2f0] sm:$0xf] %v3242
    %3499 = vst [vmem:[#allocation7 + $0x2f4] sm:$0xff] %v3243
    %3500 = vst [vmem:[#allocation7 + $0x2fc] sm:$0xf] %v3244
    // Predicated region
    $region18: #{dsi_predictor_forward.8} parent=1 // pred_check
      _
    $region19: #{dsi_predictor_forward.8} parent=1 // pred_check_branch
      %3502 = sbr.rel (0) target = $region21
    $region20: #{dsi_predictor_forward.8} parent=1 // pred_region
      %s3504 = ssub.s32 12288, 12288
      %3505 = vsyncadd [#allocation4], %s3504
      %s3506 = sshll.u32 [#allocation7], 4
      %s3507 = int_to_ptr.vmem [resolvable:$true] %s3506
      %3512 = dma.vmem_to_hbm [thread:$0]  %s3507, 12288, %s2, [#allocation4], 192, 192, 12
    $region21: #{dsi_predictor_forward.8} parent=1 // pred_fallthru
      _
    // Predicated region
    $region22: #{dsi_predictor_forward.8} parent=1 // pred_check
      _
    $region23: #{dsi_predictor_forward.8} parent=1 // pred_check_branch
      %3514 = sbr.rel (0) target = $region25
    $region24: #{dsi_predictor_forward.8} parent=1 // pred_region
      %3515 = dma.done [#allocation4], 12288
    $region25: #{dsi_predictor_forward.8} parent=1 // pred_fallthru
      _
    %3516 = vsyncpa [#allocation3], 1
    %3517 = vsyncpa [#allocation6], 1
    %3518 = vsyncpa [#allocation4], 1

// kernel: dsi_predictor_forward.6
$region0: #{dsi_predictor_forward.6}
  #allocation0 [shape = 'u32[]', space=smem, size = 0x4, offset = 0x4, fixed_abs, tag = 'smem constant byte address 0x4 - core index']
  #allocation1 [shape = 'u32[144,128]{1,0:T(1,128)}', space=vmem, size = 0x12000, scoped, tag = 'internal scratch']
  %s0 = inlined_call_operand.hbm [shape: bf16[512,512], index: 0, kind: input, shape index: {}]
  %s1 = inlined_call_operand.hbm [shape: bf16[512,384], index: 1, kind: input, shape index: {}]
  %s2 = inlined_call_operand.hbm [shape: bf16[512,384], index: 2, kind: output, shape index: {}]
  %s3 = sld [smem:[#allocation0]]
  $region26: #{dsi_predictor_forward.6} parent=0
    _
  %s5 = ssub.s32 1, %s3
  %s6 = scalar_select 0, %s5, %s3
  $region1: #{dsi_predictor_forward.6} parent=0
    #allocation2 [shape = 'u8[524288]{0}', space=vmem, size = 0x80000, scoped, tag = 'input window, operand 0, single buffered']
    #allocation3 [shape = 's32[1]{0}', space=sflag, size = 0x4, scoped, tag = 'scoped memory for dsi_predictor_forward.6']
    #allocation4 [shape = 's32[1]{0}', space=sflag, size = 0x4, scoped, tag = 'scoped memory for dsi_predictor_forward.6']
    #allocation5 [shape = 'u8[393216]{0}', space=vmem, size = 0x60000, scoped, tag = 'input window, operand 1, single buffered']
    #allocation6 [shape = 's32[1]{0}', space=sflag, size = 0x4, scoped, tag = 'scoped memory for dsi_predictor_forward.6']
    #allocation7 [shape = 'u8[393216]{0}', space=vmem, size = 0x60000, scoped, tag = 'output window, operand 0, single buffered']
    %7 = vsyncpa [#allocation3], 0
    %8 = vsyncpa [#allocation6], 0
    %9 = vsyncpa [#allocation4], 0
    // Predicated region
    $region2: #{dsi_predictor_forward.6} parent=1 // pred_check
      _
    $region3: #{dsi_predictor_forward.6} parent=1 // pred_check_branch
      %11 = sbr.rel (0) target = $region5
    $region4: #{dsi_predictor_forward.6} parent=1 // pred_region
      %s13 = ssub.s32 16384, 16384
      %14 = vsyncadd [#allocation3], %s13
      %s15 = sshll.u32 [#allocation2], 4
      %s16 = int_to_ptr.vmem [resolvable:$true] %s15
      %21 = dma.hbm_to_vmem [thread:$0]  %s0, 16384, %s16, [#allocation3], 256, 256, 16
    $region5: #{dsi_predictor_forward.6} parent=1 // pred_fallthru
      _
    // Predicated region
    $region6: #{dsi_predictor_forward.6} parent=1 // pred_check
      _
    $region7: #{dsi_predictor_forward.6} parent=1 // pred_check_branch
      %23 = sbr.rel (0) target = $region9
    $region8: #{dsi_predictor_forward.6} parent=1 // pred_region
      %s25 = ssub.s32 12288, 12288
      %26 = vsyncadd [#allocation6], %s25
      %s27 = sshll.u32 [#allocation5], 4
      %s28 = int_to_ptr.vmem [resolvable:$true] %s27
      %33 = dma.hbm_to_vmem [thread:$0]  %s1, 12288, %s28, [#allocation6], 192, 192, 12
    $region9: #{dsi_predictor_forward.6} parent=1 // pred_fallthru
      _
    // Predicated region
    $region10: #{dsi_predictor_forward.6} parent=1 // pred_check
      _
    $region11: #{dsi_predictor_forward.6} parent=1 // pred_check_branch
      %35 = sbr.rel (0) target = $region13
    $region12: #{dsi_predictor_forward.6} parent=1 // pred_region
      %36 = dma.done [#allocation3], 16384
    $region13: #{dsi_predictor_forward.6} parent=1 // pred_fallthru
      _
    // Predicated region
    $region14: #{dsi_predictor_forward.6} parent=1 // pred_check
      _
    $region15: #{dsi_predictor_forward.6} parent=1 // pred_check_branch
      %38 = sbr.rel (0) target = $region17
    $region16: #{dsi_predictor_forward.6} parent=1 // pred_region
      %39 = dma.done [#allocation6], 12288
    $region17: #{dsi_predictor_forward.6} parent=1 // pred_fallthru
      _
    %v41 = vld [vmem:[#allocation2] sm:$0xff]
    %v42 = vld [vmem:[#allocation2 + $0x8] sm:$0xff]
    %v43 = vld [vmem:[#allocation2 + $0x10] sm:$0xff]
    %v44 = vld [vmem:[#allocation2 + $0x18] sm:$0xff]
    %v45 = vld [vmem:[#allocation2 + $0x20] sm:$0xff]
    %v46 = vld [vmem:[#allocation2 + $0x28] sm:$0xff]
    %v47 = vld [vmem:[#allocation2 + $0x30] sm:$0xff]
    %v48 = vld [vmem:[#allocation2 + $0x38] sm:$0xff]
    %v49 = vld [vmem:[#allocation2 + $0x40] sm:$0xff]
    %v50 = vld [vmem:[#allocation2 + $0x48] sm:$0xff]
    %v51 = vld [vmem:[#allocation2 + $0x50] sm:$0xff]
    %v52 = vld [vmem:[#allocation2 + $0x58] sm:$0xff]
    %v53 = vld [vmem:[#allocation2 + $0x60] sm:$0xff]
    %v54 = vld [vmem:[#allocation2 + $0x68] sm:$0xff]
    %v55 = vld [vmem:[#allocation2 + $0x70] sm:$0xff]
    %v56 = vld [vmem:[#allocation2 + $0x78] sm:$0xff]
    %v57 = vld [vmem:[#allocation2 + $0x80] sm:$0xff]
    %v58 = vld [vmem:[#allocation2 + $0x88] sm:$0xff]
    %v59 = vld [vmem:[#allocation2 + $0x90] sm:$0xff]
    %v60 = vld [vmem:[#allocation2 + $0x98] sm:$0xff]
    %v61 = vld [vmem:[#allocation2 + $0xa0] sm:$0xff]
    %v62 = vld [vmem:[#allocation2 + $0xa8] sm:$0xff]
    %v63 = vld [vmem:[#allocation2 + $0xb0] sm:$0xff]
    %v64 = vld [vmem:[#allocation2 + $0xb8] sm:$0xff]
    %v65 = vld [vmem:[#allocation2 + $0xc0] sm:$0xff]
    %v66 = vld [vmem:[#allocation2 + $0xc8] sm:$0xff]
    %v67 = vld [vmem:[#allocation2 + $0xd0] sm:$0xff]
    %v68 = vld [vmem:[#allocation2 + $0xd8] sm:$0xff]
    %v69 = vld [vmem:[#allocation2 + $0xe0] sm:$0xff]
    %v70 = vld [vmem:[#allocation2 + $0xe8] sm:$0xff]
    %v71 = vld [vmem:[#allocation2 + $0xf0] sm:$0xff]
    %v72 = vld [vmem:[#allocation2 + $0xf8] sm:$0xff]
    %v73 = vld [vmem:[#allocation2 + $0x100] sm:$0xff]
    %v74 = vld [vmem:[#allocation2 + $0x108] sm:$0xff]
    %v75 = vld [vmem:[#allocation2 + $0x110] sm:$0xff]
    %v76 = vld [vmem:[#allocation2 + $0x118] sm:$0xff]
    %v77 = vld [vmem:[#allocation2 + $0x120] sm:$0xff]
    %v78 = vld [vmem:[#allocation2 + $0x128] sm:$0xff]
    %v79 = vld [vmem:[#allocation2 + $0x130] sm:$0xff]
    %v80 = vld [vmem:[#allocation2 + $0x138] sm:$0xff]
    %v81 = vld [vmem:[#allocation2 + $0x140] sm:$0xff]
    %v82 = vld [vmem:[#allocation2 + $0x148] sm:$0xff]
    %v83 = vld [vmem:[#allocation2 + $0x150] sm:$0xff]
    %v84 = vld [vmem:[#allocation2 + $0x158] sm:$0xff]
    %v85 = vld [vmem:[#allocation2 + $0x160] sm:$0xff]
    %v86 = vld [vmem:[#allocation2 + $0x168] sm:$0xff]
    %v87 = vld [vmem:[#allocation2 + $0x170] sm:$0xff]
    %v88 = vld [vmem:[#allocation2 + $0x178] sm:$0xff]
    %v89 = vld [vmem:[#allocation2 + $0x180] sm:$0xff]
    %v90 = vld [vmem:[#allocation2 + $0x188] sm:$0xff]
    %v91 = vld [vmem:[#allocation2 + $0x190] sm:$0xff]
    %v92 = vld [vmem:[#allocation2 + $0x198] sm:$0xff]
    %v93 = vld [vmem:[#allocation2 + $0x1a0] sm:$0xff]
    %v94 = vld [vmem:[#allocation2 + $0x1a8] sm:$0xff]
    %v95 = vld [vmem:[#allocation2 + $0x1b0] sm:$0xff]
    %v96 = vld [vmem:[#allocation2 + $0x1b8] sm:$0xff]
    %v97 = vld [vmem:[#allocation2 + $0x1c0] sm:$0xff]
    %v98 = vld [vmem:[#allocation2 + $0x1c8] sm:$0xff]
    %v99 = vld [vmem:[#allocation2 + $0x1d0] sm:$0xff]
    %v100 = vld [vmem:[#allocation2 + $0x1d8] sm:$0xff]
    %v101 = vld [vmem:[#allocation2 + $0x1e0] sm:$0xff]
    %v102 = vld [vmem:[#allocation2 + $0x1e8] sm:$0xff]
    %v103 = vld [vmem:[#allocation2 + $0x1f0] sm:$0xff]
    %v104 = vld [vmem:[#allocation2 + $0x1f8] sm:$0xff]
    %v105 = vld [vmem:[#allocation2 + $0x200] sm:$0xff]
    %v106 = vld [vmem:[#allocation2 + $0x208] sm:$0xff]
    %v107 = vld [vmem:[#allocation2 + $0x210] sm:$0xff]
    %v108 = vld [vmem:[#allocation2 + $0x218] sm:$0xff]
    %v109 = vld [vmem:[#allocation2 + $0x220] sm:$0xff]
    %v110 = vld [vmem:[#allocation2 + $0x228] sm:$0xff]
    %v111 = vld [vmem:[#allocation2 + $0x230] sm:$0xff]
    %v112 = vld [vmem:[#allocation2 + $0x238] sm:$0xff]
    %v113 = vld [vmem:[#allocation2 + $0x240] sm:$0xff]
    %v114 = vld [vmem:[#allocation2 + $0x248] sm:$0xff]
    %v115 = vld [vmem:[#allocation2 + $0x250] sm:$0xff]
    %v116 = vld [vmem:[#allocation2 + $0x258] sm:$0xff]
    %v117 = vld [vmem:[#allocation2 + $0x260] sm:$0xff]
    %v118 = vld [vmem:[#allocation2 + $0x268] sm:$0xff]
    %v119 = vld [vmem:[#allocation2 + $0x270] sm:$0xff]
    %v120 = vld [vmem:[#allocation2 + $0x278] sm:$0xff]
    %v121 = vld [vmem:[#allocation2 + $0x280] sm:$0xff]
    %v122 = vld [vmem:[#allocation2 + $0x288] sm:$0xff]
    %v123 = vld [vmem:[#allocation2 + $0x290] sm:$0xff]
    %v124 = vld [vmem:[#allocation2 + $0x298] sm:$0xff]
    %v125 = vld [vmem:[#allocation2 + $0x2a0] sm:$0xff]
    %v126 = vld [vmem:[#allocation2 + $0x2a8] sm:$0xff]
    %v127 = vld [vmem:[#allocation2 + $0x2b0] sm:$0xff]
    %v128 = vld [vmem:[#allocation2 + $0x2b8] sm:$0xff]
    %v129 = vld [vmem:[#allocation2 + $0x2c0] sm:$0xff]
    %v130 = vld [vmem:[#allocation2 + $0x2c8] sm:$0xff]
    %v131 = vld [vmem:[#allocation2 + $0x2d0] sm:$0xff]
    %v132 = vld [vmem:[#allocation2 + $0x2d8] sm:$0xff]
    %v133 = vld [vmem:[#allocation2 + $0x2e0] sm:$0xff]
    %v134 = vld [vmem:[#allocation2 + $0x2e8] sm:$0xff]
    %v135 = vld [vmem:[#allocation2 + $0x2f0] sm:$0xff]
    %v136 = vld [vmem:[#allocation2 + $0x2f8] sm:$0xff]
    %v137 = vld [vmem:[#allocation2 + $0x300] sm:$0xff]
    %v138 = vld [vmem:[#allocation2 + $0x308] sm:$0xff]
    %v139 = vld [vmem:[#allocation2 + $0x310] sm:$0xff]
    %v140 = vld [vmem:[#allocation2 + $0x318] sm:$0xff]
    %v141 = vld [vmem:[#allocation2 + $0x320] sm:$0xff]
    %v142 = vld [vmem:[#allocation2 + $0x328] sm:$0xff]
    %v143 = vld [vmem:[#allocation2 + $0x330] sm:$0xff]
    %v144 = vld [vmem:[#allocation2 + $0x338] sm:$0xff]
    %v145 = vld [vmem:[#allocation2 + $0x340] sm:$0xff]
    %v146 = vld [vmem:[#allocation2 + $0x348] sm:$0xff]
    %v147 = vld [vmem:[#allocation2 + $0x350] sm:$0xff]
    %v148 = vld [vmem:[#allocation2 + $0x358] sm:$0xff]
    %v149 = vld [vmem:[#allocation2 + $0x360] sm:$0xff]
    %v150 = vld [vmem:[#allocation2 + $0x368] sm:$0xff]
    %v151 = vld [vmem:[#allocation2 + $0x370] sm:$0xff]
    %v152 = vld [vmem:[#allocation2 + $0x378] sm:$0xff]
    %v153 = vld [vmem:[#allocation2 + $0x380] sm:$0xff]
    %v154 = vld [vmem:[#allocation2 + $0x388] sm:$0xff]
    %v155 = vld [vmem:[#allocation2 + $0x390] sm:$0xff]
    %v156 = vld [vmem:[#allocation2 + $0x398] sm:$0xff]
    %v157 = vld [vmem:[#allocation2 + $0x3a0] sm:$0xff]
    %v158 = vld [vmem:[#allocation2 + $0x3a8] sm:$0xff]
    %v159 = vld [vmem:[#allocation2 + $0x3b0] sm:$0xff]
    %v160 = vld [vmem:[#allocation2 + $0x3b8] sm:$0xff]
    %v161 = vld [vmem:[#allocation2 + $0x3c0] sm:$0xff]
    %v162 = vld [vmem:[#allocation2 + $0x3c8] sm:$0xff]
    %v163 = vld [vmem:[#allocation2 + $0x3d0] sm:$0xff]
    %v164 = vld [vmem:[#allocation2 + $0x3d8] sm:$0xff]
    %v165 = vld [vmem:[#allocation2 + $0x3e0] sm:$0xff]
    %v166 = vld [vmem:[#allocation2 + $0x3e8] sm:$0xff]
    %v167 = vld [vmem:[#allocation2 + $0x3f0] sm:$0xff]
    %v168 = vld [vmem:[#allocation2 + $0x3f8] sm:$0xff]
    %v169 = vld [vmem:[#allocation5] sm:$0xff]
    %v170 = vld [vmem:[#allocation5 + $0x8] sm:$0xf]
    %v171 = vld [vmem:[#allocation5 + $0xc] sm:$0xff]
    %v172 = vld [vmem:[#allocation5 + $0x14] sm:$0xf]
    %v173 = vld [vmem:[#allocation5 + $0x18] sm:$0xff]
    %v174 = vld [vmem:[#allocation5 + $0x20] sm:$0xf]
    %v175 = vld [vmem:[#allocation5 + $0x24] sm:$0xff]
    %v176 = vld [vmem:[#allocation5 + $0x2c] sm:$0xf]
    %v177 = vld [vmem:[#allocation5 + $0x30] sm:$0xff]
    %v178 = vld [vmem:[#allocation5 + $0x38] sm:$0xf]
    %v179 = vld [vmem:[#allocation5 + $0x3c] sm:$0xff]
    %v180 = vld [vmem:[#allocation5 + $0x44] sm:$0xf]
    %v181 = vld [vmem:[#allocation5 + $0x48] sm:$0xff]
    %v182 = vld [vmem:[#allocation5 + $0x50] sm:$0xf]
    %v183 = vld [vmem:[#allocation5 + $0x54] sm:$0xff]
    %v184 = vld [vmem:[#allocation5 + $0x5c] sm:$0xf]
    %v185 = vld [vmem:[#allocation5 + $0x60] sm:$0xff]
    %v186 = vld [vmem:[#allocation5 + $0x68] sm:$0xf]
    %v187 = vld [vmem:[#allocation5 + $0x6c] sm:$0xff]
    %v188 = vld [vmem:[#allocation5 + $0x74] sm:$0xf]
    %v189 = vld [vmem:[#allocation5 + $0x78] sm:$0xff]
    %v190 = vld [vmem:[#allocation5 + $0x80] sm:$0xf]
    %v191 = vld [vmem:[#allocation5 + $0x84] sm:$0xff]
    %v192 = vld [vmem:[#allocation5 + $0x8c] sm:$0xf]
    %v193 = vld [vmem:[#allocation5 + $0x90] sm:$0xff]
    %v194 = vld [vmem:[#allocation5 + $0x98] sm:$0xf]
    %v195 = vld [vmem:[#allocation5 + $0x9c] sm:$0xff]
    %v196 = vld [vmem:[#allocation5 + $0xa4] sm:$0xf]
    %v197 = vld [vmem:[#allocation5 + $0xa8] sm:$0xff]
    %v198 = vld [vmem:[#allocation5 + $0xb0] sm:$0xf]
    %v199 = vld [vmem:[#allocation5 + $0xb4] sm:$0xff]
    %v200 = vld [vmem:[#allocation5 + $0xbc] sm:$0xf]
    %v201 = vld [vmem:[#allocation5 + $0xc0] sm:$0xff]
    %v202 = vld [vmem:[#allocation5 + $0xc8] sm:$0xf]
    %v203 = vld [vmem:[#allocation5 + $0xcc] sm:$0xff]
    %v204 = vld [vmem:[#allocation5 + $0xd4] sm:$0xf]
    %v205 = vld [vmem:[#allocation5 + $0xd8] sm:$0xff]
    %v206 = vld [vmem:[#allocation5 + $0xe0] sm:$0xf]
    %v207 = vld [vmem:[#allocation5 + $0xe4] sm:$0xff]
    %v208 = vld [vmem:[#allocation5 + $0xec] sm:$0xf]
    %v209 = vld [vmem:[#allocation5 + $0xf0] sm:$0xff]
    %v210 = vld [vmem:[#allocation5 + $0xf8] sm:$0xf]
    %v211 = vld [vmem:[#allocation5 + $0xfc] sm:$0xff]
    %v212 = vld [vmem:[#allocation5 + $0x104] sm:$0xf]
    %v213 = vld [vmem:[#allocation5 + $0x108] sm:$0xff]
    %v214 = vld [vmem:[#allocation5 + $0x110] sm:$0xf]
    %v215 = vld [vmem:[#allocation5 + $0x114] sm:$0xff]
    %v216 = vld [vmem:[#allocation5 + $0x11c] sm:$0xf]
    %v217 = vld [vmem:[#allocation5 + $0x120] sm:$0xff]
    %v218 = vld [vmem:[#allocation5 + $0x128] sm:$0xf]
    %v219 = vld [vmem:[#allocation5 + $0x12c] sm:$0xff]
    %v220 = vld [vmem:[#allocation5 + $0x134] sm:$0xf]
    %v221 = vld [vmem:[#allocation5 + $0x138] sm:$0xff]
    %v222 = vld [vmem:[#allocation5 + $0x140] sm:$0xf]
    %v223 = vld [vmem:[#allocation5 + $0x144] sm:$0xff]
    %v224 = vld [vmem:[#allocation5 + $0x14c] sm:$0xf]
    %v225 = vld [vmem:[#allocation5 + $0x150] sm:$0xff]
    %v226 = vld [vmem:[#allocation5 + $0x158] sm:$0xf]
    %v227 = vld [vmem:[#allocation5 + $0x15c] sm:$0xff]
    %v228 = vld [vmem:[#allocation5 + $0x164] sm:$0xf]
    %v229 = vld [vmem:[#allocation5 + $0x168] sm:$0xff]
    %v230 = vld [vmem:[#allocation5 + $0x170] sm:$0xf]
    %v231 = vld [vmem:[#allocation5 + $0x174] sm:$0xff]
    %v232 = vld [vmem:[#allocation5 + $0x17c] sm:$0xf]
    %v233 = vld [vmem:[#allocation5 + $0x180] sm:$0xff]
    %v234 = vld [vmem:[#allocation5 + $0x188] sm:$0xf]
    %v235 = vld [vmem:[#allocation5 + $0x18c] sm:$0xff]
    %v236 = vld [vmem:[#allocation5 + $0x194] sm:$0xf]
    %v237 = vld [vmem:[#allocation5 + $0x198] sm:$0xff]
    %v238 = vld [vmem:[#allocation5 + $0x1a0] sm:$0xf]
    %v239 = vld [vmem:[#allocation5 + $0x1a4] sm:$0xff]
    %v240 = vld [vmem:[#allocation5 + $0x1ac] sm:$0xf]
    %v241 = vld [vmem:[#allocation5 + $0x1b0] sm:$0xff]
    %v242 = vld [vmem:[#allocation5 + $0x1b8] sm:$0xf]
    %v243 = vld [vmem:[#allocation5 + $0x1bc] sm:$0xff]
    %v244 = vld [vmem:[#allocation5 + $0x1c4] sm:$0xf]
    %v245 = vld [vmem:[#allocation5 + $0x1c8] sm:$0xff]
    %v246 = vld [vmem:[#allocation5 + $0x1d0] sm:$0xf]
    %v247 = vld [vmem:[#allocation5 + $0x1d4] sm:$0xff]
    %v248 = vld [vmem:[#allocation5 + $0x1dc] sm:$0xf]
    %v249 = vld [vmem:[#allocation5 + $0x1e0] sm:$0xff]
    %v250 = vld [vmem:[#allocation5 + $0x1e8] sm:$0xf]
    %v251 = vld [vmem:[#allocation5 + $0x1ec] sm:$0xff]
    %v252 = vld [vmem:[#allocation5 + $0x1f4] sm:$0xf]
    %v253 = vld [vmem:[#allocation5 + $0x1f8] sm:$0xff]
    %v254 = vld [vmem:[#allocation5 + $0x200] sm:$0xf]
    %v255 = vld [vmem:[#allocation5 + $0x204] sm:$0xff]
    %v256 = vld [vmem:[#allocation5 + $0x20c] sm:$0xf]
    %v257 = vld [vmem:[#allocation5 + $0x210] sm:$0xff]
    %v258 = vld [vmem:[#allocation5 + $0x218] sm:$0xf]
    %v259 = vld [vmem:[#allocation5 + $0x21c] sm:$0xff]
    %v260 = vld [vmem:[#allocation5 + $0x224] sm:$0xf]
    %v261 = vld [vmem:[#allocation5 + $0x228] sm:$0xff]
    %v262 = vld [vmem:[#allocation5 + $0x230] sm:$0xf]
    %v263 = vld [vmem:[#allocation5 + $0x234] sm:$0xff]
    %v264 = vld [vmem:[#allocation5 + $0x23c] sm:$0xf]
    %v265 = vld [vmem:[#allocation5 + $0x240] sm:$0xff]
    %v266 = vld [vmem:[#allocation5 + $0x248] sm:$0xf]
    %v267 = vld [vmem:[#allocation5 + $0x24c] sm:$0xff]
    %v268 = vld [vmem:[#allocation5 + $0x254] sm:$0xf]
    %v269 = vld [vmem:[#allocation5 + $0x258] sm:$0xff]
    %v270 = vld [vmem:[#allocation5 + $0x260] sm:$0xf]
    %v271 = vld [vmem:[#allocation5 + $0x264] sm:$0xff]
    %v272 = vld [vmem:[#allocation5 + $0x26c] sm:$0xf]
    %v273 = vld [vmem:[#allocation5 + $0x270] sm:$0xff]
    %v274 = vld [vmem:[#allocation5 + $0x278] sm:$0xf]
    %v275 = vld [vmem:[#allocation5 + $0x27c] sm:$0xff]
    %v276 = vld [vmem:[#allocation5 + $0x284] sm:$0xf]
    %v277 = vld [vmem:[#allocation5 + $0x288] sm:$0xff]
    %v278 = vld [vmem:[#allocation5 + $0x290] sm:$0xf]
    %v279 = vld [vmem:[#allocation5 + $0x294] sm:$0xff]
    %v280 = vld [vmem:[#allocation5 + $0x29c] sm:$0xf]
    %v281 = vld [vmem:[#allocation5 + $0x2a0] sm:$0xff]
    %v282 = vld [vmem:[#allocation5 + $0x2a8] sm:$0xf]
    %v283 = vld [vmem:[#allocation5 + $0x2ac] sm:$0xff]
    %v284 = vld [vmem:[#allocation5 + $0x2b4] sm:$0xf]
    %v285 = vld [vmem:[#allocation5 + $0x2b8] sm:$0xff]
    %v286 = vld [vmem:[#allocation5 + $0x2c0] sm:$0xf]
    %v287 = vld [vmem:[#allocation5 + $0x2c4] sm:$0xff]
    %v288 = vld [vmem:[#allocation5 + $0x2cc] sm:$0xf]
    %v289 = vld [vmem:[#allocation5 + $0x2d0] sm:$0xff]
    %v290 = vld [vmem:[#allocation5 + $0x2d8] sm:$0xf]
    %v291 = vld [vmem:[#allocation5 + $0x2dc] sm:$0xff]
    %v292 = vld [vmem:[#allocation5 + $0x2e4] sm:$0xf]
    %v293 = vld [vmem:[#allocation5 + $0x2e8] sm:$0xff]
    %v294 = vld [vmem:[#allocation5 + $0x2f0] sm:$0xf]
    %v295 = vld [vmem:[#allocation5 + $0x2f4] sm:$0xff]
    %v296 = vld [vmem:[#allocation5 + $0x2fc] sm:$0xf]
    %v425 = vunpack.c.l.b16 %v41
    %v426 = vunpack.c.h.b16 %v41
    %v427 = vunpack.c.l.b16 %v42
    %v428 = vunpack.c.h.b16 %v42
    %v429 = vunpack.c.l.b16 %v43
    %v430 = vunpack.c.h.b16 %v43
    %v431 = vunpack.c.l.b16 %v44
    %v432 = vunpack.c.h.b16 %v44
    %v433 = vunpack.c.l.b16 %v45
    %v434 = vunpack.c.h.b16 %v45
    %v435 = vunpack.c.l.b16 %v46
    %v436 = vunpack.c.h.b16 %v46
    %v437 = vunpack.c.l.b16 %v47
    %v438 = vunpack.c.h.b16 %v47
    %v439 = vunpack.c.l.b16 %v48
    %v440 = vunpack.c.h.b16 %v48
    %v441 = vunpack.c.l.b16 %v49
    %v442 = vunpack.c.h.b16 %v49
    %v443 = vunpack.c.l.b16 %v50
    %v444 = vunpack.c.h.b16 %v50
    %v445 = vunpack.c.l.b16 %v51
    %v446 = vunpack.c.h.b16 %v51
    %v447 = vunpack.c.l.b16 %v52
    %v448 = vunpack.c.h.b16 %v52
    %v449 = vunpack.c.l.b16 %v53
    %v450 = vunpack.c.h.b16 %v53
    %v451 = vunpack.c.l.b16 %v54
    %v452 = vunpack.c.h.b16 %v54
    %v453 = vunpack.c.l.b16 %v55
    %v454 = vunpack.c.h.b16 %v55
    %v455 = vunpack.c.l.b16 %v56
    %v456 = vunpack.c.h.b16 %v56
    %v457 = vunpack.c.l.b16 %v57
    %v458 = vunpack.c.h.b16 %v57
    %v459 = vunpack.c.l.b16 %v58
    %v460 = vunpack.c.h.b16 %v58
    %v461 = vunpack.c.l.b16 %v59
    %v462 = vunpack.c.h.b16 %v59
    %v463 = vunpack.c.l.b16 %v60
    %v464 = vunpack.c.h.b16 %v60
    %v465 = vunpack.c.l.b16 %v61
    %v466 = vunpack.c.h.b16 %v61
    %v467 = vunpack.c.l.b16 %v62
    %v468 = vunpack.c.h.b16 %v62
    %v469 = vunpack.c.l.b16 %v63
    %v470 = vunpack.c.h.b16 %v63
    %v471 = vunpack.c.l.b16 %v64
    %v472 = vunpack.c.h.b16 %v64
    %v473 = vunpack.c.l.b16 %v65
    %v474 = vunpack.c.h.b16 %v65
    %v475 = vunpack.c.l.b16 %v66
    %v476 = vunpack.c.h.b16 %v66
    %v477 = vunpack.c.l.b16 %v67
    %v478 = vunpack.c.h.b16 %v67
    %v479 = vunpack.c.l.b16 %v68
    %v480 = vunpack.c.h.b16 %v68
    %v481 = vunpack.c.l.b16 %v69
    %v482 = vunpack.c.h.b16 %v69
    %v483 = vunpack.c.l.b16 %v70
    %v484 = vunpack.c.h.b16 %v70
    %v485 = vunpack.c.l.b16 %v71
    %v486 = vunpack.c.h.b16 %v71
    %v487 = vunpack.c.l.b16 %v72
    %v488 = vunpack.c.h.b16 %v72
    %v489 = vunpack.c.l.b16 %v73
    %v490 = vunpack.c.h.b16 %v73
    %v491 = vunpack.c.l.b16 %v74
    %v492 = vunpack.c.h.b16 %v74
    %v493 = vunpack.c.l.b16 %v75
    %v494 = vunpack.c.h.b16 %v75
    %v495 = vunpack.c.l.b16 %v76
    %v496 = vunpack.c.h.b16 %v76
    %v497 = vunpack.c.l.b16 %v77
    %v498 = vunpack.c.h.b16 %v77
    %v499 = vunpack.c.l.b16 %v78
    %v500 = vunpack.c.h.b16 %v78
    %v501 = vunpack.c.l.b16 %v79
    %v502 = vunpack.c.h.b16 %v79
    %v503 = vunpack.c.l.b16 %v80
    %v504 = vunpack.c.h.b16 %v80
    %v505 = vunpack.c.l.b16 %v81
    %v506 = vunpack.c.h.b16 %v81
    %v507 = vunpack.c.l.b16 %v82
    %v508 = vunpack.c.h.b16 %v82
    %v509 = vunpack.c.l.b16 %v83
    %v510 = vunpack.c.h.b16 %v83
    %v511 = vunpack.c.l.b16 %v84
    %v512 = vunpack.c.h.b16 %v84
    %v513 = vunpack.c.l.b16 %v85
    %v514 = vunpack.c.h.b16 %v85
    %v515 = vunpack.c.l.b16 %v86
    %v516 = vunpack.c.h.b16 %v86
    %v517 = vunpack.c.l.b16 %v87
    %v518 = vunpack.c.h.b16 %v87
    %v519 = vunpack.c.l.b16 %v88
    %v520 = vunpack.c.h.b16 %v88
    %v521 = vunpack.c.l.b16 %v89
    %v522 = vunpack.c.h.b16 %v89
    %v523 = vunpack.c.l.b16 %v90
    %v524 = vunpack.c.h.b16 %v90
    %v525 = vunpack.c.l.b16 %v91
    %v526 = vunpack.c.h.b16 %v91
    %v527 = vunpack.c.l.b16 %v92
    %v528 = vunpack.c.h.b16 %v92
    %v529 = vunpack.c.l.b16 %v93
    %v530 = vunpack.c.h.b16 %v93
    %v531 = vunpack.c.l.b16 %v94
    %v532 = vunpack.c.h.b16 %v94
    %v533 = vunpack.c.l.b16 %v95
    %v534 = vunpack.c.h.b16 %v95
    %v535 = vunpack.c.l.b16 %v96
    %v536 = vunpack.c.h.b16 %v96
    %v537 = vunpack.c.l.b16 %v97
    %v538 = vunpack.c.h.b16 %v97
    %v539 = vunpack.c.l.b16 %v98
    %v540 = vunpack.c.h.b16 %v98
    %v541 = vunpack.c.l.b16 %v99
    %v542 = vunpack.c.h.b16 %v99
    %v543 = vunpack.c.l.b16 %v100
    %v544 = vunpack.c.h.b16 %v100
    %v545 = vunpack.c.l.b16 %v101
    %v546 = vunpack.c.h.b16 %v101
    %v547 = vunpack.c.l.b16 %v102
    %v548 = vunpack.c.h.b16 %v102
    %v549 = vunpack.c.l.b16 %v103
    %v550 = vunpack.c.h.b16 %v103
    %v551 = vunpack.c.l.b16 %v104
    %v552 = vunpack.c.h.b16 %v104
    %v553 = vunpack.c.l.b16 %v105
    %v554 = vunpack.c.h.b16 %v105
    %v555 = vunpack.c.l.b16 %v106
    %v556 = vunpack.c.h.b16 %v106
    %v557 = vunpack.c.l.b16 %v107
    %v558 = vunpack.c.h.b16 %v107
    %v559 = vunpack.c.l.b16 %v108
    %v560 = vunpack.c.h.b16 %v108
    %v561 = vunpack.c.l.b16 %v109
    %v562 = vunpack.c.h.b16 %v109
    %v563 = vunpack.c.l.b16 %v110
    %v564 = vunpack.c.h.b16 %v110
    %v565 = vunpack.c.l.b16 %v111
    %v566 = vunpack.c.h.b16 %v111
    %v567 = vunpack.c.l.b16 %v112
    %v568 = vunpack.c.h.b16 %v112
    %v569 = vunpack.c.l.b16 %v113
    %v570 = vunpack.c.h.b16 %v113
    %v571 = vunpack.c.l.b16 %v114
    %v572 = vunpack.c.h.b16 %v114
    %v573 = vunpack.c.l.b16 %v115
    %v574 = vunpack.c.h.b16 %v115
    %v575 = vunpack.c.l.b16 %v116
    %v576 = vunpack.c.h.b16 %v116
    %v577 = vunpack.c.l.b16 %v117
    %v578 = vunpack.c.h.b16 %v117
    %v579 = vunpack.c.l.b16 %v118
    %v580 = vunpack.c.h.b16 %v118
    %v581 = vunpack.c.l.b16 %v119
    %v582 = vunpack.c.h.b16 %v119
    %v583 = vunpack.c.l.b16 %v120
    %v584 = vunpack.c.h.b16 %v120
    %v585 = vunpack.c.l.b16 %v121
    %v586 = vunpack.c.h.b16 %v121
    %v587 = vunpack.c.l.b16 %v122
    %v588 = vunpack.c.h.b16 %v122
    %v589 = vunpack.c.l.b16 %v123
    %v590 = vunpack.c.h.b16 %v123
    %v591 = vunpack.c.l.b16 %v124
    %v592 = vunpack.c.h.b16 %v124
    %v593 = vunpack.c.l.b16 %v125
    %v594 = vunpack.c.h.b16 %v125
    %v595 = vunpack.c.l.b16 %v126
    %v596 = vunpack.c.h.b16 %v126
    %v597 = vunpack.c.l.b16 %v127
    %v598 = vunpack.c.h.b16 %v127
    %v599 = vunpack.c.l.b16 %v128
    %v600 = vunpack.c.h.b16 %v128
    %v601 = vunpack.c.l.b16 %v129
    %v602 = vunpack.c.h.b16 %v129
    %v603 = vunpack.c.l.b16 %v130
    %v604 = vunpack.c.h.b16 %v130
    %v605 = vunpack.c.l.b16 %v131
    %v606 = vunpack.c.h.b16 %v131
    %v607 = vunpack.c.l.b16 %v132
    %v608 = vunpack.c.h.b16 %v132
    %v609 = vunpack.c.l.b16 %v133
    %v610 = vunpack.c.h.b16 %v133
    %v611 = vunpack.c.l.b16 %v134
    %v612 = vunpack.c.h.b16 %v134
    %v613 = vunpack.c.l.b16 %v135
    %v614 = vunpack.c.h.b16 %v135
    %v615 = vunpack.c.l.b16 %v136
    %v616 = vunpack.c.h.b16 %v136
    %v617 = vunpack.c.l.b16 %v137
    %v618 = vunpack.c.h.b16 %v137
    %v619 = vunpack.c.l.b16 %v138
    %v620 = vunpack.c.h.b16 %v138
    %v621 = vunpack.c.l.b16 %v139
    %v622 = vunpack.c.h.b16 %v139
    %v623 = vunpack.c.l.b16 %v140
    %v624 = vunpack.c.h.b16 %v140
    %v625 = vunpack.c.l.b16 %v141
    %v626 = vunpack.c.h.b16 %v141
    %v627 = vunpack.c.l.b16 %v142
    %v628 = vunpack.c.h.b16 %v142
    %v629 = vunpack.c.l.b16 %v143
    %v630 = vunpack.c.h.b16 %v143
    %v631 = vunpack.c.l.b16 %v144
    %v632 = vunpack.c.h.b16 %v144
    %v633 = vunpack.c.l.b16 %v145
    %v634 = vunpack.c.h.b16 %v145
    %v635 = vunpack.c.l.b16 %v146
    %v636 = vunpack.c.h.b16 %v146
    %v637 = vunpack.c.l.b16 %v147
    %v638 = vunpack.c.h.b16 %v147
    %v639 = vunpack.c.l.b16 %v148
    %v640 = vunpack.c.h.b16 %v148
    %v641 = vunpack.c.l.b16 %v149
    %v642 = vunpack.c.h.b16 %v149
    %v643 = vunpack.c.l.b16 %v150
    %v644 = vunpack.c.h.b16 %v150
    %v645 = vunpack.c.l.b16 %v151
    %v646 = vunpack.c.h.b16 %v151
    %v647 = vunpack.c.l.b16 %v152
    %v648 = vunpack.c.h.b16 %v152
    %v649 = vunpack.c.l.b16 %v153
    %v650 = vunpack.c.h.b16 %v153
    %v651 = vunpack.c.l.b16 %v154
    %v652 = vunpack.c.h.b16 %v154
    %v653 = vunpack.c.l.b16 %v155
    %v654 = vunpack.c.h.b16 %v155
    %v655 = vunpack.c.l.b16 %v156
    %v656 = vunpack.c.h.b16 %v156
    %v657 = vunpack.c.l.b16 %v157
    %v658 = vunpack.c.h.b16 %v157
    %v659 = vunpack.c.l.b16 %v158
    %v660 = vunpack.c.h.b16 %v158
    %v661 = vunpack.c.l.b16 %v159
    %v662 = vunpack.c.h.b16 %v159
    %v663 = vunpack.c.l.b16 %v160
    %v664 = vunpack.c.h.b16 %v160
    %v665 = vunpack.c.l.b16 %v161
    %v666 = vunpack.c.h.b16 %v161
    %v667 = vunpack.c.l.b16 %v162
    %v668 = vunpack.c.h.b16 %v162
    %v669 = vunpack.c.l.b16 %v163
    %v670 = vunpack.c.h.b16 %v163
    %v671 = vunpack.c.l.b16 %v164
    %v672 = vunpack.c.h.b16 %v164
    %v673 = vunpack.c.l.b16 %v165
    %v674 = vunpack.c.h.b16 %v165
    %v675 = vunpack.c.l.b16 %v166
    %v676 = vunpack.c.h.b16 %v166
    %v677 = vunpack.c.l.b16 %v167
    %v678 = vunpack.c.h.b16 %v167
    %v679 = vunpack.c.l.b16 %v168
    %v680 = vunpack.c.h.b16 %v168
    %v681 = vpack.c.b16 %v429, %v425
    %v682 = vpack.c.b16 %v430, %v426
    %v683 = vpack.c.b16 %v431, %v427
    %v684 = vpack.c.b16 %v432, %v428
    %v685 = vpack.c.b16 %v437, %v433
    %v686 = vpack.c.b16 %v438, %v434
    %v687 = vpack.c.b16 %v439, %v435
    %v688 = vpack.c.b16 %v440, %v436
    %v689 = vpack.c.b16 %v445, %v441
    %v690 = vpack.c.b16 %v446, %v442
    %v691 = vpack.c.b16 %v447, %v443
    %v692 = vpack.c.b16 %v448, %v444
    %v693 = vpack.c.b16 %v453, %v449
    %v694 = vpack.c.b16 %v454, %v450
    %v695 = vpack.c.b16 %v455, %v451
    %v696 = vpack.c.b16 %v456, %v452
    %v697 = vpack.c.b16 %v461, %v457
    %v698 = vpack.c.b16 %v462, %v458
    %v699 = vpack.c.b16 %v463, %v459
    %v700 = vpack.c.b16 %v464, %v460
    %v701 = vpack.c.b16 %v469, %v465
    %v702 = vpack.c.b16 %v470, %v466
    %v703 = vpack.c.b16 %v471, %v467
    %v704 = vpack.c.b16 %v472, %v468
    %v705 = vpack.c.b16 %v477, %v473
    %v706 = vpack.c.b16 %v478, %v474
    %v707 = vpack.c.b16 %v479, %v475
    %v708 = vpack.c.b16 %v480, %v476
    %v709 = vpack.c.b16 %v485, %v481
    %v710 = vpack.c.b16 %v486, %v482
    %v711 = vpack.c.b16 %v487, %v483
    %v712 = vpack.c.b16 %v488, %v484
    %v713 = vpack.c.b16 %v493, %v489
    %v714 = vpack.c.b16 %v494, %v490
    %v715 = vpack.c.b16 %v495, %v491
    %v716 = vpack.c.b16 %v496, %v492
    %v717 = vpack.c.b16 %v501, %v497
    %v718 = vpack.c.b16 %v502, %v498
    %v719 = vpack.c.b16 %v503, %v499
    %v720 = vpack.c.b16 %v504, %v500
    %v721 = vpack.c.b16 %v509, %v505
    %v722 = vpack.c.b16 %v510, %v506
    %v723 = vpack.c.b16 %v511, %v507
    %v724 = vpack.c.b16 %v512, %v508
    %v725 = vpack.c.b16 %v517, %v513
    %v726 = vpack.c.b16 %v518, %v514
    %v727 = vpack.c.b16 %v519, %v515
    %v728 = vpack.c.b16 %v520, %v516
    %v729 = vpack.c.b16 %v525, %v521
    %v730 = vpack.c.b16 %v526, %v522
    %v731 = vpack.c.b16 %v527, %v523
    %v732 = vpack.c.b16 %v528, %v524
    %v733 = vpack.c.b16 %v533, %v529
    %v734 = vpack.c.b16 %v534, %v530
    %v735 = vpack.c.b16 %v535, %v531
    %v736 = vpack.c.b16 %v536, %v532
    %v737 = vpack.c.b16 %v541, %v537
    %v738 = vpack.c.b16 %v542, %v538
    %v739 = vpack.c.b16 %v543, %v539
    %v740 = vpack.c.b16 %v544, %v540
    %v741 = vpack.c.b16 %v549, %v545
    %v742 = vpack.c.b16 %v550, %v546
    %v743 = vpack.c.b16 %v551, %v547
    %v744 = vpack.c.b16 %v552, %v548
    %v745 = vpack.c.b16 %v557, %v553
    %v746 = vpack.c.b16 %v558, %v554
    %v747 = vpack.c.b16 %v559, %v555
    %v748 = vpack.c.b16 %v560, %v556
    %v749 = vpack.c.b16 %v565, %v561
    %v750 = vpack.c.b16 %v566, %v562
    %v751 = vpack.c.b16 %v567, %v563
    %v752 = vpack.c.b16 %v568, %v564
    %v753 = vpack.c.b16 %v573, %v569
    %v754 = vpack.c.b16 %v574, %v570
    %v755 = vpack.c.b16 %v575, %v571
    %v756 = vpack.c.b16 %v576, %v572
    %v757 = vpack.c.b16 %v581, %v577
    %v758 = vpack.c.b16 %v582, %v578
    %v759 = vpack.c.b16 %v583, %v579
    %v760 = vpack.c.b16 %v584, %v580
    %v761 = vpack.c.b16 %v589, %v585
    %v762 = vpack.c.b16 %v590, %v586
    %v763 = vpack.c.b16 %v591, %v587
    %v764 = vpack.c.b16 %v592, %v588
    %v765 = vpack.c.b16 %v597, %v593
    %v766 = vpack.c.b16 %v598, %v594
    %v767 = vpack.c.b16 %v599, %v595
    %v768 = vpack.c.b16 %v600, %v596
    %v769 = vpack.c.b16 %v605, %v601
    %v770 = vpack.c.b16 %v606, %v602
    %v771 = vpack.c.b16 %v607, %v603
    %v772 = vpack.c.b16 %v608, %v604
    %v773 = vpack.c.b16 %v613, %v609
    %v774 = vpack.c.b16 %v614, %v610
    %v775 = vpack.c.b16 %v615, %v611
    %v776 = vpack.c.b16 %v616, %v612
    %v777 = vpack.c.b16 %v621, %v617
    %v778 = vpack.c.b16 %v622, %v618
    %v779 = vpack.c.b16 %v623, %v619
    %v780 = vpack.c.b16 %v624, %v620
    %v781 = vpack.c.b16 %v629, %v625
    %v782 = vpack.c.b16 %v630, %v626
    %v783 = vpack.c.b16 %v631, %v627
    %v784 = vpack.c.b16 %v632, %v628
    %v785 = vpack.c.b16 %v637, %v633
    %v786 = vpack.c.b16 %v638, %v634
    %v787 = vpack.c.b16 %v639, %v635
    %v788 = vpack.c.b16 %v640, %v636
    %v789 = vpack.c.b16 %v645, %v641
    %v790 = vpack.c.b16 %v646, %v642
    %v791 = vpack.c.b16 %v647, %v643
    %v792 = vpack.c.b16 %v648, %v644
    %v793 = vpack.c.b16 %v653, %v649
    %v794 = vpack.c.b16 %v654, %v650
    %v795 = vpack.c.b16 %v655, %v651
    %v796 = vpack.c.b16 %v656, %v652
    %v797 = vpack.c.b16 %v661, %v657
    %v798 = vpack.c.b16 %v662, %v658
    %v799 = vpack.c.b16 %v663, %v659
    %v800 = vpack.c.b16 %v664, %v660
    %v801 = vpack.c.b16 %v669, %v665
    %v802 = vpack.c.b16 %v670, %v666
    %v803 = vpack.c.b16 %v671, %v667
    %v804 = vpack.c.b16 %v672, %v668
    %v805 = vpack.c.b16 %v677, %v673
    %v806 = vpack.c.b16 %v678, %v674
    %v807 = vpack.c.b16 %v679, %v675
    %v808 = vpack.c.b16 %v680, %v676
    %v1065 = vunpack.c.l.b16 %v169
    %v1066 = vunpack.c.h.b16 %v169
    %v1067 = vunpack.c.l.b16 %v170
    %v1068 = vunpack.c.l.b16 %v171
    %v1069 = vunpack.c.h.b16 %v171
    %v1070 = vunpack.c.l.b16 %v172
    %v1071 = vunpack.c.l.b16 %v173
    %v1072 = vunpack.c.h.b16 %v173
    %v1073 = vunpack.c.l.b16 %v174
    %v1074 = vunpack.c.l.b16 %v175
    %v1075 = vunpack.c.h.b16 %v175
    %v1076 = vunpack.c.l.b16 %v176
    %v1077 = vunpack.c.l.b16 %v177
    %v1078 = vunpack.c.h.b16 %v177
    %v1079 = vunpack.c.l.b16 %v178
    %v1080 = vunpack.c.l.b16 %v179
    %v1081 = vunpack.c.h.b16 %v179
    %v1082 = vunpack.c.l.b16 %v180
    %v1083 = vunpack.c.l.b16 %v181
    %v1084 = vunpack.c.h.b16 %v181
    %v1085 = vunpack.c.l.b16 %v182
    %v1086 = vunpack.c.l.b16 %v183
    %v1087 = vunpack.c.h.b16 %v183
    %v1088 = vunpack.c.l.b16 %v184
    %v1089 = vunpack.c.l.b16 %v185
    %v1090 = vunpack.c.h.b16 %v185
    %v1091 = vunpack.c.l.b16 %v186
    %v1092 = vunpack.c.l.b16 %v187
    %v1093 = vunpack.c.h.b16 %v187
    %v1094 = vunpack.c.l.b16 %v188
    %v1095 = vunpack.c.l.b16 %v189
    %v1096 = vunpack.c.h.b16 %v189
    %v1097 = vunpack.c.l.b16 %v190
    %v1098 = vunpack.c.l.b16 %v191
    %v1099 = vunpack.c.h.b16 %v191
    %v1100 = vunpack.c.l.b16 %v192
    %v1101 = vunpack.c.l.b16 %v193
    %v1102 = vunpack.c.h.b16 %v193
    %v1103 = vunpack.c.l.b16 %v194
    %v1104 = vunpack.c.l.b16 %v195
    %v1105 = vunpack.c.h.b16 %v195
    %v1106 = vunpack.c.l.b16 %v196
    %v1107 = vunpack.c.l.b16 %v197
    %v1108 = vunpack.c.h.b16 %v197
    %v1109 = vunpack.c.l.b16 %v198
    %v1110 = vunpack.c.l.b16 %v199
    %v1111 = vunpack.c.h.b16 %v199
    %v1112 = vunpack.c.l.b16 %v200
    %v1113 = vunpack.c.l.b16 %v201
    %v1114 = vunpack.c.h.b16 %v201
    %v1115 = vunpack.c.l.b16 %v202
    %v1116 = vunpack.c.l.b16 %v203
    %v1117 = vunpack.c.h.b16 %v203
    %v1118 = vunpack.c.l.b16 %v204
    %v1119 = vunpack.c.l.b16 %v205
    %v1120 = vunpack.c.h.b16 %v205
    %v1121 = vunpack.c.l.b16 %v206
    %v1122 = vunpack.c.l.b16 %v207
    %v1123 = vunpack.c.h.b16 %v207
    %v1124 = vunpack.c.l.b16 %v208
    %v1125 = vunpack.c.l.b16 %v209
    %v1126 = vunpack.c.h.b16 %v209
    %v1127 = vunpack.c.l.b16 %v210
    %v1128 = vunpack.c.l.b16 %v211
    %v1129 = vunpack.c.h.b16 %v211
    %v1130 = vunpack.c.l.b16 %v212
    %v1131 = vunpack.c.l.b16 %v213
    %v1132 = vunpack.c.h.b16 %v213
    %v1133 = vunpack.c.l.b16 %v214
    %v1134 = vunpack.c.l.b16 %v215
    %v1135 = vunpack.c.h.b16 %v215
    %v1136 = vunpack.c.l.b16 %v216
    %v1137 = vunpack.c.l.b16 %v217
    %v1138 = vunpack.c.h.b16 %v217
    %v1139 = vunpack.c.l.b16 %v218
    %v1140 = vunpack.c.l.b16 %v219
    %v1141 = vunpack.c.h.b16 %v219
    %v1142 = vunpack.c.l.b16 %v220
    %v1143 = vunpack.c.l.b16 %v221
    %v1144 = vunpack.c.h.b16 %v221
    %v1145 = vunpack.c.l.b16 %v222
    %v1146 = vunpack.c.l.b16 %v223
    %v1147 = vunpack.c.h.b16 %v223
    %v1148 = vunpack.c.l.b16 %v224
    %v1149 = vunpack.c.l.b16 %v225
    %v1150 = vunpack.c.h.b16 %v225
    %v1151 = vunpack.c.l.b16 %v226
    %v1152 = vunpack.c.l.b16 %v227
    %v1153 = vunpack.c.h.b16 %v227
    %v1154 = vunpack.c.l.b16 %v228
    %v1155 = vunpack.c.l.b16 %v229
    %v1156 = vunpack.c.h.b16 %v229
    %v1157 = vunpack.c.l.b16 %v230
    %v1158 = vunpack.c.l.b16 %v231
    %v1159 = vunpack.c.h.b16 %v231
    %v1160 = vunpack.c.l.b16 %v232
    %v1161 = vunpack.c.l.b16 %v233
    %v1162 = vunpack.c.h.b16 %v233
    %v1163 = vunpack.c.l.b16 %v234
    %v1164 = vunpack.c.l.b16 %v235
    %v1165 = vunpack.c.h.b16 %v235
    %v1166 = vunpack.c.l.b16 %v236
    %v1167 = vunpack.c.l.b16 %v237
    %v1168 = vunpack.c.h.b16 %v237
    %v1169 = vunpack.c.l.b16 %v238
    %v1170 = vunpack.c.l.b16 %v239
    %v1171 = vunpack.c.h.b16 %v239
    %v1172 = vunpack.c.l.b16 %v240
    %v1173 = vunpack.c.l.b16 %v241
    %v1174 = vunpack.c.h.b16 %v241
    %v1175 = vunpack.c.l.b16 %v242
    %v1176 = vunpack.c.l.b16 %v243
    %v1177 = vunpack.c.h.b16 %v243
    %v1178 = vunpack.c.l.b16 %v244
    %v1179 = vunpack.c.l.b16 %v245
    %v1180 = vunpack.c.h.b16 %v245
    %v1181 = vunpack.c.l.b16 %v246
    %v1182 = vunpack.c.l.b16 %v247
    %v1183 = vunpack.c.h.b16 %v247
    %v1184 = vunpack.c.l.b16 %v248
    %v1185 = vunpack.c.l.b16 %v249
    %v1186 = vunpack.c.h.b16 %v249
    %v1187 = vunpack.c.l.b16 %v250
    %v1188 = vunpack.c.l.b16 %v251
    %v1189 = vunpack.c.h.b16 %v251
    %v1190 = vunpack.c.l.b16 %v252
    %v1191 = vunpack.c.l.b16 %v253
    %v1192 = vunpack.c.h.b16 %v253
    %v1193 = vunpack.c.l.b16 %v254
    %v1194 = vunpack.c.l.b16 %v255
    %v1195 = vunpack.c.h.b16 %v255
    %v1196 = vunpack.c.l.b16 %v256
    %v1197 = vunpack.c.l.b16 %v257
    %v1198 = vunpack.c.h.b16 %v257
    %v1199 = vunpack.c.l.b16 %v258
    %v1200 = vunpack.c.l.b16 %v259
    %v1201 = vunpack.c.h.b16 %v259
    %v1202 = vunpack.c.l.b16 %v260
    %v1203 = vunpack.c.l.b16 %v261
    %v1204 = vunpack.c.h.b16 %v261
    %v1205 = vunpack.c.l.b16 %v262
    %v1206 = vunpack.c.l.b16 %v263
    %v1207 = vunpack.c.h.b16 %v263
    %v1208 = vunpack.c.l.b16 %v264
    %v1209 = vunpack.c.l.b16 %v265
    %v1210 = vunpack.c.h.b16 %v265
    %v1211 = vunpack.c.l.b16 %v266
    %v1212 = vunpack.c.l.b16 %v267
    %v1213 = vunpack.c.h.b16 %v267
    %v1214 = vunpack.c.l.b16 %v268
    %v1215 = vunpack.c.l.b16 %v269
    %v1216 = vunpack.c.h.b16 %v269
    %v1217 = vunpack.c.l.b16 %v270
    %v1218 = vunpack.c.l.b16 %v271
    %v1219 = vunpack.c.h.b16 %v271
    %v1220 = vunpack.c.l.b16 %v272
    %v1221 = vunpack.c.l.b16 %v273
    %v1222 = vunpack.c.h.b16 %v273
    %v1223 = vunpack.c.l.b16 %v274
    %v1224 = vunpack.c.l.b16 %v275
    %v1225 = vunpack.c.h.b16 %v275
    %v1226 = vunpack.c.l.b16 %v276
    %v1227 = vunpack.c.l.b16 %v277
    %v1228 = vunpack.c.h.b16 %v277
    %v1229 = vunpack.c.l.b16 %v278
    %v1230 = vunpack.c.l.b16 %v279
    %v1231 = vunpack.c.h.b16 %v279
    %v1232 = vunpack.c.l.b16 %v280
    %v1233 = vunpack.c.l.b16 %v281
    %v1234 = vunpack.c.h.b16 %v281
    %v1235 = vunpack.c.l.b16 %v282
    %v1236 = vunpack.c.l.b16 %v283
    %v1237 = vunpack.c.h.b16 %v283
    %v1238 = vunpack.c.l.b16 %v284
    %v1239 = vunpack.c.l.b16 %v285
    %v1240 = vunpack.c.h.b16 %v285
    %v1241 = vunpack.c.l.b16 %v286
    %v1242 = vunpack.c.l.b16 %v287
    %v1243 = vunpack.c.h.b16 %v287
    %v1244 = vunpack.c.l.b16 %v288
    %v1245 = vunpack.c.l.b16 %v289
    %v1246 = vunpack.c.h.b16 %v289
    %v1247 = vunpack.c.l.b16 %v290
    %v1248 = vunpack.c.l.b16 %v291
    %v1249 = vunpack.c.h.b16 %v291
    %v1250 = vunpack.c.l.b16 %v292
    %v1251 = vunpack.c.l.b16 %v293
    %v1252 = vunpack.c.h.b16 %v293
    %v1253 = vunpack.c.l.b16 %v294
    %v1254 = vunpack.c.l.b16 %v295
    %v1255 = vunpack.c.h.b16 %v295
    %v1256 = vunpack.c.l.b16 %v296
    %v1257 = vpack.c.b16 %v1068, %v1065
    %v1258 = vpack.c.b16 %v1069, %v1066
    %v1259 = vpack.c.b16 %v1070, %v1067
    %v1260 = vpack.c.b16 %v1074, %v1071
    %v1261 = vpack.c.b16 %v1075, %v1072
    %v1262 = vpack.c.b16 %v1076, %v1073
    %v1263 = vpack.c.b16 %v1080, %v1077
    %v1264 = vpack.c.b16 %v1081, %v1078
    %v1265 = vpack.c.b16 %v1082, %v1079
    %v1266 = vpack.c.b16 %v1086, %v1083
    %v1267 = vpack.c.b16 %v1087, %v1084
    %v1268 = vpack.c.b16 %v1088, %v1085
    %v1269 = vpack.c.b16 %v1092, %v1089
    %v1270 = vpack.c.b16 %v1093, %v1090
    %v1271 = vpack.c.b16 %v1094, %v1091
    %v1272 = vpack.c.b16 %v1098, %v1095
    %v1273 = vpack.c.b16 %v1099, %v1096
    %v1274 = vpack.c.b16 %v1100, %v1097
    %v1275 = vpack.c.b16 %v1104, %v1101
    %v1276 = vpack.c.b16 %v1105, %v1102
    %v1277 = vpack.c.b16 %v1106, %v1103
    %v1278 = vpack.c.b16 %v1110, %v1107
    %v1279 = vpack.c.b16 %v1111, %v1108
    %v1280 = vpack.c.b16 %v1112, %v1109
    %v1281 = vpack.c.b16 %v1116, %v1113
    %v1282 = vpack.c.b16 %v1117, %v1114
    %v1283 = vpack.c.b16 %v1118, %v1115
    %v1284 = vpack.c.b16 %v1122, %v1119
    %v1285 = vpack.c.b16 %v1123, %v1120
    %v1286 = vpack.c.b16 %v1124, %v1121
    %v1287 = vpack.c.b16 %v1128, %v1125
    %v1288 = vpack.c.b16 %v1129, %v1126
    %v1289 = vpack.c.b16 %v1130, %v1127
    %v1290 = vpack.c.b16 %v1134, %v1131
    %v1291 = vpack.c.b16 %v1135, %v1132
    %v1292 = vpack.c.b16 %v1136, %v1133
    %v1293 = vpack.c.b16 %v1140, %v1137
    %v1294 = vpack.c.b16 %v1141, %v1138
    %v1295 = vpack.c.b16 %v1142, %v1139
    %v1296 = vpack.c.b16 %v1146, %v1143
    %v1297 = vpack.c.b16 %v1147, %v1144
    %v1298 = vpack.c.b16 %v1148, %v1145
    %v1299 = vpack.c.b16 %v1152, %v1149
    %v1300 = vpack.c.b16 %v1153, %v1150
    %v1301 = vpack.c.b16 %v1154, %v1151
    %v1302 = vpack.c.b16 %v1158, %v1155
    %v1303 = vpack.c.b16 %v1159, %v1156
    %v1304 = vpack.c.b16 %v1160, %v1157
    %v1305 = vpack.c.b16 %v1164, %v1161
    %v1306 = vpack.c.b16 %v1165, %v1162
    %v1307 = vpack.c.b16 %v1166, %v1163
    %v1308 = vpack.c.b16 %v1170, %v1167
    %v1309 = vpack.c.b16 %v1171, %v1168
    %v1310 = vpack.c.b16 %v1172, %v1169
    %v1311 = vpack.c.b16 %v1176, %v1173
    %v1312 = vpack.c.b16 %v1177, %v1174
    %v1313 = vpack.c.b16 %v1178, %v1175
    %v1314 = vpack.c.b16 %v1182, %v1179
    %v1315 = vpack.c.b16 %v1183, %v1180
    %v1316 = vpack.c.b16 %v1184, %v1181
    %v1317 = vpack.c.b16 %v1188, %v1185
    %v1318 = vpack.c.b16 %v1189, %v1186
    %v1319 = vpack.c.b16 %v1190, %v1187
    %v1320 = vpack.c.b16 %v1194, %v1191
    %v1321 = vpack.c.b16 %v1195, %v1192
    %v1322 = vpack.c.b16 %v1196, %v1193
    %v1323 = vpack.c.b16 %v1200, %v1197
    %v1324 = vpack.c.b16 %v1201, %v1198
    %v1325 = vpack.c.b16 %v1202, %v1199
    %v1326 = vpack.c.b16 %v1206, %v1203
    %v1327 = vpack.c.b16 %v1207, %v1204
    %v1328 = vpack.c.b16 %v1208, %v1205
    %v1329 = vpack.c.b16 %v1212, %v1209
    %v1330 = vpack.c.b16 %v1213, %v1210
    %v1331 = vpack.c.b16 %v1214, %v1211
    %v1332 = vpack.c.b16 %v1218, %v1215
    %v1333 = vpack.c.b16 %v1219, %v1216
    %v1334 = vpack.c.b16 %v1220, %v1217
    %v1335 = vpack.c.b16 %v1224, %v1221
    %v1336 = vpack.c.b16 %v1225, %v1222
    %v1337 = vpack.c.b16 %v1226, %v1223
    %v1338 = vpack.c.b16 %v1230, %v1227
    %v1339 = vpack.c.b16 %v1231, %v1228
    %v1340 = vpack.c.b16 %v1232, %v1229
    %v1341 = vpack.c.b16 %v1236, %v1233
    %v1342 = vpack.c.b16 %v1237, %v1234
    %v1343 = vpack.c.b16 %v1238, %v1235
    %v1344 = vpack.c.b16 %v1242, %v1239
    %v1345 = vpack.c.b16 %v1243, %v1240
    %v1346 = vpack.c.b16 %v1244, %v1241
    %v1347 = vpack.c.b16 %v1248, %v1245
    %v1348 = vpack.c.b16 %v1249, %v1246
    %v1349 = vpack.c.b16 %v1250, %v1247
    %v1350 = vpack.c.b16 %v1254, %v1251
    %v1351 = vpack.c.b16 %v1255, %v1252
    %v1352 = vpack.c.b16 %v1256, %v1253
    %1449 = vmatprep.subr.bf16.mxu0 %v1258
    %1450 = vmatpush1.bf16.msra.mxu0 %v1257
    %1451 = vmatprep.subr.bf16.mxu0 %v1261
    %1452 = vmatpush1.bf16.msra.mxu0 %v1260
    %1453 = vmatprep.subr.bf16.mxu0 %v1264
    %1454 = vmatpush1.bf16.msra.mxu0 %v1263
    %1455 = vmatprep.subr.bf16.mxu0 %v1267
    %1456 = vmatpush1.bf16.msra.mxu0 %v1266
    %1457 = vmatprep.subr.bf16.mxu0 %v1270
    %1458 = vmatpush1.bf16.msra.mxu0 %v1269
    %1459 = vmatprep.subr.bf16.mxu0 %v1273
    %1460 = vmatpush1.bf16.msra.mxu0 %v1272
    %1461 = vmatprep.subr.bf16.mxu0 %v1276
    %1462 = vmatpush1.bf16.msra.mxu0 %v1275
    %1463 = vmatprep.subr.bf16.mxu0 %v1279
    %1464 = vmatpush1.bf16.msra.mxu0 %v1278
    %1465 = vmatprep.subr.bf16.mxu0 %v1282
    %1466 = vmatpush1.bf16.msra.mxu0 %v1281
    %1467 = vmatprep.subr.bf16.mxu0 %v1285
    %1468 = vmatpush1.bf16.msra.mxu0 %v1284
    %1469 = vmatprep.subr.bf16.mxu0 %v1288
    %1470 = vmatpush1.bf16.msra.mxu0 %v1287
    %1471 = vmatprep.subr.bf16.mxu0 %v1291
    %1472 = vmatpush1.bf16.msra.mxu0 %v1290
    %1473 = vmatprep.subr.bf16.mxu0 %v1294
    %1474 = vmatpush1.bf16.msra.mxu0 %v1293
    %1475 = vmatprep.subr.bf16.mxu0 %v1297
    %1476 = vmatpush1.bf16.msra.mxu0 %v1296
    %1477 = vmatprep.subr.bf16.mxu0 %v1300
    %1478 = vmatpush1.bf16.msra.mxu0 %v1299
    %1479 = vmatprep.subr.bf16.mxu0 %v1303
    %1480 = vmatpush1.bf16.msra.mxu0 %v1302
    %1481 = vmatprep.mubr.bf16.mxu0 %v682
    %1482 = vmatmul.mubr.bf16.gmra.mrb[0].mxu0 %v681
    %v1483 = vpop.f32.mrb[0].mxu0
    %v1484 = vadd.f32 0.0, %v1483
    %v1485 = vpop.f32.mrb[0].mxu0
    %v1486 = vadd.f32 0.0, %v1485
    %v1487 = vpop.f32.mrb[0].mxu0
    %v1488 = vadd.f32 0.0, %v1487
    %v1489 = vpop.f32.mrb[0].mxu0
    %v1490 = vadd.f32 0.0, %v1489
    %1491 = vmatprep.mubr.bf16.mxu0 %v686
    %1492 = vmatmul.mubr.bf16.gmra.mrb[0].mxu0 %v685
    %v1493 = vpop.f32.mrb[0].mxu0
    %v1494 = vadd.f32 0.0, %v1493
    %v1495 = vpop.f32.mrb[0].mxu0
    %v1496 = vadd.f32 0.0, %v1495
    %v1497 = vpop.f32.mrb[0].mxu0
    %v1498 = vadd.f32 0.0, %v1497
    %v1499 = vpop.f32.mrb[0].mxu0
    %v1500 = vadd.f32 0.0, %v1499
    %1501 = vmatprep.mubr.bf16.mxu0 %v690
    %1502 = vmatmul.mubr.bf16.gmra.mrb[0].mxu0 %v689
    %v1503 = vpop.f32.mrb[0].mxu0
    %v1504 = vadd.f32 0.0, %v1503
    %v1505 = vpop.f32.mrb[0].mxu0
    %v1506 = vadd.f32 0.0, %v1505
    %v1507 = vpop.f32.mrb[0].mxu0
    %v1508 = vadd.f32 0.0, %v1507
    %v1509 = vpop.f32.mrb[0].mxu0
    %v1510 = vadd.f32 0.0, %v1509
    %1511 = vmatprep.mubr.bf16.mxu0 %v694
    %1512 = vmatmul.mubr.bf16.gmra.mrb[0].mxu0 %v693
    %v1513 = vpop.f32.mrb[0].mxu0
    %v1514 = vadd.f32 0.0, %v1513
    %v1515 = vpop.f32.mrb[0].mxu0
    %v1516 = vadd.f32 0.0, %v1515
    %v1517 = vpop.f32.mrb[0].mxu0
    %v1518 = vadd.f32 0.0, %v1517
    %v1519 = vpop.f32.mrb[0].mxu0
    %v1520 = vadd.f32 0.0, %v1519
    %1521 = vmatprep.mubr.bf16.mxu0 %v698
    %1522 = vmatmul.mubr.bf16.gmra.mrb[0].mxu0 %v697
    %v1523 = vpop.f32.mrb[0].mxu0
    %v1524 = vadd.f32 0.0, %v1523
    %v1525 = vpop.f32.mrb[0].mxu0
    %v1526 = vadd.f32 0.0, %v1525
    %v1527 = vpop.f32.mrb[0].mxu0
    %v1528 = vadd.f32 0.0, %v1527
    %v1529 = vpop.f32.mrb[0].mxu0
    %v1530 = vadd.f32 0.0, %v1529
    %1531 = vmatprep.mubr.bf16.mxu0 %v702
    %1532 = vmatmul.mubr.bf16.gmra.mrb[0].mxu0 %v701
    %v1533 = vpop.f32.mrb[0].mxu0
    %v1534 = vadd.f32 0.0, %v1533
    %v1535 = vpop.f32.mrb[0].mxu0
    %v1536 = vadd.f32 0.0, %v1535
    %v1537 = vpop.f32.mrb[0].mxu0
    %v1538 = vadd.f32 0.0, %v1537
    %v1539 = vpop.f32.mrb[0].mxu0
    %v1540 = vadd.f32 0.0, %v1539
    %1541 = vmatprep.mubr.bf16.mxu0 %v706
    %1542 = vmatmul.mubr.bf16.gmra.mrb[0].mxu0 %v705
    %v1543 = vpop.f32.mrb[0].mxu0
    %v1544 = vadd.f32 0.0, %v1543
    %v1545 = vpop.f32.mrb[0].mxu0
    %v1546 = vadd.f32 0.0, %v1545
    %v1547 = vpop.f32.mrb[0].mxu0
    %v1548 = vadd.f32 0.0, %v1547
    %v1549 = vpop.f32.mrb[0].mxu0
    %v1550 = vadd.f32 0.0, %v1549
    %1551 = vmatprep.mubr.bf16.mxu0 %v710
    %1552 = vmatmul.mubr.bf16.gmra.mrb[0].mxu0 %v709
    %v1553 = vpop.f32.mrb[0].mxu0
    %v1554 = vadd.f32 0.0, %v1553
    %v1555 = vpop.f32.mrb[0].mxu0
    %v1556 = vadd.f32 0.0, %v1555
    %v1557 = vpop.f32.mrb[0].mxu0
    %v1558 = vadd.f32 0.0, %v1557
    %v1559 = vpop.f32.mrb[0].mxu0
    %v1560 = vadd.f32 0.0, %v1559
    %1561 = vmatprep.mubr.bf16.mxu0 %v714
    %1562 = vmatmul.mubr.bf16.gmra.mrb[0].mxu0 %v713
    %v1563 = vpop.f32.mrb[0].mxu0
    %v1564 = vadd.f32 0.0, %v1563
    %v1565 = vpop.f32.mrb[0].mxu0
    %v1566 = vadd.f32 0.0, %v1565
    %v1567 = vpop.f32.mrb[0].mxu0
    %v1568 = vadd.f32 0.0, %v1567
    %v1569 = vpop.f32.mrb[0].mxu0
    %v1570 = vadd.f32 0.0, %v1569
    %1571 = vmatprep.mubr.bf16.mxu0 %v718
    %1572 = vmatmul.mubr.bf16.gmra.mrb[0].mxu0 %v717
    %v1573 = vpop.f32.mrb[0].mxu0
    %v1574 = vadd.f32 0.0, %v1573
    %v1575 = vpop.f32.mrb[0].mxu0
    %v1576 = vadd.f32 0.0, %v1575
    %v1577 = vpop.f32.mrb[0].mxu0
    %v1578 = vadd.f32 0.0, %v1577
    %v1579 = vpop.f32.mrb[0].mxu0
    %v1580 = vadd.f32 0.0, %v1579
    %1581 = vmatprep.mubr.bf16.mxu0 %v722
    %1582 = vmatmul.mubr.bf16.gmra.mrb[0].mxu0 %v721
    %v1583 = vpop.f32.mrb[0].mxu0
    %v1584 = vadd.f32 0.0, %v1583
    %v1585 = vpop.f32.mrb[0].mxu0
    %v1586 = vadd.f32 0.0, %v1585
    %v1587 = vpop.f32.mrb[0].mxu0
    %v1588 = vadd.f32 0.0, %v1587
    %v1589 = vpop.f32.mrb[0].mxu0
    %v1590 = vadd.f32 0.0, %v1589
    %1591 = vmatprep.mubr.bf16.mxu0 %v726
    %1592 = vmatmul.mubr.bf16.gmra.mrb[0].mxu0 %v725
    %v1593 = vpop.f32.mrb[0].mxu0
    %v1594 = vadd.f32 0.0, %v1593
    %v1595 = vpop.f32.mrb[0].mxu0
    %v1596 = vadd.f32 0.0, %v1595
    %v1597 = vpop.f32.mrb[0].mxu0
    %v1598 = vadd.f32 0.0, %v1597
    %v1599 = vpop.f32.mrb[0].mxu0
    %v1600 = vadd.f32 0.0, %v1599
    %1601 = vmatprep.mubr.bf16.mxu0 %v730
    %1602 = vmatmul.mubr.bf16.gmra.mrb[0].mxu0 %v729
    %v1603 = vpop.f32.mrb[0].mxu0
    %v1604 = vadd.f32 0.0, %v1603
    %v1605 = vpop.f32.mrb[0].mxu0
    %v1606 = vadd.f32 0.0, %v1605
    %v1607 = vpop.f32.mrb[0].mxu0
    %v1608 = vadd.f32 0.0, %v1607
    %v1609 = vpop.f32.mrb[0].mxu0
    %v1610 = vadd.f32 0.0, %v1609
    %1611 = vmatprep.mubr.bf16.mxu0 %v734
    %1612 = vmatmul.mubr.bf16.gmra.mrb[0].mxu0 %v733
    %v1613 = vpop.f32.mrb[0].mxu0
    %v1614 = vadd.f32 0.0, %v1613
    %v1615 = vpop.f32.mrb[0].mxu0
    %v1616 = vadd.f32 0.0, %v1615
    %v1617 = vpop.f32.mrb[0].mxu0
    %v1618 = vadd.f32 0.0, %v1617
    %v1619 = vpop.f32.mrb[0].mxu0
    %v1620 = vadd.f32 0.0, %v1619
    %1621 = vmatprep.mubr.bf16.mxu0 %v738
    %1622 = vmatmul.mubr.bf16.gmra.mrb[0].mxu0 %v737
    %v1623 = vpop.f32.mrb[0].mxu0
    %v1624 = vadd.f32 0.0, %v1623
    %v1625 = vpop.f32.mrb[0].mxu0
    %v1626 = vadd.f32 0.0, %v1625
    %v1627 = vpop.f32.mrb[0].mxu0
    %v1628 = vadd.f32 0.0, %v1627
    %v1629 = vpop.f32.mrb[0].mxu0
    %v1630 = vadd.f32 0.0, %v1629
    %1631 = vmatprep.mubr.bf16.mxu0 %v742
    %1632 = vmatmul.mubr.bf16.gmra.mrb[0].mxu0 %v741
    %v1633 = vpop.f32.mrb[0].mxu0
    %v1634 = vadd.f32 0.0, %v1633
    %v1635 = vpop.f32.mrb[0].mxu0
    %v1636 = vadd.f32 0.0, %v1635
    %v1637 = vpop.f32.mrb[0].mxu0
    %v1638 = vadd.f32 0.0, %v1637
    %v1639 = vpop.f32.mrb[0].mxu0
    %v1640 = vadd.f32 0.0, %v1639
    %1641 = vmatprep.mubr.bf16.mxu0 %v746
    %1642 = vmatmul.mubr.bf16.gmra.mrb[0].mxu0 %v745
    %v1643 = vpop.f32.mrb[0].mxu0
    %v1644 = vadd.f32 0.0, %v1643
    %v1645 = vpop.f32.mrb[0].mxu0
    %v1646 = vadd.f32 0.0, %v1645
    %v1647 = vpop.f32.mrb[0].mxu0
    %v1648 = vadd.f32 0.0, %v1647
    %v1649 = vpop.f32.mrb[0].mxu0
    %v1650 = vadd.f32 0.0, %v1649
    %1651 = vmatprep.mubr.bf16.mxu0 %v750
    %1652 = vmatmul.mubr.bf16.gmra.mrb[0].mxu0 %v749
    %v1653 = vpop.f32.mrb[0].mxu0
    %v1654 = vadd.f32 0.0, %v1653
    %v1655 = vpop.f32.mrb[0].mxu0
    %v1656 = vadd.f32 0.0, %v1655
    %v1657 = vpop.f32.mrb[0].mxu0
    %v1658 = vadd.f32 0.0, %v1657
    %v1659 = vpop.f32.mrb[0].mxu0
    %v1660 = vadd.f32 0.0, %v1659
    %1661 = vmatprep.mubr.bf16.mxu0 %v754
    %1662 = vmatmul.mubr.bf16.gmra.mrb[0].mxu0 %v753
    %v1663 = vpop.f32.mrb[0].mxu0
    %v1664 = vadd.f32 0.0, %v1663
    %v1665 = vpop.f32.mrb[0].mxu0
    %v1666 = vadd.f32 0.0, %v1665
    %v1667 = vpop.f32.mrb[0].mxu0
    %v1668 = vadd.f32 0.0, %v1667
    %v1669 = vpop.f32.mrb[0].mxu0
    %v1670 = vadd.f32 0.0, %v1669
    %1671 = vmatprep.mubr.bf16.mxu0 %v758
    %1672 = vmatmul.mubr.bf16.gmra.mrb[0].mxu0 %v757
    %v1673 = vpop.f32.mrb[0].mxu0
    %v1674 = vadd.f32 0.0, %v1673
    %v1675 = vpop.f32.mrb[0].mxu0
    %v1676 = vadd.f32 0.0, %v1675
    %v1677 = vpop.f32.mrb[0].mxu0
    %v1678 = vadd.f32 0.0, %v1677
    %v1679 = vpop.f32.mrb[0].mxu0
    %v1680 = vadd.f32 0.0, %v1679
    %1681 = vmatprep.mubr.bf16.mxu0 %v762
    %1682 = vmatmul.mubr.bf16.gmra.mrb[0].mxu0 %v761
    %v1683 = vpop.f32.mrb[0].mxu0
    %v1684 = vadd.f32 0.0, %v1683
    %v1685 = vpop.f32.mrb[0].mxu0
    %v1686 = vadd.f32 0.0, %v1685
    %v1687 = vpop.f32.mrb[0].mxu0
    %v1688 = vadd.f32 0.0, %v1687
    %v1689 = vpop.f32.mrb[0].mxu0
    %v1690 = vadd.f32 0.0, %v1689
    %1691 = vmatprep.mubr.bf16.mxu0 %v766
    %1692 = vmatmul.mubr.bf16.gmra.mrb[0].mxu0 %v765
    %v1693 = vpop.f32.mrb[0].mxu0
    %v1694 = vadd.f32 0.0, %v1693
    %v1695 = vpop.f32.mrb[0].mxu0
    %v1696 = vadd.f32 0.0, %v1695
    %v1697 = vpop.f32.mrb[0].mxu0
    %v1698 = vadd.f32 0.0, %v1697
    %v1699 = vpop.f32.mrb[0].mxu0
    %v1700 = vadd.f32 0.0, %v1699
    %1701 = vmatprep.mubr.bf16.mxu0 %v770
    %1702 = vmatmul.mubr.bf16.gmra.mrb[0].mxu0 %v769
    %v1703 = vpop.f32.mrb[0].mxu0
    %v1704 = vadd.f32 0.0, %v1703
    %v1705 = vpop.f32.mrb[0].mxu0
    %v1706 = vadd.f32 0.0, %v1705
    %v1707 = vpop.f32.mrb[0].mxu0
    %v1708 = vadd.f32 0.0, %v1707
    %v1709 = vpop.f32.mrb[0].mxu0
    %v1710 = vadd.f32 0.0, %v1709
    %1711 = vmatprep.mubr.bf16.mxu0 %v774
    %1712 = vmatmul.mubr.bf16.gmra.mrb[0].mxu0 %v773
    %v1713 = vpop.f32.mrb[0].mxu0
    %v1714 = vadd.f32 0.0, %v1713
    %v1715 = vpop.f32.mrb[0].mxu0
    %v1716 = vadd.f32 0.0, %v1715
    %v1717 = vpop.f32.mrb[0].mxu0
    %v1718 = vadd.f32 0.0, %v1717
    %v1719 = vpop.f32.mrb[0].mxu0
    %v1720 = vadd.f32 0.0, %v1719
    %1721 = vmatprep.mubr.bf16.mxu0 %v778
    %1722 = vmatmul.mubr.bf16.gmra.mrb[0].mxu0 %v777
    %v1723 = vpop.f32.mrb[0].mxu0
    %v1724 = vadd.f32 0.0, %v1723
    %v1725 = vpop.f32.mrb[0].mxu0
    %v1726 = vadd.f32 0.0, %v1725
    %v1727 = vpop.f32.mrb[0].mxu0
    %v1728 = vadd.f32 0.0, %v1727
    %v1729 = vpop.f32.mrb[0].mxu0
    %v1730 = vadd.f32 0.0, %v1729
    %1731 = vmatprep.mubr.bf16.mxu0 %v782
    %1732 = vmatmul.mubr.bf16.gmra.mrb[0].mxu0 %v781
    %v1733 = vpop.f32.mrb[0].mxu0
    %v1734 = vadd.f32 0.0, %v1733
    %v1735 = vpop.f32.mrb[0].mxu0
    %v1736 = vadd.f32 0.0, %v1735
    %v1737 = vpop.f32.mrb[0].mxu0
    %v1738 = vadd.f32 0.0, %v1737
    %v1739 = vpop.f32.mrb[0].mxu0
    %v1740 = vadd.f32 0.0, %v1739
    %1741 = vmatprep.mubr.bf16.mxu0 %v786
    %1742 = vmatmul.mubr.bf16.gmra.mrb[0].mxu0 %v785
    %v1743 = vpop.f32.mrb[0].mxu0
    %v1744 = vadd.f32 0.0, %v1743
    %v1745 = vpop.f32.mrb[0].mxu0
    %v1746 = vadd.f32 0.0, %v1745
    %v1747 = vpop.f32.mrb[0].mxu0
    %v1748 = vadd.f32 0.0, %v1747
    %v1749 = vpop.f32.mrb[0].mxu0
    %v1750 = vadd.f32 0.0, %v1749
    %1751 = vmatprep.mubr.bf16.mxu0 %v790
    %1752 = vmatmul.mubr.bf16.gmra.mrb[0].mxu0 %v789
    %v1753 = vpop.f32.mrb[0].mxu0
    %v1754 = vadd.f32 0.0, %v1753
    %v1755 = vpop.f32.mrb[0].mxu0
    %v1756 = vadd.f32 0.0, %v1755
    %v1757 = vpop.f32.mrb[0].mxu0
    %v1758 = vadd.f32 0.0, %v1757
    %v1759 = vpop.f32.mrb[0].mxu0
    %v1760 = vadd.f32 0.0, %v1759
    %1761 = vmatprep.mubr.bf16.mxu0 %v794
    %1762 = vmatmul.mubr.bf16.gmra.mrb[0].mxu0 %v793
    %v1763 = vpop.f32.mrb[0].mxu0
    %v1764 = vadd.f32 0.0, %v1763
    %v1765 = vpop.f32.mrb[0].mxu0
    %v1766 = vadd.f32 0.0, %v1765
    %v1767 = vpop.f32.mrb[0].mxu0
    %v1768 = vadd.f32 0.0, %v1767
    %v1769 = vpop.f32.mrb[0].mxu0
    %v1770 = vadd.f32 0.0, %v1769
    %1771 = vmatprep.mubr.bf16.mxu0 %v798
    %1772 = vmatmul.mubr.bf16.gmra.mrb[0].mxu0 %v797
    %v1773 = vpop.f32.mrb[0].mxu0
    %v1774 = vadd.f32 0.0, %v1773
    %v1775 = vpop.f32.mrb[0].mxu0
    %v1776 = vadd.f32 0.0, %v1775
    %v1777 = vpop.f32.mrb[0].mxu0
    %v1778 = vadd.f32 0.0, %v1777
    %v1779 = vpop.f32.mrb[0].mxu0
    %v1780 = vadd.f32 0.0, %v1779
    %1781 = vmatprep.mubr.bf16.mxu0 %v802
    %1782 = vmatmul.mubr.bf16.gmra.mrb[0].mxu0 %v801
    %v1783 = vpop.f32.mrb[0].mxu0
    %v1784 = vadd.f32 0.0, %v1783
    %v1785 = vpop.f32.mrb[0].mxu0
    %v1786 = vadd.f32 0.0, %v1785
    %v1787 = vpop.f32.mrb[0].mxu0
    %v1788 = vadd.f32 0.0, %v1787
    %v1789 = vpop.f32.mrb[0].mxu0
    %v1790 = vadd.f32 0.0, %v1789
    %1791 = vmatprep.mubr.bf16.mxu0 %v806
    %1792 = vmatmul.mubr.bf16.gmra.mrb[0].mxu0 %v805
    %v1793 = vpop.f32.mrb[0].mxu0
    %v1794 = vadd.f32 0.0, %v1793
    %v1795 = vpop.f32.mrb[0].mxu0
    %v1796 = vadd.f32 0.0, %v1795
    %v1797 = vpop.f32.mrb[0].mxu0
    %v1798 = vadd.f32 0.0, %v1797
    %v1799 = vpop.f32.mrb[0].mxu0
    %v1800 = vadd.f32 0.0, %v1799
    %1801 = vdwg.mxu0
    %1802 = vmatprep.subr.bf16.mxu0 %v1306
    %1803 = vmatpush1.bf16.msra.mxu0 %v1305
    %1804 = vmatprep.subr.bf16.mxu0 %v1309
    %1805 = vmatpush1.bf16.msra.mxu0 %v1308
    %1806 = vmatprep.subr.bf16.mxu0 %v1312
    %1807 = vmatpush1.bf16.msra.mxu0 %v1311
    %1808 = vmatprep.subr.bf16.mxu0 %v1315
    %1809 = vmatpush1.bf16.msra.mxu0 %v1314
    %1810 = vmatprep.subr.bf16.mxu0 %v1318
    %1811 = vmatpush1.bf16.msra.mxu0 %v1317
    %1812 = vmatprep.subr.bf16.mxu0 %v1321
    %1813 = vmatpush1.bf16.msra.mxu0 %v1320
    %1814 = vmatprep.subr.bf16.mxu0 %v1324
    %1815 = vmatpush1.bf16.msra.mxu0 %v1323
    %1816 = vmatprep.subr.bf16.mxu0 %v1327
    %1817 = vmatpush1.bf16.msra.mxu0 %v1326
    %1818 = vmatprep.subr.bf16.mxu0 %v1330
    %1819 = vmatpush1.bf16.msra.mxu0 %v1329
    %1820 = vmatprep.subr.bf16.mxu0 %v1333
    %1821 = vmatpush1.bf16.msra.mxu0 %v1332
    %1822 = vmatprep.subr.bf16.mxu0 %v1336
    %1823 = vmatpush1.bf16.msra.mxu0 %v1335
    %1824 = vmatprep.subr.bf16.mxu0 %v1339
    %1825 = vmatpush1.bf16.msra.mxu0 %v1338
    %1826 = vmatprep.subr.bf16.mxu0 %v1342
    %1827 = vmatpush1.bf16.msra.mxu0 %v1341
    %1828 = vmatprep.subr.bf16.mxu0 %v1345
    %1829 = vmatpush1.bf16.msra.mxu0 %v1344
    %1830 = vmatprep.subr.bf16.mxu0 %v1348
    %1831 = vmatpush1.bf16.msra.mxu0 %v1347
    %1832 = vmatprep.subr.bf16.mxu0 %v1351
    %1833 = vmatpush1.bf16.msra.mxu0 %v1350
    %1834 = vmatprep.mubr.bf16.mxu0 %v684
    %1835 = vmatmul.mubr.bf16.gmra.mrb[0].mxu0 %v683
    %v1836 = vpop.f32.mrb[0].mxu0
    %v1837 = vadd.f32 %v1484, %v1836
    %v1838 = vpop.f32.mrb[0].mxu0
    %v1839 = vadd.f32 %v1486, %v1838
    %v1840 = vpop.f32.mrb[0].mxu0
    %v1841 = vadd.f32 %v1488, %v1840
    %v1842 = vpop.f32.mrb[0].mxu0
    %v1843 = vadd.f32 %v1490, %v1842
    %1844 = vmatprep.mubr.bf16.mxu0 %v688
    %1845 = vmatmul.mubr.bf16.gmra.mrb[0].mxu0 %v687
    %v1846 = vpop.f32.mrb[0].mxu0
    %v1847 = vadd.f32 %v1494, %v1846
    %v1848 = vpop.f32.mrb[0].mxu0
    %v1849 = vadd.f32 %v1496, %v1848
    %v1850 = vpop.f32.mrb[0].mxu0
    %v1851 = vadd.f32 %v1498, %v1850
    %v1852 = vpop.f32.mrb[0].mxu0
    %v1853 = vadd.f32 %v1500, %v1852
    %1854 = vmatprep.mubr.bf16.mxu0 %v692
    %1855 = vmatmul.mubr.bf16.gmra.mrb[0].mxu0 %v691
    %v1856 = vpop.f32.mrb[0].mxu0
    %v1857 = vadd.f32 %v1504, %v1856
    %v1858 = vpop.f32.mrb[0].mxu0
    %v1859 = vadd.f32 %v1506, %v1858
    %v1860 = vpop.f32.mrb[0].mxu0
    %v1861 = vadd.f32 %v1508, %v1860
    %v1862 = vpop.f32.mrb[0].mxu0
    %v1863 = vadd.f32 %v1510, %v1862
    %1864 = vmatprep.mubr.bf16.mxu0 %v696
    %1865 = vmatmul.mubr.bf16.gmra.mrb[0].mxu0 %v695
    %v1866 = vpop.f32.mrb[0].mxu0
    %v1867 = vadd.f32 %v1514, %v1866
    %v1868 = vpop.f32.mrb[0].mxu0
    %v1869 = vadd.f32 %v1516, %v1868
    %v1870 = vpop.f32.mrb[0].mxu0
    %v1871 = vadd.f32 %v1518, %v1870
    %v1872 = vpop.f32.mrb[0].mxu0
    %v1873 = vadd.f32 %v1520, %v1872
    %1874 = vmatprep.mubr.bf16.mxu0 %v700
    %1875 = vmatmul.mubr.bf16.gmra.mrb[0].mxu0 %v699
    %v1876 = vpop.f32.mrb[0].mxu0
    %v1877 = vadd.f32 %v1524, %v1876
    %v1878 = vpop.f32.mrb[0].mxu0
    %v1879 = vadd.f32 %v1526, %v1878
    %v1880 = vpop.f32.mrb[0].mxu0
    %v1881 = vadd.f32 %v1528, %v1880
    %v1882 = vpop.f32.mrb[0].mxu0
    %v1883 = vadd.f32 %v1530, %v1882
    %1884 = vmatprep.mubr.bf16.mxu0 %v704
    %1885 = vmatmul.mubr.bf16.gmra.mrb[0].mxu0 %v703
    %v1886 = vpop.f32.mrb[0].mxu0
    %v1887 = vadd.f32 %v1534, %v1886
    %v1888 = vpop.f32.mrb[0].mxu0
    %v1889 = vadd.f32 %v1536, %v1888
    %v1890 = vpop.f32.mrb[0].mxu0
    %v1891 = vadd.f32 %v1538, %v1890
    %v1892 = vpop.f32.mrb[0].mxu0
    %v1893 = vadd.f32 %v1540, %v1892
    %1894 = vmatprep.mubr.bf16.mxu0 %v708
    %1895 = vmatmul.mubr.bf16.gmra.mrb[0].mxu0 %v707
    %v1896 = vpop.f32.mrb[0].mxu0
    %v1897 = vadd.f32 %v1544, %v1896
    %v1898 = vpop.f32.mrb[0].mxu0
    %v1899 = vadd.f32 %v1546, %v1898
    %v1900 = vpop.f32.mrb[0].mxu0
    %v1901 = vadd.f32 %v1548, %v1900
    %v1902 = vpop.f32.mrb[0].mxu0
    %v1903 = vadd.f32 %v1550, %v1902
    %1904 = vmatprep.mubr.bf16.mxu0 %v712
    %1905 = vmatmul.mubr.bf16.gmra.mrb[0].mxu0 %v711
    %v1906 = vpop.f32.mrb[0].mxu0
    %v1907 = vadd.f32 %v1554, %v1906
    %v1908 = vpop.f32.mrb[0].mxu0
    %v1909 = vadd.f32 %v1556, %v1908
    %v1910 = vpop.f32.mrb[0].mxu0
    %v1911 = vadd.f32 %v1558, %v1910
    %v1912 = vpop.f32.mrb[0].mxu0
    %v1913 = vadd.f32 %v1560, %v1912
    %1914 = vmatprep.mubr.bf16.mxu0 %v716
    %1915 = vmatmul.mubr.bf16.gmra.mrb[0].mxu0 %v715
    %v1916 = vpop.f32.mrb[0].mxu0
    %v1917 = vadd.f32 %v1564, %v1916
    %v1918 = vpop.f32.mrb[0].mxu0
    %v1919 = vadd.f32 %v1566, %v1918
    %v1920 = vpop.f32.mrb[0].mxu0
    %v1921 = vadd.f32 %v1568, %v1920
    %v1922 = vpop.f32.mrb[0].mxu0
    %v1923 = vadd.f32 %v1570, %v1922
    %1924 = vmatprep.mubr.bf16.mxu0 %v720
    %1925 = vmatmul.mubr.bf16.gmra.mrb[0].mxu0 %v719
    %v1926 = vpop.f32.mrb[0].mxu0
    %v1927 = vadd.f32 %v1574, %v1926
    %v1928 = vpop.f32.mrb[0].mxu0
    %v1929 = vadd.f32 %v1576, %v1928
    %v1930 = vpop.f32.mrb[0].mxu0
    %v1931 = vadd.f32 %v1578, %v1930
    %v1932 = vpop.f32.mrb[0].mxu0
    %v1933 = vadd.f32 %v1580, %v1932
    %1934 = vmatprep.mubr.bf16.mxu0 %v724
    %1935 = vmatmul.mubr.bf16.gmra.mrb[0].mxu0 %v723
    %v1936 = vpop.f32.mrb[0].mxu0
    %v1937 = vadd.f32 %v1584, %v1936
    %v1938 = vpop.f32.mrb[0].mxu0
    %v1939 = vadd.f32 %v1586, %v1938
    %v1940 = vpop.f32.mrb[0].mxu0
    %v1941 = vadd.f32 %v1588, %v1940
    %v1942 = vpop.f32.mrb[0].mxu0
    %v1943 = vadd.f32 %v1590, %v1942
    %1944 = vmatprep.mubr.bf16.mxu0 %v728
    %1945 = vmatmul.mubr.bf16.gmra.mrb[0].mxu0 %v727
    %v1946 = vpop.f32.mrb[0].mxu0
    %v1947 = vadd.f32 %v1594, %v1946
    %v1948 = vpop.f32.mrb[0].mxu0
    %v1949 = vadd.f32 %v1596, %v1948
    %v1950 = vpop.f32.mrb[0].mxu0
    %v1951 = vadd.f32 %v1598, %v1950
    %v1952 = vpop.f32.mrb[0].mxu0
    %v1953 = vadd.f32 %v1600, %v1952
    %1954 = vmatprep.mubr.bf16.mxu0 %v732
    %1955 = vmatmul.mubr.bf16.gmra.mrb[0].mxu0 %v731
    %v1956 = vpop.f32.mrb[0].mxu0
    %v1957 = vadd.f32 %v1604, %v1956
    %v1958 = vpop.f32.mrb[0].mxu0
    %v1959 = vadd.f32 %v1606, %v1958
    %v1960 = vpop.f32.mrb[0].mxu0
    %v1961 = vadd.f32 %v1608, %v1960
    %v1962 = vpop.f32.mrb[0].mxu0
    %v1963 = vadd.f32 %v1610, %v1962
    %1964 = vmatprep.mubr.bf16.mxu0 %v736
    %1965 = vmatmul.mubr.bf16.gmra.mrb[0].mxu0 %v735
    %v1966 = vpop.f32.mrb[0].mxu0
    %v1967 = vadd.f32 %v1614, %v1966
    %v1968 = vpop.f32.mrb[0].mxu0
    %v1969 = vadd.f32 %v1616, %v1968
    %v1970 = vpop.f32.mrb[0].mxu0
    %v1971 = vadd.f32 %v1618, %v1970
    %v1972 = vpop.f32.mrb[0].mxu0
    %v1973 = vadd.f32 %v1620, %v1972
    %1974 = vmatprep.mubr.bf16.mxu0 %v740
    %1975 = vmatmul.mubr.bf16.gmra.mrb[0].mxu0 %v739
    %v1976 = vpop.f32.mrb[0].mxu0
    %v1977 = vadd.f32 %v1624, %v1976
    %v1978 = vpop.f32.mrb[0].mxu0
    %v1979 = vadd.f32 %v1626, %v1978
    %v1980 = vpop.f32.mrb[0].mxu0
    %v1981 = vadd.f32 %v1628, %v1980
    %v1982 = vpop.f32.mrb[0].mxu0
    %v1983 = vadd.f32 %v1630, %v1982
    %1984 = vmatprep.mubr.bf16.mxu0 %v744
    %1985 = vmatmul.mubr.bf16.gmra.mrb[0].mxu0 %v743
    %v1986 = vpop.f32.mrb[0].mxu0
    %v1987 = vadd.f32 %v1634, %v1986
    %v1988 = vpop.f32.mrb[0].mxu0
    %v1989 = vadd.f32 %v1636, %v1988
    %v1990 = vpop.f32.mrb[0].mxu0
    %v1991 = vadd.f32 %v1638, %v1990
    %v1992 = vpop.f32.mrb[0].mxu0
    %v1993 = vadd.f32 %v1640, %v1992
    %1994 = vmatprep.mubr.bf16.mxu0 %v748
    %1995 = vmatmul.mubr.bf16.gmra.mrb[0].mxu0 %v747
    %v1996 = vpop.f32.mrb[0].mxu0
    %v1997 = vadd.f32 %v1644, %v1996
    %v1998 = vpop.f32.mrb[0].mxu0
    %v1999 = vadd.f32 %v1646, %v1998
    %v2000 = vpop.f32.mrb[0].mxu0
    %v2001 = vadd.f32 %v1648, %v2000
    %v2002 = vpop.f32.mrb[0].mxu0
    %v2003 = vadd.f32 %v1650, %v2002
    %2004 = vmatprep.mubr.bf16.mxu0 %v752
    %2005 = vmatmul.mubr.bf16.gmra.mrb[0].mxu0 %v751
    %v2006 = vpop.f32.mrb[0].mxu0
    %v2007 = vadd.f32 %v1654, %v2006
    %v2008 = vpop.f32.mrb[0].mxu0
    %v2009 = vadd.f32 %v1656, %v2008
    %v2010 = vpop.f32.mrb[0].mxu0
    %v2011 = vadd.f32 %v1658, %v2010
    %v2012 = vpop.f32.mrb[0].mxu0
    %v2013 = vadd.f32 %v1660, %v2012
    %2014 = vmatprep.mubr.bf16.mxu0 %v756
    %2015 = vmatmul.mubr.bf16.gmra.mrb[0].mxu0 %v755
    %v2016 = vpop.f32.mrb[0].mxu0
    %v2017 = vadd.f32 %v1664, %v2016
    %v2018 = vpop.f32.mrb[0].mxu0
    %v2019 = vadd.f32 %v1666, %v2018
    %v2020 = vpop.f32.mrb[0].mxu0
    %v2021 = vadd.f32 %v1668, %v2020
    %v2022 = vpop.f32.mrb[0].mxu0
    %v2023 = vadd.f32 %v1670, %v2022
    %2024 = vmatprep.mubr.bf16.mxu0 %v760
    %2025 = vmatmul.mubr.bf16.gmra.mrb[0].mxu0 %v759
    %v2026 = vpop.f32.mrb[0].mxu0
    %v2027 = vadd.f32 %v1674, %v2026
    %v2028 = vpop.f32.mrb[0].mxu0
    %v2029 = vadd.f32 %v1676, %v2028
    %v2030 = vpop.f32.mrb[0].mxu0
    %v2031 = vadd.f32 %v1678, %v2030
    %v2032 = vpop.f32.mrb[0].mxu0
    %v2033 = vadd.f32 %v1680, %v2032
    %2034 = vmatprep.mubr.bf16.mxu0 %v764
    %2035 = vmatmul.mubr.bf16.gmra.mrb[0].mxu0 %v763
    %v2036 = vpop.f32.mrb[0].mxu0
    %v2037 = vadd.f32 %v1684, %v2036
    %v2038 = vpop.f32.mrb[0].mxu0
    %v2039 = vadd.f32 %v1686, %v2038
    %v2040 = vpop.f32.mrb[0].mxu0
    %v2041 = vadd.f32 %v1688, %v2040
    %v2042 = vpop.f32.mrb[0].mxu0
    %v2043 = vadd.f32 %v1690, %v2042
    %2044 = vmatprep.mubr.bf16.mxu0 %v768
    %2045 = vmatmul.mubr.bf16.gmra.mrb[0].mxu0 %v767
    %v2046 = vpop.f32.mrb[0].mxu0
    %v2047 = vadd.f32 %v1694, %v2046
    %v2048 = vpop.f32.mrb[0].mxu0
    %v2049 = vadd.f32 %v1696, %v2048
    %v2050 = vpop.f32.mrb[0].mxu0
    %v2051 = vadd.f32 %v1698, %v2050
    %v2052 = vpop.f32.mrb[0].mxu0
    %v2053 = vadd.f32 %v1700, %v2052
    %2054 = vmatprep.mubr.bf16.mxu0 %v772
    %2055 = vmatmul.mubr.bf16.gmra.mrb[0].mxu0 %v771
    %v2056 = vpop.f32.mrb[0].mxu0
    %v2057 = vadd.f32 %v1704, %v2056
    %v2058 = vpop.f32.mrb[0].mxu0
    %v2059 = vadd.f32 %v1706, %v2058
    %v2060 = vpop.f32.mrb[0].mxu0
    %v2061 = vadd.f32 %v1708, %v2060
    %v2062 = vpop.f32.mrb[0].mxu0
    %v2063 = vadd.f32 %v1710, %v2062
    %2064 = vmatprep.mubr.bf16.mxu0 %v776
    %2065 = vmatmul.mubr.bf16.gmra.mrb[0].mxu0 %v775
    %v2066 = vpop.f32.mrb[0].mxu0
    %v2067 = vadd.f32 %v1714, %v2066
    %v2068 = vpop.f32.mrb[0].mxu0
    %v2069 = vadd.f32 %v1716, %v2068
    %v2070 = vpop.f32.mrb[0].mxu0
    %v2071 = vadd.f32 %v1718, %v2070
    %v2072 = vpop.f32.mrb[0].mxu0
    %v2073 = vadd.f32 %v1720, %v2072
    %2074 = vmatprep.mubr.bf16.mxu0 %v780
    %2075 = vmatmul.mubr.bf16.gmra.mrb[0].mxu0 %v779
    %v2076 = vpop.f32.mrb[0].mxu0
    %v2077 = vadd.f32 %v1724, %v2076
    %v2078 = vpop.f32.mrb[0].mxu0
    %v2079 = vadd.f32 %v1726, %v2078
    %v2080 = vpop.f32.mrb[0].mxu0
    %v2081 = vadd.f32 %v1728, %v2080
    %v2082 = vpop.f32.mrb[0].mxu0
    %v2083 = vadd.f32 %v1730, %v2082
    %2084 = vmatprep.mubr.bf16.mxu0 %v784
    %2085 = vmatmul.mubr.bf16.gmra.mrb[0].mxu0 %v783
    %v2086 = vpop.f32.mrb[0].mxu0
    %v2087 = vadd.f32 %v1734, %v2086
    %v2088 = vpop.f32.mrb[0].mxu0
    %v2089 = vadd.f32 %v1736, %v2088
    %v2090 = vpop.f32.mrb[0].mxu0
    %v2091 = vadd.f32 %v1738, %v2090
    %v2092 = vpop.f32.mrb[0].mxu0
    %v2093 = vadd.f32 %v1740, %v2092
    %2094 = vmatprep.mubr.bf16.mxu0 %v788
    %2095 = vmatmul.mubr.bf16.gmra.mrb[0].mxu0 %v787
    %v2096 = vpop.f32.mrb[0].mxu0
    %v2097 = vadd.f32 %v1744, %v2096
    %v2098 = vpop.f32.mrb[0].mxu0
    %v2099 = vadd.f32 %v1746, %v2098
    %v2100 = vpop.f32.mrb[0].mxu0
    %v2101 = vadd.f32 %v1748, %v2100
    %v2102 = vpop.f32.mrb[0].mxu0
    %v2103 = vadd.f32 %v1750, %v2102
    %2104 = vmatprep.mubr.bf16.mxu0 %v792
    %2105 = vmatmul.mubr.bf16.gmra.mrb[0].mxu0 %v791
    %v2106 = vpop.f32.mrb[0].mxu0
    %v2107 = vadd.f32 %v1754, %v2106
    %v2108 = vpop.f32.mrb[0].mxu0
    %v2109 = vadd.f32 %v1756, %v2108
    %v2110 = vpop.f32.mrb[0].mxu0
    %v2111 = vadd.f32 %v1758, %v2110
    %v2112 = vpop.f32.mrb[0].mxu0
    %v2113 = vadd.f32 %v1760, %v2112
    %2114 = vmatprep.mubr.bf16.mxu0 %v796
    %2115 = vmatmul.mubr.bf16.gmra.mrb[0].mxu0 %v795
    %v2116 = vpop.f32.mrb[0].mxu0
    %v2117 = vadd.f32 %v1764, %v2116
    %v2118 = vpop.f32.mrb[0].mxu0
    %v2119 = vadd.f32 %v1766, %v2118
    %v2120 = vpop.f32.mrb[0].mxu0
    %v2121 = vadd.f32 %v1768, %v2120
    %v2122 = vpop.f32.mrb[0].mxu0
    %v2123 = vadd.f32 %v1770, %v2122
    %2124 = vmatprep.mubr.bf16.mxu0 %v800
    %2125 = vmatmul.mubr.bf16.gmra.mrb[0].mxu0 %v799
    %v2126 = vpop.f32.mrb[0].mxu0
    %v2127 = vadd.f32 %v1774, %v2126
    %v2128 = vpop.f32.mrb[0].mxu0
    %v2129 = vadd.f32 %v1776, %v2128
    %v2130 = vpop.f32.mrb[0].mxu0
    %v2131 = vadd.f32 %v1778, %v2130
    %v2132 = vpop.f32.mrb[0].mxu0
    %v2133 = vadd.f32 %v1780, %v2132
    %2134 = vmatprep.mubr.bf16.mxu0 %v804
    %2135 = vmatmul.mubr.bf16.gmra.mrb[0].mxu0 %v803
    %v2136 = vpop.f32.mrb[0].mxu0
    %v2137 = vadd.f32 %v1784, %v2136
    %v2138 = vpop.f32.mrb[0].mxu0
    %v2139 = vadd.f32 %v1786, %v2138
    %v2140 = vpop.f32.mrb[0].mxu0
    %v2141 = vadd.f32 %v1788, %v2140
    %v2142 = vpop.f32.mrb[0].mxu0
    %v2143 = vadd.f32 %v1790, %v2142
    %2144 = vmatprep.mubr.bf16.mxu0 %v808
    %2145 = vmatmul.mubr.bf16.gmra.mrb[0].mxu0 %v807
    %v2146 = vpop.f32.mrb[0].mxu0
    %v2147 = vadd.f32 %v1794, %v2146
    %v2148 = vpop.f32.mrb[0].mxu0
    %v2149 = vadd.f32 %v1796, %v2148
    %v2150 = vpop.f32.mrb[0].mxu0
    %v2151 = vadd.f32 %v1798, %v2150
    %v2152 = vpop.f32.mrb[0].mxu0
    %v2153 = vadd.f32 %v1800, %v2152
    %2154 = vdwg.mxu0
    %2155 = vmatprep.subr.bf16.mxu0 0
    %2156 = vmatpush1.bf16.msra.mxu0 %v1259
    %2157 = vmatprep.subr.bf16.mxu0 0
    %2158 = vmatpush1.bf16.msra.mxu0 %v1262
    %2159 = vmatprep.subr.bf16.mxu0 0
    %2160 = vmatpush1.bf16.msra.mxu0 %v1265
    %2161 = vmatprep.subr.bf16.mxu0 0
    %2162 = vmatpush1.bf16.msra.mxu0 %v1268
    %2163 = vmatprep.subr.bf16.mxu0 0
    %2164 = vmatpush1.bf16.msra.mxu0 %v1271
    %2165 = vmatprep.subr.bf16.mxu0 0
    %2166 = vmatpush1.bf16.msra.mxu0 %v1274
    %2167 = vmatprep.subr.bf16.mxu0 0
    %2168 = vmatpush1.bf16.msra.mxu0 %v1277
    %2169 = vmatprep.subr.bf16.mxu0 0
    %2170 = vmatpush1.bf16.msra.mxu0 %v1280
    %2171 = vmatprep.subr.bf16.mxu0 0
    %2172 = vmatpush1.bf16.msra.mxu0 %v1283
    %2173 = vmatprep.subr.bf16.mxu0 0
    %2174 = vmatpush1.bf16.msra.mxu0 %v1286
    %2175 = vmatprep.subr.bf16.mxu0 0
    %2176 = vmatpush1.bf16.msra.mxu0 %v1289
    %2177 = vmatprep.subr.bf16.mxu0 0
    %2178 = vmatpush1.bf16.msra.mxu0 %v1292
    %2179 = vmatprep.subr.bf16.mxu0 0
    %2180 = vmatpush1.bf16.msra.mxu0 %v1295
    %2181 = vmatprep.subr.bf16.mxu0 0
    %2182 = vmatpush1.bf16.msra.mxu0 %v1298
    %2183 = vmatprep.subr.bf16.mxu0 0
    %2184 = vmatpush1.bf16.msra.mxu0 %v1301
    %2185 = vmatprep.subr.bf16.mxu0 0
    %2186 = vmatpush1.bf16.msra.mxu0 %v1304
    %2187 = vmatprep.mubr.bf16.mxu0 %v682
    %2188 = vmatmul.mubr.bf16.gmra.mrb[0].mxu0 %v681
    %v2189 = vpop.f32.mrb[0].mxu0
    %v2190 = vadd.f32 0.0, %v2189
    %v2191 = vpop.f32.mrb[0].mxu0
    %v2192 = vpop.f32.mrb[0].mxu0
    %v2193 = vadd.f32 0.0, %v2192
    %v2194 = vpop.f32.mrb[0].mxu0
    %2195 = vmatprep.mubr.bf16.mxu0 %v686
    %2196 = vmatmul.mubr.bf16.gmra.mrb[0].mxu0 %v685
    %v2197 = vpop.f32.mrb[0].mxu0
    %v2198 = vadd.f32 0.0, %v2197
    %v2199 = vpop.f32.mrb[0].mxu0
    %v2200 = vpop.f32.mrb[0].mxu0
    %v2201 = vadd.f32 0.0, %v2200
    %v2202 = vpop.f32.mrb[0].mxu0
    %2203 = vmatprep.mubr.bf16.mxu0 %v690
    %2204 = vmatmul.mubr.bf16.gmra.mrb[0].mxu0 %v689
    %v2205 = vpop.f32.mrb[0].mxu0
    %v2206 = vadd.f32 0.0, %v2205
    %v2207 = vpop.f32.mrb[0].mxu0
    %v2208 = vpop.f32.mrb[0].mxu0
    %v2209 = vadd.f32 0.0, %v2208
    %v2210 = vpop.f32.mrb[0].mxu0
    %2211 = vmatprep.mubr.bf16.mxu0 %v694
    %2212 = vmatmul.mubr.bf16.gmra.mrb[0].mxu0 %v693
    %v2213 = vpop.f32.mrb[0].mxu0
    %v2214 = vadd.f32 0.0, %v2213
    %v2215 = vpop.f32.mrb[0].mxu0
    %v2216 = vpop.f32.mrb[0].mxu0
    %v2217 = vadd.f32 0.0, %v2216
    %v2218 = vpop.f32.mrb[0].mxu0
    %2219 = vmatprep.mubr.bf16.mxu0 %v698
    %2220 = vmatmul.mubr.bf16.gmra.mrb[0].mxu0 %v697
    %v2221 = vpop.f32.mrb[0].mxu0
    %v2222 = vadd.f32 0.0, %v2221
    %v2223 = vpop.f32.mrb[0].mxu0
    %v2224 = vpop.f32.mrb[0].mxu0
    %v2225 = vadd.f32 0.0, %v2224
    %v2226 = vpop.f32.mrb[0].mxu0
    %2227 = vmatprep.mubr.bf16.mxu0 %v702
    %2228 = vmatmul.mubr.bf16.gmra.mrb[0].mxu0 %v701
    %v2229 = vpop.f32.mrb[0].mxu0
    %v2230 = vadd.f32 0.0, %v2229
    %v2231 = vpop.f32.mrb[0].mxu0
    %v2232 = vpop.f32.mrb[0].mxu0
    %v2233 = vadd.f32 0.0, %v2232
    %v2234 = vpop.f32.mrb[0].mxu0
    %2235 = vmatprep.mubr.bf16.mxu0 %v706
    %2236 = vmatmul.mubr.bf16.gmra.mrb[0].mxu0 %v705
    %v2237 = vpop.f32.mrb[0].mxu0
    %v2238 = vadd.f32 0.0, %v2237
    %v2239 = vpop.f32.mrb[0].mxu0
    %v2240 = vpop.f32.mrb[0].mxu0
    %v2241 = vadd.f32 0.0, %v2240
    %v2242 = vpop.f32.mrb[0].mxu0
    %2243 = vmatprep.mubr.bf16.mxu0 %v710
    %2244 = vmatmul.mubr.bf16.gmra.mrb[0].mxu0 %v709
    %v2245 = vpop.f32.mrb[0].mxu0
    %v2246 = vadd.f32 0.0, %v2245
    %v2247 = vpop.f32.mrb[0].mxu0
    %v2248 = vpop.f32.mrb[0].mxu0
    %v2249 = vadd.f32 0.0, %v2248
    %v2250 = vpop.f32.mrb[0].mxu0
    %2251 = vmatprep.mubr.bf16.mxu0 %v714
    %2252 = vmatmul.mubr.bf16.gmra.mrb[0].mxu0 %v713
    %v2253 = vpop.f32.mrb[0].mxu0
    %v2254 = vadd.f32 0.0, %v2253
    %v2255 = vpop.f32.mrb[0].mxu0
    %v2256 = vpop.f32.mrb[0].mxu0
    %v2257 = vadd.f32 0.0, %v2256
    %v2258 = vpop.f32.mrb[0].mxu0
    %2259 = vmatprep.mubr.bf16.mxu0 %v718
    %2260 = vmatmul.mubr.bf16.gmra.mrb[0].mxu0 %v717
    %v2261 = vpop.f32.mrb[0].mxu0
    %v2262 = vadd.f32 0.0, %v2261
    %v2263 = vpop.f32.mrb[0].mxu0
    %v2264 = vpop.f32.mrb[0].mxu0
    %v2265 = vadd.f32 0.0, %v2264
    %v2266 = vpop.f32.mrb[0].mxu0
    %2267 = vmatprep.mubr.bf16.mxu0 %v722
    %2268 = vmatmul.mubr.bf16.gmra.mrb[0].mxu0 %v721
    %v2269 = vpop.f32.mrb[0].mxu0
    %v2270 = vadd.f32 0.0, %v2269
    %v2271 = vpop.f32.mrb[0].mxu0
    %v2272 = vpop.f32.mrb[0].mxu0
    %v2273 = vadd.f32 0.0, %v2272
    %v2274 = vpop.f32.mrb[0].mxu0
    %2275 = vmatprep.mubr.bf16.mxu0 %v726
    %2276 = vmatmul.mubr.bf16.gmra.mrb[0].mxu0 %v725
    %v2277 = vpop.f32.mrb[0].mxu0
    %v2278 = vadd.f32 0.0, %v2277
    %v2279 = vpop.f32.mrb[0].mxu0
    %v2280 = vpop.f32.mrb[0].mxu0
    %v2281 = vadd.f32 0.0, %v2280
    %v2282 = vpop.f32.mrb[0].mxu0
    %2283 = vmatprep.mubr.bf16.mxu0 %v730
    %2284 = vmatmul.mubr.bf16.gmra.mrb[0].mxu0 %v729
    %v2285 = vpop.f32.mrb[0].mxu0
    %v2286 = vadd.f32 0.0, %v2285
    %v2287 = vpop.f32.mrb[0].mxu0
    %v2288 = vpop.f32.mrb[0].mxu0
    %v2289 = vadd.f32 0.0, %v2288
    %v2290 = vpop.f32.mrb[0].mxu0
    %2291 = vmatprep.mubr.bf16.mxu0 %v734
    %2292 = vmatmul.mubr.bf16.gmra.mrb[0].mxu0 %v733
    %v2293 = vpop.f32.mrb[0].mxu0
    %v2294 = vadd.f32 0.0, %v2293
    %v2295 = vpop.f32.mrb[0].mxu0
    %v2296 = vpop.f32.mrb[0].mxu0
    %v2297 = vadd.f32 0.0, %v2296
    %v2298 = vpop.f32.mrb[0].mxu0
    %2299 = vmatprep.mubr.bf16.mxu0 %v738
    %2300 = vmatmul.mubr.bf16.gmra.mrb[0].mxu0 %v737
    %v2301 = vpop.f32.mrb[0].mxu0
    %v2302 = vadd.f32 0.0, %v2301
    %v2303 = vpop.f32.mrb[0].mxu0
    %v2304 = vpop.f32.mrb[0].mxu0
    %v2305 = vadd.f32 0.0, %v2304
    %v2306 = vpop.f32.mrb[0].mxu0
    %2307 = vmatprep.mubr.bf16.mxu0 %v742
    %2308 = vmatmul.mubr.bf16.gmra.mrb[0].mxu0 %v741
    %v2309 = vpop.f32.mrb[0].mxu0
    %v2310 = vadd.f32 0.0, %v2309
    %v2311 = vpop.f32.mrb[0].mxu0
    %v2312 = vpop.f32.mrb[0].mxu0
    %v2313 = vadd.f32 0.0, %v2312
    %v2314 = vpop.f32.mrb[0].mxu0
    %2315 = vmatprep.mubr.bf16.mxu0 %v746
    %2316 = vmatmul.mubr.bf16.gmra.mrb[0].mxu0 %v745
    %v2317 = vpop.f32.mrb[0].mxu0
    %v2318 = vadd.f32 0.0, %v2317
    %v2319 = vpop.f32.mrb[0].mxu0
    %v2320 = vpop.f32.mrb[0].mxu0
    %v2321 = vadd.f32 0.0, %v2320
    %v2322 = vpop.f32.mrb[0].mxu0
    %2323 = vmatprep.mubr.bf16.mxu0 %v750
    %2324 = vmatmul.mubr.bf16.gmra.mrb[0].mxu0 %v749
    %v2325 = vpop.f32.mrb[0].mxu0
    %v2326 = vadd.f32 0.0, %v2325
    %v2327 = vpop.f32.mrb[0].mxu0
    %v2328 = vpop.f32.mrb[0].mxu0
    %v2329 = vadd.f32 0.0, %v2328
    %v2330 = vpop.f32.mrb[0].mxu0
    %2331 = vmatprep.mubr.bf16.mxu0 %v754
    %2332 = vmatmul.mubr.bf16.gmra.mrb[0].mxu0 %v753
    %v2333 = vpop.f32.mrb[0].mxu0
    %v2334 = vadd.f32 0.0, %v2333
    %v2335 = vpop.f32.mrb[0].mxu0
    %v2336 = vpop.f32.mrb[0].mxu0
    %v2337 = vadd.f32 0.0, %v2336
    %v2338 = vpop.f32.mrb[0].mxu0
    %2339 = vmatprep.mubr.bf16.mxu0 %v758
    %2340 = vmatmul.mubr.bf16.gmra.mrb[0].mxu0 %v757
    %v2341 = vpop.f32.mrb[0].mxu0
    %v2342 = vadd.f32 0.0, %v2341
    %v2343 = vpop.f32.mrb[0].mxu0
    %v2344 = vpop.f32.mrb[0].mxu0
    %v2345 = vadd.f32 0.0, %v2344
    %v2346 = vpop.f32.mrb[0].mxu0
    %2347 = vmatprep.mubr.bf16.mxu0 %v762
    %2348 = vmatmul.mubr.bf16.gmra.mrb[0].mxu0 %v761
    %v2349 = vpop.f32.mrb[0].mxu0
    %v2350 = vadd.f32 0.0, %v2349
    %v2351 = vpop.f32.mrb[0].mxu0
    %v2352 = vpop.f32.mrb[0].mxu0
    %v2353 = vadd.f32 0.0, %v2352
    %v2354 = vpop.f32.mrb[0].mxu0
    %2355 = vmatprep.mubr.bf16.mxu0 %v766
    %2356 = vmatmul.mubr.bf16.gmra.mrb[0].mxu0 %v765
    %v2357 = vpop.f32.mrb[0].mxu0
    %v2358 = vadd.f32 0.0, %v2357
    %v2359 = vpop.f32.mrb[0].mxu0
    %v2360 = vpop.f32.mrb[0].mxu0
    %v2361 = vadd.f32 0.0, %v2360
    %v2362 = vpop.f32.mrb[0].mxu0
    %2363 = vmatprep.mubr.bf16.mxu0 %v770
    %2364 = vmatmul.mubr.bf16.gmra.mrb[0].mxu0 %v769
    %v2365 = vpop.f32.mrb[0].mxu0
    %v2366 = vadd.f32 0.0, %v2365
    %v2367 = vpop.f32.mrb[0].mxu0
    %v2368 = vpop.f32.mrb[0].mxu0
    %v2369 = vadd.f32 0.0, %v2368
    %v2370 = vpop.f32.mrb[0].mxu0
    %2371 = vmatprep.mubr.bf16.mxu0 %v774
    %2372 = vmatmul.mubr.bf16.gmra.mrb[0].mxu0 %v773
    %v2373 = vpop.f32.mrb[0].mxu0
    %v2374 = vadd.f32 0.0, %v2373
    %v2375 = vpop.f32.mrb[0].mxu0
    %v2376 = vpop.f32.mrb[0].mxu0
    %v2377 = vadd.f32 0.0, %v2376
    %v2378 = vpop.f32.mrb[0].mxu0
    %2379 = vmatprep.mubr.bf16.mxu0 %v778
    %2380 = vmatmul.mubr.bf16.gmra.mrb[0].mxu0 %v777
    %v2381 = vpop.f32.mrb[0].mxu0
    %v2382 = vadd.f32 0.0, %v2381
    %v2383 = vpop.f32.mrb[0].mxu0
    %v2384 = vpop.f32.mrb[0].mxu0
    %v2385 = vadd.f32 0.0, %v2384
    %v2386 = vpop.f32.mrb[0].mxu0
    %2387 = vmatprep.mubr.bf16.mxu0 %v782
    %2388 = vmatmul.mubr.bf16.gmra.mrb[0].mxu0 %v781
    %v2389 = vpop.f32.mrb[0].mxu0
    %v2390 = vadd.f32 0.0, %v2389
    %v2391 = vpop.f32.mrb[0].mxu0
    %v2392 = vpop.f32.mrb[0].mxu0
    %v2393 = vadd.f32 0.0, %v2392
    %v2394 = vpop.f32.mrb[0].mxu0
    %2395 = vmatprep.mubr.bf16.mxu0 %v786
    %2396 = vmatmul.mubr.bf16.gmra.mrb[0].mxu0 %v785
    %v2397 = vpop.f32.mrb[0].mxu0
    %v2398 = vadd.f32 0.0, %v2397
    %v2399 = vpop.f32.mrb[0].mxu0
    %v2400 = vpop.f32.mrb[0].mxu0
    %v2401 = vadd.f32 0.0, %v2400
    %v2402 = vpop.f32.mrb[0].mxu0
    %2403 = vmatprep.mubr.bf16.mxu0 %v790
    %2404 = vmatmul.mubr.bf16.gmra.mrb[0].mxu0 %v789
    %v2405 = vpop.f32.mrb[0].mxu0
    %v2406 = vadd.f32 0.0, %v2405
    %v2407 = vpop.f32.mrb[0].mxu0
    %v2408 = vpop.f32.mrb[0].mxu0
    %v2409 = vadd.f32 0.0, %v2408
    %v2410 = vpop.f32.mrb[0].mxu0
    %2411 = vmatprep.mubr.bf16.mxu0 %v794
    %2412 = vmatmul.mubr.bf16.gmra.mrb[0].mxu0 %v793
    %v2413 = vpop.f32.mrb[0].mxu0
    %v2414 = vadd.f32 0.0, %v2413
    %v2415 = vpop.f32.mrb[0].mxu0
    %v2416 = vpop.f32.mrb[0].mxu0
    %v2417 = vadd.f32 0.0, %v2416
    %v2418 = vpop.f32.mrb[0].mxu0
    %2419 = vmatprep.mubr.bf16.mxu0 %v798
    %2420 = vmatmul.mubr.bf16.gmra.mrb[0].mxu0 %v797
    %v2421 = vpop.f32.mrb[0].mxu0
    %v2422 = vadd.f32 0.0, %v2421
    %v2423 = vpop.f32.mrb[0].mxu0
    %v2424 = vpop.f32.mrb[0].mxu0
    %v2425 = vadd.f32 0.0, %v2424
    %v2426 = vpop.f32.mrb[0].mxu0
    %2427 = vmatprep.mubr.bf16.mxu0 %v802
    %2428 = vmatmul.mubr.bf16.gmra.mrb[0].mxu0 %v801
    %v2429 = vpop.f32.mrb[0].mxu0
    %v2430 = vadd.f32 0.0, %v2429
    %v2431 = vpop.f32.mrb[0].mxu0
    %v2432 = vpop.f32.mrb[0].mxu0
    %v2433 = vadd.f32 0.0, %v2432
    %v2434 = vpop.f32.mrb[0].mxu0
    %2435 = vmatprep.mubr.bf16.mxu0 %v806
    %2436 = vmatmul.mubr.bf16.gmra.mrb[0].mxu0 %v805
    %v2437 = vpop.f32.mrb[0].mxu0
    %v2438 = vadd.f32 0.0, %v2437
    %v2439 = vpop.f32.mrb[0].mxu0
    %v2440 = vpop.f32.mrb[0].mxu0
    %v2441 = vadd.f32 0.0, %v2440
    %v2442 = vpop.f32.mrb[0].mxu0
    %2443 = vdwg.mxu0
    %2444 = vmatprep.subr.bf16.mxu0 0
    %2445 = vmatpush1.bf16.msra.mxu0 %v1307
    %2446 = vmatprep.subr.bf16.mxu0 0
    %2447 = vmatpush1.bf16.msra.mxu0 %v1310
    %2448 = vmatprep.subr.bf16.mxu0 0
    %2449 = vmatpush1.bf16.msra.mxu0 %v1313
    %2450 = vmatprep.subr.bf16.mxu0 0
    %2451 = vmatpush1.bf16.msra.mxu0 %v1316
    %2452 = vmatprep.subr.bf16.mxu0 0
    %2453 = vmatpush1.bf16.msra.mxu0 %v1319
    %2454 = vmatprep.subr.bf16.mxu0 0
    %2455 = vmatpush1.bf16.msra.mxu0 %v1322
    %2456 = vmatprep.subr.bf16.mxu0 0
    %2457 = vmatpush1.bf16.msra.mxu0 %v1325
    %2458 = vmatprep.subr.bf16.mxu0 0
    %2459 = vmatpush1.bf16.msra.mxu0 %v1328
    %2460 = vmatprep.subr.bf16.mxu0 0
    %2461 = vmatpush1.bf16.msra.mxu0 %v1331
    %2462 = vmatprep.subr.bf16.mxu0 0
    %2463 = vmatpush1.bf16.msra.mxu0 %v1334
    %2464 = vmatprep.subr.bf16.mxu0 0
    %2465 = vmatpush1.bf16.msra.mxu0 %v1337
    %2466 = vmatprep.subr.bf16.mxu0 0
    %2467 = vmatpush1.bf16.msra.mxu0 %v1340
    %2468 = vmatprep.subr.bf16.mxu0 0
    %2469 = vmatpush1.bf16.msra.mxu0 %v1343
    %2470 = vmatprep.subr.bf16.mxu0 0
    %2471 = vmatpush1.bf16.msra.mxu0 %v1346
    %2472 = vmatprep.subr.bf16.mxu0 0
    %2473 = vmatpush1.bf16.msra.mxu0 %v1349
    %2474 = vmatprep.subr.bf16.mxu0 0
    %2475 = vmatpush1.bf16.msra.mxu0 %v1352
    %2476 = vmatprep.mubr.bf16.mxu0 %v684
    %2477 = vmatmul.mubr.bf16.gmra.mrb[0].mxu0 %v683
    %v2478 = vpop.f32.mrb[0].mxu0
    %v2479 = vadd.f32 %v2190, %v2478
    %v2480 = vpop.f32.mrb[0].mxu0
    %v2481 = vpop.f32.mrb[0].mxu0
    %v2482 = vadd.f32 %v2193, %v2481
    %v2483 = vpop.f32.mrb[0].mxu0
    %2484 = vmatprep.mubr.bf16.mxu0 %v688
    %2485 = vmatmul.mubr.bf16.gmra.mrb[0].mxu0 %v687
    %v2486 = vpop.f32.mrb[0].mxu0
    %v2487 = vadd.f32 %v2198, %v2486
    %v2488 = vpop.f32.mrb[0].mxu0
    %v2489 = vpop.f32.mrb[0].mxu0
    %v2490 = vadd.f32 %v2201, %v2489
    %v2491 = vpop.f32.mrb[0].mxu0
    %2492 = vmatprep.mubr.bf16.mxu0 %v692
    %2493 = vmatmul.mubr.bf16.gmra.mrb[0].mxu0 %v691
    %v2494 = vpop.f32.mrb[0].mxu0
    %v2495 = vadd.f32 %v2206, %v2494
    %v2496 = vpop.f32.mrb[0].mxu0
    %v2497 = vpop.f32.mrb[0].mxu0
    %v2498 = vadd.f32 %v2209, %v2497
    %v2499 = vpop.f32.mrb[0].mxu0
    %2500 = vmatprep.mubr.bf16.mxu0 %v696
    %2501 = vmatmul.mubr.bf16.gmra.mrb[0].mxu0 %v695
    %v2502 = vpop.f32.mrb[0].mxu0
    %v2503 = vadd.f32 %v2214, %v2502
    %v2504 = vpop.f32.mrb[0].mxu0
    %v2505 = vpop.f32.mrb[0].mxu0
    %v2506 = vadd.f32 %v2217, %v2505
    %v2507 = vpop.f32.mrb[0].mxu0
    %2508 = vmatprep.mubr.bf16.mxu0 %v700
    %2509 = vmatmul.mubr.bf16.gmra.mrb[0].mxu0 %v699
    %v2510 = vpop.f32.mrb[0].mxu0
    %v2511 = vadd.f32 %v2222, %v2510
    %v2512 = vpop.f32.mrb[0].mxu0
    %v2513 = vpop.f32.mrb[0].mxu0
    %v2514 = vadd.f32 %v2225, %v2513
    %v2515 = vpop.f32.mrb[0].mxu0
    %2516 = vmatprep.mubr.bf16.mxu0 %v704
    %2517 = vmatmul.mubr.bf16.gmra.mrb[0].mxu0 %v703
    %v2518 = vpop.f32.mrb[0].mxu0
    %v2519 = vadd.f32 %v2230, %v2518
    %v2520 = vpop.f32.mrb[0].mxu0
    %v2521 = vpop.f32.mrb[0].mxu0
    %v2522 = vadd.f32 %v2233, %v2521
    %v2523 = vpop.f32.mrb[0].mxu0
    %2524 = vmatprep.mubr.bf16.mxu0 %v708
    %2525 = vmatmul.mubr.bf16.gmra.mrb[0].mxu0 %v707
    %v2526 = vpop.f32.mrb[0].mxu0
    %v2527 = vadd.f32 %v2238, %v2526
    %v2528 = vpop.f32.mrb[0].mxu0
    %v2529 = vpop.f32.mrb[0].mxu0
    %v2530 = vadd.f32 %v2241, %v2529
    %v2531 = vpop.f32.mrb[0].mxu0
    %2532 = vmatprep.mubr.bf16.mxu0 %v712
    %2533 = vmatmul.mubr.bf16.gmra.mrb[0].mxu0 %v711
    %v2534 = vpop.f32.mrb[0].mxu0
    %v2535 = vadd.f32 %v2246, %v2534
    %v2536 = vpop.f32.mrb[0].mxu0
    %v2537 = vpop.f32.mrb[0].mxu0
    %v2538 = vadd.f32 %v2249, %v2537
    %v2539 = vpop.f32.mrb[0].mxu0
    %2540 = vmatprep.mubr.bf16.mxu0 %v716
    %2541 = vmatmul.mubr.bf16.gmra.mrb[0].mxu0 %v715
    %v2542 = vpop.f32.mrb[0].mxu0
    %v2543 = vadd.f32 %v2254, %v2542
    %v2544 = vpop.f32.mrb[0].mxu0
    %v2545 = vpop.f32.mrb[0].mxu0
    %v2546 = vadd.f32 %v2257, %v2545
    %v2547 = vpop.f32.mrb[0].mxu0
    %2548 = vmatprep.mubr.bf16.mxu0 %v720
    %2549 = vmatmul.mubr.bf16.gmra.mrb[0].mxu0 %v719
    %v2550 = vpop.f32.mrb[0].mxu0
    %v2551 = vadd.f32 %v2262, %v2550
    %v2552 = vpop.f32.mrb[0].mxu0
    %v2553 = vpop.f32.mrb[0].mxu0
    %v2554 = vadd.f32 %v2265, %v2553
    %v2555 = vpop.f32.mrb[0].mxu0
    %2556 = vmatprep.mubr.bf16.mxu0 %v724
    %2557 = vmatmul.mubr.bf16.gmra.mrb[0].mxu0 %v723
    %v2558 = vpop.f32.mrb[0].mxu0
    %v2559 = vadd.f32 %v2270, %v2558
    %v2560 = vpop.f32.mrb[0].mxu0
    %v2561 = vpop.f32.mrb[0].mxu0
    %v2562 = vadd.f32 %v2273, %v2561
    %v2563 = vpop.f32.mrb[0].mxu0
    %2564 = vmatprep.mubr.bf16.mxu0 %v728
    %2565 = vmatmul.mubr.bf16.gmra.mrb[0].mxu0 %v727
    %v2566 = vpop.f32.mrb[0].mxu0
    %v2567 = vadd.f32 %v2278, %v2566
    %v2568 = vpop.f32.mrb[0].mxu0
    %v2569 = vpop.f32.mrb[0].mxu0
    %v2570 = vadd.f32 %v2281, %v2569
    %v2571 = vpop.f32.mrb[0].mxu0
    %2572 = vmatprep.mubr.bf16.mxu0 %v732
    %2573 = vmatmul.mubr.bf16.gmra.mrb[0].mxu0 %v731
    %v2574 = vpop.f32.mrb[0].mxu0
    %v2575 = vadd.f32 %v2286, %v2574
    %v2576 = vpop.f32.mrb[0].mxu0
    %v2577 = vpop.f32.mrb[0].mxu0
    %v2578 = vadd.f32 %v2289, %v2577
    %v2579 = vpop.f32.mrb[0].mxu0
    %2580 = vmatprep.mubr.bf16.mxu0 %v736
    %2581 = vmatmul.mubr.bf16.gmra.mrb[0].mxu0 %v735
    %v2582 = vpop.f32.mrb[0].mxu0
    %v2583 = vadd.f32 %v2294, %v2582
    %v2584 = vpop.f32.mrb[0].mxu0
    %v2585 = vpop.f32.mrb[0].mxu0
    %v2586 = vadd.f32 %v2297, %v2585
    %v2587 = vpop.f32.mrb[0].mxu0
    %2588 = vmatprep.mubr.bf16.mxu0 %v740
    %2589 = vmatmul.mubr.bf16.gmra.mrb[0].mxu0 %v739
    %v2590 = vpop.f32.mrb[0].mxu0
    %v2591 = vadd.f32 %v2302, %v2590
    %v2592 = vpop.f32.mrb[0].mxu0
    %v2593 = vpop.f32.mrb[0].mxu0
    %v2594 = vadd.f32 %v2305, %v2593
    %v2595 = vpop.f32.mrb[0].mxu0
    %2596 = vmatprep.mubr.bf16.mxu0 %v744
    %2597 = vmatmul.mubr.bf16.gmra.mrb[0].mxu0 %v743
    %v2598 = vpop.f32.mrb[0].mxu0
    %v2599 = vadd.f32 %v2310, %v2598
    %v2600 = vpop.f32.mrb[0].mxu0
    %v2601 = vpop.f32.mrb[0].mxu0
    %v2602 = vadd.f32 %v2313, %v2601
    %v2603 = vpop.f32.mrb[0].mxu0
    %2604 = vmatprep.mubr.bf16.mxu0 %v748
    %2605 = vmatmul.mubr.bf16.gmra.mrb[0].mxu0 %v747
    %v2606 = vpop.f32.mrb[0].mxu0
    %v2607 = vadd.f32 %v2318, %v2606
    %v2608 = vpop.f32.mrb[0].mxu0
    %v2609 = vpop.f32.mrb[0].mxu0
    %v2610 = vadd.f32 %v2321, %v2609
    %v2611 = vpop.f32.mrb[0].mxu0
    %2612 = vmatprep.mubr.bf16.mxu0 %v752
    %2613 = vmatmul.mubr.bf16.gmra.mrb[0].mxu0 %v751
    %v2614 = vpop.f32.mrb[0].mxu0
    %v2615 = vadd.f32 %v2326, %v2614
    %v2616 = vpop.f32.mrb[0].mxu0
    %v2617 = vpop.f32.mrb[0].mxu0
    %v2618 = vadd.f32 %v2329, %v2617
    %v2619 = vpop.f32.mrb[0].mxu0
    %2620 = vmatprep.mubr.bf16.mxu0 %v756
    %2621 = vmatmul.mubr.bf16.gmra.mrb[0].mxu0 %v755
    %v2622 = vpop.f32.mrb[0].mxu0
    %v2623 = vadd.f32 %v2334, %v2622
    %v2624 = vpop.f32.mrb[0].mxu0
    %v2625 = vpop.f32.mrb[0].mxu0
    %v2626 = vadd.f32 %v2337, %v2625
    %v2627 = vpop.f32.mrb[0].mxu0
    %2628 = vmatprep.mubr.bf16.mxu0 %v760
    %2629 = vmatmul.mubr.bf16.gmra.mrb[0].mxu0 %v759
    %v2630 = vpop.f32.mrb[0].mxu0
    %v2631 = vadd.f32 %v2342, %v2630
    %v2632 = vpop.f32.mrb[0].mxu0
    %v2633 = vpop.f32.mrb[0].mxu0
    %v2634 = vadd.f32 %v2345, %v2633
    %v2635 = vpop.f32.mrb[0].mxu0
    %2636 = vmatprep.mubr.bf16.mxu0 %v764
    %2637 = vmatmul.mubr.bf16.gmra.mrb[0].mxu0 %v763
    %v2638 = vpop.f32.mrb[0].mxu0
    %v2639 = vadd.f32 %v2350, %v2638
    %v2640 = vpop.f32.mrb[0].mxu0
    %v2641 = vpop.f32.mrb[0].mxu0
    %v2642 = vadd.f32 %v2353, %v2641
    %v2643 = vpop.f32.mrb[0].mxu0
    %2644 = vmatprep.mubr.bf16.mxu0 %v768
    %2645 = vmatmul.mubr.bf16.gmra.mrb[0].mxu0 %v767
    %v2646 = vpop.f32.mrb[0].mxu0
    %v2647 = vadd.f32 %v2358, %v2646
    %v2648 = vpop.f32.mrb[0].mxu0
    %v2649 = vpop.f32.mrb[0].mxu0
    %v2650 = vadd.f32 %v2361, %v2649
    %v2651 = vpop.f32.mrb[0].mxu0
    %2652 = vmatprep.mubr.bf16.mxu0 %v772
    %2653 = vmatmul.mubr.bf16.gmra.mrb[0].mxu0 %v771
    %v2654 = vpop.f32.mrb[0].mxu0
    %v2655 = vadd.f32 %v2366, %v2654
    %v2656 = vpop.f32.mrb[0].mxu0
    %v2657 = vpop.f32.mrb[0].mxu0
    %v2658 = vadd.f32 %v2369, %v2657
    %v2659 = vpop.f32.mrb[0].mxu0
    %2660 = vmatprep.mubr.bf16.mxu0 %v776
    %2661 = vmatmul.mubr.bf16.gmra.mrb[0].mxu0 %v775
    %v2662 = vpop.f32.mrb[0].mxu0
    %v2663 = vadd.f32 %v2374, %v2662
    %v2664 = vpop.f32.mrb[0].mxu0
    %v2665 = vpop.f32.mrb[0].mxu0
    %v2666 = vadd.f32 %v2377, %v2665
    %v2667 = vpop.f32.mrb[0].mxu0
    %2668 = vmatprep.mubr.bf16.mxu0 %v780
    %2669 = vmatmul.mubr.bf16.gmra.mrb[0].mxu0 %v779
    %v2670 = vpop.f32.mrb[0].mxu0
    %v2671 = vadd.f32 %v2382, %v2670
    %v2672 = vpop.f32.mrb[0].mxu0
    %v2673 = vpop.f32.mrb[0].mxu0
    %v2674 = vadd.f32 %v2385, %v2673
    %v2675 = vpop.f32.mrb[0].mxu0
    %2676 = vmatprep.mubr.bf16.mxu0 %v784
    %2677 = vmatmul.mubr.bf16.gmra.mrb[0].mxu0 %v783
    %v2678 = vpop.f32.mrb[0].mxu0
    %v2679 = vadd.f32 %v2390, %v2678
    %v2680 = vpop.f32.mrb[0].mxu0
    %v2681 = vpop.f32.mrb[0].mxu0
    %v2682 = vadd.f32 %v2393, %v2681
    %v2683 = vpop.f32.mrb[0].mxu0
    %2684 = vmatprep.mubr.bf16.mxu0 %v788
    %2685 = vmatmul.mubr.bf16.gmra.mrb[0].mxu0 %v787
    %v2686 = vpop.f32.mrb[0].mxu0
    %v2687 = vadd.f32 %v2398, %v2686
    %v2688 = vpop.f32.mrb[0].mxu0
    %v2689 = vpop.f32.mrb[0].mxu0
    %v2690 = vadd.f32 %v2401, %v2689
    %v2691 = vpop.f32.mrb[0].mxu0
    %2692 = vmatprep.mubr.bf16.mxu0 %v792
    %2693 = vmatmul.mubr.bf16.gmra.mrb[0].mxu0 %v791
    %v2694 = vpop.f32.mrb[0].mxu0
    %v2695 = vadd.f32 %v2406, %v2694
    %v2696 = vpop.f32.mrb[0].mxu0
    %v2697 = vpop.f32.mrb[0].mxu0
    %v2698 = vadd.f32 %v2409, %v2697
    %v2699 = vpop.f32.mrb[0].mxu0
    %2700 = vmatprep.mubr.bf16.mxu0 %v796
    %2701 = vmatmul.mubr.bf16.gmra.mrb[0].mxu0 %v795
    %v2702 = vpop.f32.mrb[0].mxu0
    %v2703 = vadd.f32 %v2414, %v2702
    %v2704 = vpop.f32.mrb[0].mxu0
    %v2705 = vpop.f32.mrb[0].mxu0
    %v2706 = vadd.f32 %v2417, %v2705
    %v2707 = vpop.f32.mrb[0].mxu0
    %2708 = vmatprep.mubr.bf16.mxu0 %v800
    %2709 = vmatmul.mubr.bf16.gmra.mrb[0].mxu0 %v799
    %v2710 = vpop.f32.mrb[0].mxu0
    %v2711 = vadd.f32 %v2422, %v2710
    %v2712 = vpop.f32.mrb[0].mxu0
    %v2713 = vpop.f32.mrb[0].mxu0
    %v2714 = vadd.f32 %v2425, %v2713
    %v2715 = vpop.f32.mrb[0].mxu0
    %2716 = vmatprep.mubr.bf16.mxu0 %v804
    %2717 = vmatmul.mubr.bf16.gmra.mrb[0].mxu0 %v803
    %v2718 = vpop.f32.mrb[0].mxu0
    %v2719 = vadd.f32 %v2430, %v2718
    %v2720 = vpop.f32.mrb[0].mxu0
    %v2721 = vpop.f32.mrb[0].mxu0
    %v2722 = vadd.f32 %v2433, %v2721
    %v2723 = vpop.f32.mrb[0].mxu0
    %2724 = vmatprep.mubr.bf16.mxu0 %v808
    %2725 = vmatmul.mubr.bf16.gmra.mrb[0].mxu0 %v807
    %v2726 = vpop.f32.mrb[0].mxu0
    %v2727 = vadd.f32 %v2438, %v2726
    %v2728 = vpop.f32.mrb[0].mxu0
    %v2729 = vpop.f32.mrb[0].mxu0
    %v2730 = vadd.f32 %v2441, %v2729
    %v2731 = vpop.f32.mrb[0].mxu0
    %2732 = vdwg.mxu0
    %v2733 = vmax.f32 %v1837, 0.0
    %v2734 = vmax.f32 %v1839, 0.0
    %v2735 = vmax.f32 %v2479, 0.0
    %v2736 = vmax.f32 %v1841, 0.0
    %v2737 = vmax.f32 %v1843, 0.0
    %v2738 = vmax.f32 %v2482, 0.0
    %v2739 = vmax.f32 %v1847, 0.0
    %v2740 = vmax.f32 %v1849, 0.0
    %v2741 = vmax.f32 %v2487, 0.0
    %v2742 = vmax.f32 %v1851, 0.0
    %v2743 = vmax.f32 %v1853, 0.0
    %v2744 = vmax.f32 %v2490, 0.0
    %v2745 = vmax.f32 %v1857, 0.0
    %v2746 = vmax.f32 %v1859, 0.0
    %v2747 = vmax.f32 %v2495, 0.0
    %v2748 = vmax.f32 %v1861, 0.0
    %v2749 = vmax.f32 %v1863, 0.0
    %v2750 = vmax.f32 %v2498, 0.0
    %v2751 = vmax.f32 %v1867, 0.0
    %v2752 = vmax.f32 %v1869, 0.0
    %v2753 = vmax.f32 %v2503, 0.0
    %v2754 = vmax.f32 %v1871, 0.0
    %v2755 = vmax.f32 %v1873, 0.0
    %v2756 = vmax.f32 %v2506, 0.0
    %v2757 = vmax.f32 %v1877, 0.0
    %v2758 = vmax.f32 %v1879, 0.0
    %v2759 = vmax.f32 %v2511, 0.0
    %v2760 = vmax.f32 %v1881, 0.0
    %v2761 = vmax.f32 %v1883, 0.0
    %v2762 = vmax.f32 %v2514, 0.0
    %v2763 = vmax.f32 %v1887, 0.0
    %v2764 = vmax.f32 %v1889, 0.0
    %v2765 = vmax.f32 %v2519, 0.0
    %v2766 = vmax.f32 %v1891, 0.0
    %v2767 = vmax.f32 %v1893, 0.0
    %v2768 = vmax.f32 %v2522, 0.0
    %v2769 = vmax.f32 %v1897, 0.0
    %v2770 = vmax.f32 %v1899, 0.0
    %v2771 = vmax.f32 %v2527, 0.0
    %v2772 = vmax.f32 %v1901, 0.0
    %v2773 = vmax.f32 %v1903, 0.0
    %v2774 = vmax.f32 %v2530, 0.0
    %v2775 = vmax.f32 %v1907, 0.0
    %v2776 = vmax.f32 %v1909, 0.0
    %v2777 = vmax.f32 %v2535, 0.0
    %v2778 = vmax.f32 %v1911, 0.0
    %v2779 = vmax.f32 %v1913, 0.0
    %v2780 = vmax.f32 %v2538, 0.0
    %v2781 = vmax.f32 %v1917, 0.0
    %v2782 = vmax.f32 %v1919, 0.0
    %v2783 = vmax.f32 %v2543, 0.0
    %v2784 = vmax.f32 %v1921, 0.0
    %v2785 = vmax.f32 %v1923, 0.0
    %v2786 = vmax.f32 %v2546, 0.0
    %v2787 = vmax.f32 %v1927, 0.0
    %v2788 = vmax.f32 %v1929, 0.0
    %v2789 = vmax.f32 %v2551, 0.0
    %v2790 = vmax.f32 %v1931, 0.0
    %v2791 = vmax.f32 %v1933, 0.0
    %v2792 = vmax.f32 %v2554, 0.0
    %v2793 = vmax.f32 %v1937, 0.0
    %v2794 = vmax.f32 %v1939, 0.0
    %v2795 = vmax.f32 %v2559, 0.0
    %v2796 = vmax.f32 %v1941, 0.0
    %v2797 = vmax.f32 %v1943, 0.0
    %v2798 = vmax.f32 %v2562, 0.0
    %v2799 = vmax.f32 %v1947, 0.0
    %v2800 = vmax.f32 %v1949, 0.0
    %v2801 = vmax.f32 %v2567, 0.0
    %v2802 = vmax.f32 %v1951, 0.0
    %v2803 = vmax.f32 %v1953, 0.0
    %v2804 = vmax.f32 %v2570, 0.0
    %v2805 = vmax.f32 %v1957, 0.0
    %v2806 = vmax.f32 %v1959, 0.0
    %v2807 = vmax.f32 %v2575, 0.0
    %v2808 = vmax.f32 %v1961, 0.0
    %v2809 = vmax.f32 %v1963, 0.0
    %v2810 = vmax.f32 %v2578, 0.0
    %v2811 = vmax.f32 %v1967, 0.0
    %v2812 = vmax.f32 %v1969, 0.0
    %v2813 = vmax.f32 %v2583, 0.0
    %v2814 = vmax.f32 %v1971, 0.0
    %v2815 = vmax.f32 %v1973, 0.0
    %v2816 = vmax.f32 %v2586, 0.0
    %v2817 = vmax.f32 %v1977, 0.0
    %v2818 = vmax.f32 %v1979, 0.0
    %v2819 = vmax.f32 %v2591, 0.0
    %v2820 = vmax.f32 %v1981, 0.0
    %v2821 = vmax.f32 %v1983, 0.0
    %v2822 = vmax.f32 %v2594, 0.0
    %v2823 = vmax.f32 %v1987, 0.0
    %v2824 = vmax.f32 %v1989, 0.0
    %v2825 = vmax.f32 %v2599, 0.0
    %v2826 = vmax.f32 %v1991, 0.0
    %v2827 = vmax.f32 %v1993, 0.0
    %v2828 = vmax.f32 %v2602, 0.0
    %v2829 = vmax.f32 %v1997, 0.0
    %v2830 = vmax.f32 %v1999, 0.0
    %v2831 = vmax.f32 %v2607, 0.0
    %v2832 = vmax.f32 %v2001, 0.0
    %v2833 = vmax.f32 %v2003, 0.0
    %v2834 = vmax.f32 %v2610, 0.0
    %v2835 = vmax.f32 %v2007, 0.0
    %v2836 = vmax.f32 %v2009, 0.0
    %v2837 = vmax.f32 %v2615, 0.0
    %v2838 = vmax.f32 %v2011, 0.0
    %v2839 = vmax.f32 %v2013, 0.0
    %v2840 = vmax.f32 %v2618, 0.0
    %v2841 = vmax.f32 %v2017, 0.0
    %v2842 = vmax.f32 %v2019, 0.0
    %v2843 = vmax.f32 %v2623, 0.0
    %v2844 = vmax.f32 %v2021, 0.0
    %v2845 = vmax.f32 %v2023, 0.0
    %v2846 = vmax.f32 %v2626, 0.0
    %v2847 = vmax.f32 %v2027, 0.0
    %v2848 = vmax.f32 %v2029, 0.0
    %v2849 = vmax.f32 %v2631, 0.0
    %v2850 = vmax.f32 %v2031, 0.0
    %v2851 = vmax.f32 %v2033, 0.0
    %v2852 = vmax.f32 %v2634, 0.0
    %v2853 = vmax.f32 %v2037, 0.0
    %v2854 = vmax.f32 %v2039, 0.0
    %v2855 = vmax.f32 %v2639, 0.0
    %v2856 = vmax.f32 %v2041, 0.0
    %v2857 = vmax.f32 %v2043, 0.0
    %v2858 = vmax.f32 %v2642, 0.0
    %v2859 = vmax.f32 %v2047, 0.0
    %v2860 = vmax.f32 %v2049, 0.0
    %v2861 = vmax.f32 %v2647, 0.0
    %v2862 = vmax.f32 %v2051, 0.0
    %v2863 = vmax.f32 %v2053, 0.0
    %v2864 = vmax.f32 %v2650, 0.0
    %v2865 = vmax.f32 %v2057, 0.0
    %v2866 = vmax.f32 %v2059, 0.0
    %v2867 = vmax.f32 %v2655, 0.0
    %v2868 = vmax.f32 %v2061, 0.0
    %v2869 = vmax.f32 %v2063, 0.0
    %v2870 = vmax.f32 %v2658, 0.0
    %v2871 = vmax.f32 %v2067, 0.0
    %v2872 = vmax.f32 %v2069, 0.0
    %v2873 = vmax.f32 %v2663, 0.0
    %v2874 = vmax.f32 %v2071, 0.0
    %v2875 = vmax.f32 %v2073, 0.0
    %v2876 = vmax.f32 %v2666, 0.0
    %v2877 = vmax.f32 %v2077, 0.0
    %v2878 = vmax.f32 %v2079, 0.0
    %v2879 = vmax.f32 %v2671, 0.0
    %v2880 = vmax.f32 %v2081, 0.0
    %v2881 = vmax.f32 %v2083, 0.0
    %v2882 = vmax.f32 %v2674, 0.0
    %v2883 = vmax.f32 %v2087, 0.0
    %v2884 = vmax.f32 %v2089, 0.0
    %v2885 = vmax.f32 %v2679, 0.0
    %v2886 = vmax.f32 %v2091, 0.0
    %v2887 = vmax.f32 %v2093, 0.0
    %v2888 = vmax.f32 %v2682, 0.0
    %v2889 = vmax.f32 %v2097, 0.0
    %v2890 = vmax.f32 %v2099, 0.0
    %v2891 = vmax.f32 %v2687, 0.0
    %v2892 = vmax.f32 %v2101, 0.0
    %v2893 = vmax.f32 %v2103, 0.0
    %v2894 = vmax.f32 %v2690, 0.0
    %v2895 = vmax.f32 %v2107, 0.0
    %v2896 = vmax.f32 %v2109, 0.0
    %v2897 = vmax.f32 %v2695, 0.0
    %v2898 = vmax.f32 %v2111, 0.0
    %v2899 = vmax.f32 %v2113, 0.0
    %v2900 = vmax.f32 %v2698, 0.0
    %v2901 = vmax.f32 %v2117, 0.0
    %v2902 = vmax.f32 %v2119, 0.0
    %v2903 = vmax.f32 %v2703, 0.0
    %v2904 = vmax.f32 %v2121, 0.0
    %v2905 = vmax.f32 %v2123, 0.0
    %v2906 = vmax.f32 %v2706, 0.0
    %v2907 = vmax.f32 %v2127, 0.0
    %v2908 = vmax.f32 %v2129, 0.0
    %v2909 = vmax.f32 %v2711, 0.0
    %v2910 = vmax.f32 %v2131, 0.0
    %v2911 = vmax.f32 %v2133, 0.0
    %v2912 = vmax.f32 %v2714, 0.0
    %v2913 = vmax.f32 %v2137, 0.0
    %v2914 = vmax.f32 %v2139, 0.0
    %v2915 = vmax.f32 %v2719, 0.0
    %v2916 = vmax.f32 %v2141, 0.0
    %v2917 = vmax.f32 %v2143, 0.0
    %v2918 = vmax.f32 %v2722, 0.0
    %v2919 = vmax.f32 %v2147, 0.0
    %v2920 = vmax.f32 %v2149, 0.0
    %v2921 = vmax.f32 %v2727, 0.0
    %v2922 = vmax.f32 %v2151, 0.0
    %v2923 = vmax.f32 %v2153, 0.0
    %v2924 = vmax.f32 %v2730, 0.0
    %v2925 = vpack.c.bf16 %v2736, %v2733
    %v2926 = vpack.c.bf16 %v2737, %v2734
    %v2927 = vpack.c.bf16 %v2738, %v2735
    %v2928 = vpack.c.bf16 %v2742, %v2739
    %v2929 = vpack.c.bf16 %v2743, %v2740
    %v2930 = vpack.c.bf16 %v2744, %v2741
    %v2931 = vpack.c.bf16 %v2748, %v2745
    %v2932 = vpack.c.bf16 %v2749, %v2746
    %v2933 = vpack.c.bf16 %v2750, %v2747
    %v2934 = vpack.c.bf16 %v2754, %v2751
    %v2935 = vpack.c.bf16 %v2755, %v2752
    %v2936 = vpack.c.bf16 %v2756, %v2753
    %v2937 = vpack.c.bf16 %v2760, %v2757
    %v2938 = vpack.c.bf16 %v2761, %v2758
    %v2939 = vpack.c.bf16 %v2762, %v2759
    %v2940 = vpack.c.bf16 %v2766, %v2763
    %v2941 = vpack.c.bf16 %v2767, %v2764
    %v2942 = vpack.c.bf16 %v2768, %v2765
    %v2943 = vpack.c.bf16 %v2772, %v2769
    %v2944 = vpack.c.bf16 %v2773, %v2770
    %v2945 = vpack.c.bf16 %v2774, %v2771
    %v2946 = vpack.c.bf16 %v2778, %v2775
    %v2947 = vpack.c.bf16 %v2779, %v2776
    %v2948 = vpack.c.bf16 %v2780, %v2777
    %v2949 = vpack.c.bf16 %v2784, %v2781
    %v2950 = vpack.c.bf16 %v2785, %v2782
    %v2951 = vpack.c.bf16 %v2786, %v2783
    %v2952 = vpack.c.bf16 %v2790, %v2787
    %v2953 = vpack.c.bf16 %v2791, %v2788
    %v2954 = vpack.c.bf16 %v2792, %v2789
    %v2955 = vpack.c.bf16 %v2796, %v2793
    %v2956 = vpack.c.bf16 %v2797, %v2794
    %v2957 = vpack.c.bf16 %v2798, %v2795
    %v2958 = vpack.c.bf16 %v2802, %v2799
    %v2959 = vpack.c.bf16 %v2803, %v2800
    %v2960 = vpack.c.bf16 %v2804, %v2801
    %v2961 = vpack.c.bf16 %v2808, %v2805
    %v2962 = vpack.c.bf16 %v2809, %v2806
    %v2963 = vpack.c.bf16 %v2810, %v2807
    %v2964 = vpack.c.bf16 %v2814, %v2811
    %v2965 = vpack.c.bf16 %v2815, %v2812
    %v2966 = vpack.c.bf16 %v2816, %v2813
    %v2967 = vpack.c.bf16 %v2820, %v2817
    %v2968 = vpack.c.bf16 %v2821, %v2818
    %v2969 = vpack.c.bf16 %v2822, %v2819
    %v2970 = vpack.c.bf16 %v2826, %v2823
    %v2971 = vpack.c.bf16 %v2827, %v2824
    %v2972 = vpack.c.bf16 %v2828, %v2825
    %v2973 = vpack.c.bf16 %v2832, %v2829
    %v2974 = vpack.c.bf16 %v2833, %v2830
    %v2975 = vpack.c.bf16 %v2834, %v2831
    %v2976 = vpack.c.bf16 %v2838, %v2835
    %v2977 = vpack.c.bf16 %v2839, %v2836
    %v2978 = vpack.c.bf16 %v2840, %v2837
    %v2979 = vpack.c.bf16 %v2844, %v2841
    %v2980 = vpack.c.bf16 %v2845, %v2842
    %v2981 = vpack.c.bf16 %v2846, %v2843
    %v2982 = vpack.c.bf16 %v2850, %v2847
    %v2983 = vpack.c.bf16 %v2851, %v2848
    %v2984 = vpack.c.bf16 %v2852, %v2849
    %v2985 = vpack.c.bf16 %v2856, %v2853
    %v2986 = vpack.c.bf16 %v2857, %v2854
    %v2987 = vpack.c.bf16 %v2858, %v2855
    %v2988 = vpack.c.bf16 %v2862, %v2859
    %v2989 = vpack.c.bf16 %v2863, %v2860
    %v2990 = vpack.c.bf16 %v2864, %v2861
    %v2991 = vpack.c.bf16 %v2868, %v2865
    %v2992 = vpack.c.bf16 %v2869, %v2866
    %v2993 = vpack.c.bf16 %v2870, %v2867
    %v2994 = vpack.c.bf16 %v2874, %v2871
    %v2995 = vpack.c.bf16 %v2875, %v2872
    %v2996 = vpack.c.bf16 %v2876, %v2873
    %v2997 = vpack.c.bf16 %v2880, %v2877
    %v2998 = vpack.c.bf16 %v2881, %v2878
    %v2999 = vpack.c.bf16 %v2882, %v2879
    %v3000 = vpack.c.bf16 %v2886, %v2883
    %v3001 = vpack.c.bf16 %v2887, %v2884
    %v3002 = vpack.c.bf16 %v2888, %v2885
    %v3003 = vpack.c.bf16 %v2892, %v2889
    %v3004 = vpack.c.bf16 %v2893, %v2890
    %v3005 = vpack.c.bf16 %v2894, %v2891
    %v3006 = vpack.c.bf16 %v2898, %v2895
    %v3007 = vpack.c.bf16 %v2899, %v2896
    %v3008 = vpack.c.bf16 %v2900, %v2897
    %v3009 = vpack.c.bf16 %v2904, %v2901
    %v3010 = vpack.c.bf16 %v2905, %v2902
    %v3011 = vpack.c.bf16 %v2906, %v2903
    %v3012 = vpack.c.bf16 %v2910, %v2907
    %v3013 = vpack.c.bf16 %v2911, %v2908
    %v3014 = vpack.c.bf16 %v2912, %v2909
    %v3015 = vpack.c.bf16 %v2916, %v2913
    %v3016 = vpack.c.bf16 %v2917, %v2914
    %v3017 = vpack.c.bf16 %v2918, %v2915
    %v3018 = vpack.c.bf16 %v2922, %v2919
    %v3019 = vpack.c.bf16 %v2923, %v2920
    %v3020 = vpack.c.bf16 %v2924, %v2921
    %v3117 = vunpack.c.l.b16 %v2925
    %v3118 = vunpack.c.l.b16 %v2926
    %v3119 = vunpack.c.l.b16 %v2927
    %v3120 = vunpack.c.h.b16 %v2925
    %v3121 = vunpack.c.h.b16 %v2926
    %v3122 = vunpack.c.h.b16 %v2927
    %v3123 = vunpack.c.l.b16 %v2928
    %v3124 = vunpack.c.l.b16 %v2929
    %v3125 = vunpack.c.l.b16 %v2930
    %v3126 = vunpack.c.h.b16 %v2928
    %v3127 = vunpack.c.h.b16 %v2929
    %v3128 = vunpack.c.h.b16 %v2930
    %v3129 = vunpack.c.l.b16 %v2931
    %v3130 = vunpack.c.l.b16 %v2932
    %v3131 = vunpack.c.l.b16 %v2933
    %v3132 = vunpack.c.h.b16 %v2931
    %v3133 = vunpack.c.h.b16 %v2932
    %v3134 = vunpack.c.h.b16 %v2933
    %v3135 = vunpack.c.l.b16 %v2934
    %v3136 = vunpack.c.l.b16 %v2935
    %v3137 = vunpack.c.l.b16 %v2936
    %v3138 = vunpack.c.h.b16 %v2934
    %v3139 = vunpack.c.h.b16 %v2935
    %v3140 = vunpack.c.h.b16 %v2936
    %v3141 = vunpack.c.l.b16 %v2937
    %v3142 = vunpack.c.l.b16 %v2938
    %v3143 = vunpack.c.l.b16 %v2939
    %v3144 = vunpack.c.h.b16 %v2937
    %v3145 = vunpack.c.h.b16 %v2938
    %v3146 = vunpack.c.h.b16 %v2939
    %v3147 = vunpack.c.l.b16 %v2940
    %v3148 = vunpack.c.l.b16 %v2941
    %v3149 = vunpack.c.l.b16 %v2942
    %v3150 = vunpack.c.h.b16 %v2940
    %v3151 = vunpack.c.h.b16 %v2941
    %v3152 = vunpack.c.h.b16 %v2942
    %v3153 = vunpack.c.l.b16 %v2943
    %v3154 = vunpack.c.l.b16 %v2944
    %v3155 = vunpack.c.l.b16 %v2945
    %v3156 = vunpack.c.h.b16 %v2943
    %v3157 = vunpack.c.h.b16 %v2944
    %v3158 = vunpack.c.h.b16 %v2945
    %v3159 = vunpack.c.l.b16 %v2946
    %v3160 = vunpack.c.l.b16 %v2947
    %v3161 = vunpack.c.l.b16 %v2948
    %v3162 = vunpack.c.h.b16 %v2946
    %v3163 = vunpack.c.h.b16 %v2947
    %v3164 = vunpack.c.h.b16 %v2948
    %v3165 = vunpack.c.l.b16 %v2949
    %v3166 = vunpack.c.l.b16 %v2950
    %v3167 = vunpack.c.l.b16 %v2951
    %v3168 = vunpack.c.h.b16 %v2949
    %v3169 = vunpack.c.h.b16 %v2950
    %v3170 = vunpack.c.h.b16 %v2951
    %v3171 = vunpack.c.l.b16 %v2952
    %v3172 = vunpack.c.l.b16 %v2953
    %v3173 = vunpack.c.l.b16 %v2954
    %v3174 = vunpack.c.h.b16 %v2952
    %v3175 = vunpack.c.h.b16 %v2953
    %v3176 = vunpack.c.h.b16 %v2954
    %v3177 = vunpack.c.l.b16 %v2955
    %v3178 = vunpack.c.l.b16 %v2956
    %v3179 = vunpack.c.l.b16 %v2957
    %v3180 = vunpack.c.h.b16 %v2955
    %v3181 = vunpack.c.h.b16 %v2956
    %v3182 = vunpack.c.h.b16 %v2957
    %v3183 = vunpack.c.l.b16 %v2958
    %v3184 = vunpack.c.l.b16 %v2959
    %v3185 = vunpack.c.l.b16 %v2960
    %v3186 = vunpack.c.h.b16 %v2958
    %v3187 = vunpack.c.h.b16 %v2959
    %v3188 = vunpack.c.h.b16 %v2960
    %v3189 = vunpack.c.l.b16 %v2961
    %v3190 = vunpack.c.l.b16 %v2962
    %v3191 = vunpack.c.l.b16 %v2963
    %v3192 = vunpack.c.h.b16 %v2961
    %v3193 = vunpack.c.h.b16 %v2962
    %v3194 = vunpack.c.h.b16 %v2963
    %v3195 = vunpack.c.l.b16 %v2964
    %v3196 = vunpack.c.l.b16 %v2965
    %v3197 = vunpack.c.l.b16 %v2966
    %v3198 = vunpack.c.h.b16 %v2964
    %v3199 = vunpack.c.h.b16 %v2965
    %v3200 = vunpack.c.h.b16 %v2966
    %v3201 = vunpack.c.l.b16 %v2967
    %v3202 = vunpack.c.l.b16 %v2968
    %v3203 = vunpack.c.l.b16 %v2969
    %v3204 = vunpack.c.h.b16 %v2967
    %v3205 = vunpack.c.h.b16 %v2968
    %v3206 = vunpack.c.h.b16 %v2969
    %v3207 = vunpack.c.l.b16 %v2970
    %v3208 = vunpack.c.l.b16 %v2971
    %v3209 = vunpack.c.l.b16 %v2972
    %v3210 = vunpack.c.h.b16 %v2970
    %v3211 = vunpack.c.h.b16 %v2971
    %v3212 = vunpack.c.h.b16 %v2972
    %v3213 = vunpack.c.l.b16 %v2973
    %v3214 = vunpack.c.l.b16 %v2974
    %v3215 = vunpack.c.l.b16 %v2975
    %v3216 = vunpack.c.h.b16 %v2973
    %v3217 = vunpack.c.h.b16 %v2974
    %v3218 = vunpack.c.h.b16 %v2975
    %v3219 = vunpack.c.l.b16 %v2976
    %v3220 = vunpack.c.l.b16 %v2977
    %v3221 = vunpack.c.l.b16 %v2978
    %v3222 = vunpack.c.h.b16 %v2976
    %v3223 = vunpack.c.h.b16 %v2977
    %v3224 = vunpack.c.h.b16 %v2978
    %v3225 = vunpack.c.l.b16 %v2979
    %v3226 = vunpack.c.l.b16 %v2980
    %v3227 = vunpack.c.l.b16 %v2981
    %v3228 = vunpack.c.h.b16 %v2979
    %v3229 = vunpack.c.h.b16 %v2980
    %v3230 = vunpack.c.h.b16 %v2981
    %v3231 = vunpack.c.l.b16 %v2982
    %v3232 = vunpack.c.l.b16 %v2983
    %v3233 = vunpack.c.l.b16 %v2984
    %v3234 = vunpack.c.h.b16 %v2982
    %v3235 = vunpack.c.h.b16 %v2983
    %v3236 = vunpack.c.h.b16 %v2984
    %v3237 = vunpack.c.l.b16 %v2985
    %v3238 = vunpack.c.l.b16 %v2986
    %v3239 = vunpack.c.l.b16 %v2987
    %v3240 = vunpack.c.h.b16 %v2985
    %v3241 = vunpack.c.h.b16 %v2986
    %v3242 = vunpack.c.h.b16 %v2987
    %v3243 = vunpack.c.l.b16 %v2988
    %v3244 = vunpack.c.l.b16 %v2989
    %v3245 = vunpack.c.l.b16 %v2990
    %v3246 = vunpack.c.h.b16 %v2988
    %v3247 = vunpack.c.h.b16 %v2989
    %v3248 = vunpack.c.h.b16 %v2990
    %v3249 = vunpack.c.l.b16 %v2991
    %v3250 = vunpack.c.l.b16 %v2992
    %v3251 = vunpack.c.l.b16 %v2993
    %v3252 = vunpack.c.h.b16 %v2991
    %v3253 = vunpack.c.h.b16 %v2992
    %v3254 = vunpack.c.h.b16 %v2993
    %v3255 = vunpack.c.l.b16 %v2994
    %v3256 = vunpack.c.l.b16 %v2995
    %v3257 = vunpack.c.l.b16 %v2996
    %v3258 = vunpack.c.h.b16 %v2994
    %v3259 = vunpack.c.h.b16 %v2995
    %v3260 = vunpack.c.h.b16 %v2996
    %v3261 = vunpack.c.l.b16 %v2997
    %v3262 = vunpack.c.l.b16 %v2998
    %v3263 = vunpack.c.l.b16 %v2999
    %v3264 = vunpack.c.h.b16 %v2997
    %v3265 = vunpack.c.h.b16 %v2998
    %v3266 = vunpack.c.h.b16 %v2999
    %v3267 = vunpack.c.l.b16 %v3000
    %v3268 = vunpack.c.l.b16 %v3001
    %v3269 = vunpack.c.l.b16 %v3002
    %v3270 = vunpack.c.h.b16 %v3000
    %v3271 = vunpack.c.h.b16 %v3001
    %v3272 = vunpack.c.h.b16 %v3002
    %v3273 = vunpack.c.l.b16 %v3003
    %v3274 = vunpack.c.l.b16 %v3004
    %v3275 = vunpack.c.l.b16 %v3005
    %v3276 = vunpack.c.h.b16 %v3003
    %v3277 = vunpack.c.h.b16 %v3004
    %v3278 = vunpack.c.h.b16 %v3005
    %v3279 = vunpack.c.l.b16 %v3006
    %v3280 = vunpack.c.l.b16 %v3007
    %v3281 = vunpack.c.l.b16 %v3008
    %v3282 = vunpack.c.h.b16 %v3006
    %v3283 = vunpack.c.h.b16 %v3007
    %v3284 = vunpack.c.h.b16 %v3008
    %v3285 = vunpack.c.l.b16 %v3009
    %v3286 = vunpack.c.l.b16 %v3010
    %v3287 = vunpack.c.l.b16 %v3011
    %v3288 = vunpack.c.h.b16 %v3009
    %v3289 = vunpack.c.h.b16 %v3010
    %v3290 = vunpack.c.h.b16 %v3011
    %v3291 = vunpack.c.l.b16 %v3012
    %v3292 = vunpack.c.l.b16 %v3013
    %v3293 = vunpack.c.l.b16 %v3014
    %v3294 = vunpack.c.h.b16 %v3012
    %v3295 = vunpack.c.h.b16 %v3013
    %v3296 = vunpack.c.h.b16 %v3014
    %v3297 = vunpack.c.l.b16 %v3015
    %v3298 = vunpack.c.l.b16 %v3016
    %v3299 = vunpack.c.l.b16 %v3017
    %v3300 = vunpack.c.h.b16 %v3015
    %v3301 = vunpack.c.h.b16 %v3016
    %v3302 = vunpack.c.h.b16 %v3017
    %v3303 = vunpack.c.l.b16 %v3018
    %v3304 = vunpack.c.l.b16 %v3019
    %v3305 = vunpack.c.l.b16 %v3020
    %v3306 = vunpack.c.h.b16 %v3018
    %v3307 = vunpack.c.h.b16 %v3019
    %v3308 = vunpack.c.h.b16 %v3020
    %v3309 = vpack.c.b16 %v3118, %v3117
    %v3310 = vpack.c.b16 %v3119, %v3119
    %v3311 = vpack.c.b16 %v3121, %v3120
    %v3312 = vpack.c.b16 %v3122, %v3122
    %v3313 = vpack.c.b16 %v3124, %v3123
    %v3314 = vpack.c.b16 %v3125, %v3125
    %v3315 = vpack.c.b16 %v3127, %v3126
    %v3316 = vpack.c.b16 %v3128, %v3128
    %v3317 = vpack.c.b16 %v3130, %v3129
    %v3318 = vpack.c.b16 %v3131, %v3131
    %v3319 = vpack.c.b16 %v3133, %v3132
    %v3320 = vpack.c.b16 %v3134, %v3134
    %v3321 = vpack.c.b16 %v3136, %v3135
    %v3322 = vpack.c.b16 %v3137, %v3137
    %v3323 = vpack.c.b16 %v3139, %v3138
    %v3324 = vpack.c.b16 %v3140, %v3140
    %v3325 = vpack.c.b16 %v3142, %v3141
    %v3326 = vpack.c.b16 %v3143, %v3143
    %v3327 = vpack.c.b16 %v3145, %v3144
    %v3328 = vpack.c.b16 %v3146, %v3146
    %v3329 = vpack.c.b16 %v3148, %v3147
    %v3330 = vpack.c.b16 %v3149, %v3149
    %v3331 = vpack.c.b16 %v3151, %v3150
    %v3332 = vpack.c.b16 %v3152, %v3152
    %v3333 = vpack.c.b16 %v3154, %v3153
    %v3334 = vpack.c.b16 %v3155, %v3155
    %v3335 = vpack.c.b16 %v3157, %v3156
    %v3336 = vpack.c.b16 %v3158, %v3158
    %v3337 = vpack.c.b16 %v3160, %v3159
    %v3338 = vpack.c.b16 %v3161, %v3161
    %v3339 = vpack.c.b16 %v3163, %v3162
    %v3340 = vpack.c.b16 %v3164, %v3164
    %v3341 = vpack.c.b16 %v3166, %v3165
    %v3342 = vpack.c.b16 %v3167, %v3167
    %v3343 = vpack.c.b16 %v3169, %v3168
    %v3344 = vpack.c.b16 %v3170, %v3170
    %v3345 = vpack.c.b16 %v3172, %v3171
    %v3346 = vpack.c.b16 %v3173, %v3173
    %v3347 = vpack.c.b16 %v3175, %v3174
    %v3348 = vpack.c.b16 %v3176, %v3176
    %v3349 = vpack.c.b16 %v3178, %v3177
    %v3350 = vpack.c.b16 %v3179, %v3179
    %v3351 = vpack.c.b16 %v3181, %v3180
    %v3352 = vpack.c.b16 %v3182, %v3182
    %v3353 = vpack.c.b16 %v3184, %v3183
    %v3354 = vpack.c.b16 %v3185, %v3185
    %v3355 = vpack.c.b16 %v3187, %v3186
    %v3356 = vpack.c.b16 %v3188, %v3188
    %v3357 = vpack.c.b16 %v3190, %v3189
    %v3358 = vpack.c.b16 %v3191, %v3191
    %v3359 = vpack.c.b16 %v3193, %v3192
    %v3360 = vpack.c.b16 %v3194, %v3194
    %v3361 = vpack.c.b16 %v3196, %v3195
    %v3362 = vpack.c.b16 %v3197, %v3197
    %v3363 = vpack.c.b16 %v3199, %v3198
    %v3364 = vpack.c.b16 %v3200, %v3200
    %v3365 = vpack.c.b16 %v3202, %v3201
    %v3366 = vpack.c.b16 %v3203, %v3203
    %v3367 = vpack.c.b16 %v3205, %v3204
    %v3368 = vpack.c.b16 %v3206, %v3206
    %v3369 = vpack.c.b16 %v3208, %v3207
    %v3370 = vpack.c.b16 %v3209, %v3209
    %v3371 = vpack.c.b16 %v3211, %v3210
    %v3372 = vpack.c.b16 %v3212, %v3212
    %v3373 = vpack.c.b16 %v3214, %v3213
    %v3374 = vpack.c.b16 %v3215, %v3215
    %v3375 = vpack.c.b16 %v3217, %v3216
    %v3376 = vpack.c.b16 %v3218, %v3218
    %v3377 = vpack.c.b16 %v3220, %v3219
    %v3378 = vpack.c.b16 %v3221, %v3221
    %v3379 = vpack.c.b16 %v3223, %v3222
    %v3380 = vpack.c.b16 %v3224, %v3224
    %v3381 = vpack.c.b16 %v3226, %v3225
    %v3382 = vpack.c.b16 %v3227, %v3227
    %v3383 = vpack.c.b16 %v3229, %v3228
    %v3384 = vpack.c.b16 %v3230, %v3230
    %v3385 = vpack.c.b16 %v3232, %v3231
    %v3386 = vpack.c.b16 %v3233, %v3233
    %v3387 = vpack.c.b16 %v3235, %v3234
    %v3388 = vpack.c.b16 %v3236, %v3236
    %v3389 = vpack.c.b16 %v3238, %v3237
    %v3390 = vpack.c.b16 %v3239, %v3239
    %v3391 = vpack.c.b16 %v3241, %v3240
    %v3392 = vpack.c.b16 %v3242, %v3242
    %v3393 = vpack.c.b16 %v3244, %v3243
    %v3394 = vpack.c.b16 %v3245, %v3245
    %v3395 = vpack.c.b16 %v3247, %v3246
    %v3396 = vpack.c.b16 %v3248, %v3248
    %v3397 = vpack.c.b16 %v3250, %v3249
    %v3398 = vpack.c.b16 %v3251, %v3251
    %v3399 = vpack.c.b16 %v3253, %v3252
    %v3400 = vpack.c.b16 %v3254, %v3254
    %v3401 = vpack.c.b16 %v3256, %v3255
    %v3402 = vpack.c.b16 %v3257, %v3257
    %v3403 = vpack.c.b16 %v3259, %v3258
    %v3404 = vpack.c.b16 %v3260, %v3260
    %v3405 = vpack.c.b16 %v3262, %v3261
    %v3406 = vpack.c.b16 %v3263, %v3263
    %v3407 = vpack.c.b16 %v3265, %v3264
    %v3408 = vpack.c.b16 %v3266, %v3266
    %v3409 = vpack.c.b16 %v3268, %v3267
    %v3410 = vpack.c.b16 %v3269, %v3269
    %v3411 = vpack.c.b16 %v3271, %v3270
    %v3412 = vpack.c.b16 %v3272, %v3272
    %v3413 = vpack.c.b16 %v3274, %v3273
    %v3414 = vpack.c.b16 %v3275, %v3275
    %v3415 = vpack.c.b16 %v3277, %v3276
    %v3416 = vpack.c.b16 %v3278, %v3278
    %v3417 = vpack.c.b16 %v3280, %v3279
    %v3418 = vpack.c.b16 %v3281, %v3281
    %v3419 = vpack.c.b16 %v3283, %v3282
    %v3420 = vpack.c.b16 %v3284, %v3284
    %v3421 = vpack.c.b16 %v3286, %v3285
    %v3422 = vpack.c.b16 %v3287, %v3287
    %v3423 = vpack.c.b16 %v3289, %v3288
    %v3424 = vpack.c.b16 %v3290, %v3290
    %v3425 = vpack.c.b16 %v3292, %v3291
    %v3426 = vpack.c.b16 %v3293, %v3293
    %v3427 = vpack.c.b16 %v3295, %v3294
    %v3428 = vpack.c.b16 %v3296, %v3296
    %v3429 = vpack.c.b16 %v3298, %v3297
    %v3430 = vpack.c.b16 %v3299, %v3299
    %v3431 = vpack.c.b16 %v3301, %v3300
    %v3432 = vpack.c.b16 %v3302, %v3302
    %v3433 = vpack.c.b16 %v3304, %v3303
    %v3434 = vpack.c.b16 %v3305, %v3305
    %v3435 = vpack.c.b16 %v3307, %v3306
    %v3436 = vpack.c.b16 %v3308, %v3308
    %3565 = vst [vmem:[#allocation7] sm:$0xff] %v3309
    %3566 = vst [vmem:[#allocation7 + $0x8] sm:$0xf] %v3310
    %3567 = vst [vmem:[#allocation7 + $0xc] sm:$0xff] %v3311
    %3568 = vst [vmem:[#allocation7 + $0x14] sm:$0xf] %v3312
    %3569 = vst [vmem:[#allocation7 + $0x18] sm:$0xff] %v3313
    %3570 = vst [vmem:[#allocation7 + $0x20] sm:$0xf] %v3314
    %3571 = vst [vmem:[#allocation7 + $0x24] sm:$0xff] %v3315
    %3572 = vst [vmem:[#allocation7 + $0x2c] sm:$0xf] %v3316
    %3573 = vst [vmem:[#allocation7 + $0x30] sm:$0xff] %v3317
    %3574 = vst [vmem:[#allocation7 + $0x38] sm:$0xf] %v3318
    %3575 = vst [vmem:[#allocation7 + $0x3c] sm:$0xff] %v3319
    %3576 = vst [vmem:[#allocation7 + $0x44] sm:$0xf] %v3320
    %3577 = vst [vmem:[#allocation7 + $0x48] sm:$0xff] %v3321
    %3578 = vst [vmem:[#allocation7 + $0x50] sm:$0xf] %v3322
    %3579 = vst [vmem:[#allocation7 + $0x54] sm:$0xff] %v3323
    %3580 = vst [vmem:[#allocation7 + $0x5c] sm:$0xf] %v3324
    %3581 = vst [vmem:[#allocation7 + $0x60] sm:$0xff] %v3325
    %3582 = vst [vmem:[#allocation7 + $0x68] sm:$0xf] %v3326
    %3583 = vst [vmem:[#allocation7 + $0x6c] sm:$0xff] %v3327
    %3584 = vst [vmem:[#allocation7 + $0x74] sm:$0xf] %v3328
    %3585 = vst [vmem:[#allocation7 + $0x78] sm:$0xff] %v3329
    %3586 = vst [vmem:[#allocation7 + $0x80] sm:$0xf] %v3330
    %3587 = vst [vmem:[#allocation7 + $0x84] sm:$0xff] %v3331
    %3588 = vst [vmem:[#allocation7 + $0x8c] sm:$0xf] %v3332
    %3589 = vst [vmem:[#allocation7 + $0x90] sm:$0xff] %v3333
    %3590 = vst [vmem:[#allocation7 + $0x98] sm:$0xf] %v3334
    %3591 = vst [vmem:[#allocation7 + $0x9c] sm:$0xff] %v3335
    %3592 = vst [vmem:[#allocation7 + $0xa4] sm:$0xf] %v3336
    %3593 = vst [vmem:[#allocation7 + $0xa8] sm:$0xff] %v3337
    %3594 = vst [vmem:[#allocation7 + $0xb0] sm:$0xf] %v3338
    %3595 = vst [vmem:[#allocation7 + $0xb4] sm:$0xff] %v3339
    %3596 = vst [vmem:[#allocation7 + $0xbc] sm:$0xf] %v3340
    %3597 = vst [vmem:[#allocation7 + $0xc0] sm:$0xff] %v3341
    %3598 = vst [vmem:[#allocation7 + $0xc8] sm:$0xf] %v3342
    %3599 = vst [vmem:[#allocation7 + $0xcc] sm:$0xff] %v3343
    %3600 = vst [vmem:[#allocation7 + $0xd4] sm:$0xf] %v3344
    %3601 = vst [vmem:[#allocation7 + $0xd8] sm:$0xff] %v3345
    %3602 = vst [vmem:[#allocation7 + $0xe0] sm:$0xf] %v3346
    %3603 = vst [vmem:[#allocation7 + $0xe4] sm:$0xff] %v3347
    %3604 = vst [vmem:[#allocation7 + $0xec] sm:$0xf] %v3348
    %3605 = vst [vmem:[#allocation7 + $0xf0] sm:$0xff] %v3349
    %3606 = vst [vmem:[#allocation7 + $0xf8] sm:$0xf] %v3350
    %3607 = vst [vmem:[#allocation7 + $0xfc] sm:$0xff] %v3351
    %3608 = vst [vmem:[#allocation7 + $0x104] sm:$0xf] %v3352
    %3609 = vst [vmem:[#allocation7 + $0x108] sm:$0xff] %v3353
    %3610 = vst [vmem:[#allocation7 + $0x110] sm:$0xf] %v3354
    %3611 = vst [vmem:[#allocation7 + $0x114] sm:$0xff] %v3355
    %3612 = vst [vmem:[#allocation7 + $0x11c] sm:$0xf] %v3356
    %3613 = vst [vmem:[#allocation7 + $0x120] sm:$0xff] %v3357
    %3614 = vst [vmem:[#allocation7 + $0x128] sm:$0xf] %v3358
    %3615 = vst [vmem:[#allocation7 + $0x12c] sm:$0xff] %v3359
    %3616 = vst [vmem:[#allocation7 + $0x134] sm:$0xf] %v3360
    %3617 = vst [vmem:[#allocation7 + $0x138] sm:$0xff] %v3361
    %3618 = vst [vmem:[#allocation7 + $0x140] sm:$0xf] %v3362
    %3619 = vst [vmem:[#allocation7 + $0x144] sm:$0xff] %v3363
    %3620 = vst [vmem:[#allocation7 + $0x14c] sm:$0xf] %v3364
    %3621 = vst [vmem:[#allocation7 + $0x150] sm:$0xff] %v3365
    %3622 = vst [vmem:[#allocation7 + $0x158] sm:$0xf] %v3366
    %3623 = vst [vmem:[#allocation7 + $0x15c] sm:$0xff] %v3367
    %3624 = vst [vmem:[#allocation7 + $0x164] sm:$0xf] %v3368
    %3625 = vst [vmem:[#allocation7 + $0x168] sm:$0xff] %v3369
    %3626 = vst [vmem:[#allocation7 + $0x170] sm:$0xf] %v3370
    %3627 = vst [vmem:[#allocation7 + $0x174] sm:$0xff] %v3371
    %3628 = vst [vmem:[#allocation7 + $0x17c] sm:$0xf] %v3372
    %3629 = vst [vmem:[#allocation7 + $0x180] sm:$0xff] %v3373
    %3630 = vst [vmem:[#allocation7 + $0x188] sm:$0xf] %v3374
    %3631 = vst [vmem:[#allocation7 + $0x18c] sm:$0xff] %v3375
    %3632 = vst [vmem:[#allocation7 + $0x194] sm:$0xf] %v3376
    %3633 = vst [vmem:[#allocation7 + $0x198] sm:$0xff] %v3377
    %3634 = vst [vmem:[#allocation7 + $0x1a0] sm:$0xf] %v3378
    %3635 = vst [vmem:[#allocation7 + $0x1a4] sm:$0xff] %v3379
    %3636 = vst [vmem:[#allocation7 + $0x1ac] sm:$0xf] %v3380
    %3637 = vst [vmem:[#allocation7 + $0x1b0] sm:$0xff] %v3381
    %3638 = vst [vmem:[#allocation7 + $0x1b8] sm:$0xf] %v3382
    %3639 = vst [vmem:[#allocation7 + $0x1bc] sm:$0xff] %v3383
    %3640 = vst [vmem:[#allocation7 + $0x1c4] sm:$0xf] %v3384
    %3641 = vst [vmem:[#allocation7 + $0x1c8] sm:$0xff] %v3385
    %3642 = vst [vmem:[#allocation7 + $0x1d0] sm:$0xf] %v3386
    %3643 = vst [vmem:[#allocation7 + $0x1d4] sm:$0xff] %v3387
    %3644 = vst [vmem:[#allocation7 + $0x1dc] sm:$0xf] %v3388
    %3645 = vst [vmem:[#allocation7 + $0x1e0] sm:$0xff] %v3389
    %3646 = vst [vmem:[#allocation7 + $0x1e8] sm:$0xf] %v3390
    %3647 = vst [vmem:[#allocation7 + $0x1ec] sm:$0xff] %v3391
    %3648 = vst [vmem:[#allocation7 + $0x1f4] sm:$0xf] %v3392
    %3649 = vst [vmem:[#allocation7 + $0x1f8] sm:$0xff] %v3393
    %3650 = vst [vmem:[#allocation7 + $0x200] sm:$0xf] %v3394
    %3651 = vst [vmem:[#allocation7 + $0x204] sm:$0xff] %v3395
    %3652 = vst [vmem:[#allocation7 + $0x20c] sm:$0xf] %v3396
    %3653 = vst [vmem:[#allocation7 + $0x210] sm:$0xff] %v3397
    %3654 = vst [vmem:[#allocation7 + $0x218] sm:$0xf] %v3398
    %3655 = vst [vmem:[#allocation7 + $0x21c] sm:$0xff] %v3399
    %3656 = vst [vmem:[#allocation7 + $0x224] sm:$0xf] %v3400
    %3657 = vst [vmem:[#allocation7 + $0x228] sm:$0xff] %v3401
    %3658 = vst [vmem:[#allocation7 + $0x230] sm:$0xf] %v3402
    %3659 = vst [vmem:[#allocation7 + $0x234] sm:$0xff] %v3403
    %3660 = vst [vmem:[#allocation7 + $0x23c] sm:$0xf] %v3404
    %3661 = vst [vmem:[#allocation7 + $0x240] sm:$0xff] %v3405
    %3662 = vst [vmem:[#allocation7 + $0x248] sm:$0xf] %v3406
    %3663 = vst [vmem:[#allocation7 + $0x24c] sm:$0xff] %v3407
    %3664 = vst [vmem:[#allocation7 + $0x254] sm:$0xf] %v3408
    %3665 = vst [vmem:[#allocation7 + $0x258] sm:$0xff] %v3409
    %3666 = vst [vmem:[#allocation7 + $0x260] sm:$0xf] %v3410
    %3667 = vst [vmem:[#allocation7 + $0x264] sm:$0xff] %v3411
    %3668 = vst [vmem:[#allocation7 + $0x26c] sm:$0xf] %v3412
    %3669 = vst [vmem:[#allocation7 + $0x270] sm:$0xff] %v3413
    %3670 = vst [vmem:[#allocation7 + $0x278] sm:$0xf] %v3414
    %3671 = vst [vmem:[#allocation7 + $0x27c] sm:$0xff] %v3415
    %3672 = vst [vmem:[#allocation7 + $0x284] sm:$0xf] %v3416
    %3673 = vst [vmem:[#allocation7 + $0x288] sm:$0xff] %v3417
    %3674 = vst [vmem:[#allocation7 + $0x290] sm:$0xf] %v3418
    %3675 = vst [vmem:[#allocation7 + $0x294] sm:$0xff] %v3419
    %3676 = vst [vmem:[#allocation7 + $0x29c] sm:$0xf] %v3420
    %3677 = vst [vmem:[#allocation7 + $0x2a0] sm:$0xff] %v3421
    %3678 = vst [vmem:[#allocation7 + $0x2a8] sm:$0xf] %v3422
    %3679 = vst [vmem:[#allocation7 + $0x2ac] sm:$0xff] %v3423
    %3680 = vst [vmem:[#allocation7 + $0x2b4] sm:$0xf] %v3424
    %3681 = vst [vmem:[#allocation7 + $0x2b8] sm:$0xff] %v3425
    %3682 = vst [vmem:[#allocation7 + $0x2c0] sm:$0xf] %v3426
    %3683 = vst [vmem:[#allocation7 + $0x2c4] sm:$0xff] %v3427
    %3684 = vst [vmem:[#allocation7 + $0x2cc] sm:$0xf] %v3428
    %3685 = vst [vmem:[#allocation7 + $0x2d0] sm:$0xff] %v3429
    %3686 = vst [vmem:[#allocation7 + $0x2d8] sm:$0xf] %v3430
    %3687 = vst [vmem:[#allocation7 + $0x2dc] sm:$0xff] %v3431
    %3688 = vst [vmem:[#allocation7 + $0x2e4] sm:$0xf] %v3432
    %3689 = vst [vmem:[#allocation7 + $0x2e8] sm:$0xff] %v3433
    %3690 = vst [vmem:[#allocation7 + $0x2f0] sm:$0xf] %v3434
    %3691 = vst [vmem:[#allocation7 + $0x2f4] sm:$0xff] %v3435
    %3692 = vst [vmem:[#allocation7 + $0x2fc] sm:$0xf] %v3436
    // Predicated region
    $region18: #{dsi_predictor_forward.6} parent=1 // pred_check
      _
    $region19: #{dsi_predictor_forward.6} parent=1 // pred_check_branch
      %3694 = sbr.rel (0) target = $region21
    $region20: #{dsi_predictor_forward.6} parent=1 // pred_region
      %s3696 = ssub.s32 12288, 12288
      %3697 = vsyncadd [#allocation4], %s3696
      %s3698 = sshll.u32 [#allocation7], 4
      %s3699 = int_to_ptr.vmem [resolvable:$true] %s3698
      %3704 = dma.vmem_to_hbm [thread:$0]  %s3699, 12288, %s2, [#allocation4], 192, 192, 12
    $region21: #{dsi_predictor_forward.6} parent=1 // pred_fallthru
      _
    // Predicated region
    $region22: #{dsi_predictor_forward.6} parent=1 // pred_check
      _
    $region23: #{dsi_predictor_forward.6} parent=1 // pred_check_branch
      %3706 = sbr.rel (0) target = $region25
    $region24: #{dsi_predictor_forward.6} parent=1 // pred_region
      %3707 = dma.done [#allocation4], 12288
    $region25: #{dsi_predictor_forward.6} parent=1 // pred_fallthru
      _
    %3708 = vsyncpa [#allocation3], 1
    %3709 = vsyncpa [#allocation6], 1
    %3710 = vsyncpa [#allocation4], 1

// kernel: dsi_predictor_forward.9
$region0: #{dsi_predictor_forward.9}
  #allocation0 [shape = 'u32[]', space=smem, size = 0x4, offset = 0x4, fixed_abs, tag = 'smem constant byte address 0x4 - core index']
  #allocation1 [shape = 'u32[144,128]{1,0:T(1,128)}', space=vmem, size = 0x12000, scoped, tag = 'internal scratch']
  %s0 = inlined_call_operand.hbm [shape: bf16[8,768], index: 0, kind: input, shape index: {}]
  %s1 = inlined_call_operand.hbm [shape: bf16[768,512], index: 1, kind: input, shape index: {}]
  %s2 = inlined_call_operand.hbm [shape: f32[1,512], index: 2, kind: input, shape index: {}]
  %s3 = inlined_call_operand.hbm [shape: bf16[512,256], index: 3, kind: input, shape index: {}]
  %s4 = inlined_call_operand.hbm [shape: f32[1,256], index: 4, kind: input, shape index: {}]
  %s5 = inlined_call_operand.hbm [shape: bf16[256,128], index: 5, kind: input, shape index: {}]
  %s6 = inlined_call_operand.hbm [shape: f32[1,128], index: 6, kind: input, shape index: {}]
  %s7 = inlined_call_operand.hbm [shape: bf16[128,128], index: 7, kind: input, shape index: {}]
  %s8 = inlined_call_operand.hbm [shape: f32[1,128], index: 8, kind: input, shape index: {}]
  %s9 = inlined_call_operand.hbm [shape: f32[8,128], index: 9, kind: output, shape index: {}]
  %s10 = sld [smem:[#allocation0]]
  $region82: #{dsi_predictor_forward.9} parent=0
    _
  %s12 = ssub.s32 1, %s10
  %s13 = scalar_select 0, %s12, %s10
  $region1: #{dsi_predictor_forward.9} parent=0
    #allocation2 [shape = 'u8[12288]{0}', space=vmem, size = 0x3000, scoped, tag = 'input window, operand 0, single buffered']
    #allocation3 [shape = 's32[1]{0}', space=sflag, size = 0x4, scoped, tag = 'scoped memory for dsi_predictor_forward.9']
    #allocation4 [shape = 's32[1]{0}', space=sflag, size = 0x4, scoped, tag = 'scoped memory for dsi_predictor_forward.9']
    #allocation5 [shape = 'u8[786432]{0}', space=vmem, size = 0xc0000, scoped, tag = 'input window, operand 1, single buffered']
    #allocation6 [shape = 's32[1]{0}', space=sflag, size = 0x4, scoped, tag = 'scoped memory for dsi_predictor_forward.9']
    #allocation7 [shape = 'u8[2048]{0}', space=vmem, size = 0x800, scoped, tag = 'input window, operand 2, single buffered']
    #allocation8 [shape = 'u8[262144]{0}', space=vmem, size = 0x40000, scoped, tag = 'input window, operand 3, single buffered']
    #allocation9 [shape = 's32[1]{0}', space=sflag, size = 0x4, scoped, tag = 'scoped memory for dsi_predictor_forward.9']
    #allocation10 [shape = 'u8[1024]{0}', space=vmem, size = 0x400, scoped, tag = 'input window, operand 4, single buffered']
    #allocation11 [shape = 'u8[65536]{0}', space=vmem, size = 0x10000, scoped, tag = 'input window, operand 5, single buffered']
    #allocation12 [shape = 's32[1]{0}', space=sflag, size = 0x4, scoped, tag = 'scoped memory for dsi_predictor_forward.9']
    #allocation13 [shape = 'u8[512]{0}', space=vmem, size = 0x400, scoped, tag = 'input window, operand 6, single buffered']
    #allocation14 [shape = 'u8[32768]{0}', space=vmem, size = 0x8000, scoped, tag = 'input window, operand 7, single buffered']
    #allocation15 [shape = 's32[1]{0}', space=sflag, size = 0x4, scoped, tag = 'scoped memory for dsi_predictor_forward.9']
    #allocation16 [shape = 'u8[512]{0}', space=vmem, size = 0x400, scoped, tag = 'input window, operand 8, single buffered']
    #allocation17 [shape = 'u8[4096]{0}', space=vmem, size = 0x1000, scoped, tag = 'output window, operand 0, single buffered']
    %14 = vsyncpa [#allocation3], 0
    %15 = vsyncpa [#allocation6], 0
    %16 = vsyncpa [#allocation9], 0
    %17 = vsyncpa [#allocation12], 0
    %18 = vsyncpa [#allocation15], 0
    %19 = vsyncpa [#allocation4], 0
    // Predicated region
    $region2: #{dsi_predictor_forward.9} parent=1 // pred_check
      _
    $region3: #{dsi_predictor_forward.9} parent=1 // pred_check_branch
      %21 = sbr.rel (0) target = $region5
    $region4: #{dsi_predictor_forward.9} parent=1 // pred_region
      %s23 = ssub.s32 384, 384
      %24 = vsyncadd [#allocation3], %s23
      %s26 = sshll.u32 [#allocation2], 4
      %s27 = int_to_ptr.vmem [resolvable:$true] %s26
      %29 = dma.hbm_to_vmem [thread:$0]  %s0, 384, %s27, [#allocation3]
    $region5: #{dsi_predictor_forward.9} parent=1 // pred_fallthru
      _
    // Predicated region
    $region6: #{dsi_predictor_forward.9} parent=1 // pred_check
      _
    $region7: #{dsi_predictor_forward.9} parent=1 // pred_check_branch
      %31 = sbr.rel (0) target = $region9
    $region8: #{dsi_predictor_forward.9} parent=1 // pred_region
      %s33 = ssub.s32 24576, 24576
      %34 = vsyncadd [#allocation6], %s33
      %s35 = sshll.u32 [#allocation5], 4
      %s36 = int_to_ptr.vmem [resolvable:$true] %s35
      %41 = dma.hbm_to_vmem [thread:$0]  %s1, 24576, %s36, [#allocation6], 256, 256, 16
    $region9: #{dsi_predictor_forward.9} parent=1 // pred_fallthru
      _
    // Predicated region
    $region10: #{dsi_predictor_forward.9} parent=1 // pred_check
      _
    $region11: #{dsi_predictor_forward.9} parent=1 // pred_check_branch
      %43 = sbr.rel (0) target = $region13
    $region12: #{dsi_predictor_forward.9} parent=1 // pred_region
      %s45 = ssub.s32 64, 64
      %46 = vsyncadd [#allocation6], %s45
      %s48 = sshll.u32 [#allocation7], 4
      %s49 = int_to_ptr.vmem [resolvable:$true] %s48
      %51 = dma.hbm_to_vmem [thread:$0]  %s2, 64, %s49, [#allocation6]
    $region13: #{dsi_predictor_forward.9} parent=1 // pred_fallthru
      _
    // Predicated region
    $region14: #{dsi_predictor_forward.9} parent=1 // pred_check
      _
    $region15: #{dsi_predictor_forward.9} parent=1 // pred_check_branch
      %53 = sbr.rel (0) target = $region17
    $region16: #{dsi_predictor_forward.9} parent=1 // pred_region
      %s55 = ssub.s32 8192, 8192
      %56 = vsyncadd [#allocation9], %s55
      %s57 = sshll.u32 [#allocation8], 4
      %s58 = int_to_ptr.vmem [resolvable:$true] %s57
      %63 = dma.hbm_to_vmem [thread:$0]  %s3, 8192, %s58, [#allocation9], 128, 128, 8
    $region17: #{dsi_predictor_forward.9} parent=1 // pred_fallthru
      _
    // Predicated region
    $region18: #{dsi_predictor_forward.9} parent=1 // pred_check
      _
    $region19: #{dsi_predictor_forward.9} parent=1 // pred_check_branch
      %65 = sbr.rel (0) target = $region21
    $region20: #{dsi_predictor_forward.9} parent=1 // pred_region
      %s67 = ssub.s32 32, 32
      %68 = vsyncadd [#allocation9], %s67
      %s70 = sshll.u32 [#allocation10], 4
      %s71 = int_to_ptr.vmem [resolvable:$true] %s70
      %73 = dma.hbm_to_vmem [thread:$0]  %s4, 32, %s71, [#allocation9]
    $region21: #{dsi_predictor_forward.9} parent=1 // pred_fallthru
      _
    // Predicated region
    $region22: #{dsi_predictor_forward.9} parent=1 // pred_check
      _
    $region23: #{dsi_predictor_forward.9} parent=1 // pred_check_branch
      %75 = sbr.rel (0) target = $region25
    $region24: #{dsi_predictor_forward.9} parent=1 // pred_region
      %s77 = ssub.s32 2048, 2048
      %78 = vsyncadd [#allocation12], %s77
      %s79 = sshll.u32 [#allocation11], 4
      %s80 = int_to_ptr.vmem [resolvable:$true] %s79
      %85 = dma.hbm_to_vmem [thread:$0]  %s5, 2048, %s80, [#allocation12], 64, 64, 4
    $region25: #{dsi_predictor_forward.9} parent=1 // pred_fallthru
      _
    // Predicated region
    $region26: #{dsi_predictor_forward.9} parent=1 // pred_check
      _
    $region27: #{dsi_predictor_forward.9} parent=1 // pred_check_branch
      %87 = sbr.rel (0) target = $region29
    $region28: #{dsi_predictor_forward.9} parent=1 // pred_region
      %s89 = ssub.s32 16, 16
      %90 = vsyncadd [#allocation12], %s89
      %s92 = sshll.u32 [#allocation13], 4
      %s93 = int_to_ptr.vmem [resolvable:$true] %s92
      %95 = dma.hbm_to_vmem [thread:$0]  %s6, 16, %s93, [#allocation12]
    $region29: #{dsi_predictor_forward.9} parent=1 // pred_fallthru
      _
    // Predicated region
    $region30: #{dsi_predictor_forward.9} parent=1 // pred_check
      _
    $region31: #{dsi_predictor_forward.9} parent=1 // pred_check_branch
      %97 = sbr.rel (0) target = $region33
    $region32: #{dsi_predictor_forward.9} parent=1 // pred_region
      %s99 = ssub.s32 1024, 1024
      %100 = vsyncadd [#allocation15], %s99
      %s101 = sshll.u32 [#allocation14], 4
      %s102 = int_to_ptr.vmem [resolvable:$true] %s101
      %107 = dma.hbm_to_vmem [thread:$0]  %s7, 1024, %s102, [#allocation15], 64, 64, 4
    $region33: #{dsi_predictor_forward.9} parent=1 // pred_fallthru
      _
    // Predicated region
    $region34: #{dsi_predictor_forward.9} parent=1 // pred_check
      _
    $region35: #{dsi_predictor_forward.9} parent=1 // pred_check_branch
      %109 = sbr.rel (0) target = $region37
    $region36: #{dsi_predictor_forward.9} parent=1 // pred_region
      %s111 = ssub.s32 16, 16
      %112 = vsyncadd [#allocation15], %s111
      %s114 = sshll.u32 [#allocation16], 4
      %s115 = int_to_ptr.vmem [resolvable:$true] %s114
      %117 = dma.hbm_to_vmem [thread:$0]  %s8, 16, %s115, [#allocation15]
    $region37: #{dsi_predictor_forward.9} parent=1 // pred_fallthru
      _
    // Predicated region
    $region38: #{dsi_predictor_forward.9} parent=1 // pred_check
      _
    $region39: #{dsi_predictor_forward.9} parent=1 // pred_check_branch
      %119 = sbr.rel (0) target = $region41
    $region40: #{dsi_predictor_forward.9} parent=1 // pred_region
      %120 = dma.done [#allocation3], 384
    $region41: #{dsi_predictor_forward.9} parent=1 // pred_fallthru
      _
    // Predicated region
    $region42: #{dsi_predictor_forward.9} parent=1 // pred_check
      _
    $region43: #{dsi_predictor_forward.9} parent=1 // pred_check_branch
      %122 = sbr.rel (0) target = $region45
    $region44: #{dsi_predictor_forward.9} parent=1 // pred_region
      %123 = dma.done [#allocation6], 24576
    $region45: #{dsi_predictor_forward.9} parent=1 // pred_fallthru
      _
    // Predicated region
    $region46: #{dsi_predictor_forward.9} parent=1 // pred_check
      _
    $region47: #{dsi_predictor_forward.9} parent=1 // pred_check_branch
      %125 = sbr.rel (0) target = $region49
    $region48: #{dsi_predictor_forward.9} parent=1 // pred_region
      %126 = dma.done [#allocation6], 64
    $region49: #{dsi_predictor_forward.9} parent=1 // pred_fallthru
      _
    // Predicated region
    $region50: #{dsi_predictor_forward.9} parent=1 // pred_check
      _
    $region51: #{dsi_predictor_forward.9} parent=1 // pred_check_branch
      %128 = sbr.rel (0) target = $region53
    $region52: #{dsi_predictor_forward.9} parent=1 // pred_region
      %129 = dma.done [#allocation9], 8192
    $region53: #{dsi_predictor_forward.9} parent=1 // pred_fallthru
      _
    // Predicated region
    $region54: #{dsi_predictor_forward.9} parent=1 // pred_check
      _
    $region55: #{dsi_predictor_forward.9} parent=1 // pred_check_branch
      %131 = sbr.rel (0) target = $region57
    $region56: #{dsi_predictor_forward.9} parent=1 // pred_region
      %132 = dma.done [#allocation9], 32
    $region57: #{dsi_predictor_forward.9} parent=1 // pred_fallthru
      _
    // Predicated region
    $region58: #{dsi_predictor_forward.9} parent=1 // pred_check
      _
    $region59: #{dsi_predictor_forward.9} parent=1 // pred_check_branch
      %134 = sbr.rel (0) target = $region61
    $region60: #{dsi_predictor_forward.9} parent=1 // pred_region
      %135 = dma.done [#allocation12], 2048
    $region61: #{dsi_predictor_forward.9} parent=1 // pred_fallthru
      _
    // Predicated region
    $region62: #{dsi_predictor_forward.9} parent=1 // pred_check
      _
    $region63: #{dsi_predictor_forward.9} parent=1 // pred_check_branch
      %137 = sbr.rel (0) target = $region65
    $region64: #{dsi_predictor_forward.9} parent=1 // pred_region
      %138 = dma.done [#allocation12], 16
    $region65: #{dsi_predictor_forward.9} parent=1 // pred_fallthru
      _
    // Predicated region
    $region66: #{dsi_predictor_forward.9} parent=1 // pred_check
      _
    $region67: #{dsi_predictor_forward.9} parent=1 // pred_check_branch
      %140 = sbr.rel (0) target = $region69
    $region68: #{dsi_predictor_forward.9} parent=1 // pred_region
      %141 = dma.done [#allocation15], 1024
    $region69: #{dsi_predictor_forward.9} parent=1 // pred_fallthru
      _
    // Predicated region
    $region70: #{dsi_predictor_forward.9} parent=1 // pred_check
      _
    $region71: #{dsi_predictor_forward.9} parent=1 // pred_check_branch
      %143 = sbr.rel (0) target = $region73
    $region72: #{dsi_predictor_forward.9} parent=1 // pred_region
      %144 = dma.done [#allocation15], 16
    $region73: #{dsi_predictor_forward.9} parent=1 // pred_fallthru
      _
    %v146 = vld [vmem:[#allocation2] sm:$0xff]
    %v147 = vld [vmem:[#allocation2 + $0x8] sm:$0xff]
    %v148 = vld [vmem:[#allocation2 + $0x10] sm:$0xff]
    %v149 = vld [vmem:[#allocation5] sm:$0xff]
    %v150 = vld [vmem:[#allocation5 + $0x8] sm:$0xff]
    %v151 = vld [vmem:[#allocation5 + $0x10] sm:$0xff]
    %v152 = vld [vmem:[#allocation5 + $0x18] sm:$0xff]
    %v153 = vld [vmem:[#allocation5 + $0x20] sm:$0xff]
    %v154 = vld [vmem:[#allocation5 + $0x28] sm:$0xff]
    %v155 = vld [vmem:[#allocation5 + $0x30] sm:$0xff]
    %v156 = vld [vmem:[#allocation5 + $0x38] sm:$0xff]
    %v157 = vld [vmem:[#allocation5 + $0x40] sm:$0xff]
    %v158 = vld [vmem:[#allocation5 + $0x48] sm:$0xff]
    %v159 = vld [vmem:[#allocation5 + $0x50] sm:$0xff]
    %v160 = vld [vmem:[#allocation5 + $0x58] sm:$0xff]
    %v161 = vld [vmem:[#allocation5 + $0x60] sm:$0xff]
    %v162 = vld [vmem:[#allocation5 + $0x68] sm:$0xff]
    %v163 = vld [vmem:[#allocation5 + $0x70] sm:$0xff]
    %v164 = vld [vmem:[#allocation5 + $0x78] sm:$0xff]
    %v165 = vld [vmem:[#allocation5 + $0x80] sm:$0xff]
    %v166 = vld [vmem:[#allocation5 + $0x88] sm:$0xff]
    %v167 = vld [vmem:[#allocation5 + $0x90] sm:$0xff]
    %v168 = vld [vmem:[#allocation5 + $0x98] sm:$0xff]
    %v169 = vld [vmem:[#allocation5 + $0xa0] sm:$0xff]
    %v170 = vld [vmem:[#allocation5 + $0xa8] sm:$0xff]
    %v171 = vld [vmem:[#allocation5 + $0xb0] sm:$0xff]
    %v172 = vld [vmem:[#allocation5 + $0xb8] sm:$0xff]
    %v173 = vld [vmem:[#allocation5 + $0xc0] sm:$0xff]
    %v174 = vld [vmem:[#allocation5 + $0xc8] sm:$0xff]
    %v175 = vld [vmem:[#allocation5 + $0xd0] sm:$0xff]
    %v176 = vld [vmem:[#allocation5 + $0xd8] sm:$0xff]
    %v177 = vld [vmem:[#allocation5 + $0xe0] sm:$0xff]
    %v178 = vld [vmem:[#allocation5 + $0xe8] sm:$0xff]
    %v179 = vld [vmem:[#allocation5 + $0xf0] sm:$0xff]
    %v180 = vld [vmem:[#allocation5 + $0xf8] sm:$0xff]
    %v181 = vld [vmem:[#allocation5 + $0x100] sm:$0xff]
    %v182 = vld [vmem:[#allocation5 + $0x108] sm:$0xff]
    %v183 = vld [vmem:[#allocation5 + $0x110] sm:$0xff]
    %v184 = vld [vmem:[#allocation5 + $0x118] sm:$0xff]
    %v185 = vld [vmem:[#allocation5 + $0x120] sm:$0xff]
    %v186 = vld [vmem:[#allocation5 + $0x128] sm:$0xff]
    %v187 = vld [vmem:[#allocation5 + $0x130] sm:$0xff]
    %v188 = vld [vmem:[#allocation5 + $0x138] sm:$0xff]
    %v189 = vld [vmem:[#allocation5 + $0x140] sm:$0xff]
    %v190 = vld [vmem:[#allocation5 + $0x148] sm:$0xff]
    %v191 = vld [vmem:[#allocation5 + $0x150] sm:$0xff]
    %v192 = vld [vmem:[#allocation5 + $0x158] sm:$0xff]
    %v193 = vld [vmem:[#allocation5 + $0x160] sm:$0xff]
    %v194 = vld [vmem:[#allocation5 + $0x168] sm:$0xff]
    %v195 = vld [vmem:[#allocation5 + $0x170] sm:$0xff]
    %v196 = vld [vmem:[#allocation5 + $0x178] sm:$0xff]
    %v197 = vld [vmem:[#allocation5 + $0x180] sm:$0xff]
    %v198 = vld [vmem:[#allocation5 + $0x188] sm:$0xff]
    %v199 = vld [vmem:[#allocation5 + $0x190] sm:$0xff]
    %v200 = vld [vmem:[#allocation5 + $0x198] sm:$0xff]
    %v201 = vld [vmem:[#allocation5 + $0x1a0] sm:$0xff]
    %v202 = vld [vmem:[#allocation5 + $0x1a8] sm:$0xff]
    %v203 = vld [vmem:[#allocation5 + $0x1b0] sm:$0xff]
    %v204 = vld [vmem:[#allocation5 + $0x1b8] sm:$0xff]
    %v205 = vld [vmem:[#allocation5 + $0x1c0] sm:$0xff]
    %v206 = vld [vmem:[#allocation5 + $0x1c8] sm:$0xff]
    %v207 = vld [vmem:[#allocation5 + $0x1d0] sm:$0xff]
    %v208 = vld [vmem:[#allocation5 + $0x1d8] sm:$0xff]
    %v209 = vld [vmem:[#allocation5 + $0x1e0] sm:$0xff]
    %v210 = vld [vmem:[#allocation5 + $0x1e8] sm:$0xff]
    %v211 = vld [vmem:[#allocation5 + $0x1f0] sm:$0xff]
    %v212 = vld [vmem:[#allocation5 + $0x1f8] sm:$0xff]
    %v213 = vld [vmem:[#allocation5 + $0x200] sm:$0xff]
    %v214 = vld [vmem:[#allocation5 + $0x208] sm:$0xff]
    %v215 = vld [vmem:[#allocation5 + $0x210] sm:$0xff]
    %v216 = vld [vmem:[#allocation5 + $0x218] sm:$0xff]
    %v217 = vld [vmem:[#allocation5 + $0x220] sm:$0xff]
    %v218 = vld [vmem:[#allocation5 + $0x228] sm:$0xff]
    %v219 = vld [vmem:[#allocation5 + $0x230] sm:$0xff]
    %v220 = vld [vmem:[#allocation5 + $0x238] sm:$0xff]
    %v221 = vld [vmem:[#allocation5 + $0x240] sm:$0xff]
    %v222 = vld [vmem:[#allocation5 + $0x248] sm:$0xff]
    %v223 = vld [vmem:[#allocation5 + $0x250] sm:$0xff]
    %v224 = vld [vmem:[#allocation5 + $0x258] sm:$0xff]
    %v225 = vld [vmem:[#allocation5 + $0x260] sm:$0xff]
    %v226 = vld [vmem:[#allocation5 + $0x268] sm:$0xff]
    %v227 = vld [vmem:[#allocation5 + $0x270] sm:$0xff]
    %v228 = vld [vmem:[#allocation5 + $0x278] sm:$0xff]
    %v229 = vld [vmem:[#allocation5 + $0x280] sm:$0xff]
    %v230 = vld [vmem:[#allocation5 + $0x288] sm:$0xff]
    %v231 = vld [vmem:[#allocation5 + $0x290] sm:$0xff]
    %v232 = vld [vmem:[#allocation5 + $0x298] sm:$0xff]
    %v233 = vld [vmem:[#allocation5 + $0x2a0] sm:$0xff]
    %v234 = vld [vmem:[#allocation5 + $0x2a8] sm:$0xff]
    %v235 = vld [vmem:[#allocation5 + $0x2b0] sm:$0xff]
    %v236 = vld [vmem:[#allocation5 + $0x2b8] sm:$0xff]
    %v237 = vld [vmem:[#allocation5 + $0x2c0] sm:$0xff]
    %v238 = vld [vmem:[#allocation5 + $0x2c8] sm:$0xff]
    %v239 = vld [vmem:[#allocation5 + $0x2d0] sm:$0xff]
    %v240 = vld [vmem:[#allocation5 + $0x2d8] sm:$0xff]
    %v241 = vld [vmem:[#allocation5 + $0x2e0] sm:$0xff]
    %v242 = vld [vmem:[#allocation5 + $0x2e8] sm:$0xff]
    %v243 = vld [vmem:[#allocation5 + $0x2f0] sm:$0xff]
    %v244 = vld [vmem:[#allocation5 + $0x2f8] sm:$0xff]
    %v245 = vld [vmem:[#allocation5 + $0x300] sm:$0xff]
    %v246 = vld [vmem:[#allocation5 + $0x308] sm:$0xff]
    %v247 = vld [vmem:[#allocation5 + $0x310] sm:$0xff]
    %v248 = vld [vmem:[#allocation5 + $0x318] sm:$0xff]
    %v249 = vld [vmem:[#allocation5 + $0x320] sm:$0xff]
    %v250 = vld [vmem:[#allocation5 + $0x328] sm:$0xff]
    %v251 = vld [vmem:[#allocation5 + $0x330] sm:$0xff]
    %v252 = vld [vmem:[#allocation5 + $0x338] sm:$0xff]
    %v253 = vld [vmem:[#allocation5 + $0x340] sm:$0xff]
    %v254 = vld [vmem:[#allocation5 + $0x348] sm:$0xff]
    %v255 = vld [vmem:[#allocation5 + $0x350] sm:$0xff]
    %v256 = vld [vmem:[#allocation5 + $0x358] sm:$0xff]
    %v257 = vld [vmem:[#allocation5 + $0x360] sm:$0xff]
    %v258 = vld [vmem:[#allocation5 + $0x368] sm:$0xff]
    %v259 = vld [vmem:[#allocation5 + $0x370] sm:$0xff]
    %v260 = vld [vmem:[#allocation5 + $0x378] sm:$0xff]
    %v261 = vld [vmem:[#allocation5 + $0x380] sm:$0xff]
    %v262 = vld [vmem:[#allocation5 + $0x388] sm:$0xff]
    %v263 = vld [vmem:[#allocation5 + $0x390] sm:$0xff]
    %v264 = vld [vmem:[#allocation5 + $0x398] sm:$0xff]
    %v265 = vld [vmem:[#allocation5 + $0x3a0] sm:$0xff]
    %v266 = vld [vmem:[#allocation5 + $0x3a8] sm:$0xff]
    %v267 = vld [vmem:[#allocation5 + $0x3b0] sm:$0xff]
    %v268 = vld [vmem:[#allocation5 + $0x3b8] sm:$0xff]
    %v269 = vld [vmem:[#allocation5 + $0x3c0] sm:$0xff]
    %v270 = vld [vmem:[#allocation5 + $0x3c8] sm:$0xff]
    %v271 = vld [vmem:[#allocation5 + $0x3d0] sm:$0xff]
    %v272 = vld [vmem:[#allocation5 + $0x3d8] sm:$0xff]
    %v273 = vld [vmem:[#allocation5 + $0x3e0] sm:$0xff]
    %v274 = vld [vmem:[#allocation5 + $0x3e8] sm:$0xff]
    %v275 = vld [vmem:[#allocation5 + $0x3f0] sm:$0xff]
    %v276 = vld [vmem:[#allocation5 + $0x3f8] sm:$0xff]
    %v277 = vld [vmem:[#allocation5 + $0x400] sm:$0xff]
    %v278 = vld [vmem:[#allocation5 + $0x408] sm:$0xff]
    %v279 = vld [vmem:[#allocation5 + $0x410] sm:$0xff]
    %v280 = vld [vmem:[#allocation5 + $0x418] sm:$0xff]
    %v281 = vld [vmem:[#allocation5 + $0x420] sm:$0xff]
    %v282 = vld [vmem:[#allocation5 + $0x428] sm:$0xff]
    %v283 = vld [vmem:[#allocation5 + $0x430] sm:$0xff]
    %v284 = vld [vmem:[#allocation5 + $0x438] sm:$0xff]
    %v285 = vld [vmem:[#allocation5 + $0x440] sm:$0xff]
    %v286 = vld [vmem:[#allocation5 + $0x448] sm:$0xff]
    %v287 = vld [vmem:[#allocation5 + $0x450] sm:$0xff]
    %v288 = vld [vmem:[#allocation5 + $0x458] sm:$0xff]
    %v289 = vld [vmem:[#allocation5 + $0x460] sm:$0xff]
    %v290 = vld [vmem:[#allocation5 + $0x468] sm:$0xff]
    %v291 = vld [vmem:[#allocation5 + $0x470] sm:$0xff]
    %v292 = vld [vmem:[#allocation5 + $0x478] sm:$0xff]
    %v293 = vld [vmem:[#allocation5 + $0x480] sm:$0xff]
    %v294 = vld [vmem:[#allocation5 + $0x488] sm:$0xff]
    %v295 = vld [vmem:[#allocation5 + $0x490] sm:$0xff]
    %v296 = vld [vmem:[#allocation5 + $0x498] sm:$0xff]
    %v297 = vld [vmem:[#allocation5 + $0x4a0] sm:$0xff]
    %v298 = vld [vmem:[#allocation5 + $0x4a8] sm:$0xff]
    %v299 = vld [vmem:[#allocation5 + $0x4b0] sm:$0xff]
    %v300 = vld [vmem:[#allocation5 + $0x4b8] sm:$0xff]
    %v301 = vld [vmem:[#allocation5 + $0x4c0] sm:$0xff]
    %v302 = vld [vmem:[#allocation5 + $0x4c8] sm:$0xff]
    %v303 = vld [vmem:[#allocation5 + $0x4d0] sm:$0xff]
    %v304 = vld [vmem:[#allocation5 + $0x4d8] sm:$0xff]
    %v305 = vld [vmem:[#allocation5 + $0x4e0] sm:$0xff]
    %v306 = vld [vmem:[#allocation5 + $0x4e8] sm:$0xff]
    %v307 = vld [vmem:[#allocation5 + $0x4f0] sm:$0xff]
    %v308 = vld [vmem:[#allocation5 + $0x4f8] sm:$0xff]
    %v309 = vld [vmem:[#allocation5 + $0x500] sm:$0xff]
    %v310 = vld [vmem:[#allocation5 + $0x508] sm:$0xff]
    %v311 = vld [vmem:[#allocation5 + $0x510] sm:$0xff]
    %v312 = vld [vmem:[#allocation5 + $0x518] sm:$0xff]
    %v313 = vld [vmem:[#allocation5 + $0x520] sm:$0xff]
    %v314 = vld [vmem:[#allocation5 + $0x528] sm:$0xff]
    %v315 = vld [vmem:[#allocation5 + $0x530] sm:$0xff]
    %v316 = vld [vmem:[#allocation5 + $0x538] sm:$0xff]
    %v317 = vld [vmem:[#allocation5 + $0x540] sm:$0xff]
    %v318 = vld [vmem:[#allocation5 + $0x548] sm:$0xff]
    %v319 = vld [vmem:[#allocation5 + $0x550] sm:$0xff]
    %v320 = vld [vmem:[#allocation5 + $0x558] sm:$0xff]
    %v321 = vld [vmem:[#allocation5 + $0x560] sm:$0xff]
    %v322 = vld [vmem:[#allocation5 + $0x568] sm:$0xff]
    %v323 = vld [vmem:[#allocation5 + $0x570] sm:$0xff]
    %v324 = vld [vmem:[#allocation5 + $0x578] sm:$0xff]
    %v325 = vld [vmem:[#allocation5 + $0x580] sm:$0xff]
    %v326 = vld [vmem:[#allocation5 + $0x588] sm:$0xff]
    %v327 = vld [vmem:[#allocation5 + $0x590] sm:$0xff]
    %v328 = vld [vmem:[#allocation5 + $0x598] sm:$0xff]
    %v329 = vld [vmem:[#allocation5 + $0x5a0] sm:$0xff]
    %v330 = vld [vmem:[#allocation5 + $0x5a8] sm:$0xff]
    %v331 = vld [vmem:[#allocation5 + $0x5b0] sm:$0xff]
    %v332 = vld [vmem:[#allocation5 + $0x5b8] sm:$0xff]
    %v333 = vld [vmem:[#allocation5 + $0x5c0] sm:$0xff]
    %v334 = vld [vmem:[#allocation5 + $0x5c8] sm:$0xff]
    %v335 = vld [vmem:[#allocation5 + $0x5d0] sm:$0xff]
    %v336 = vld [vmem:[#allocation5 + $0x5d8] sm:$0xff]
    %v337 = vld [vmem:[#allocation5 + $0x5e0] sm:$0xff]
    %v338 = vld [vmem:[#allocation5 + $0x5e8] sm:$0xff]
    %v339 = vld [vmem:[#allocation5 + $0x5f0] sm:$0xff]
    %v340 = vld [vmem:[#allocation5 + $0x5f8] sm:$0xff]
    %v341 = vld [vmem:[#allocation7] sm:$0xf]
    %v343 = vlaneseq
    %v344 = vshrl.u32 %v343, 7
    %v345 = vsub.s32 0, %v344
    %v346 = vrot.slane %v341, %v345
    %v347 = vlaneseq
    %v348 = vshrl.u32 %v347, 7
    %v349 = vsub.s32 1, %v348
    %v350 = vrot.slane %v341, %v349
    %v351 = vlaneseq
    %v352 = vshrl.u32 %v351, 7
    %v353 = vsub.s32 2, %v352
    %v354 = vrot.slane %v341, %v353
    %v355 = vlaneseq
    %v356 = vshrl.u32 %v355, 7
    %v357 = vsub.s32 3, %v356
    %v358 = vrot.slane %v341, %v357
    %v366 = vunpack.c.l.b16 %v146
    %v367 = vunpack.c.h.b16 %v146
    %v368 = vunpack.c.l.b16 %v147
    %v369 = vunpack.c.h.b16 %v147
    %v370 = vunpack.c.l.b16 %v148
    %v371 = vunpack.c.h.b16 %v148
    %v372 = vpack.c.b16 %v366, %v366
    %v373 = vpack.c.b16 %v367, %v367
    %v374 = vpack.c.b16 %v368, %v368
    %v375 = vpack.c.b16 %v369, %v369
    %v376 = vpack.c.b16 %v370, %v370
    %v377 = vpack.c.b16 %v371, %v371
    %v576 = vunpack.c.l.b16 %v149
    %v577 = vunpack.c.h.b16 %v149
    %v578 = vunpack.c.l.b16 %v150
    %v579 = vunpack.c.h.b16 %v150
    %v580 = vunpack.c.l.b16 %v151
    %v581 = vunpack.c.h.b16 %v151
    %v582 = vunpack.c.l.b16 %v152
    %v583 = vunpack.c.h.b16 %v152
    %v584 = vunpack.c.l.b16 %v153
    %v585 = vunpack.c.h.b16 %v153
    %v586 = vunpack.c.l.b16 %v154
    %v587 = vunpack.c.h.b16 %v154
    %v588 = vunpack.c.l.b16 %v155
    %v589 = vunpack.c.h.b16 %v155
    %v590 = vunpack.c.l.b16 %v156
    %v591 = vunpack.c.h.b16 %v156
    %v592 = vunpack.c.l.b16 %v157
    %v593 = vunpack.c.h.b16 %v157
    %v594 = vunpack.c.l.b16 %v158
    %v595 = vunpack.c.h.b16 %v158
    %v596 = vunpack.c.l.b16 %v159
    %v597 = vunpack.c.h.b16 %v159
    %v598 = vunpack.c.l.b16 %v160
    %v599 = vunpack.c.h.b16 %v160
    %v600 = vunpack.c.l.b16 %v161
    %v601 = vunpack.c.h.b16 %v161
    %v602 = vunpack.c.l.b16 %v162
    %v603 = vunpack.c.h.b16 %v162
    %v604 = vunpack.c.l.b16 %v163
    %v605 = vunpack.c.h.b16 %v163
    %v606 = vunpack.c.l.b16 %v164
    %v607 = vunpack.c.h.b16 %v164
    %v608 = vunpack.c.l.b16 %v165
    %v609 = vunpack.c.h.b16 %v165
    %v610 = vunpack.c.l.b16 %v166
    %v611 = vunpack.c.h.b16 %v166
    %v612 = vunpack.c.l.b16 %v167
    %v613 = vunpack.c.h.b16 %v167
    %v614 = vunpack.c.l.b16 %v168
    %v615 = vunpack.c.h.b16 %v168
    %v616 = vunpack.c.l.b16 %v169
    %v617 = vunpack.c.h.b16 %v169
    %v618 = vunpack.c.l.b16 %v170
    %v619 = vunpack.c.h.b16 %v170
    %v620 = vunpack.c.l.b16 %v171
    %v621 = vunpack.c.h.b16 %v171
    %v622 = vunpack.c.l.b16 %v172
    %v623 = vunpack.c.h.b16 %v172
    %v624 = vunpack.c.l.b16 %v173
    %v625 = vunpack.c.h.b16 %v173
    %v626 = vunpack.c.l.b16 %v174
    %v627 = vunpack.c.h.b16 %v174
    %v628 = vunpack.c.l.b16 %v175
    %v629 = vunpack.c.h.b16 %v175
    %v630 = vunpack.c.l.b16 %v176
    %v631 = vunpack.c.h.b16 %v176
    %v632 = vunpack.c.l.b16 %v177
    %v633 = vunpack.c.h.b16 %v177
    %v634 = vunpack.c.l.b16 %v178
    %v635 = vunpack.c.h.b16 %v178
    %v636 = vunpack.c.l.b16 %v179
    %v637 = vunpack.c.h.b16 %v179
    %v638 = vunpack.c.l.b16 %v180
    %v639 = vunpack.c.h.b16 %v180
    %v640 = vunpack.c.l.b16 %v181
    %v641 = vunpack.c.h.b16 %v181
    %v642 = vunpack.c.l.b16 %v182
    %v643 = vunpack.c.h.b16 %v182
    %v644 = vunpack.c.l.b16 %v183
    %v645 = vunpack.c.h.b16 %v183
    %v646 = vunpack.c.l.b16 %v184
    %v647 = vunpack.c.h.b16 %v184
    %v648 = vunpack.c.l.b16 %v185
    %v649 = vunpack.c.h.b16 %v185
    %v650 = vunpack.c.l.b16 %v186
    %v651 = vunpack.c.h.b16 %v186
    %v652 = vunpack.c.l.b16 %v187
    %v653 = vunpack.c.h.b16 %v187
    %v654 = vunpack.c.l.b16 %v188
    %v655 = vunpack.c.h.b16 %v188
    %v656 = vunpack.c.l.b16 %v189
    %v657 = vunpack.c.h.b16 %v189
    %v658 = vunpack.c.l.b16 %v190
    %v659 = vunpack.c.h.b16 %v190
    %v660 = vunpack.c.l.b16 %v191
    %v661 = vunpack.c.h.b16 %v191
    %v662 = vunpack.c.l.b16 %v192
    %v663 = vunpack.c.h.b16 %v192
    %v664 = vunpack.c.l.b16 %v193
    %v665 = vunpack.c.h.b16 %v193
    %v666 = vunpack.c.l.b16 %v194
    %v667 = vunpack.c.h.b16 %v194
    %v668 = vunpack.c.l.b16 %v195
    %v669 = vunpack.c.h.b16 %v195
    %v670 = vunpack.c.l.b16 %v196
    %v671 = vunpack.c.h.b16 %v196
    %v672 = vunpack.c.l.b16 %v197
    %v673 = vunpack.c.h.b16 %v197
    %v674 = vunpack.c.l.b16 %v198
    %v675 = vunpack.c.h.b16 %v198
    %v676 = vunpack.c.l.b16 %v199
    %v677 = vunpack.c.h.b16 %v199
    %v678 = vunpack.c.l.b16 %v200
    %v679 = vunpack.c.h.b16 %v200
    %v680 = vunpack.c.l.b16 %v201
    %v681 = vunpack.c.h.b16 %v201
    %v682 = vunpack.c.l.b16 %v202
    %v683 = vunpack.c.h.b16 %v202
    %v684 = vunpack.c.l.b16 %v203
    %v685 = vunpack.c.h.b16 %v203
    %v686 = vunpack.c.l.b16 %v204
    %v687 = vunpack.c.h.b16 %v204
    %v688 = vunpack.c.l.b16 %v205
    %v689 = vunpack.c.h.b16 %v205
    %v690 = vunpack.c.l.b16 %v206
    %v691 = vunpack.c.h.b16 %v206
    %v692 = vunpack.c.l.b16 %v207
    %v693 = vunpack.c.h.b16 %v207
    %v694 = vunpack.c.l.b16 %v208
    %v695 = vunpack.c.h.b16 %v208
    %v696 = vunpack.c.l.b16 %v209
    %v697 = vunpack.c.h.b16 %v209
    %v698 = vunpack.c.l.b16 %v210
    %v699 = vunpack.c.h.b16 %v210
    %v700 = vunpack.c.l.b16 %v211
    %v701 = vunpack.c.h.b16 %v211
    %v702 = vunpack.c.l.b16 %v212
    %v703 = vunpack.c.h.b16 %v212
    %v704 = vunpack.c.l.b16 %v213
    %v705 = vunpack.c.h.b16 %v213
    %v706 = vunpack.c.l.b16 %v214
    %v707 = vunpack.c.h.b16 %v214
    %v708 = vunpack.c.l.b16 %v215
    %v709 = vunpack.c.h.b16 %v215
    %v710 = vunpack.c.l.b16 %v216
    %v711 = vunpack.c.h.b16 %v216
    %v712 = vunpack.c.l.b16 %v217
    %v713 = vunpack.c.h.b16 %v217
    %v714 = vunpack.c.l.b16 %v218
    %v715 = vunpack.c.h.b16 %v218
    %v716 = vunpack.c.l.b16 %v219
    %v717 = vunpack.c.h.b16 %v219
    %v718 = vunpack.c.l.b16 %v220
    %v719 = vunpack.c.h.b16 %v220
    %v720 = vunpack.c.l.b16 %v221
    %v721 = vunpack.c.h.b16 %v221
    %v722 = vunpack.c.l.b16 %v222
    %v723 = vunpack.c.h.b16 %v222
    %v724 = vunpack.c.l.b16 %v223
    %v725 = vunpack.c.h.b16 %v223
    %v726 = vunpack.c.l.b16 %v224
    %v727 = vunpack.c.h.b16 %v224
    %v728 = vunpack.c.l.b16 %v225
    %v729 = vunpack.c.h.b16 %v225
    %v730 = vunpack.c.l.b16 %v226
    %v731 = vunpack.c.h.b16 %v226
    %v732 = vunpack.c.l.b16 %v227
    %v733 = vunpack.c.h.b16 %v227
    %v734 = vunpack.c.l.b16 %v228
    %v735 = vunpack.c.h.b16 %v228
    %v736 = vunpack.c.l.b16 %v229
    %v737 = vunpack.c.h.b16 %v229
    %v738 = vunpack.c.l.b16 %v230
    %v739 = vunpack.c.h.b16 %v230
    %v740 = vunpack.c.l.b16 %v231
    %v741 = vunpack.c.h.b16 %v231
    %v742 = vunpack.c.l.b16 %v232
    %v743 = vunpack.c.h.b16 %v232
    %v744 = vunpack.c.l.b16 %v233
    %v745 = vunpack.c.h.b16 %v233
    %v746 = vunpack.c.l.b16 %v234
    %v747 = vunpack.c.h.b16 %v234
    %v748 = vunpack.c.l.b16 %v235
    %v749 = vunpack.c.h.b16 %v235
    %v750 = vunpack.c.l.b16 %v236
    %v751 = vunpack.c.h.b16 %v236
    %v752 = vunpack.c.l.b16 %v237
    %v753 = vunpack.c.h.b16 %v237
    %v754 = vunpack.c.l.b16 %v238
    %v755 = vunpack.c.h.b16 %v238
    %v756 = vunpack.c.l.b16 %v239
    %v757 = vunpack.c.h.b16 %v239
    %v758 = vunpack.c.l.b16 %v240
    %v759 = vunpack.c.h.b16 %v240
    %v760 = vunpack.c.l.b16 %v241
    %v761 = vunpack.c.h.b16 %v241
    %v762 = vunpack.c.l.b16 %v242
    %v763 = vunpack.c.h.b16 %v242
    %v764 = vunpack.c.l.b16 %v243
    %v765 = vunpack.c.h.b16 %v243
    %v766 = vunpack.c.l.b16 %v244
    %v767 = vunpack.c.h.b16 %v244
    %v768 = vunpack.c.l.b16 %v245
    %v769 = vunpack.c.h.b16 %v245
    %v770 = vunpack.c.l.b16 %v246
    %v771 = vunpack.c.h.b16 %v246
    %v772 = vunpack.c.l.b16 %v247
    %v773 = vunpack.c.h.b16 %v247
    %v774 = vunpack.c.l.b16 %v248
    %v775 = vunpack.c.h.b16 %v248
    %v776 = vunpack.c.l.b16 %v249
    %v777 = vunpack.c.h.b16 %v249
    %v778 = vunpack.c.l.b16 %v250
    %v779 = vunpack.c.h.b16 %v250
    %v780 = vunpack.c.l.b16 %v251
    %v781 = vunpack.c.h.b16 %v251
    %v782 = vunpack.c.l.b16 %v252
    %v783 = vunpack.c.h.b16 %v252
    %v784 = vunpack.c.l.b16 %v253
    %v785 = vunpack.c.h.b16 %v253
    %v786 = vunpack.c.l.b16 %v254
    %v787 = vunpack.c.h.b16 %v254
    %v788 = vunpack.c.l.b16 %v255
    %v789 = vunpack.c.h.b16 %v255
    %v790 = vunpack.c.l.b16 %v256
    %v791 = vunpack.c.h.b16 %v256
    %v792 = vunpack.c.l.b16 %v257
    %v793 = vunpack.c.h.b16 %v257
    %v794 = vunpack.c.l.b16 %v258
    %v795 = vunpack.c.h.b16 %v258
    %v796 = vunpack.c.l.b16 %v259
    %v797 = vunpack.c.h.b16 %v259
    %v798 = vunpack.c.l.b16 %v260
    %v799 = vunpack.c.h.b16 %v260
    %v800 = vunpack.c.l.b16 %v261
    %v801 = vunpack.c.h.b16 %v261
    %v802 = vunpack.c.l.b16 %v262
    %v803 = vunpack.c.h.b16 %v262
    %v804 = vunpack.c.l.b16 %v263
    %v805 = vunpack.c.h.b16 %v263
    %v806 = vunpack.c.l.b16 %v264
    %v807 = vunpack.c.h.b16 %v264
    %v808 = vunpack.c.l.b16 %v265
    %v809 = vunpack.c.h.b16 %v265
    %v810 = vunpack.c.l.b16 %v266
    %v811 = vunpack.c.h.b16 %v266
    %v812 = vunpack.c.l.b16 %v267
    %v813 = vunpack.c.h.b16 %v267
    %v814 = vunpack.c.l.b16 %v268
    %v815 = vunpack.c.h.b16 %v268
    %v816 = vunpack.c.l.b16 %v269
    %v817 = vunpack.c.h.b16 %v269
    %v818 = vunpack.c.l.b16 %v270
    %v819 = vunpack.c.h.b16 %v270
    %v820 = vunpack.c.l.b16 %v271
    %v821 = vunpack.c.h.b16 %v271
    %v822 = vunpack.c.l.b16 %v272
    %v823 = vunpack.c.h.b16 %v272
    %v824 = vunpack.c.l.b16 %v273
    %v825 = vunpack.c.h.b16 %v273
    %v826 = vunpack.c.l.b16 %v274
    %v827 = vunpack.c.h.b16 %v274
    %v828 = vunpack.c.l.b16 %v275
    %v829 = vunpack.c.h.b16 %v275
    %v830 = vunpack.c.l.b16 %v276
    %v831 = vunpack.c.h.b16 %v276
    %v832 = vunpack.c.l.b16 %v277
    %v833 = vunpack.c.h.b16 %v277
    %v834 = vunpack.c.l.b16 %v278
    %v835 = vunpack.c.h.b16 %v278
    %v836 = vunpack.c.l.b16 %v279
    %v837 = vunpack.c.h.b16 %v279
    %v838 = vunpack.c.l.b16 %v280
    %v839 = vunpack.c.h.b16 %v280
    %v840 = vunpack.c.l.b16 %v281
    %v841 = vunpack.c.h.b16 %v281
    %v842 = vunpack.c.l.b16 %v282
    %v843 = vunpack.c.h.b16 %v282
    %v844 = vunpack.c.l.b16 %v283
    %v845 = vunpack.c.h.b16 %v283
    %v846 = vunpack.c.l.b16 %v284
    %v847 = vunpack.c.h.b16 %v284
    %v848 = vunpack.c.l.b16 %v285
    %v849 = vunpack.c.h.b16 %v285
    %v850 = vunpack.c.l.b16 %v286
    %v851 = vunpack.c.h.b16 %v286
    %v852 = vunpack.c.l.b16 %v287
    %v853 = vunpack.c.h.b16 %v287
    %v854 = vunpack.c.l.b16 %v288
    %v855 = vunpack.c.h.b16 %v288
    %v856 = vunpack.c.l.b16 %v289
    %v857 = vunpack.c.h.b16 %v289
    %v858 = vunpack.c.l.b16 %v290
    %v859 = vunpack.c.h.b16 %v290
    %v860 = vunpack.c.l.b16 %v291
    %v861 = vunpack.c.h.b16 %v291
    %v862 = vunpack.c.l.b16 %v292
    %v863 = vunpack.c.h.b16 %v292
    %v864 = vunpack.c.l.b16 %v293
    %v865 = vunpack.c.h.b16 %v293
    %v866 = vunpack.c.l.b16 %v294
    %v867 = vunpack.c.h.b16 %v294
    %v868 = vunpack.c.l.b16 %v295
    %v869 = vunpack.c.h.b16 %v295
    %v870 = vunpack.c.l.b16 %v296
    %v871 = vunpack.c.h.b16 %v296
    %v872 = vunpack.c.l.b16 %v297
    %v873 = vunpack.c.h.b16 %v297
    %v874 = vunpack.c.l.b16 %v298
    %v875 = vunpack.c.h.b16 %v298
    %v876 = vunpack.c.l.b16 %v299
    %v877 = vunpack.c.h.b16 %v299
    %v878 = vunpack.c.l.b16 %v300
    %v879 = vunpack.c.h.b16 %v300
    %v880 = vunpack.c.l.b16 %v301
    %v881 = vunpack.c.h.b16 %v301
    %v882 = vunpack.c.l.b16 %v302
    %v883 = vunpack.c.h.b16 %v302
    %v884 = vunpack.c.l.b16 %v303
    %v885 = vunpack.c.h.b16 %v303
    %v886 = vunpack.c.l.b16 %v304
    %v887 = vunpack.c.h.b16 %v304
    %v888 = vunpack.c.l.b16 %v305
    %v889 = vunpack.c.h.b16 %v305
    %v890 = vunpack.c.l.b16 %v306
    %v891 = vunpack.c.h.b16 %v306
    %v892 = vunpack.c.l.b16 %v307
    %v893 = vunpack.c.h.b16 %v307
    %v894 = vunpack.c.l.b16 %v308
    %v895 = vunpack.c.h.b16 %v308
    %v896 = vunpack.c.l.b16 %v309
    %v897 = vunpack.c.h.b16 %v309
    %v898 = vunpack.c.l.b16 %v310
    %v899 = vunpack.c.h.b16 %v310
    %v900 = vunpack.c.l.b16 %v311
    %v901 = vunpack.c.h.b16 %v311
    %v902 = vunpack.c.l.b16 %v312
    %v903 = vunpack.c.h.b16 %v312
    %v904 = vunpack.c.l.b16 %v313
    %v905 = vunpack.c.h.b16 %v313
    %v906 = vunpack.c.l.b16 %v314
    %v907 = vunpack.c.h.b16 %v314
    %v908 = vunpack.c.l.b16 %v315
    %v909 = vunpack.c.h.b16 %v315
    %v910 = vunpack.c.l.b16 %v316
    %v911 = vunpack.c.h.b16 %v316
    %v912 = vunpack.c.l.b16 %v317
    %v913 = vunpack.c.h.b16 %v317
    %v914 = vunpack.c.l.b16 %v318
    %v915 = vunpack.c.h.b16 %v318
    %v916 = vunpack.c.l.b16 %v319
    %v917 = vunpack.c.h.b16 %v319
    %v918 = vunpack.c.l.b16 %v320
    %v919 = vunpack.c.h.b16 %v320
    %v920 = vunpack.c.l.b16 %v321
    %v921 = vunpack.c.h.b16 %v321
    %v922 = vunpack.c.l.b16 %v322
    %v923 = vunpack.c.h.b16 %v322
    %v924 = vunpack.c.l.b16 %v323
    %v925 = vunpack.c.h.b16 %v323
    %v926 = vunpack.c.l.b16 %v324
    %v927 = vunpack.c.h.b16 %v324
    %v928 = vunpack.c.l.b16 %v325
    %v929 = vunpack.c.h.b16 %v325
    %v930 = vunpack.c.l.b16 %v326
    %v931 = vunpack.c.h.b16 %v326
    %v932 = vunpack.c.l.b16 %v327
    %v933 = vunpack.c.h.b16 %v327
    %v934 = vunpack.c.l.b16 %v328
    %v935 = vunpack.c.h.b16 %v328
    %v936 = vunpack.c.l.b16 %v329
    %v937 = vunpack.c.h.b16 %v329
    %v938 = vunpack.c.l.b16 %v330
    %v939 = vunpack.c.h.b16 %v330
    %v940 = vunpack.c.l.b16 %v331
    %v941 = vunpack.c.h.b16 %v331
    %v942 = vunpack.c.l.b16 %v332
    %v943 = vunpack.c.h.b16 %v332
    %v944 = vunpack.c.l.b16 %v333
    %v945 = vunpack.c.h.b16 %v333
    %v946 = vunpack.c.l.b16 %v334
    %v947 = vunpack.c.h.b16 %v334
    %v948 = vunpack.c.l.b16 %v335
    %v949 = vunpack.c.h.b16 %v335
    %v950 = vunpack.c.l.b16 %v336
    %v951 = vunpack.c.h.b16 %v336
    %v952 = vunpack.c.l.b16 %v337
    %v953 = vunpack.c.h.b16 %v337
    %v954 = vunpack.c.l.b16 %v338
    %v955 = vunpack.c.h.b16 %v338
    %v956 = vunpack.c.l.b16 %v339
    %v957 = vunpack.c.h.b16 %v339
    %v958 = vunpack.c.l.b16 %v340
    %v959 = vunpack.c.h.b16 %v340
    %v960 = vpack.c.b16 %v580, %v576
    %v961 = vpack.c.b16 %v581, %v577
    %v962 = vpack.c.b16 %v582, %v578
    %v963 = vpack.c.b16 %v583, %v579
    %v964 = vpack.c.b16 %v588, %v584
    %v965 = vpack.c.b16 %v589, %v585
    %v966 = vpack.c.b16 %v590, %v586
    %v967 = vpack.c.b16 %v591, %v587
    %v968 = vpack.c.b16 %v596, %v592
    %v969 = vpack.c.b16 %v597, %v593
    %v970 = vpack.c.b16 %v598, %v594
    %v971 = vpack.c.b16 %v599, %v595
    %v972 = vpack.c.b16 %v604, %v600
    %v973 = vpack.c.b16 %v605, %v601
    %v974 = vpack.c.b16 %v606, %v602
    %v975 = vpack.c.b16 %v607, %v603
    %v976 = vpack.c.b16 %v612, %v608
    %v977 = vpack.c.b16 %v613, %v609
    %v978 = vpack.c.b16 %v614, %v610
    %v979 = vpack.c.b16 %v615, %v611
    %v980 = vpack.c.b16 %v620, %v616
    %v981 = vpack.c.b16 %v621, %v617
    %v982 = vpack.c.b16 %v622, %v618
    %v983 = vpack.c.b16 %v623, %v619
    %v984 = vpack.c.b16 %v628, %v624
    %v985 = vpack.c.b16 %v629, %v625
    %v986 = vpack.c.b16 %v630, %v626
    %v987 = vpack.c.b16 %v631, %v627
    %v988 = vpack.c.b16 %v636, %v632
    %v989 = vpack.c.b16 %v637, %v633
    %v990 = vpack.c.b16 %v638, %v634
    %v991 = vpack.c.b16 %v639, %v635
    %v992 = vpack.c.b16 %v644, %v640
    %v993 = vpack.c.b16 %v645, %v641
    %v994 = vpack.c.b16 %v646, %v642
    %v995 = vpack.c.b16 %v647, %v643
    %v996 = vpack.c.b16 %v652, %v648
    %v997 = vpack.c.b16 %v653, %v649
    %v998 = vpack.c.b16 %v654, %v650
    %v999 = vpack.c.b16 %v655, %v651
    %v1000 = vpack.c.b16 %v660, %v656
    %v1001 = vpack.c.b16 %v661, %v657
    %v1002 = vpack.c.b16 %v662, %v658
    %v1003 = vpack.c.b16 %v663, %v659
    %v1004 = vpack.c.b16 %v668, %v664
    %v1005 = vpack.c.b16 %v669, %v665
    %v1006 = vpack.c.b16 %v670, %v666
    %v1007 = vpack.c.b16 %v671, %v667
    %v1008 = vpack.c.b16 %v676, %v672
    %v1009 = vpack.c.b16 %v677, %v673
    %v1010 = vpack.c.b16 %v678, %v674
    %v1011 = vpack.c.b16 %v679, %v675
    %v1012 = vpack.c.b16 %v684, %v680
    %v1013 = vpack.c.b16 %v685, %v681
    %v1014 = vpack.c.b16 %v686, %v682
    %v1015 = vpack.c.b16 %v687, %v683
    %v1016 = vpack.c.b16 %v692, %v688
    %v1017 = vpack.c.b16 %v693, %v689
    %v1018 = vpack.c.b16 %v694, %v690
    %v1019 = vpack.c.b16 %v695, %v691
    %v1020 = vpack.c.b16 %v700, %v696
    %v1021 = vpack.c.b16 %v701, %v697
    %v1022 = vpack.c.b16 %v702, %v698
    %v1023 = vpack.c.b16 %v703, %v699
    %v1024 = vpack.c.b16 %v708, %v704
    %v1025 = vpack.c.b16 %v709, %v705
    %v1026 = vpack.c.b16 %v710, %v706
    %v1027 = vpack.c.b16 %v711, %v707
    %v1028 = vpack.c.b16 %v716, %v712
    %v1029 = vpack.c.b16 %v717, %v713
    %v1030 = vpack.c.b16 %v718, %v714
    %v1031 = vpack.c.b16 %v719, %v715
    %v1032 = vpack.c.b16 %v724, %v720
    %v1033 = vpack.c.b16 %v725, %v721
    %v1034 = vpack.c.b16 %v726, %v722
    %v1035 = vpack.c.b16 %v727, %v723
    %v1036 = vpack.c.b16 %v732, %v728
    %v1037 = vpack.c.b16 %v733, %v729
    %v1038 = vpack.c.b16 %v734, %v730
    %v1039 = vpack.c.b16 %v735, %v731
    %v1040 = vpack.c.b16 %v740, %v736
    %v1041 = vpack.c.b16 %v741, %v737
    %v1042 = vpack.c.b16 %v742, %v738
    %v1043 = vpack.c.b16 %v743, %v739
    %v1044 = vpack.c.b16 %v748, %v744
    %v1045 = vpack.c.b16 %v749, %v745
    %v1046 = vpack.c.b16 %v750, %v746
    %v1047 = vpack.c.b16 %v751, %v747
    %v1048 = vpack.c.b16 %v756, %v752
    %v1049 = vpack.c.b16 %v757, %v753
    %v1050 = vpack.c.b16 %v758, %v754
    %v1051 = vpack.c.b16 %v759, %v755
    %v1052 = vpack.c.b16 %v764, %v760
    %v1053 = vpack.c.b16 %v765, %v761
    %v1054 = vpack.c.b16 %v766, %v762
    %v1055 = vpack.c.b16 %v767, %v763
    %v1056 = vpack.c.b16 %v772, %v768
    %v1057 = vpack.c.b16 %v773, %v769
    %v1058 = vpack.c.b16 %v774, %v770
    %v1059 = vpack.c.b16 %v775, %v771
    %v1060 = vpack.c.b16 %v780, %v776
    %v1061 = vpack.c.b16 %v781, %v777
    %v1062 = vpack.c.b16 %v782, %v778
    %v1063 = vpack.c.b16 %v783, %v779
    %v1064 = vpack.c.b16 %v788, %v784
    %v1065 = vpack.c.b16 %v789, %v785
    %v1066 = vpack.c.b16 %v790, %v786
    %v1067 = vpack.c.b16 %v791, %v787
    %v1068 = vpack.c.b16 %v796, %v792
    %v1069 = vpack.c.b16 %v797, %v793
    %v1070 = vpack.c.b16 %v798, %v794
    %v1071 = vpack.c.b16 %v799, %v795
    %v1072 = vpack.c.b16 %v804, %v800
    %v1073 = vpack.c.b16 %v805, %v801
    %v1074 = vpack.c.b16 %v806, %v802
    %v1075 = vpack.c.b16 %v807, %v803
    %v1076 = vpack.c.b16 %v812, %v808
    %v1077 = vpack.c.b16 %v813, %v809
    %v1078 = vpack.c.b16 %v814, %v810
    %v1079 = vpack.c.b16 %v815, %v811
    %v1080 = vpack.c.b16 %v820, %v816
    %v1081 = vpack.c.b16 %v821, %v817
    %v1082 = vpack.c.b16 %v822, %v818
    %v1083 = vpack.c.b16 %v823, %v819
    %v1084 = vpack.c.b16 %v828, %v824
    %v1085 = vpack.c.b16 %v829, %v825
    %v1086 = vpack.c.b16 %v830, %v826
    %v1087 = vpack.c.b16 %v831, %v827
    %v1088 = vpack.c.b16 %v836, %v832
    %v1089 = vpack.c.b16 %v837, %v833
    %v1090 = vpack.c.b16 %v838, %v834
    %v1091 = vpack.c.b16 %v839, %v835
    %v1092 = vpack.c.b16 %v844, %v840
    %v1093 = vpack.c.b16 %v845, %v841
    %v1094 = vpack.c.b16 %v846, %v842
    %v1095 = vpack.c.b16 %v847, %v843
    %v1096 = vpack.c.b16 %v852, %v848
    %v1097 = vpack.c.b16 %v853, %v849
    %v1098 = vpack.c.b16 %v854, %v850
    %v1099 = vpack.c.b16 %v855, %v851
    %v1100 = vpack.c.b16 %v860, %v856
    %v1101 = vpack.c.b16 %v861, %v857
    %v1102 = vpack.c.b16 %v862, %v858
    %v1103 = vpack.c.b16 %v863, %v859
    %v1104 = vpack.c.b16 %v868, %v864
    %v1105 = vpack.c.b16 %v869, %v865
    %v1106 = vpack.c.b16 %v870, %v866
    %v1107 = vpack.c.b16 %v871, %v867
    %v1108 = vpack.c.b16 %v876, %v872
    %v1109 = vpack.c.b16 %v877, %v873
    %v1110 = vpack.c.b16 %v878, %v874
    %v1111 = vpack.c.b16 %v879, %v875
    %v1112 = vpack.c.b16 %v884, %v880
    %v1113 = vpack.c.b16 %v885, %v881
    %v1114 = vpack.c.b16 %v886, %v882
    %v1115 = vpack.c.b16 %v887, %v883
    %v1116 = vpack.c.b16 %v892, %v888
    %v1117 = vpack.c.b16 %v893, %v889
    %v1118 = vpack.c.b16 %v894, %v890
    %v1119 = vpack.c.b16 %v895, %v891
    %v1120 = vpack.c.b16 %v900, %v896
    %v1121 = vpack.c.b16 %v901, %v897
    %v1122 = vpack.c.b16 %v902, %v898
    %v1123 = vpack.c.b16 %v903, %v899
    %v1124 = vpack.c.b16 %v908, %v904
    %v1125 = vpack.c.b16 %v909, %v905
    %v1126 = vpack.c.b16 %v910, %v906
    %v1127 = vpack.c.b16 %v911, %v907
    %v1128 = vpack.c.b16 %v916, %v912
    %v1129 = vpack.c.b16 %v917, %v913
    %v1130 = vpack.c.b16 %v918, %v914
    %v1131 = vpack.c.b16 %v919, %v915
    %v1132 = vpack.c.b16 %v924, %v920
    %v1133 = vpack.c.b16 %v925, %v921
    %v1134 = vpack.c.b16 %v926, %v922
    %v1135 = vpack.c.b16 %v927, %v923
    %v1136 = vpack.c.b16 %v932, %v928
    %v1137 = vpack.c.b16 %v933, %v929
    %v1138 = vpack.c.b16 %v934, %v930
    %v1139 = vpack.c.b16 %v935, %v931
    %v1140 = vpack.c.b16 %v940, %v936
    %v1141 = vpack.c.b16 %v941, %v937
    %v1142 = vpack.c.b16 %v942, %v938
    %v1143 = vpack.c.b16 %v943, %v939
    %v1144 = vpack.c.b16 %v948, %v944
    %v1145 = vpack.c.b16 %v949, %v945
    %v1146 = vpack.c.b16 %v950, %v946
    %v1147 = vpack.c.b16 %v951, %v947
    %v1148 = vpack.c.b16 %v956, %v952
    %v1149 = vpack.c.b16 %v957, %v953
    %v1150 = vpack.c.b16 %v958, %v954
    %v1151 = vpack.c.b16 %v959, %v955
    %1344 = vmatprep.subr.bf16.mxu0 %v961
    %1345 = vmatpush1.bf16.msra.mxu0 %v960
    %1346 = vmatprep.subr.bf16.mxu0 %v965
    %1347 = vmatpush1.bf16.msra.mxu0 %v964
    %1348 = vmatprep.subr.bf16.mxu0 %v969
    %1349 = vmatpush1.bf16.msra.mxu0 %v968
    %1350 = vmatprep.subr.bf16.mxu0 %v973
    %1351 = vmatpush1.bf16.msra.mxu0 %v972
    %1352 = vmatprep.subr.bf16.mxu0 %v977
    %1353 = vmatpush1.bf16.msra.mxu0 %v976
    %1354 = vmatprep.subr.bf16.mxu0 %v981
    %1355 = vmatpush1.bf16.msra.mxu0 %v980
    %1356 = vmatprep.subr.bf16.mxu0 %v985
    %1357 = vmatpush1.bf16.msra.mxu0 %v984
    %1358 = vmatprep.subr.bf16.mxu0 %v989
    %1359 = vmatpush1.bf16.msra.mxu0 %v988
    %1360 = vmatprep.subr.bf16.mxu0 %v993
    %1361 = vmatpush1.bf16.msra.mxu0 %v992
    %1362 = vmatprep.subr.bf16.mxu0 %v997
    %1363 = vmatpush1.bf16.msra.mxu0 %v996
    %1364 = vmatprep.subr.bf16.mxu0 %v1001
    %1365 = vmatpush1.bf16.msra.mxu0 %v1000
    %1366 = vmatprep.subr.bf16.mxu0 %v1005
    %1367 = vmatpush1.bf16.msra.mxu0 %v1004
    %1368 = vmatprep.subr.bf16.mxu0 %v1009
    %1369 = vmatpush1.bf16.msra.mxu0 %v1008
    %1370 = vmatprep.subr.bf16.mxu0 %v1013
    %1371 = vmatpush1.bf16.msra.mxu0 %v1012
    %1372 = vmatprep.subr.bf16.mxu0 %v1017
    %1373 = vmatpush1.bf16.msra.mxu0 %v1016
    %1374 = vmatprep.subr.bf16.mxu0 %v1021
    %1375 = vmatpush1.bf16.msra.mxu0 %v1020
    %1376 = vmatprep.mubr.bf16.mxu0 %v373
    %1377 = vmatmul.mubr.bf16.gmra.mrb[0].mxu0 %v372
    %v1378 = vpop.f32.mrb[0].mxu0
    %v1379 = vadd.f32 %v346, %v1378
    %v1380 = vpop.f32.mrb[0].mxu0
    %v1381 = vadd.f32 %v350, %v1380
    %v1382 = vpop.f32.mrb[0].mxu0
    %v1383 = vpop.f32.mrb[0].mxu0
    %1384 = vdwg.mxu0
    %1385 = vmatprep.subr.bf16.mxu0 %v1025
    %1386 = vmatpush1.bf16.msra.mxu0 %v1024
    %1387 = vmatprep.subr.bf16.mxu0 %v1029
    %1388 = vmatpush1.bf16.msra.mxu0 %v1028
    %1389 = vmatprep.subr.bf16.mxu0 %v1033
    %1390 = vmatpush1.bf16.msra.mxu0 %v1032
    %1391 = vmatprep.subr.bf16.mxu0 %v1037
    %1392 = vmatpush1.bf16.msra.mxu0 %v1036
    %1393 = vmatprep.subr.bf16.mxu0 %v1041
    %1394 = vmatpush1.bf16.msra.mxu0 %v1040
    %1395 = vmatprep.subr.bf16.mxu0 %v1045
    %1396 = vmatpush1.bf16.msra.mxu0 %v1044
    %1397 = vmatprep.subr.bf16.mxu0 %v1049
    %1398 = vmatpush1.bf16.msra.mxu0 %v1048
    %1399 = vmatprep.subr.bf16.mxu0 %v1053
    %1400 = vmatpush1.bf16.msra.mxu0 %v1052
    %1401 = vmatprep.subr.bf16.mxu0 %v1057
    %1402 = vmatpush1.bf16.msra.mxu0 %v1056
    %1403 = vmatprep.subr.bf16.mxu0 %v1061
    %1404 = vmatpush1.bf16.msra.mxu0 %v1060
    %1405 = vmatprep.subr.bf16.mxu0 %v1065
    %1406 = vmatpush1.bf16.msra.mxu0 %v1064
    %1407 = vmatprep.subr.bf16.mxu0 %v1069
    %1408 = vmatpush1.bf16.msra.mxu0 %v1068
    %1409 = vmatprep.subr.bf16.mxu0 %v1073
    %1410 = vmatpush1.bf16.msra.mxu0 %v1072
    %1411 = vmatprep.subr.bf16.mxu0 %v1077
    %1412 = vmatpush1.bf16.msra.mxu0 %v1076
    %1413 = vmatprep.subr.bf16.mxu0 %v1081
    %1414 = vmatpush1.bf16.msra.mxu0 %v1080
    %1415 = vmatprep.subr.bf16.mxu0 %v1085
    %1416 = vmatpush1.bf16.msra.mxu0 %v1084
    %1417 = vmatprep.mubr.bf16.mxu0 %v375
    %1418 = vmatmul.mubr.bf16.gmra.mrb[0].mxu0 %v374
    %v1419 = vpop.f32.mrb[0].mxu0
    %v1420 = vadd.f32 %v1379, %v1419
    %v1421 = vpop.f32.mrb[0].mxu0
    %v1422 = vadd.f32 %v1381, %v1421
    %v1423 = vpop.f32.mrb[0].mxu0
    %v1424 = vpop.f32.mrb[0].mxu0
    %1425 = vdwg.mxu0
    %1426 = vmatprep.subr.bf16.mxu0 %v1089
    %1427 = vmatpush1.bf16.msra.mxu0 %v1088
    %1428 = vmatprep.subr.bf16.mxu0 %v1093
    %1429 = vmatpush1.bf16.msra.mxu0 %v1092
    %1430 = vmatprep.subr.bf16.mxu0 %v1097
    %1431 = vmatpush1.bf16.msra.mxu0 %v1096
    %1432 = vmatprep.subr.bf16.mxu0 %v1101
    %1433 = vmatpush1.bf16.msra.mxu0 %v1100
    %1434 = vmatprep.subr.bf16.mxu0 %v1105
    %1435 = vmatpush1.bf16.msra.mxu0 %v1104
    %1436 = vmatprep.subr.bf16.mxu0 %v1109
    %1437 = vmatpush1.bf16.msra.mxu0 %v1108
    %1438 = vmatprep.subr.bf16.mxu0 %v1113
    %1439 = vmatpush1.bf16.msra.mxu0 %v1112
    %1440 = vmatprep.subr.bf16.mxu0 %v1117
    %1441 = vmatpush1.bf16.msra.mxu0 %v1116
    %1442 = vmatprep.subr.bf16.mxu0 %v1121
    %1443 = vmatpush1.bf16.msra.mxu0 %v1120
    %1444 = vmatprep.subr.bf16.mxu0 %v1125
    %1445 = vmatpush1.bf16.msra.mxu0 %v1124
    %1446 = vmatprep.subr.bf16.mxu0 %v1129
    %1447 = vmatpush1.bf16.msra.mxu0 %v1128
    %1448 = vmatprep.subr.bf16.mxu0 %v1133
    %1449 = vmatpush1.bf16.msra.mxu0 %v1132
    %1450 = vmatprep.subr.bf16.mxu0 %v1137
    %1451 = vmatpush1.bf16.msra.mxu0 %v1136
    %1452 = vmatprep.subr.bf16.mxu0 %v1141
    %1453 = vmatpush1.bf16.msra.mxu0 %v1140
    %1454 = vmatprep.subr.bf16.mxu0 %v1145
    %1455 = vmatpush1.bf16.msra.mxu0 %v1144
    %1456 = vmatprep.subr.bf16.mxu0 %v1149
    %1457 = vmatpush1.bf16.msra.mxu0 %v1148
    %1458 = vmatprep.mubr.bf16.mxu0 %v377
    %1459 = vmatmul.mubr.bf16.gmra.mrb[0].mxu0 %v376
    %v1460 = vpop.f32.mrb[0].mxu0
    %v1461 = vadd.f32 %v1420, %v1460
    %v1462 = vpop.f32.mrb[0].mxu0
    %v1463 = vadd.f32 %v1422, %v1462
    %v1464 = vpop.f32.mrb[0].mxu0
    %v1465 = vpop.f32.mrb[0].mxu0
    %1466 = vdwg.mxu0
    %1467 = vmatprep.subr.bf16.mxu0 %v963
    %1468 = vmatpush1.bf16.msra.mxu0 %v962
    %1469 = vmatprep.subr.bf16.mxu0 %v967
    %1470 = vmatpush1.bf16.msra.mxu0 %v966
    %1471 = vmatprep.subr.bf16.mxu0 %v971
    %1472 = vmatpush1.bf16.msra.mxu0 %v970
    %1473 = vmatprep.subr.bf16.mxu0 %v975
    %1474 = vmatpush1.bf16.msra.mxu0 %v974
    %1475 = vmatprep.subr.bf16.mxu0 %v979
    %1476 = vmatpush1.bf16.msra.mxu0 %v978
    %1477 = vmatprep.subr.bf16.mxu0 %v983
    %1478 = vmatpush1.bf16.msra.mxu0 %v982
    %1479 = vmatprep.subr.bf16.mxu0 %v987
    %1480 = vmatpush1.bf16.msra.mxu0 %v986
    %1481 = vmatprep.subr.bf16.mxu0 %v991
    %1482 = vmatpush1.bf16.msra.mxu0 %v990
    %1483 = vmatprep.subr.bf16.mxu0 %v995
    %1484 = vmatpush1.bf16.msra.mxu0 %v994
    %1485 = vmatprep.subr.bf16.mxu0 %v999
    %1486 = vmatpush1.bf16.msra.mxu0 %v998
    %1487 = vmatprep.subr.bf16.mxu0 %v1003
    %1488 = vmatpush1.bf16.msra.mxu0 %v1002
    %1489 = vmatprep.subr.bf16.mxu0 %v1007
    %1490 = vmatpush1.bf16.msra.mxu0 %v1006
    %1491 = vmatprep.subr.bf16.mxu0 %v1011
    %1492 = vmatpush1.bf16.msra.mxu0 %v1010
    %1493 = vmatprep.subr.bf16.mxu0 %v1015
    %1494 = vmatpush1.bf16.msra.mxu0 %v1014
    %1495 = vmatprep.subr.bf16.mxu0 %v1019
    %1496 = vmatpush1.bf16.msra.mxu0 %v1018
    %1497 = vmatprep.subr.bf16.mxu0 %v1023
    %1498 = vmatpush1.bf16.msra.mxu0 %v1022
    %1499 = vmatprep.mubr.bf16.mxu0 %v373
    %1500 = vmatmul.mubr.bf16.gmra.mrb[0].mxu0 %v372
    %v1501 = vpop.f32.mrb[0].mxu0
    %v1502 = vadd.f32 %v354, %v1501
    %v1503 = vpop.f32.mrb[0].mxu0
    %v1504 = vadd.f32 %v358, %v1503
    %v1505 = vpop.f32.mrb[0].mxu0
    %v1506 = vpop.f32.mrb[0].mxu0
    %1507 = vdwg.mxu0
    %1508 = vmatprep.subr.bf16.mxu0 %v1027
    %1509 = vmatpush1.bf16.msra.mxu0 %v1026
    %1510 = vmatprep.subr.bf16.mxu0 %v1031
    %1511 = vmatpush1.bf16.msra.mxu0 %v1030
    %1512 = vmatprep.subr.bf16.mxu0 %v1035
    %1513 = vmatpush1.bf16.msra.mxu0 %v1034
    %1514 = vmatprep.subr.bf16.mxu0 %v1039
    %1515 = vmatpush1.bf16.msra.mxu0 %v1038
    %1516 = vmatprep.subr.bf16.mxu0 %v1043
    %1517 = vmatpush1.bf16.msra.mxu0 %v1042
    %1518 = vmatprep.subr.bf16.mxu0 %v1047
    %1519 = vmatpush1.bf16.msra.mxu0 %v1046
    %1520 = vmatprep.subr.bf16.mxu0 %v1051
    %1521 = vmatpush1.bf16.msra.mxu0 %v1050
    %1522 = vmatprep.subr.bf16.mxu0 %v1055
    %1523 = vmatpush1.bf16.msra.mxu0 %v1054
    %1524 = vmatprep.subr.bf16.mxu0 %v1059
    %1525 = vmatpush1.bf16.msra.mxu0 %v1058
    %1526 = vmatprep.subr.bf16.mxu0 %v1063
    %1527 = vmatpush1.bf16.msra.mxu0 %v1062
    %1528 = vmatprep.subr.bf16.mxu0 %v1067
    %1529 = vmatpush1.bf16.msra.mxu0 %v1066
    %1530 = vmatprep.subr.bf16.mxu0 %v1071
    %1531 = vmatpush1.bf16.msra.mxu0 %v1070
    %1532 = vmatprep.subr.bf16.mxu0 %v1075
    %1533 = vmatpush1.bf16.msra.mxu0 %v1074
    %1534 = vmatprep.subr.bf16.mxu0 %v1079
    %1535 = vmatpush1.bf16.msra.mxu0 %v1078
    %1536 = vmatprep.subr.bf16.mxu0 %v1083
    %1537 = vmatpush1.bf16.msra.mxu0 %v1082
    %1538 = vmatprep.subr.bf16.mxu0 %v1087
    %1539 = vmatpush1.bf16.msra.mxu0 %v1086
    %1540 = vmatprep.mubr.bf16.mxu0 %v375
    %1541 = vmatmul.mubr.bf16.gmra.mrb[0].mxu0 %v374
    %v1542 = vpop.f32.mrb[0].mxu0
    %v1543 = vadd.f32 %v1502, %v1542
    %v1544 = vpop.f32.mrb[0].mxu0
    %v1545 = vadd.f32 %v1504, %v1544
    %v1546 = vpop.f32.mrb[0].mxu0
    %v1547 = vpop.f32.mrb[0].mxu0
    %1548 = vdwg.mxu0
    %1549 = vmatprep.subr.bf16.mxu0 %v1091
    %1550 = vmatpush1.bf16.msra.mxu0 %v1090
    %1551 = vmatprep.subr.bf16.mxu0 %v1095
    %1552 = vmatpush1.bf16.msra.mxu0 %v1094
    %1553 = vmatprep.subr.bf16.mxu0 %v1099
    %1554 = vmatpush1.bf16.msra.mxu0 %v1098
    %1555 = vmatprep.subr.bf16.mxu0 %v1103
    %1556 = vmatpush1.bf16.msra.mxu0 %v1102
    %1557 = vmatprep.subr.bf16.mxu0 %v1107
    %1558 = vmatpush1.bf16.msra.mxu0 %v1106
    %1559 = vmatprep.subr.bf16.mxu0 %v1111
    %1560 = vmatpush1.bf16.msra.mxu0 %v1110
    %1561 = vmatprep.subr.bf16.mxu0 %v1115
    %1562 = vmatpush1.bf16.msra.mxu0 %v1114
    %1563 = vmatprep.subr.bf16.mxu0 %v1119
    %1564 = vmatpush1.bf16.msra.mxu0 %v1118
    %1565 = vmatprep.subr.bf16.mxu0 %v1123
    %1566 = vmatpush1.bf16.msra.mxu0 %v1122
    %1567 = vmatprep.subr.bf16.mxu0 %v1127
    %1568 = vmatpush1.bf16.msra.mxu0 %v1126
    %1569 = vmatprep.subr.bf16.mxu0 %v1131
    %1570 = vmatpush1.bf16.msra.mxu0 %v1130
    %1571 = vmatprep.subr.bf16.mxu0 %v1135
    %1572 = vmatpush1.bf16.msra.mxu0 %v1134
    %1573 = vmatprep.subr.bf16.mxu0 %v1139
    %1574 = vmatpush1.bf16.msra.mxu0 %v1138
    %1575 = vmatprep.subr.bf16.mxu0 %v1143
    %1576 = vmatpush1.bf16.msra.mxu0 %v1142
    %1577 = vmatprep.subr.bf16.mxu0 %v1147
    %1578 = vmatpush1.bf16.msra.mxu0 %v1146
    %1579 = vmatprep.subr.bf16.mxu0 %v1151
    %1580 = vmatpush1.bf16.msra.mxu0 %v1150
    %1581 = vmatprep.mubr.bf16.mxu0 %v377
    %1582 = vmatmul.mubr.bf16.gmra.mrb[0].mxu0 %v376
    %v1583 = vpop.f32.mrb[0].mxu0
    %v1584 = vadd.f32 %v1543, %v1583
    %v1585 = vpop.f32.mrb[0].mxu0
    %v1586 = vadd.f32 %v1545, %v1585
    %v1587 = vpop.f32.mrb[0].mxu0
    %v1588 = vpop.f32.mrb[0].mxu0
    %1589 = vdwg.mxu0
    %v1590 = vmin.f32 %v1461, 20.0
    %v1591 = vmin.f32 %v1463, 20.0
    %v1592 = vmin.f32 %v1584, 20.0
    %v1593 = vmin.f32 %v1586, 20.0
    %v1594 = vmul.f32 %v1590, 1.442695
    %v1595 = vpow.pop %v1594
    %v1596 = vmul.f32 %v1591, 1.442695
    %v1597 = vpow.pop %v1596
    %v1598 = vmul.f32 %v1592, 1.442695
    %v1599 = vpow.pop %v1598
    %v1600 = vmul.f32 %v1593, 1.442695
    %v1601 = vpow.pop %v1600
    %v1602 = vadd.f32 %v1595, 2.0
    %v1603 = vadd.f32 %v1597, 2.0
    %v1604 = vadd.f32 %v1599, 2.0
    %v1605 = vadd.f32 %v1601, 2.0
    %v1606 = vmul.f32 %v1595, %v1602
    %v1607 = vmul.f32 %v1597, %v1603
    %v1608 = vmul.f32 %v1599, %v1604
    %v1609 = vmul.f32 %v1601, %v1605
    %v1610 = vmul.f32 %v1461, %v1606
    %v1611 = vmul.f32 %v1463, %v1607
    %v1612 = vmul.f32 %v1584, %v1608
    %v1613 = vmul.f32 %v1586, %v1609
    %v1614 = vadd.f32 %v1606, 2.0
    %v1615 = vadd.f32 %v1607, 2.0
    %v1616 = vadd.f32 %v1608, 2.0
    %v1617 = vadd.f32 %v1609, 2.0
    %v1618 = vrcp.pop %v1614
    %v1619 = vrcp.pop %v1615
    %v1620 = vrcp.pop %v1616
    %v1621 = vrcp.pop %v1617
    %v1622 = vmul.f32 %v1610, %v1618
    %v1623 = vmul.f32 %v1611, %v1619
    %v1624 = vmul.f32 %v1612, %v1620
    %v1625 = vmul.f32 %v1613, %v1621
    %vm1626 = vcmp.gt.f32.partialorder %v1461, 20.0
    %vm1627 = vcmp.gt.f32.partialorder %v1463, 20.0
    %vm1628 = vcmp.gt.f32.partialorder %v1584, 20.0
    %vm1629 = vcmp.gt.f32.partialorder %v1586, 20.0
    %v1630 = vsel %vm1626, %v1461, %v1622
    %v1631 = vsel %vm1627, %v1463, %v1623
    %v1632 = vsel %vm1628, %v1584, %v1624
    %v1633 = vsel %vm1629, %v1586, %v1625
    %v1634 = vpack.c.bf16 %v1630, %v1630
    %v1635 = vpack.c.bf16 %v1631, %v1631
    %v1636 = vpack.c.bf16 %v1632, %v1632
    %v1637 = vpack.c.bf16 %v1633, %v1633
    %v1638 = vld [vmem:[#allocation8] sm:$0xff]
    %v1639 = vld [vmem:[#allocation8 + $0x8] sm:$0xff]
    %v1640 = vld [vmem:[#allocation8 + $0x10] sm:$0xff]
    %v1641 = vld [vmem:[#allocation8 + $0x18] sm:$0xff]
    %v1642 = vld [vmem:[#allocation8 + $0x20] sm:$0xff]
    %v1643 = vld [vmem:[#allocation8 + $0x28] sm:$0xff]
    %v1644 = vld [vmem:[#allocation8 + $0x30] sm:$0xff]
    %v1645 = vld [vmem:[#allocation8 + $0x38] sm:$0xff]
    %v1646 = vld [vmem:[#allocation8 + $0x40] sm:$0xff]
    %v1647 = vld [vmem:[#allocation8 + $0x48] sm:$0xff]
    %v1648 = vld [vmem:[#allocation8 + $0x50] sm:$0xff]
    %v1649 = vld [vmem:[#allocation8 + $0x58] sm:$0xff]
    %v1650 = vld [vmem:[#allocation8 + $0x60] sm:$0xff]
    %v1651 = vld [vmem:[#allocation8 + $0x68] sm:$0xff]
    %v1652 = vld [vmem:[#allocation8 + $0x70] sm:$0xff]
    %v1653 = vld [vmem:[#allocation8 + $0x78] sm:$0xff]
    %v1654 = vld [vmem:[#allocation8 + $0x80] sm:$0xff]
    %v1655 = vld [vmem:[#allocation8 + $0x88] sm:$0xff]
    %v1656 = vld [vmem:[#allocation8 + $0x90] sm:$0xff]
    %v1657 = vld [vmem:[#allocation8 + $0x98] sm:$0xff]
    %v1658 = vld [vmem:[#allocation8 + $0xa0] sm:$0xff]
    %v1659 = vld [vmem:[#allocation8 + $0xa8] sm:$0xff]
    %v1660 = vld [vmem:[#allocation8 + $0xb0] sm:$0xff]
    %v1661 = vld [vmem:[#allocation8 + $0xb8] sm:$0xff]
    %v1662 = vld [vmem:[#allocation8 + $0xc0] sm:$0xff]
    %v1663 = vld [vmem:[#allocation8 + $0xc8] sm:$0xff]
    %v1664 = vld [vmem:[#allocation8 + $0xd0] sm:$0xff]
    %v1665 = vld [vmem:[#allocation8 + $0xd8] sm:$0xff]
    %v1666 = vld [vmem:[#allocation8 + $0xe0] sm:$0xff]
    %v1667 = vld [vmem:[#allocation8 + $0xe8] sm:$0xff]
    %v1668 = vld [vmem:[#allocation8 + $0xf0] sm:$0xff]
    %v1669 = vld [vmem:[#allocation8 + $0xf8] sm:$0xff]
    %v1670 = vld [vmem:[#allocation8 + $0x100] sm:$0xff]
    %v1671 = vld [vmem:[#allocation8 + $0x108] sm:$0xff]
    %v1672 = vld [vmem:[#allocation8 + $0x110] sm:$0xff]
    %v1673 = vld [vmem:[#allocation8 + $0x118] sm:$0xff]
    %v1674 = vld [vmem:[#allocation8 + $0x120] sm:$0xff]
    %v1675 = vld [vmem:[#allocation8 + $0x128] sm:$0xff]
    %v1676 = vld [vmem:[#allocation8 + $0x130] sm:$0xff]
    %v1677 = vld [vmem:[#allocation8 + $0x138] sm:$0xff]
    %v1678 = vld [vmem:[#allocation8 + $0x140] sm:$0xff]
    %v1679 = vld [vmem:[#allocation8 + $0x148] sm:$0xff]
    %v1680 = vld [vmem:[#allocation8 + $0x150] sm:$0xff]
    %v1681 = vld [vmem:[#allocation8 + $0x158] sm:$0xff]
    %v1682 = vld [vmem:[#allocation8 + $0x160] sm:$0xff]
    %v1683 = vld [vmem:[#allocation8 + $0x168] sm:$0xff]
    %v1684 = vld [vmem:[#allocation8 + $0x170] sm:$0xff]
    %v1685 = vld [vmem:[#allocation8 + $0x178] sm:$0xff]
    %v1686 = vld [vmem:[#allocation8 + $0x180] sm:$0xff]
    %v1687 = vld [vmem:[#allocation8 + $0x188] sm:$0xff]
    %v1688 = vld [vmem:[#allocation8 + $0x190] sm:$0xff]
    %v1689 = vld [vmem:[#allocation8 + $0x198] sm:$0xff]
    %v1690 = vld [vmem:[#allocation8 + $0x1a0] sm:$0xff]
    %v1691 = vld [vmem:[#allocation8 + $0x1a8] sm:$0xff]
    %v1692 = vld [vmem:[#allocation8 + $0x1b0] sm:$0xff]
    %v1693 = vld [vmem:[#allocation8 + $0x1b8] sm:$0xff]
    %v1694 = vld [vmem:[#allocation8 + $0x1c0] sm:$0xff]
    %v1695 = vld [vmem:[#allocation8 + $0x1c8] sm:$0xff]
    %v1696 = vld [vmem:[#allocation8 + $0x1d0] sm:$0xff]
    %v1697 = vld [vmem:[#allocation8 + $0x1d8] sm:$0xff]
    %v1698 = vld [vmem:[#allocation8 + $0x1e0] sm:$0xff]
    %v1699 = vld [vmem:[#allocation8 + $0x1e8] sm:$0xff]
    %v1700 = vld [vmem:[#allocation8 + $0x1f0] sm:$0xff]
    %v1701 = vld [vmem:[#allocation8 + $0x1f8] sm:$0xff]
    %v1702 = vld [vmem:[#allocation10] sm:$0x3]
    %v1704 = vlaneseq
    %v1705 = vshrl.u32 %v1704, 7
    %v1706 = vsub.s32 0, %v1705
    %v1707 = vrot.slane %v1702, %v1706
    %v1708 = vlaneseq
    %v1709 = vshrl.u32 %v1708, 7
    %v1710 = vsub.s32 1, %v1709
    %v1711 = vrot.slane %v1702, %v1710
    %v1778 = vunpack.c.l.b16 %v1638
    %v1779 = vunpack.c.h.b16 %v1638
    %v1780 = vunpack.c.l.b16 %v1639
    %v1781 = vunpack.c.h.b16 %v1639
    %v1782 = vunpack.c.l.b16 %v1640
    %v1783 = vunpack.c.h.b16 %v1640
    %v1784 = vunpack.c.l.b16 %v1641
    %v1785 = vunpack.c.h.b16 %v1641
    %v1786 = vunpack.c.l.b16 %v1642
    %v1787 = vunpack.c.h.b16 %v1642
    %v1788 = vunpack.c.l.b16 %v1643
    %v1789 = vunpack.c.h.b16 %v1643
    %v1790 = vunpack.c.l.b16 %v1644
    %v1791 = vunpack.c.h.b16 %v1644
    %v1792 = vunpack.c.l.b16 %v1645
    %v1793 = vunpack.c.h.b16 %v1645
    %v1794 = vunpack.c.l.b16 %v1646
    %v1795 = vunpack.c.h.b16 %v1646
    %v1796 = vunpack.c.l.b16 %v1647
    %v1797 = vunpack.c.h.b16 %v1647
    %v1798 = vunpack.c.l.b16 %v1648
    %v1799 = vunpack.c.h.b16 %v1648
    %v1800 = vunpack.c.l.b16 %v1649
    %v1801 = vunpack.c.h.b16 %v1649
    %v1802 = vunpack.c.l.b16 %v1650
    %v1803 = vunpack.c.h.b16 %v1650
    %v1804 = vunpack.c.l.b16 %v1651
    %v1805 = vunpack.c.h.b16 %v1651
    %v1806 = vunpack.c.l.b16 %v1652
    %v1807 = vunpack.c.h.b16 %v1652
    %v1808 = vunpack.c.l.b16 %v1653
    %v1809 = vunpack.c.h.b16 %v1653
    %v1810 = vunpack.c.l.b16 %v1654
    %v1811 = vunpack.c.h.b16 %v1654
    %v1812 = vunpack.c.l.b16 %v1655
    %v1813 = vunpack.c.h.b16 %v1655
    %v1814 = vunpack.c.l.b16 %v1656
    %v1815 = vunpack.c.h.b16 %v1656
    %v1816 = vunpack.c.l.b16 %v1657
    %v1817 = vunpack.c.h.b16 %v1657
    %v1818 = vunpack.c.l.b16 %v1658
    %v1819 = vunpack.c.h.b16 %v1658
    %v1820 = vunpack.c.l.b16 %v1659
    %v1821 = vunpack.c.h.b16 %v1659
    %v1822 = vunpack.c.l.b16 %v1660
    %v1823 = vunpack.c.h.b16 %v1660
    %v1824 = vunpack.c.l.b16 %v1661
    %v1825 = vunpack.c.h.b16 %v1661
    %v1826 = vunpack.c.l.b16 %v1662
    %v1827 = vunpack.c.h.b16 %v1662
    %v1828 = vunpack.c.l.b16 %v1663
    %v1829 = vunpack.c.h.b16 %v1663
    %v1830 = vunpack.c.l.b16 %v1664
    %v1831 = vunpack.c.h.b16 %v1664
    %v1832 = vunpack.c.l.b16 %v1665
    %v1833 = vunpack.c.h.b16 %v1665
    %v1834 = vunpack.c.l.b16 %v1666
    %v1835 = vunpack.c.h.b16 %v1666
    %v1836 = vunpack.c.l.b16 %v1667
    %v1837 = vunpack.c.h.b16 %v1667
    %v1838 = vunpack.c.l.b16 %v1668
    %v1839 = vunpack.c.h.b16 %v1668
    %v1840 = vunpack.c.l.b16 %v1669
    %v1841 = vunpack.c.h.b16 %v1669
    %v1842 = vunpack.c.l.b16 %v1670
    %v1843 = vunpack.c.h.b16 %v1670
    %v1844 = vunpack.c.l.b16 %v1671
    %v1845 = vunpack.c.h.b16 %v1671
    %v1846 = vunpack.c.l.b16 %v1672
    %v1847 = vunpack.c.h.b16 %v1672
    %v1848 = vunpack.c.l.b16 %v1673
    %v1849 = vunpack.c.h.b16 %v1673
    %v1850 = vunpack.c.l.b16 %v1674
    %v1851 = vunpack.c.h.b16 %v1674
    %v1852 = vunpack.c.l.b16 %v1675
    %v1853 = vunpack.c.h.b16 %v1675
    %v1854 = vunpack.c.l.b16 %v1676
    %v1855 = vunpack.c.h.b16 %v1676
    %v1856 = vunpack.c.l.b16 %v1677
    %v1857 = vunpack.c.h.b16 %v1677
    %v1858 = vunpack.c.l.b16 %v1678
    %v1859 = vunpack.c.h.b16 %v1678
    %v1860 = vunpack.c.l.b16 %v1679
    %v1861 = vunpack.c.h.b16 %v1679
    %v1862 = vunpack.c.l.b16 %v1680
    %v1863 = vunpack.c.h.b16 %v1680
    %v1864 = vunpack.c.l.b16 %v1681
    %v1865 = vunpack.c.h.b16 %v1681
    %v1866 = vunpack.c.l.b16 %v1682
    %v1867 = vunpack.c.h.b16 %v1682
    %v1868 = vunpack.c.l.b16 %v1683
    %v1869 = vunpack.c.h.b16 %v1683
    %v1870 = vunpack.c.l.b16 %v1684
    %v1871 = vunpack.c.h.b16 %v1684
    %v1872 = vunpack.c.l.b16 %v1685
    %v1873 = vunpack.c.h.b16 %v1685
    %v1874 = vunpack.c.l.b16 %v1686
    %v1875 = vunpack.c.h.b16 %v1686
    %v1876 = vunpack.c.l.b16 %v1687
    %v1877 = vunpack.c.h.b16 %v1687
    %v1878 = vunpack.c.l.b16 %v1688
    %v1879 = vunpack.c.h.b16 %v1688
    %v1880 = vunpack.c.l.b16 %v1689
    %v1881 = vunpack.c.h.b16 %v1689
    %v1882 = vunpack.c.l.b16 %v1690
    %v1883 = vunpack.c.h.b16 %v1690
    %v1884 = vunpack.c.l.b16 %v1691
    %v1885 = vunpack.c.h.b16 %v1691
    %v1886 = vunpack.c.l.b16 %v1692
    %v1887 = vunpack.c.h.b16 %v1692
    %v1888 = vunpack.c.l.b16 %v1693
    %v1889 = vunpack.c.h.b16 %v1693
    %v1890 = vunpack.c.l.b16 %v1694
    %v1891 = vunpack.c.h.b16 %v1694
    %v1892 = vunpack.c.l.b16 %v1695
    %v1893 = vunpack.c.h.b16 %v1695
    %v1894 = vunpack.c.l.b16 %v1696
    %v1895 = vunpack.c.h.b16 %v1696
    %v1896 = vunpack.c.l.b16 %v1697
    %v1897 = vunpack.c.h.b16 %v1697
    %v1898 = vunpack.c.l.b16 %v1698
    %v1899 = vunpack.c.h.b16 %v1698
    %v1900 = vunpack.c.l.b16 %v1699
    %v1901 = vunpack.c.h.b16 %v1699
    %v1902 = vunpack.c.l.b16 %v1700
    %v1903 = vunpack.c.h.b16 %v1700
    %v1904 = vunpack.c.l.b16 %v1701
    %v1905 = vunpack.c.h.b16 %v1701
    %v1906 = vpack.c.b16 %v1780, %v1778
    %v1907 = vpack.c.b16 %v1781, %v1779
    %v1908 = vpack.c.b16 %v1784, %v1782
    %v1909 = vpack.c.b16 %v1785, %v1783
    %v1910 = vpack.c.b16 %v1788, %v1786
    %v1911 = vpack.c.b16 %v1789, %v1787
    %v1912 = vpack.c.b16 %v1792, %v1790
    %v1913 = vpack.c.b16 %v1793, %v1791
    %v1914 = vpack.c.b16 %v1796, %v1794
    %v1915 = vpack.c.b16 %v1797, %v1795
    %v1916 = vpack.c.b16 %v1800, %v1798
    %v1917 = vpack.c.b16 %v1801, %v1799
    %v1918 = vpack.c.b16 %v1804, %v1802
    %v1919 = vpack.c.b16 %v1805, %v1803
    %v1920 = vpack.c.b16 %v1808, %v1806
    %v1921 = vpack.c.b16 %v1809, %v1807
    %v1922 = vpack.c.b16 %v1812, %v1810
    %v1923 = vpack.c.b16 %v1813, %v1811
    %v1924 = vpack.c.b16 %v1816, %v1814
    %v1925 = vpack.c.b16 %v1817, %v1815
    %v1926 = vpack.c.b16 %v1820, %v1818
    %v1927 = vpack.c.b16 %v1821, %v1819
    %v1928 = vpack.c.b16 %v1824, %v1822
    %v1929 = vpack.c.b16 %v1825, %v1823
    %v1930 = vpack.c.b16 %v1828, %v1826
    %v1931 = vpack.c.b16 %v1829, %v1827
    %v1932 = vpack.c.b16 %v1832, %v1830
    %v1933 = vpack.c.b16 %v1833, %v1831
    %v1934 = vpack.c.b16 %v1836, %v1834
    %v1935 = vpack.c.b16 %v1837, %v1835
    %v1936 = vpack.c.b16 %v1840, %v1838
    %v1937 = vpack.c.b16 %v1841, %v1839
    %v1938 = vpack.c.b16 %v1844, %v1842
    %v1939 = vpack.c.b16 %v1845, %v1843
    %v1940 = vpack.c.b16 %v1848, %v1846
    %v1941 = vpack.c.b16 %v1849, %v1847
    %v1942 = vpack.c.b16 %v1852, %v1850
    %v1943 = vpack.c.b16 %v1853, %v1851
    %v1944 = vpack.c.b16 %v1856, %v1854
    %v1945 = vpack.c.b16 %v1857, %v1855
    %v1946 = vpack.c.b16 %v1860, %v1858
    %v1947 = vpack.c.b16 %v1861, %v1859
    %v1948 = vpack.c.b16 %v1864, %v1862
    %v1949 = vpack.c.b16 %v1865, %v1863
    %v1950 = vpack.c.b16 %v1868, %v1866
    %v1951 = vpack.c.b16 %v1869, %v1867
    %v1952 = vpack.c.b16 %v1872, %v1870
    %v1953 = vpack.c.b16 %v1873, %v1871
    %v1954 = vpack.c.b16 %v1876, %v1874
    %v1955 = vpack.c.b16 %v1877, %v1875
    %v1956 = vpack.c.b16 %v1880, %v1878
    %v1957 = vpack.c.b16 %v1881, %v1879
    %v1958 = vpack.c.b16 %v1884, %v1882
    %v1959 = vpack.c.b16 %v1885, %v1883
    %v1960 = vpack.c.b16 %v1888, %v1886
    %v1961 = vpack.c.b16 %v1889, %v1887
    %v1962 = vpack.c.b16 %v1892, %v1890
    %v1963 = vpack.c.b16 %v1893, %v1891
    %v1964 = vpack.c.b16 %v1896, %v1894
    %v1965 = vpack.c.b16 %v1897, %v1895
    %v1966 = vpack.c.b16 %v1900, %v1898
    %v1967 = vpack.c.b16 %v1901, %v1899
    %v1968 = vpack.c.b16 %v1904, %v1902
    %v1969 = vpack.c.b16 %v1905, %v1903
    %2034 = vmatprep.subr.bf16.mxu0 %v1907
    %2035 = vmatpush1.bf16.msra.mxu0 %v1906
    %2036 = vmatprep.subr.bf16.mxu0 %v1909
    %2037 = vmatpush1.bf16.msra.mxu0 %v1908
    %2038 = vmatprep.subr.bf16.mxu0 %v1911
    %2039 = vmatpush1.bf16.msra.mxu0 %v1910
    %2040 = vmatprep.subr.bf16.mxu0 %v1913
    %2041 = vmatpush1.bf16.msra.mxu0 %v1912
    %2042 = vmatprep.subr.bf16.mxu0 %v1915
    %2043 = vmatpush1.bf16.msra.mxu0 %v1914
    %2044 = vmatprep.subr.bf16.mxu0 %v1917
    %2045 = vmatpush1.bf16.msra.mxu0 %v1916
    %2046 = vmatprep.subr.bf16.mxu0 %v1919
    %2047 = vmatpush1.bf16.msra.mxu0 %v1918
    %2048 = vmatprep.subr.bf16.mxu0 %v1921
    %2049 = vmatpush1.bf16.msra.mxu0 %v1920
    %2050 = vmatprep.subr.bf16.mxu0 %v1923
    %2051 = vmatpush1.bf16.msra.mxu0 %v1922
    %2052 = vmatprep.subr.bf16.mxu0 %v1925
    %2053 = vmatpush1.bf16.msra.mxu0 %v1924
    %2054 = vmatprep.subr.bf16.mxu0 %v1927
    %2055 = vmatpush1.bf16.msra.mxu0 %v1926
    %2056 = vmatprep.subr.bf16.mxu0 %v1929
    %2057 = vmatpush1.bf16.msra.mxu0 %v1928
    %2058 = vmatprep.subr.bf16.mxu0 %v1931
    %2059 = vmatpush1.bf16.msra.mxu0 %v1930
    %2060 = vmatprep.subr.bf16.mxu0 %v1933
    %2061 = vmatpush1.bf16.msra.mxu0 %v1932
    %2062 = vmatprep.subr.bf16.mxu0 %v1935
    %2063 = vmatpush1.bf16.msra.mxu0 %v1934
    %2064 = vmatprep.subr.bf16.mxu0 %v1937
    %2065 = vmatpush1.bf16.msra.mxu0 %v1936
    %2066 = vmatprep.mubr.bf16.mxu0 %v1635
    %2067 = vmatmul.mubr.bf16.gmra.mrb[0].mxu0 %v1634
    %v2068 = vpop.f32.mrb[0].mxu0
    %v2069 = vadd.f32 %v1707, %v2068
    %v2070 = vpop.f32.mrb[0].mxu0
    %v2071 = vadd.f32 %v1711, %v2070
    %v2072 = vpop.f32.mrb[0].mxu0
    %v2073 = vpop.f32.mrb[0].mxu0
    %2074 = vdwg.mxu0
    %2075 = vmatprep.subr.bf16.mxu0 %v1939
    %2076 = vmatpush1.bf16.msra.mxu0 %v1938
    %2077 = vmatprep.subr.bf16.mxu0 %v1941
    %2078 = vmatpush1.bf16.msra.mxu0 %v1940
    %2079 = vmatprep.subr.bf16.mxu0 %v1943
    %2080 = vmatpush1.bf16.msra.mxu0 %v1942
    %2081 = vmatprep.subr.bf16.mxu0 %v1945
    %2082 = vmatpush1.bf16.msra.mxu0 %v1944
    %2083 = vmatprep.subr.bf16.mxu0 %v1947
    %2084 = vmatpush1.bf16.msra.mxu0 %v1946
    %2085 = vmatprep.subr.bf16.mxu0 %v1949
    %2086 = vmatpush1.bf16.msra.mxu0 %v1948
    %2087 = vmatprep.subr.bf16.mxu0 %v1951
    %2088 = vmatpush1.bf16.msra.mxu0 %v1950
    %2089 = vmatprep.subr.bf16.mxu0 %v1953
    %2090 = vmatpush1.bf16.msra.mxu0 %v1952
    %2091 = vmatprep.subr.bf16.mxu0 %v1955
    %2092 = vmatpush1.bf16.msra.mxu0 %v1954
    %2093 = vmatprep.subr.bf16.mxu0 %v1957
    %2094 = vmatpush1.bf16.msra.mxu0 %v1956
    %2095 = vmatprep.subr.bf16.mxu0 %v1959
    %2096 = vmatpush1.bf16.msra.mxu0 %v1958
    %2097 = vmatprep.subr.bf16.mxu0 %v1961
    %2098 = vmatpush1.bf16.msra.mxu0 %v1960
    %2099 = vmatprep.subr.bf16.mxu0 %v1963
    %2100 = vmatpush1.bf16.msra.mxu0 %v1962
    %2101 = vmatprep.subr.bf16.mxu0 %v1965
    %2102 = vmatpush1.bf16.msra.mxu0 %v1964
    %2103 = vmatprep.subr.bf16.mxu0 %v1967
    %2104 = vmatpush1.bf16.msra.mxu0 %v1966
    %2105 = vmatprep.subr.bf16.mxu0 %v1969
    %2106 = vmatpush1.bf16.msra.mxu0 %v1968
    %2107 = vmatprep.mubr.bf16.mxu0 %v1637
    %2108 = vmatmul.mubr.bf16.gmra.mrb[0].mxu0 %v1636
    %v2109 = vpop.f32.mrb[0].mxu0
    %v2110 = vadd.f32 %v2069, %v2109
    %v2111 = vpop.f32.mrb[0].mxu0
    %v2112 = vadd.f32 %v2071, %v2111
    %v2113 = vpop.f32.mrb[0].mxu0
    %v2114 = vpop.f32.mrb[0].mxu0
    %2115 = vdwg.mxu0
    %v2116 = vmin.f32 %v2110, 20.0
    %v2117 = vmin.f32 %v2112, 20.0
    %v2118 = vmul.f32 %v2116, 1.442695
    %v2119 = vpow.pop %v2118
    %v2120 = vmul.f32 %v2117, 1.442695
    %v2121 = vpow.pop %v2120
    %v2122 = vadd.f32 %v2119, 2.0
    %v2123 = vadd.f32 %v2121, 2.0
    %v2124 = vmul.f32 %v2119, %v2122
    %v2125 = vmul.f32 %v2121, %v2123
    %v2126 = vmul.f32 %v2110, %v2124
    %v2127 = vmul.f32 %v2112, %v2125
    %v2128 = vadd.f32 %v2124, 2.0
    %v2129 = vadd.f32 %v2125, 2.0
    %v2130 = vrcp.pop %v2128
    %v2131 = vrcp.pop %v2129
    %v2132 = vmul.f32 %v2126, %v2130
    %v2133 = vmul.f32 %v2127, %v2131
    %vm2134 = vcmp.gt.f32.partialorder %v2110, 20.0
    %vm2135 = vcmp.gt.f32.partialorder %v2112, 20.0
    %v2136 = vsel %vm2134, %v2110, %v2132
    %v2137 = vsel %vm2135, %v2112, %v2133
    %v2138 = vpack.c.bf16 %v2136, %v2136
    %v2139 = vpack.c.bf16 %v2137, %v2137
    %v2140 = vld [vmem:[#allocation11] sm:$0xf]
    %v2141 = vld [vmem:[#allocation11 + $0x4] sm:$0xf]
    %v2142 = vld [vmem:[#allocation11 + $0x8] sm:$0xf]
    %v2143 = vld [vmem:[#allocation11 + $0xc] sm:$0xf]
    %v2144 = vld [vmem:[#allocation11 + $0x10] sm:$0xf]
    %v2145 = vld [vmem:[#allocation11 + $0x14] sm:$0xf]
    %v2146 = vld [vmem:[#allocation11 + $0x18] sm:$0xf]
    %v2147 = vld [vmem:[#allocation11 + $0x1c] sm:$0xf]
    %v2148 = vld [vmem:[#allocation11 + $0x20] sm:$0xf]
    %v2149 = vld [vmem:[#allocation11 + $0x24] sm:$0xf]
    %v2150 = vld [vmem:[#allocation11 + $0x28] sm:$0xf]
    %v2151 = vld [vmem:[#allocation11 + $0x2c] sm:$0xf]
    %v2152 = vld [vmem:[#allocation11 + $0x30] sm:$0xf]
    %v2153 = vld [vmem:[#allocation11 + $0x34] sm:$0xf]
    %v2154 = vld [vmem:[#allocation11 + $0x38] sm:$0xf]
    %v2155 = vld [vmem:[#allocation11 + $0x3c] sm:$0xf]
    %v2156 = vld [vmem:[#allocation11 + $0x40] sm:$0xf]
    %v2157 = vld [vmem:[#allocation11 + $0x44] sm:$0xf]
    %v2158 = vld [vmem:[#allocation11 + $0x48] sm:$0xf]
    %v2159 = vld [vmem:[#allocation11 + $0x4c] sm:$0xf]
    %v2160 = vld [vmem:[#allocation11 + $0x50] sm:$0xf]
    %v2161 = vld [vmem:[#allocation11 + $0x54] sm:$0xf]
    %v2162 = vld [vmem:[#allocation11 + $0x58] sm:$0xf]
    %v2163 = vld [vmem:[#allocation11 + $0x5c] sm:$0xf]
    %v2164 = vld [vmem:[#allocation11 + $0x60] sm:$0xf]
    %v2165 = vld [vmem:[#allocation11 + $0x64] sm:$0xf]
    %v2166 = vld [vmem:[#allocation11 + $0x68] sm:$0xf]
    %v2167 = vld [vmem:[#allocation11 + $0x6c] sm:$0xf]
    %v2168 = vld [vmem:[#allocation11 + $0x70] sm:$0xf]
    %v2169 = vld [vmem:[#allocation11 + $0x74] sm:$0xf]
    %v2170 = vld [vmem:[#allocation11 + $0x78] sm:$0xf]
    %v2171 = vld [vmem:[#allocation11 + $0x7c] sm:$0xf]
    %v2172 = vld [vmem:[#allocation13] sm:$0x1]
    %v2174 = vlaneseq
    %v2175 = vshrl.u32 %v2174, 7
    %v2176 = vsub.s32 0, %v2175
    %v2177 = vrot.slane %v2172, %v2176
    %v2211 = vunpack.c.l.b16 %v2140
    %v2212 = vunpack.c.l.b16 %v2141
    %v2213 = vunpack.c.l.b16 %v2142
    %v2214 = vunpack.c.l.b16 %v2143
    %v2215 = vunpack.c.l.b16 %v2144
    %v2216 = vunpack.c.l.b16 %v2145
    %v2217 = vunpack.c.l.b16 %v2146
    %v2218 = vunpack.c.l.b16 %v2147
    %v2219 = vunpack.c.l.b16 %v2148
    %v2220 = vunpack.c.l.b16 %v2149
    %v2221 = vunpack.c.l.b16 %v2150
    %v2222 = vunpack.c.l.b16 %v2151
    %v2223 = vunpack.c.l.b16 %v2152
    %v2224 = vunpack.c.l.b16 %v2153
    %v2225 = vunpack.c.l.b16 %v2154
    %v2226 = vunpack.c.l.b16 %v2155
    %v2227 = vunpack.c.l.b16 %v2156
    %v2228 = vunpack.c.l.b16 %v2157
    %v2229 = vunpack.c.l.b16 %v2158
    %v2230 = vunpack.c.l.b16 %v2159
    %v2231 = vunpack.c.l.b16 %v2160
    %v2232 = vunpack.c.l.b16 %v2161
    %v2233 = vunpack.c.l.b16 %v2162
    %v2234 = vunpack.c.l.b16 %v2163
    %v2235 = vunpack.c.l.b16 %v2164
    %v2236 = vunpack.c.l.b16 %v2165
    %v2237 = vunpack.c.l.b16 %v2166
    %v2238 = vunpack.c.l.b16 %v2167
    %v2239 = vunpack.c.l.b16 %v2168
    %v2240 = vunpack.c.l.b16 %v2169
    %v2241 = vunpack.c.l.b16 %v2170
    %v2242 = vunpack.c.l.b16 %v2171
    %v2243 = vpack.c.b16 %v2212, %v2211
    %v2244 = vpack.c.b16 %v2214, %v2213
    %v2245 = vpack.c.b16 %v2216, %v2215
    %v2246 = vpack.c.b16 %v2218, %v2217
    %v2247 = vpack.c.b16 %v2220, %v2219
    %v2248 = vpack.c.b16 %v2222, %v2221
    %v2249 = vpack.c.b16 %v2224, %v2223
    %v2250 = vpack.c.b16 %v2226, %v2225
    %v2251 = vpack.c.b16 %v2228, %v2227
    %v2252 = vpack.c.b16 %v2230, %v2229
    %v2253 = vpack.c.b16 %v2232, %v2231
    %v2254 = vpack.c.b16 %v2234, %v2233
    %v2255 = vpack.c.b16 %v2236, %v2235
    %v2256 = vpack.c.b16 %v2238, %v2237
    %v2257 = vpack.c.b16 %v2240, %v2239
    %v2258 = vpack.c.b16 %v2242, %v2241
    %2275 = vmatprep.subr.bf16.mxu0 0
    %2276 = vmatpush1.bf16.msra.mxu0 %v2243
    %2277 = vmatprep.subr.bf16.mxu0 0
    %2278 = vmatpush1.bf16.msra.mxu0 %v2244
    %2279 = vmatprep.subr.bf16.mxu0 0
    %2280 = vmatpush1.bf16.msra.mxu0 %v2245
    %2281 = vmatprep.subr.bf16.mxu0 0
    %2282 = vmatpush1.bf16.msra.mxu0 %v2246
    %2283 = vmatprep.subr.bf16.mxu0 0
    %2284 = vmatpush1.bf16.msra.mxu0 %v2247
    %2285 = vmatprep.subr.bf16.mxu0 0
    %2286 = vmatpush1.bf16.msra.mxu0 %v2248
    %2287 = vmatprep.subr.bf16.mxu0 0
    %2288 = vmatpush1.bf16.msra.mxu0 %v2249
    %2289 = vmatprep.subr.bf16.mxu0 0
    %2290 = vmatpush1.bf16.msra.mxu0 %v2250
    %2291 = vmatprep.subr.bf16.mxu0 0
    %2292 = vmatpush1.bf16.msra.mxu0 %v2251
    %2293 = vmatprep.subr.bf16.mxu0 0
    %2294 = vmatpush1.bf16.msra.mxu0 %v2252
    %2295 = vmatprep.subr.bf16.mxu0 0
    %2296 = vmatpush1.bf16.msra.mxu0 %v2253
    %2297 = vmatprep.subr.bf16.mxu0 0
    %2298 = vmatpush1.bf16.msra.mxu0 %v2254
    %2299 = vmatprep.subr.bf16.mxu0 0
    %2300 = vmatpush1.bf16.msra.mxu0 %v2255
    %2301 = vmatprep.subr.bf16.mxu0 0
    %2302 = vmatpush1.bf16.msra.mxu0 %v2256
    %2303 = vmatprep.subr.bf16.mxu0 0
    %2304 = vmatpush1.bf16.msra.mxu0 %v2257
    %2305 = vmatprep.subr.bf16.mxu0 0
    %2306 = vmatpush1.bf16.msra.mxu0 %v2258
    %2307 = vmatprep.mubr.bf16.mxu0 %v2139
    %2308 = vmatmul.mubr.bf16.gmra.mrb[0].mxu0 %v2138
    %v2309 = vpop.f32.mrb[0].mxu0
    %v2310 = vadd.f32 %v2177, %v2309
    %v2311 = vpop.f32.mrb[0].mxu0
    %v2312 = vpop.f32.mrb[0].mxu0
    %v2313 = vpop.f32.mrb[0].mxu0
    %2314 = vdwg.mxu0
    %v2315 = vmin.f32 %v2310, 20.0
    %v2316 = vmul.f32 %v2315, 1.442695
    %v2317 = vpow.pop %v2316
    %v2318 = vadd.f32 %v2317, 2.0
    %v2319 = vmul.f32 %v2317, %v2318
    %v2320 = vmul.f32 %v2310, %v2319
    %v2321 = vadd.f32 %v2319, 2.0
    %v2322 = vrcp.pop %v2321
    %v2323 = vmul.f32 %v2320, %v2322
    %vm2324 = vcmp.gt.f32.partialorder %v2310, 20.0
    %v2325 = vsel %vm2324, %v2310, %v2323
    %v2326 = vpack.c.bf16 %v2325, %v2325
    %v2327 = vld [vmem:[#allocation14] sm:$0xf]
    %v2328 = vld [vmem:[#allocation14 + $0x4] sm:$0xf]
    %v2329 = vld [vmem:[#allocation14 + $0x8] sm:$0xf]
    %v2330 = vld [vmem:[#allocation14 + $0xc] sm:$0xf]
    %v2331 = vld [vmem:[#allocation14 + $0x10] sm:$0xf]
    %v2332 = vld [vmem:[#allocation14 + $0x14] sm:$0xf]
    %v2333 = vld [vmem:[#allocation14 + $0x18] sm:$0xf]
    %v2334 = vld [vmem:[#allocation14 + $0x1c] sm:$0xf]
    %v2335 = vld [vmem:[#allocation14 + $0x20] sm:$0xf]
    %v2336 = vld [vmem:[#allocation14 + $0x24] sm:$0xf]
    %v2337 = vld [vmem:[#allocation14 + $0x28] sm:$0xf]
    %v2338 = vld [vmem:[#allocation14 + $0x2c] sm:$0xf]
    %v2339 = vld [vmem:[#allocation14 + $0x30] sm:$0xf]
    %v2340 = vld [vmem:[#allocation14 + $0x34] sm:$0xf]
    %v2341 = vld [vmem:[#allocation14 + $0x38] sm:$0xf]
    %v2342 = vld [vmem:[#allocation14 + $0x3c] sm:$0xf]
    %v2343 = vld [vmem:[#allocation16] sm:$0x1]
    %v2345 = vlaneseq
    %v2346 = vshrl.u32 %v2345, 7
    %v2347 = vsub.s32 0, %v2346
    %v2348 = vrot.slane %v2343, %v2347
    %v2366 = vunpack.c.l.b16 %v2327
    %v2367 = vunpack.c.l.b16 %v2328
    %v2368 = vunpack.c.l.b16 %v2329
    %v2369 = vunpack.c.l.b16 %v2330
    %v2370 = vunpack.c.l.b16 %v2331
    %v2371 = vunpack.c.l.b16 %v2332
    %v2372 = vunpack.c.l.b16 %v2333
    %v2373 = vunpack.c.l.b16 %v2334
    %v2374 = vunpack.c.l.b16 %v2335
    %v2375 = vunpack.c.l.b16 %v2336
    %v2376 = vunpack.c.l.b16 %v2337
    %v2377 = vunpack.c.l.b16 %v2338
    %v2378 = vunpack.c.l.b16 %v2339
    %v2379 = vunpack.c.l.b16 %v2340
    %v2380 = vunpack.c.l.b16 %v2341
    %v2381 = vunpack.c.l.b16 %v2342
    %v2382 = vpack.c.b16 %v2367, %v2366
    %v2383 = vpack.c.b16 %v2369, %v2368
    %v2384 = vpack.c.b16 %v2371, %v2370
    %v2385 = vpack.c.b16 %v2373, %v2372
    %v2386 = vpack.c.b16 %v2375, %v2374
    %v2387 = vpack.c.b16 %v2377, %v2376
    %v2388 = vpack.c.b16 %v2379, %v2378
    %v2389 = vpack.c.b16 %v2381, %v2380
    %2398 = vmatprep.subr.bf16.mxu0 0
    %2399 = vmatpush1.bf16.msra.mxu0 %v2382
    %2400 = vmatprep.subr.bf16.mxu0 0
    %2401 = vmatpush1.bf16.msra.mxu0 %v2383
    %2402 = vmatprep.subr.bf16.mxu0 0
    %2403 = vmatpush1.bf16.msra.mxu0 %v2384
    %2404 = vmatprep.subr.bf16.mxu0 0
    %2405 = vmatpush1.bf16.msra.mxu0 %v2385
    %2406 = vmatprep.subr.bf16.mxu0 0
    %2407 = vmatpush1.bf16.msra.mxu0 %v2386
    %2408 = vmatprep.subr.bf16.mxu0 0
    %2409 = vmatpush1.bf16.msra.mxu0 %v2387
    %2410 = vmatprep.subr.bf16.mxu0 0
    %2411 = vmatpush1.bf16.msra.mxu0 %v2388
    %2412 = vmatprep.subr.bf16.mxu0 0
    %2413 = vmatpush1.bf16.msra.mxu0 %v2389
    %2414 = vmatprep.subr.bf16.mxu0 0
    %2415 = vmatpush1.bf16.msra.mxu0 0
    %2416 = vmatprep.subr.bf16.mxu0 0
    %2417 = vmatpush1.bf16.msra.mxu0 0
    %2418 = vmatprep.subr.bf16.mxu0 0
    %2419 = vmatpush1.bf16.msra.mxu0 0
    %2420 = vmatprep.subr.bf16.mxu0 0
    %2421 = vmatpush1.bf16.msra.mxu0 0
    %2422 = vmatprep.subr.bf16.mxu0 0
    %2423 = vmatpush1.bf16.msra.mxu0 0
    %2424 = vmatprep.subr.bf16.mxu0 0
    %2425 = vmatpush1.bf16.msra.mxu0 0
    %2426 = vmatprep.subr.bf16.mxu0 0
    %2427 = vmatpush1.bf16.msra.mxu0 0
    %2428 = vmatprep.subr.bf16.mxu0 0
    %2429 = vmatpush1.bf16.msra.mxu0 0
    %2430 = vmatprep.mubr.bf16.mxu0 0
    %2431 = vmatmul.mubr.bf16.gmra.mrb[0].mxu0 %v2326
    %v2432 = vpop.f32.mrb[0].mxu0
    %v2433 = vadd.f32 %v2348, %v2432
    %v2434 = vpop.f32.mrb[0].mxu0
    %v2435 = vpop.f32.mrb[0].mxu0
    %v2436 = vpop.f32.mrb[0].mxu0
    %2437 = vdwg.mxu0
    %v2438 = vxor.u32 %v2433, 2147483648
    %v2439 = vmul.f32 %v2438, 1.442695
    %v2440 = vpow.pop %v2439
    %v2441 = vadd.f32 %v2440, 1.0
    %v2442 = vrcp.pop %v2441
    %v2443 = vmul.f32 1.0, %v2442
    %2444 = vst [vmem:[#allocation17] sm:$0xff] %v2443
    // Predicated region
    $region74: #{dsi_predictor_forward.9} parent=1 // pred_check
      _
    $region75: #{dsi_predictor_forward.9} parent=1 // pred_check_branch
      %2446 = sbr.rel (0) target = $region77
    $region76: #{dsi_predictor_forward.9} parent=1 // pred_region
      %s2448 = ssub.s32 128, 128
      %2449 = vsyncadd [#allocation4], %s2448
      %s2451 = sshll.u32 [#allocation17], 4
      %s2452 = int_to_ptr.vmem [resolvable:$true] %s2451
      %2454 = dma.vmem_to_hbm [thread:$0]  %s2452, 128, %s9, [#allocation4]
    $region77: #{dsi_predictor_forward.9} parent=1 // pred_fallthru
      _
    // Predicated region
    $region78: #{dsi_predictor_forward.9} parent=1 // pred_check
      _
    $region79: #{dsi_predictor_forward.9} parent=1 // pred_check_branch
      %2456 = sbr.rel (0) target = $region81
    $region80: #{dsi_predictor_forward.9} parent=1 // pred_region
      %2457 = dma.done [#allocation4], 128
    $region81: #{dsi_predictor_forward.9} parent=1 // pred_fallthru
      _
    %2458 = vsyncpa [#allocation3], 1
    %2459 = vsyncpa [#allocation6], 1
    %2460 = vsyncpa [#allocation9], 1
    %2461 = vsyncpa [#allocation12], 1
    %2462 = vsyncpa [#allocation15], 1
    %2463 = vsyncpa [#allocation4], 1

</llo_original>
